<compile_context>
chip_gen: v6e
topology: v6e:2x2x1
jax: 0.10.0
libtpu: 0.0.40
codegen_flags: <defaults>
</compile_context>

<pallas_src>
import functools

import jax
import jax.numpy as jnp
from jax import lax
from jax.experimental import pallas as pl
from jax.experimental.pallas import tpu as pltpu


def encoder_kernel(x_ref, w_ih_ref, w_hh_ref, b_ref, out_ref, seqf_ref, seqb_ref):
    T = x_ref.shape[0]
    H = w_hh_ref.shape[1]
    L = w_ih_ref.shape[0] // 2

    def lstm_step(pre_row, h, c, w_hh):
        # pre_row: (1, 4H) already holds x @ W_ih^T + b_ih + b_hh for this timestep.
        g = pre_row + jnp.dot(h, w_hh, preferred_element_type=jnp.float32)
        # Nonlinearities once on the full 4H vector, then static lane slices.
        sig = jax.nn.sigmoid(g)
        th = jnp.tanh(g)
        i_g = sig[:, 0 * H:1 * H]
        f_g = sig[:, 1 * H:2 * H]
        g_g = th[:, 2 * H:3 * H]
        o_g = sig[:, 3 * H:4 * H]
        c_new = f_g * c + i_g * g_g
        h_new = o_g * jnp.tanh(c_new)
        return h_new, c_new

    x = x_ref[...]                                   # (T, 2H), zero-padded layer-0 input

    for layer in range(L):
        is_last = layer == L - 1
        idx_f = 2 * layer
        idx_b = 2 * layer + 1
        w_ih_f = w_ih_ref[idx_f]                     # (2H, 4H)
        w_ih_b = w_ih_ref[idx_b]
        w_hh_f = w_hh_ref[idx_f]                     # (H, 4H)
        w_hh_b = w_hh_ref[idx_b]
        b_f = b_ref[pl.ds(idx_f, 1), :]              # (1, 4H)
        b_b = b_ref[pl.ds(idx_b, 1), :]

        # Hot path #1: one MXU matmul per direction covers the input projection
        # of every timestep of this layer.
        if layer == 0:
            pre_f = jnp.dot(x, w_ih_f, preferred_element_type=jnp.float32) + b_f
            pre_b = jnp.dot(x, w_ih_b, preferred_element_type=jnp.float32) + b_b
        else:
            # Previous layer's output is [fwd | bwd] along features; do that
            # concatenation implicitly via a split matmul (no lane concat needed).
            sf = seqf_ref[...]                       # (T, H)
            sb = seqb_ref[...]                       # (T, H)
            pre_f = (jnp.dot(sf, w_ih_f[0:H, :], preferred_element_type=jnp.float32)
                     + jnp.dot(sb, w_ih_f[H:2 * H, :], preferred_element_type=jnp.float32)
                     + b_f)
            pre_b = (jnp.dot(sf, w_ih_b[0:H, :], preferred_element_type=jnp.float32)
                     + jnp.dot(sb, w_ih_b[H:2 * H, :], preferred_element_type=jnp.float32)
                     + b_b)

        h_f = jnp.zeros((1, H), jnp.float32)
        c_f = jnp.zeros((1, H), jnp.float32)
        h_b = jnp.zeros((1, H), jnp.float32)
        c_b = jnp.zeros((1, H), jnp.float32)

        # Only the reverse state at time T-1 of the last layer is observable and it
        # is produced by the very first reverse step.
        n_bwd = 1 if is_last else T

        # Hot path #2: fully unrolled recurrence; forward and reverse chains are
        # independent, so interleaving them hides the per-step MXU latency.
        for t in range(T):
            h_f, c_f = lstm_step(pre_f[t:t + 1, :], h_f, c_f, w_hh_f)
            if not is_last:
                seqf_ref[pl.ds(t, 1), :] = h_f
            if t < n_bwd:
                tb = T - 1 - t
                h_b, c_b = lstm_step(pre_b[tb:tb + 1, :], h_b, c_b, w_hh_b)
                if not is_last:
                    seqb_ref[pl.ds(tb, 1), :] = h_b

        if is_last:
            out_ref[pl.ds(0, 1), :] = h_f            # forward half of x[:, -1, :]
            out_ref[pl.ds(1, 1), :] = h_b            # backward half of x[:, -1, :]


def init_encoder_params(key, n_features, hidden_dim, num_layers):
    """Deterministic PyTorch-style init: U(-1/sqrt(H), 1/sqrt(H))."""
    k = 1.0 / jnp.sqrt(jnp.float32(hidden_dim))
    params = {}
    for layer in range(num_layers):
        d_in = n_features if layer == 0 else 2 * hidden_dim
        for direction in range(2):
            key, k1, k2, k3, k4 = jax.random.split(key, 5)
            w_ih = jax.random.uniform(k1, (4 * hidden_dim, d_in), jnp.float32, -k, k)
            w_hh = jax.random.uniform(k2, (4 * hidden_dim, hidden_dim), jnp.float32, -k, k)
            b_ih = jax.random.uniform(k3, (4 * hidden_dim,), jnp.float32, -k, k)
            b_hh = jax.random.uniform(k4, (4 * hidden_dim,), jnp.float32, -k, k)
            params[(layer, direction)] = (w_ih, w_hh, b_ih, b_hh)
    return params


def pack_encoder_params(params, n_features, hidden_dim, num_layers):
    """One-time prep: transpose weights, combine biases, stack layer x direction."""
    H = hidden_dim
    DIN = 2 * H
    W_ih = jnp.zeros((2 * num_layers, DIN, 4 * H), jnp.float32)
    W_hh = jnp.zeros((2 * num_layers, H, 4 * H), jnp.float32)
    B = jnp.zeros((2 * num_layers, 4 * H), jnp.float32)
    for layer in range(num_layers):
        d_in = n_features if layer == 0 else DIN
        for d in range(2):
            idx = 2 * layer + d
            w_ih, w_hh, b_ih, b_hh = params[(layer, d)]
            W_ih = W_ih.at[idx, :d_in, :].set(w_ih.T)     # layer-0 rows >= n_features stay 0
            W_hh = W_hh.at[idx].set(w_hh.T)
            B = B.at[idx].set(b_ih + b_hh)
    return W_ih, W_hh, B


def encoder_forward(x, packed, seq_len, n_features, hidden_dim, num_layers):
    """Matches Encoder.forward: reshape -> num_layers-layer biLSTM -> output at last timestep."""
    del num_layers  # shapes of the packed weights carry L
    W_ih, W_hh, B = packed
    T, H = seq_len, hidden_dim
    DIN = 2 * H
    x = x.reshape(T, n_features).astype(jnp.float32)
    x_pad = jnp.zeros((T, DIN), jnp.float32).at[:, :n_features].set(x)

    out2 = pl.pallas_call(
        encoder_kernel,
        out_shape=jax.ShapeDtypeStruct((2, H), jnp.float32),
        grid=(1,),
        in_specs=[
            pl.BlockSpec((T, DIN), lambda i: (0, 0)),
            pl.BlockSpec(W_ih.shape, lambda i: (0, 0, 0)),
            pl.BlockSpec(W_hh.shape, lambda i: (0, 0, 0)),
            pl.BlockSpec(B.shape, lambda i: (0, 0)),
        ],
        out_specs=pl.BlockSpec((2, H), lambda i: (0, 0)),
        scratch_shapes=[
            pltpu.VMEM((T, H), jnp.float32),   # forward hidden states of current layer
            pltpu.VMEM((T, H), jnp.float32),   # backward hidden states of current layer
        ],
        compiler_params=pltpu.CompilerParams(dimension_semantics=("arbitrary",)),
    )(x_pad, W_ih, W_hh, B)
    # rows [fwd, bwd] -> (1, 2H) == x[:, -1, :] of the PyTorch module
    return out2.reshape(1, 2 * H)


def encoder_forward_ref(x, params, seq_len, n_features, hidden_dim, num_layers):
    """Pure-JAX reference (same math, unpacked params) for a correctness check."""
    def run_dir(seq, w_ih, w_hh, b_ih, b_hh):
        H = hidden_dim
        pre = seq @ w_ih.T + b_ih + b_hh

        def step(carry, p):
            h, c = carry
            g = p + h @ w_hh.T
            i = jax.nn.sigmoid(g[0:H]); f = jax.nn.sigmoid(g[H:2 * H])
            gg = jnp.tanh(g[2 * H:3 * H]); o = jax.nn.sigmoid(g[3 * H:4 * H])
            c = f * c + i * gg
            h = o * jnp.tanh(c)
            return (h, c), h

        (_, _), hs = lax.scan(step, (jnp.zeros(H), jnp.zeros(H)), pre)
        return hs

    x = x.reshape(1, seq_len, n_features)
    seq = x[0].astype(jnp.float32)
    for layer in range(num_layers):
        outs = []
        for direction in range(2):
            w_ih, w_hh, b_ih, b_hh = params[(layer, direction)]
            inp = seq if direction == 0 else jnp.flip(seq, axis=0)
            out = run_dir(inp, w_ih, w_hh, b_ih, b_hh)
            if direction == 1:
                out = jnp.flip(out, axis=0)
            outs.append(out)
        seq = jnp.concatenate(outs, axis=-1)
    return seq[-1][None, :]


if __name__ == "__main__":
    seq_len, n_features, embedding_dim, num_layers = 8, 4, 64, 3
    hidden_dim = embedding_dim // 2

    key = jax.random.PRNGKey(0)
    key, pkey, xkey = jax.random.split(key, 3)
    params = init_encoder_params(pkey, n_features, hidden_dim, num_layers)
    packed = pack_encoder_params(params, n_features, hidden_dim, num_layers)
    x = jax.random.normal(xkey, (seq_len, n_features), jnp.float32)

    fwd = jax.jit(functools.partial(encoder_forward, seq_len=seq_len,
                                    n_features=n_features, hidden_dim=hidden_dim,
                                    num_layers=num_layers))
    out = jax.block_until_ready(fwd(x, packed))
    assert out.shape == (1, embedding_dim), out.shape

    ref = encoder_forward_ref(x, params, seq_len, n_features, hidden_dim, num_layers)
    assert jnp.allclose(out, ref, rtol=1e-4, atol=1e-4), (out, ref)

    print("KERNEL_OK")
</pallas_src>

<mosaic_0001>
module attributes {stable_mosaic.version = 11 : i64} {
  func.func @encoder_kernel(%arg0: i32, %arg1: memref<8x64xf32, #tpu.memory_space<vmem>>, %arg2: memref<6x64x128xf32, #tpu.memory_space<vmem>>, %arg3: memref<6x32x128xf32, #tpu.memory_space<vmem>>, %arg4: memref<6x128xf32, #tpu.memory_space<vmem>>, %arg5: memref<2x32xf32, #tpu.memory_space<vmem>>, %arg6: memref<8x32xf32, #tpu.memory_space<vmem>>, %arg7: memref<8x32xf32, #tpu.memory_space<vmem>>) attributes {dimension_semantics = [#tpu.dimension_semantics<arbitrary>], iteration_bounds = array<i64: 1>, scalar_prefetch = 0 : i64, scratch_operands = 2 : i64, tpu.core_type = #tpu.core_type<tc>, window_params = [{pipeline_mode = #tpu.pipeline_mode<synchronous>, transform_indices = @transform_0, window_bounds = array<i64: 8, 64>}, {pipeline_mode = #tpu.pipeline_mode<synchronous>, transform_indices = @transform_1, window_bounds = array<i64: 6, 64, 128>}, {pipeline_mode = #tpu.pipeline_mode<synchronous>, transform_indices = @transform_2, window_bounds = array<i64: 6, 32, 128>}, {pipeline_mode = #tpu.pipeline_mode<synchronous>, transform_indices = @transform_3, window_bounds = array<i64: 6, 128>}, {pipeline_mode = #tpu.pipeline_mode<synchronous>, transform_indices = @transform_4, window_bounds = array<i64: 2, 32>}]} {
    %c0 = arith.constant 0 : index
    %c0_0 = arith.constant 0 : index
    %0 = vector.load %arg1[%c0, %c0_0] : memref<8x64xf32, #tpu.memory_space<vmem>>, vector<8x64xf32>
    %c0_1 = arith.constant 0 : index
    %c0_2 = arith.constant 0 : index
    %c0_3 = arith.constant 0 : index
    %1 = vector.load %arg2[%c0_1, %c0_2, %c0_3] : memref<6x64x128xf32, #tpu.memory_space<vmem>>, vector<1x64x128xf32>
    %2 = vector.shape_cast %1 : vector<1x64x128xf32> to vector<64x128xf32>
    %c1 = arith.constant 1 : index
    %c0_4 = arith.constant 0 : index
    %c0_5 = arith.constant 0 : index
    %3 = vector.load %arg2[%c1, %c0_4, %c0_5] : memref<6x64x128xf32, #tpu.memory_space<vmem>>, vector<1x64x128xf32>
    %4 = vector.shape_cast %3 : vector<1x64x128xf32> to vector<64x128xf32>
    %c0_6 = arith.constant 0 : index
    %c0_7 = arith.constant 0 : index
    %c0_8 = arith.constant 0 : index
    %5 = vector.load %arg3[%c0_6, %c0_7, %c0_8] : memref<6x32x128xf32, #tpu.memory_space<vmem>>, vector<1x32x128xf32>
    %6 = vector.shape_cast %5 : vector<1x32x128xf32> to vector<32x128xf32>
    %c1_9 = arith.constant 1 : index
    %c0_10 = arith.constant 0 : index
    %c0_11 = arith.constant 0 : index
    %7 = vector.load %arg3[%c1_9, %c0_10, %c0_11] : memref<6x32x128xf32, #tpu.memory_space<vmem>>, vector<1x32x128xf32>
    %8 = vector.shape_cast %7 : vector<1x32x128xf32> to vector<32x128xf32>
    %c0_12 = arith.constant 0 : index
    %c0_13 = arith.constant 0 : index
    %9 = vector.load %arg4[%c0_12, %c0_13] : memref<6x128xf32, #tpu.memory_space<vmem>>, vector<1x128xf32>
    %c1_14 = arith.constant 1 : index
    %c0_15 = arith.constant 0 : index
    %10 = vector.load %arg4[%c1_14, %c0_15] : memref<6x128xf32, #tpu.memory_space<vmem>>, vector<1x128xf32>
    %cst = arith.constant dense<0.000000e+00> : vector<8x128xf32>
    %11 = tpu.matmul %0, %2, %cst {dimension_numbers = #tpu.dot_dimension_numbers<[1], [0], [0], [1], [0, 0, 1, 1], [], []>} : vector<8x64xf32>, vector<64x128xf32>, vector<8x128xf32> -> vector<8x128xf32>
    %12 = vector.broadcast %9 : vector<1x128xf32> to vector<8x128xf32>
    %13 = arith.addf %11, %12 : vector<8x128xf32>
    %cst_16 = arith.constant dense<0.000000e+00> : vector<8x128xf32>
    %14 = tpu.matmul %0, %4, %cst_16 {dimension_numbers = #tpu.dot_dimension_numbers<[1], [0], [0], [1], [0, 0, 1, 1], [], []>} : vector<8x64xf32>, vector<64x128xf32>, vector<8x128xf32> -> vector<8x128xf32>
    %15 = vector.broadcast %10 : vector<1x128xf32> to vector<8x128xf32>
    %16 = arith.addf %14, %15 : vector<8x128xf32>
    %cst_17 = arith.constant 0.000000e+00 : f32
    %17 = vector.broadcast %cst_17 : f32 to vector<1x32xf32>
    %cst_18 = arith.constant 0.000000e+00 : f32
    %18 = vector.broadcast %cst_18 : f32 to vector<1x32xf32>
    %cst_19 = arith.constant 0.000000e+00 : f32
    %19 = vector.broadcast %cst_19 : f32 to vector<1x32xf32>
    %cst_20 = arith.constant 0.000000e+00 : f32
    %20 = vector.broadcast %cst_20 : f32 to vector<1x32xf32>
    %21 = vector.extract_strided_slice %13 {offsets = [0, 0], sizes = [1, 128], strides = [1, 1]} : vector<8x128xf32> to vector<1x128xf32>
    %cst_21 = arith.constant dense<0.000000e+00> : vector<1x128xf32>
    %22 = tpu.matmul %17, %6, %cst_21 {dimension_numbers = #tpu.dot_dimension_numbers<[1], [0], [0], [1], [0, 0, 1, 1], [], []>} : vector<1x32xf32>, vector<32x128xf32>, vector<1x128xf32> -> vector<1x128xf32>
    %23 = arith.addf %21, %22 : vector<1x128xf32>
    %24 = arith.negf %23 : vector<1x128xf32>
    %25 = math.exp %24 : vector<1x128xf32>
    %cst_22 = arith.constant 1.000000e+00 : f32
    %26 = vector.broadcast %cst_22 : f32 to vector<1x128xf32>
    %27 = arith.addf %26, %25 : vector<1x128xf32>
    %28 = arith.divf %26, %27 : vector<1x128xf32>
    %29 = math.tanh %23 : vector<1x128xf32>
    %30 = vector.extract_strided_slice %28 {offsets = [0, 0], sizes = [1, 32], strides = [1, 1]} : vector<1x128xf32> to vector<1x32xf32>
    %31 = vector.extract_strided_slice %28 {offsets = [0, 32], sizes = [1, 32], strides = [1, 1]} : vector<1x128xf32> to vector<1x32xf32>
    %32 = vector.extract_strided_slice %29 {offsets = [0, 64], sizes = [1, 32], strides = [1, 1]} : vector<1x128xf32> to vector<1x32xf32>
    %33 = vector.extract_strided_slice %28 {offsets = [0, 96], sizes = [1, 32], strides = [1, 1]} : vector<1x128xf32> to vector<1x32xf32>
    %34 = arith.mulf %31, %18 : vector<1x32xf32>
    %35 = arith.mulf %30, %32 : vector<1x32xf32>
    %36 = arith.addf %34, %35 : vector<1x32xf32>
    %37 = math.tanh %36 : vector<1x32xf32>
    %38 = arith.mulf %33, %37 : vector<1x32xf32>
    %c0_23 = arith.constant 0 : index
    %c0_24 = arith.constant 0 : index
    %39 = vector.load %arg6[%c0_23, %c0_24] : memref<8x32xf32, #tpu.memory_space<vmem>>, vector<1x32xf32>
    tpu.vector_store %arg6[%c0_23, %c0_24], %38 {strides = array<i32>} : memref<8x32xf32, #tpu.memory_space<vmem>>, vector<1x32xf32>,
    %40 = vector.extract_strided_slice %16 {offsets = [7, 0], sizes = [1, 128], strides = [1, 1]} : vector<8x128xf32> to vector<1x128xf32>
    %cst_25 = arith.constant dense<0.000000e+00> : vector<1x128xf32>
    %41 = tpu.matmul %19, %8, %cst_25 {dimension_numbers = #tpu.dot_dimension_numbers<[1], [0], [0], [1], [0, 0, 1, 1], [], []>} : vector<1x32xf32>, vector<32x128xf32>, vector<1x128xf32> -> vector<1x128xf32>
    %42 = arith.addf %40, %41 : vector<1x128xf32>
    %43 = arith.negf %42 : vector<1x128xf32>
    %44 = math.exp %43 : vector<1x128xf32>
    %cst_26 = arith.constant 1.000000e+00 : f32
    %45 = vector.broadcast %cst_26 : f32 to vector<1x128xf32>
    %46 = arith.addf %45, %44 : vector<1x128xf32>
    %47 = arith.divf %45, %46 : vector<1x128xf32>
    %48 = math.tanh %42 : vector<1x128xf32>
    %49 = vector.extract_strided_slice %47 {offsets = [0, 0], sizes = [1, 32], strides = [1, 1]} : vector<1x128xf32> to vector<1x32xf32>
    %50 = vector.extract_strided_slice %47 {offsets = [0, 32], sizes = [1, 32], strides = [1, 1]} : vector<1x128xf32> to vector<1x32xf32>
    %51 = vector.extract_strided_slice %48 {offsets = [0, 64], sizes = [1, 32], strides = [1, 1]} : vector<1x128xf32> to vector<1x32xf32>
    %52 = vector.extract_strided_slice %47 {offsets = [0, 96], sizes = [1, 32], strides = [1, 1]} : vector<1x128xf32> to vector<1x32xf32>
    %53 = arith.mulf %50, %20 : vector<1x32xf32>
    %54 = arith.mulf %49, %51 : vector<1x32xf32>
    %55 = arith.addf %53, %54 : vector<1x32xf32>
    %56 = math.tanh %55 : vector<1x32xf32>
    %57 = arith.mulf %52, %56 : vector<1x32xf32>
    %c7 = arith.constant 7 : index
    %c0_27 = arith.constant 0 : index
    %58 = vector.load %arg7[%c7, %c0_27] : memref<8x32xf32, #tpu.memory_space<vmem>>, vector<1x32xf32>
    tpu.vector_store %arg7[%c7, %c0_27], %57 {strides = array<i32>} : memref<8x32xf32, #tpu.memory_space<vmem>>, vector<1x32xf32>,
    %59 = vector.extract_strided_slice %13 {offsets = [1, 0], sizes = [1, 128], strides = [1, 1]} : vector<8x128xf32> to vector<1x128xf32>
    %cst_28 = arith.constant dense<0.000000e+00> : vector<1x128xf32>
    %60 = tpu.matmul %38, %6, %cst_28 {dimension_numbers = #tpu.dot_dimension_numbers<[1], [0], [0], [1], [0, 0, 1, 1], [], []>} : vector<1x32xf32>, vector<32x128xf32>, vector<1x128xf32> -> vector<1x128xf32>
    %61 = arith.addf %59, %60 : vector<1x128xf32>
    %62 = arith.negf %61 : vector<1x128xf32>
    %63 = math.exp %62 : vector<1x128xf32>
    %cst_29 = arith.constant 1.000000e+00 : f32
    %64 = vector.broadcast %cst_29 : f32 to vector<1x128xf32>
    %65 = arith.addf %64, %63 : vector<1x128xf32>
    %66 = arith.divf %64, %65 : vector<1x128xf32>
    %67 = math.tanh %61 : vector<1x128xf32>
    %68 = vector.extract_strided_slice %66 {offsets = [0, 0], sizes = [1, 32], strides = [1, 1]} : vector<1x128xf32> to vector<1x32xf32>
    %69 = vector.extract_strided_slice %66 {offsets = [0, 32], sizes = [1, 32], strides = [1, 1]} : vector<1x128xf32> to vector<1x32xf32>
    %70 = vector.extract_strided_slice %67 {offsets = [0, 64], sizes = [1, 32], strides = [1, 1]} : vector<1x128xf32> to vector<1x32xf32>
    %71 = vector.extract_strided_slice %66 {offsets = [0, 96], sizes = [1, 32], strides = [1, 1]} : vector<1x128xf32> to vector<1x32xf32>
    %72 = arith.mulf %69, %36 : vector<1x32xf32>
    %73 = arith.mulf %68, %70 : vector<1x32xf32>
    %74 = arith.addf %72, %73 : vector<1x32xf32>
    %75 = math.tanh %74 : vector<1x32xf32>
    %76 = arith.mulf %71, %75 : vector<1x32xf32>
    %c1_30 = arith.constant 1 : index
    %c0_31 = arith.constant 0 : index
    %77 = vector.load %arg6[%c1_30, %c0_31] : memref<8x32xf32, #tpu.memory_space<vmem>>, vector<1x32xf32>
    tpu.vector_store %arg6[%c1_30, %c0_31], %76 {strides = array<i32>} : memref<8x32xf32, #tpu.memory_space<vmem>>, vector<1x32xf32>,
    %78 = vector.extract_strided_slice %16 {offsets = [6, 0], sizes = [1, 128], strides = [1, 1]} : vector<8x128xf32> to vector<1x128xf32>
    %cst_32 = arith.constant dense<0.000000e+00> : vector<1x128xf32>
    %79 = tpu.matmul %57, %8, %cst_32 {dimension_numbers = #tpu.dot_dimension_numbers<[1], [0], [0], [1], [0, 0, 1, 1], [], []>} : vector<1x32xf32>, vector<32x128xf32>, vector<1x128xf32> -> vector<1x128xf32>
    %80 = arith.addf %78, %79 : vector<1x128xf32>
    %81 = arith.negf %80 : vector<1x128xf32>
    %82 = math.exp %81 : vector<1x128xf32>
    %cst_33 = arith.constant 1.000000e+00 : f32
    %83 = vector.broadcast %cst_33 : f32 to vector<1x128xf32>
    %84 = arith.addf %83, %82 : vector<1x128xf32>
    %85 = arith.divf %83, %84 : vector<1x128xf32>
    %86 = math.tanh %80 : vector<1x128xf32>
    %87 = vector.extract_strided_slice %85 {offsets = [0, 0], sizes = [1, 32], strides = [1, 1]} : vector<1x128xf32> to vector<1x32xf32>
    %88 = vector.extract_strided_slice %85 {offsets = [0, 32], sizes = [1, 32], strides = [1, 1]} : vector<1x128xf32> to vector<1x32xf32>
    %89 = vector.extract_strided_slice %86 {offsets = [0, 64], sizes = [1, 32], strides = [1, 1]} : vector<1x128xf32> to vector<1x32xf32>
    %90 = vector.extract_strided_slice %85 {offsets = [0, 96], sizes = [1, 32], strides = [1, 1]} : vector<1x128xf32> to vector<1x32xf32>
    %91 = arith.mulf %88, %55 : vector<1x32xf32>
    %92 = arith.mulf %87, %89 : vector<1x32xf32>
    %93 = arith.addf %91, %92 : vector<1x32xf32>
    %94 = math.tanh %93 : vector<1x32xf32>
    %95 = arith.mulf %90, %94 : vector<1x32xf32>
    %c6 = arith.constant 6 : index
    %c0_34 = arith.constant 0 : index
    %96 = vector.load %arg7[%c6, %c0_34] : memref<8x32xf32, #tpu.memory_space<vmem>>, vector<1x32xf32>
    tpu.vector_store %arg7[%c6, %c0_34], %95 {strides = array<i32>} : memref<8x32xf32, #tpu.memory_space<vmem>>, vector<1x32xf32>,
    %97 = vector.extract_strided_slice %13 {offsets = [2, 0], sizes = [1, 128], strides = [1, 1]} : vector<8x128xf32> to vector<1x128xf32>
    %cst_35 = arith.constant dense<0.000000e+00> : vector<1x128xf32>
    %98 = tpu.matmul %76, %6, %cst_35 {dimension_numbers = #tpu.dot_dimension_numbers<[1], [0], [0], [1], [0, 0, 1, 1], [], []>} : vector<1x32xf32>, vector<32x128xf32>, vector<1x128xf32> -> vector<1x128xf32>
    %99 = arith.addf %97, %98 : vector<1x128xf32>
    %100 = arith.negf %99 : vector<1x128xf32>
    %101 = math.exp %100 : vector<1x128xf32>
    %cst_36 = arith.constant 1.000000e+00 : f32
    %102 = vector.broadcast %cst_36 : f32 to vector<1x128xf32>
    %103 = arith.addf %102, %101 : vector<1x128xf32>
    %104 = arith.divf %102, %103 : vector<1x128xf32>
    %105 = math.tanh %99 : vector<1x128xf32>
    %106 = vector.extract_strided_slice %104 {offsets = [0, 0], sizes = [1, 32], strides = [1, 1]} : vector<1x128xf32> to vector<1x32xf32>
    %107 = vector.extract_strided_slice %104 {offsets = [0, 32], sizes = [1, 32], strides = [1, 1]} : vector<1x128xf32> to vector<1x32xf32>
    %108 = vector.extract_strided_slice %105 {offsets = [0, 64], sizes = [1, 32], strides = [1, 1]} : vector<1x128xf32> to vector<1x32xf32>
    %109 = vector.extract_strided_slice %104 {offsets = [0, 96], sizes = [1, 32], strides = [1, 1]} : vector<1x128xf32> to vector<1x32xf32>
    %110 = arith.mulf %107, %74 : vector<1x32xf32>
    %111 = arith.mulf %106, %108 : vector<1x32xf32>
    %112 = arith.addf %110, %111 : vector<1x32xf32>
    %113 = math.tanh %112 : vector<1x32xf32>
    %114 = arith.mulf %109, %113 : vector<1x32xf32>
    %c2 = arith.constant 2 : index
    %c0_37 = arith.constant 0 : index
    %115 = vector.load %arg6[%c2, %c0_37] : memref<8x32xf32, #tpu.memory_space<vmem>>, vector<1x32xf32>
    tpu.vector_store %arg6[%c2, %c0_37], %114 {strides = array<i32>} : memref<8x32xf32, #tpu.memory_space<vmem>>, vector<1x32xf32>,
    %116 = vector.extract_strided_slice %16 {offsets = [5, 0], sizes = [1, 128], strides = [1, 1]} : vector<8x128xf32> to vector<1x128xf32>
    %cst_38 = arith.constant dense<0.000000e+00> : vector<1x128xf32>
    %117 = tpu.matmul %95, %8, %cst_38 {dimension_numbers = #tpu.dot_dimension_numbers<[1], [0], [0], [1], [0, 0, 1, 1], [], []>} : vector<1x32xf32>, vector<32x128xf32>, vector<1x128xf32> -> vector<1x128xf32>
    %118 = arith.addf %116, %117 : vector<1x128xf32>
    %119 = arith.negf %118 : vector<1x128xf32>
    %120 = math.exp %119 : vector<1x128xf32>
    %cst_39 = arith.constant 1.000000e+00 : f32
    %121 = vector.broadcast %cst_39 : f32 to vector<1x128xf32>
    %122 = arith.addf %121, %120 : vector<1x128xf32>
    %123 = arith.divf %121, %122 : vector<1x128xf32>
    %124 = math.tanh %118 : vector<1x128xf32>
    %125 = vector.extract_strided_slice %123 {offsets = [0, 0], sizes = [1, 32], strides = [1, 1]} : vector<1x128xf32> to vector<1x32xf32>
    %126 = vector.extract_strided_slice %123 {offsets = [0, 32], sizes = [1, 32], strides = [1, 1]} : vector<1x128xf32> to vector<1x32xf32>
    %127 = vector.extract_strided_slice %124 {offsets = [0, 64], sizes = [1, 32], strides = [1, 1]} : vector<1x128xf32> to vector<1x32xf32>
    %128 = vector.extract_strided_slice %123 {offsets = [0, 96], sizes = [1, 32], strides = [1, 1]} : vector<1x128xf32> to vector<1x32xf32>
    %129 = arith.mulf %126, %93 : vector<1x32xf32>
    %130 = arith.mulf %125, %127 : vector<1x32xf32>
    %131 = arith.addf %129, %130 : vector<1x32xf32>
    %132 = math.tanh %131 : vector<1x32xf32>
    %133 = arith.mulf %128, %132 : vector<1x32xf32>
    %c5 = arith.constant 5 : index
    %c0_40 = arith.constant 0 : index
    %134 = vector.load %arg7[%c5, %c0_40] : memref<8x32xf32, #tpu.memory_space<vmem>>, vector<1x32xf32>
    tpu.vector_store %arg7[%c5, %c0_40], %133 {strides = array<i32>} : memref<8x32xf32, #tpu.memory_space<vmem>>, vector<1x32xf32>,
    %135 = vector.extract_strided_slice %13 {offsets = [3, 0], sizes = [1, 128], strides = [1, 1]} : vector<8x128xf32> to vector<1x128xf32>
    %cst_41 = arith.constant dense<0.000000e+00> : vector<1x128xf32>
    %136 = tpu.matmul %114, %6, %cst_41 {dimension_numbers = #tpu.dot_dimension_numbers<[1], [0], [0], [1], [0, 0, 1, 1], [], []>} : vector<1x32xf32>, vector<32x128xf32>, vector<1x128xf32> -> vector<1x128xf32>
    %137 = arith.addf %135, %136 : vector<1x128xf32>
    %138 = arith.negf %137 : vector<1x128xf32>
    %139 = math.exp %138 : vector<1x128xf32>
    %cst_42 = arith.constant 1.000000e+00 : f32
    %140 = vector.broadcast %cst_42 : f32 to vector<1x128xf32>
    %141 = arith.addf %140, %139 : vector<1x128xf32>
    %142 = arith.divf %140, %141 : vector<1x128xf32>
    %143 = math.tanh %137 : vector<1x128xf32>
    %144 = vector.extract_strided_slice %142 {offsets = [0, 0], sizes = [1, 32], strides = [1, 1]} : vector<1x128xf32> to vector<1x32xf32>
    %145 = vector.extract_strided_slice %142 {offsets = [0, 32], sizes = [1, 32], strides = [1, 1]} : vector<1x128xf32> to vector<1x32xf32>
    %146 = vector.extract_strided_slice %143 {offsets = [0, 64], sizes = [1, 32], strides = [1, 1]} : vector<1x128xf32> to vector<1x32xf32>
    %147 = vector.extract_strided_slice %142 {offsets = [0, 96], sizes = [1, 32], strides = [1, 1]} : vector<1x128xf32> to vector<1x32xf32>
    %148 = arith.mulf %145, %112 : vector<1x32xf32>
    %149 = arith.mulf %144, %146 : vector<1x32xf32>
    %150 = arith.addf %148, %149 : vector<1x32xf32>
    %151 = math.tanh %150 : vector<1x32xf32>
    %152 = arith.mulf %147, %151 : vector<1x32xf32>
    %c3 = arith.constant 3 : index
    %c0_43 = arith.constant 0 : index
    %153 = vector.load %arg6[%c3, %c0_43] : memref<8x32xf32, #tpu.memory_space<vmem>>, vector<1x32xf32>
    tpu.vector_store %arg6[%c3, %c0_43], %152 {strides = array<i32>} : memref<8x32xf32, #tpu.memory_space<vmem>>, vector<1x32xf32>,
    %154 = vector.extract_strided_slice %16 {offsets = [4, 0], sizes = [1, 128], strides = [1, 1]} : vector<8x128xf32> to vector<1x128xf32>
    %cst_44 = arith.constant dense<0.000000e+00> : vector<1x128xf32>
    %155 = tpu.matmul %133, %8, %cst_44 {dimension_numbers = #tpu.dot_dimension_numbers<[1], [0], [0], [1], [0, 0, 1, 1], [], []>} : vector<1x32xf32>, vector<32x128xf32>, vector<1x128xf32> -> vector<1x128xf32>
    %156 = arith.addf %154, %155 : vector<1x128xf32>
    %157 = arith.negf %156 : vector<1x128xf32>
    %158 = math.exp %157 : vector<1x128xf32>
    %cst_45 = arith.constant 1.000000e+00 : f32
    %159 = vector.broadcast %cst_45 : f32 to vector<1x128xf32>
    %160 = arith.addf %159, %158 : vector<1x128xf32>
    %161 = arith.divf %159, %160 : vector<1x128xf32>
    %162 = math.tanh %156 : vector<1x128xf32>
    %163 = vector.extract_strided_slice %161 {offsets = [0, 0], sizes = [1, 32], strides = [1, 1]} : vector<1x128xf32> to vector<1x32xf32>
    %164 = vector.extract_strided_slice %161 {offsets = [0, 32], sizes = [1, 32], strides = [1, 1]} : vector<1x128xf32> to vector<1x32xf32>
    %165 = vector.extract_strided_slice %162 {offsets = [0, 64], sizes = [1, 32], strides = [1, 1]} : vector<1x128xf32> to vector<1x32xf32>
    %166 = vector.extract_strided_slice %161 {offsets = [0, 96], sizes = [1, 32], strides = [1, 1]} : vector<1x128xf32> to vector<1x32xf32>
    %167 = arith.mulf %164, %131 : vector<1x32xf32>
    %168 = arith.mulf %163, %165 : vector<1x32xf32>
    %169 = arith.addf %167, %168 : vector<1x32xf32>
    %170 = math.tanh %169 : vector<1x32xf32>
    %171 = arith.mulf %166, %170 : vector<1x32xf32>
    %c4 = arith.constant 4 : index
    %c0_46 = arith.constant 0 : index
    %172 = vector.load %arg7[%c4, %c0_46] : memref<8x32xf32, #tpu.memory_space<vmem>>, vector<1x32xf32>
    tpu.vector_store %arg7[%c4, %c0_46], %171 {strides = array<i32>} : memref<8x32xf32, #tpu.memory_space<vmem>>, vector<1x32xf32>,
    %173 = vector.extract_strided_slice %13 {offsets = [4, 0], sizes = [1, 128], strides = [1, 1]} : vector<8x128xf32> to vector<1x128xf32>
    %cst_47 = arith.constant dense<0.000000e+00> : vector<1x128xf32>
    %174 = tpu.matmul %152, %6, %cst_47 {dimension_numbers = #tpu.dot_dimension_numbers<[1], [0], [0], [1], [0, 0, 1, 1], [], []>} : vector<1x32xf32>, vector<32x128xf32>, vector<1x128xf32> -> vector<1x128xf32>
    %175 = arith.addf %173, %174 : vector<1x128xf32>
    %176 = arith.negf %175 : vector<1x128xf32>
    %177 = math.exp %176 : vector<1x128xf32>
    %cst_48 = arith.constant 1.000000e+00 : f32
    %178 = vector.broadcast %cst_48 : f32 to vector<1x128xf32>
    %179 = arith.addf %178, %177 : vector<1x128xf32>
    %180 = arith.divf %178, %179 : vector<1x128xf32>
    %181 = math.tanh %175 : vector<1x128xf32>
    %182 = vector.extract_strided_slice %180 {offsets = [0, 0], sizes = [1, 32], strides = [1, 1]} : vector<1x128xf32> to vector<1x32xf32>
    %183 = vector.extract_strided_slice %180 {offsets = [0, 32], sizes = [1, 32], strides = [1, 1]} : vector<1x128xf32> to vector<1x32xf32>
    %184 = vector.extract_strided_slice %181 {offsets = [0, 64], sizes = [1, 32], strides = [1, 1]} : vector<1x128xf32> to vector<1x32xf32>
    %185 = vector.extract_strided_slice %180 {offsets = [0, 96], sizes = [1, 32], strides = [1, 1]} : vector<1x128xf32> to vector<1x32xf32>
    %186 = arith.mulf %183, %150 : vector<1x32xf32>
    %187 = arith.mulf %182, %184 : vector<1x32xf32>
    %188 = arith.addf %186, %187 : vector<1x32xf32>
    %189 = math.tanh %188 : vector<1x32xf32>
    %190 = arith.mulf %185, %189 : vector<1x32xf32>
    %c4_49 = arith.constant 4 : index
    %c0_50 = arith.constant 0 : index
    %191 = vector.load %arg6[%c4_49, %c0_50] : memref<8x32xf32, #tpu.memory_space<vmem>>, vector<1x32xf32>
    tpu.vector_store %arg6[%c4_49, %c0_50], %190 {strides = array<i32>} : memref<8x32xf32, #tpu.memory_space<vmem>>, vector<1x32xf32>,
    %192 = vector.extract_strided_slice %16 {offsets = [3, 0], sizes = [1, 128], strides = [1, 1]} : vector<8x128xf32> to vector<1x128xf32>
    %cst_51 = arith.constant dense<0.000000e+00> : vector<1x128xf32>
    %193 = tpu.matmul %171, %8, %cst_51 {dimension_numbers = #tpu.dot_dimension_numbers<[1], [0], [0], [1], [0, 0, 1, 1], [], []>} : vector<1x32xf32>, vector<32x128xf32>, vector<1x128xf32> -> vector<1x128xf32>
    %194 = arith.addf %192, %193 : vector<1x128xf32>
    %195 = arith.negf %194 : vector<1x128xf32>
    %196 = math.exp %195 : vector<1x128xf32>
    %cst_52 = arith.constant 1.000000e+00 : f32
    %197 = vector.broadcast %cst_52 : f32 to vector<1x128xf32>
    %198 = arith.addf %197, %196 : vector<1x128xf32>
    %199 = arith.divf %197, %198 : vector<1x128xf32>
    %200 = math.tanh %194 : vector<1x128xf32>
    %201 = vector.extract_strided_slice %199 {offsets = [0, 0], sizes = [1, 32], strides = [1, 1]} : vector<1x128xf32> to vector<1x32xf32>
    %202 = vector.extract_strided_slice %199 {offsets = [0, 32], sizes = [1, 32], strides = [1, 1]} : vector<1x128xf32> to vector<1x32xf32>
    %203 = vector.extract_strided_slice %200 {offsets = [0, 64], sizes = [1, 32], strides = [1, 1]} : vector<1x128xf32> to vector<1x32xf32>
    %204 = vector.extract_strided_slice %199 {offsets = [0, 96], sizes = [1, 32], strides = [1, 1]} : vector<1x128xf32> to vector<1x32xf32>
    %205 = arith.mulf %202, %169 : vector<1x32xf32>
    %206 = arith.mulf %201, %203 : vector<1x32xf32>
    %207 = arith.addf %205, %206 : vector<1x32xf32>
    %208 = math.tanh %207 : vector<1x32xf32>
    %209 = arith.mulf %204, %208 : vector<1x32xf32>
    %c3_53 = arith.constant 3 : index
    %c0_54 = arith.constant 0 : index
    %210 = vector.load %arg7[%c3_53, %c0_54] : memref<8x32xf32, #tpu.memory_space<vmem>>, vector<1x32xf32>
    tpu.vector_store %arg7[%c3_53, %c0_54], %209 {strides = array<i32>} : memref<8x32xf32, #tpu.memory_space<vmem>>, vector<1x32xf32>,
    %211 = vector.extract_strided_slice %13 {offsets = [5, 0], sizes = [1, 128], strides = [1, 1]} : vector<8x128xf32> to vector<1x128xf32>
    %cst_55 = arith.constant dense<0.000000e+00> : vector<1x128xf32>
    %212 = tpu.matmul %190, %6, %cst_55 {dimension_numbers = #tpu.dot_dimension_numbers<[1], [0], [0], [1], [0, 0, 1, 1], [], []>} : vector<1x32xf32>, vector<32x128xf32>, vector<1x128xf32> -> vector<1x128xf32>
    %213 = arith.addf %211, %212 : vector<1x128xf32>
    %214 = arith.negf %213 : vector<1x128xf32>
    %215 = math.exp %214 : vector<1x128xf32>
    %cst_56 = arith.constant 1.000000e+00 : f32
    %216 = vector.broadcast %cst_56 : f32 to vector<1x128xf32>
    %217 = arith.addf %216, %215 : vector<1x128xf32>
    %218 = arith.divf %216, %217 : vector<1x128xf32>
    %219 = math.tanh %213 : vector<1x128xf32>
    %220 = vector.extract_strided_slice %218 {offsets = [0, 0], sizes = [1, 32], strides = [1, 1]} : vector<1x128xf32> to vector<1x32xf32>
    %221 = vector.extract_strided_slice %218 {offsets = [0, 32], sizes = [1, 32], strides = [1, 1]} : vector<1x128xf32> to vector<1x32xf32>
    %222 = vector.extract_strided_slice %219 {offsets = [0, 64], sizes = [1, 32], strides = [1, 1]} : vector<1x128xf32> to vector<1x32xf32>
    %223 = vector.extract_strided_slice %218 {offsets = [0, 96], sizes = [1, 32], strides = [1, 1]} : vector<1x128xf32> to vector<1x32xf32>
    %224 = arith.mulf %221, %188 : vector<1x32xf32>
    %225 = arith.mulf %220, %222 : vector<1x32xf32>
    %226 = arith.addf %224, %225 : vector<1x32xf32>
    %227 = math.tanh %226 : vector<1x32xf32>
    %228 = arith.mulf %223, %227 : vector<1x32xf32>
    %c5_57 = arith.constant 5 : index
    %c0_58 = arith.constant 0 : index
    %229 = vector.load %arg6[%c5_57, %c0_58] : memref<8x32xf32, #tpu.memory_space<vmem>>, vector<1x32xf32>
    tpu.vector_store %arg6[%c5_57, %c0_58], %228 {strides = array<i32>} : memref<8x32xf32, #tpu.memory_space<vmem>>, vector<1x32xf32>,
    %230 = vector.extract_strided_slice %16 {offsets = [2, 0], sizes = [1, 128], strides = [1, 1]} : vector<8x128xf32> to vector<1x128xf32>
    %cst_59 = arith.constant dense<0.000000e+00> : vector<1x128xf32>
    %231 = tpu.matmul %209, %8, %cst_59 {dimension_numbers = #tpu.dot_dimension_numbers<[1], [0], [0], [1], [0, 0, 1, 1], [], []>} : vector<1x32xf32>, vector<32x128xf32>, vector<1x128xf32> -> vector<1x128xf32>
    %232 = arith.addf %230, %231 : vector<1x128xf32>
    %233 = arith.negf %232 : vector<1x128xf32>
    %234 = math.exp %233 : vector<1x128xf32>
    %cst_60 = arith.constant 1.000000e+00 : f32
    %235 = vector.broadcast %cst_60 : f32 to vector<1x128xf32>
    %236 = arith.addf %235, %234 : vector<1x128xf32>
    %237 = arith.divf %235, %236 : vector<1x128xf32>
    %238 = math.tanh %232 : vector<1x128xf32>
    %239 = vector.extract_strided_slice %237 {offsets = [0, 0], sizes = [1, 32], strides = [1, 1]} : vector<1x128xf32> to vector<1x32xf32>
    %240 = vector.extract_strided_slice %237 {offsets = [0, 32], sizes = [1, 32], strides = [1, 1]} : vector<1x128xf32> to vector<1x32xf32>
    %241 = vector.extract_strided_slice %238 {offsets = [0, 64], sizes = [1, 32], strides = [1, 1]} : vector<1x128xf32> to vector<1x32xf32>
    %242 = vector.extract_strided_slice %237 {offsets = [0, 96], sizes = [1, 32], strides = [1, 1]} : vector<1x128xf32> to vector<1x32xf32>
    %243 = arith.mulf %240, %207 : vector<1x32xf32>
    %244 = arith.mulf %239, %241 : vector<1x32xf32>
    %245 = arith.addf %243, %244 : vector<1x32xf32>
    %246 = math.tanh %245 : vector<1x32xf32>
    %247 = arith.mulf %242, %246 : vector<1x32xf32>
    %c2_61 = arith.constant 2 : index
    %c0_62 = arith.constant 0 : index
    %248 = vector.load %arg7[%c2_61, %c0_62] : memref<8x32xf32, #tpu.memory_space<vmem>>, vector<1x32xf32>
    tpu.vector_store %arg7[%c2_61, %c0_62], %247 {strides = array<i32>} : memref<8x32xf32, #tpu.memory_space<vmem>>, vector<1x32xf32>,
    %249 = vector.extract_strided_slice %13 {offsets = [6, 0], sizes = [1, 128], strides = [1, 1]} : vector<8x128xf32> to vector<1x128xf32>
    %cst_63 = arith.constant dense<0.000000e+00> : vector<1x128xf32>
    %250 = tpu.matmul %228, %6, %cst_63 {dimension_numbers = #tpu.dot_dimension_numbers<[1], [0], [0], [1], [0, 0, 1, 1], [], []>} : vector<1x32xf32>, vector<32x128xf32>, vector<1x128xf32> -> vector<1x128xf32>
    %251 = arith.addf %249, %250 : vector<1x128xf32>
    %252 = arith.negf %251 : vector<1x128xf32>
    %253 = math.exp %252 : vector<1x128xf32>
    %cst_64 = arith.constant 1.000000e+00 : f32
    %254 = vector.broadcast %cst_64 : f32 to vector<1x128xf32>
    %255 = arith.addf %254, %253 : vector<1x128xf32>
    %256 = arith.divf %254, %255 : vector<1x128xf32>
    %257 = math.tanh %251 : vector<1x128xf32>
    %258 = vector.extract_strided_slice %256 {offsets = [0, 0], sizes = [1, 32], strides = [1, 1]} : vector<1x128xf32> to vector<1x32xf32>
    %259 = vector.extract_strided_slice %256 {offsets = [0, 32], sizes = [1, 32], strides = [1, 1]} : vector<1x128xf32> to vector<1x32xf32>
    %260 = vector.extract_strided_slice %257 {offsets = [0, 64], sizes = [1, 32], strides = [1, 1]} : vector<1x128xf32> to vector<1x32xf32>
    %261 = vector.extract_strided_slice %256 {offsets = [0, 96], sizes = [1, 32], strides = [1, 1]} : vector<1x128xf32> to vector<1x32xf32>
    %262 = arith.mulf %259, %226 : vector<1x32xf32>
    %263 = arith.mulf %258, %260 : vector<1x32xf32>
    %264 = arith.addf %262, %263 : vector<1x32xf32>
    %265 = math.tanh %264 : vector<1x32xf32>
    %266 = arith.mulf %261, %265 : vector<1x32xf32>
    %c6_65 = arith.constant 6 : index
    %c0_66 = arith.constant 0 : index
    %267 = vector.load %arg6[%c6_65, %c0_66] : memref<8x32xf32, #tpu.memory_space<vmem>>, vector<1x32xf32>
    tpu.vector_store %arg6[%c6_65, %c0_66], %266 {strides = array<i32>} : memref<8x32xf32, #tpu.memory_space<vmem>>, vector<1x32xf32>,
    %268 = vector.extract_strided_slice %16 {offsets = [1, 0], sizes = [1, 128], strides = [1, 1]} : vector<8x128xf32> to vector<1x128xf32>
    %cst_67 = arith.constant dense<0.000000e+00> : vector<1x128xf32>
    %269 = tpu.matmul %247, %8, %cst_67 {dimension_numbers = #tpu.dot_dimension_numbers<[1], [0], [0], [1], [0, 0, 1, 1], [], []>} : vector<1x32xf32>, vector<32x128xf32>, vector<1x128xf32> -> vector<1x128xf32>
    %270 = arith.addf %268, %269 : vector<1x128xf32>
    %271 = arith.negf %270 : vector<1x128xf32>
    %272 = math.exp %271 : vector<1x128xf32>
    %cst_68 = arith.constant 1.000000e+00 : f32
    %273 = vector.broadcast %cst_68 : f32 to vector<1x128xf32>
    %274 = arith.addf %273, %272 : vector<1x128xf32>
    %275 = arith.divf %273, %274 : vector<1x128xf32>
    %276 = math.tanh %270 : vector<1x128xf32>
    %277 = vector.extract_strided_slice %275 {offsets = [0, 0], sizes = [1, 32], strides = [1, 1]} : vector<1x128xf32> to vector<1x32xf32>
    %278 = vector.extract_strided_slice %275 {offsets = [0, 32], sizes = [1, 32], strides = [1, 1]} : vector<1x128xf32> to vector<1x32xf32>
    %279 = vector.extract_strided_slice %276 {offsets = [0, 64], sizes = [1, 32], strides = [1, 1]} : vector<1x128xf32> to vector<1x32xf32>
    %280 = vector.extract_strided_slice %275 {offsets = [0, 96], sizes = [1, 32], strides = [1, 1]} : vector<1x128xf32> to vector<1x32xf32>
    %281 = arith.mulf %278, %245 : vector<1x32xf32>
    %282 = arith.mulf %277, %279 : vector<1x32xf32>
    %283 = arith.addf %281, %282 : vector<1x32xf32>
    %284 = math.tanh %283 : vector<1x32xf32>
    %285 = arith.mulf %280, %284 : vector<1x32xf32>
    %c1_69 = arith.constant 1 : index
    %c0_70 = arith.constant 0 : index
    %286 = vector.load %arg7[%c1_69, %c0_70] : memref<8x32xf32, #tpu.memory_space<vmem>>, vector<1x32xf32>
    tpu.vector_store %arg7[%c1_69, %c0_70], %285 {strides = array<i32>} : memref<8x32xf32, #tpu.memory_space<vmem>>, vector<1x32xf32>,
    %287 = vector.extract_strided_slice %13 {offsets = [7, 0], sizes = [1, 128], strides = [1, 1]} : vector<8x128xf32> to vector<1x128xf32>
    %cst_71 = arith.constant dense<0.000000e+00> : vector<1x128xf32>
    %288 = tpu.matmul %266, %6, %cst_71 {dimension_numbers = #tpu.dot_dimension_numbers<[1], [0], [0], [1], [0, 0, 1, 1], [], []>} : vector<1x32xf32>, vector<32x128xf32>, vector<1x128xf32> -> vector<1x128xf32>
    %289 = arith.addf %287, %288 : vector<1x128xf32>
    %290 = arith.negf %289 : vector<1x128xf32>
    %291 = math.exp %290 : vector<1x128xf32>
    %cst_72 = arith.constant 1.000000e+00 : f32
    %292 = vector.broadcast %cst_72 : f32 to vector<1x128xf32>
    %293 = arith.addf %292, %291 : vector<1x128xf32>
    %294 = arith.divf %292, %293 : vector<1x128xf32>
    %295 = math.tanh %289 : vector<1x128xf32>
    %296 = vector.extract_strided_slice %294 {offsets = [0, 0], sizes = [1, 32], strides = [1, 1]} : vector<1x128xf32> to vector<1x32xf32>
    %297 = vector.extract_strided_slice %294 {offsets = [0, 32], sizes = [1, 32], strides = [1, 1]} : vector<1x128xf32> to vector<1x32xf32>
    %298 = vector.extract_strided_slice %295 {offsets = [0, 64], sizes = [1, 32], strides = [1, 1]} : vector<1x128xf32> to vector<1x32xf32>
    %299 = vector.extract_strided_slice %294 {offsets = [0, 96], sizes = [1, 32], strides = [1, 1]} : vector<1x128xf32> to vector<1x32xf32>
    %300 = arith.mulf %297, %264 : vector<1x32xf32>
    %301 = arith.mulf %296, %298 : vector<1x32xf32>
    %302 = arith.addf %300, %301 : vector<1x32xf32>
    %303 = math.tanh %302 : vector<1x32xf32>
    %304 = arith.mulf %299, %303 : vector<1x32xf32>
    %c7_73 = arith.constant 7 : index
    %c0_74 = arith.constant 0 : index
    %305 = vector.load %arg6[%c7_73, %c0_74] : memref<8x32xf32, #tpu.memory_space<vmem>>, vector<1x32xf32>
    tpu.vector_store %arg6[%c7_73, %c0_74], %304 {strides = array<i32>} : memref<8x32xf32, #tpu.memory_space<vmem>>, vector<1x32xf32>,
    %306 = vector.extract_strided_slice %16 {offsets = [0, 0], sizes = [1, 128], strides = [1, 1]} : vector<8x128xf32> to vector<1x128xf32>
    %cst_75 = arith.constant dense<0.000000e+00> : vector<1x128xf32>
    %307 = tpu.matmul %285, %8, %cst_75 {dimension_numbers = #tpu.dot_dimension_numbers<[1], [0], [0], [1], [0, 0, 1, 1], [], []>} : vector<1x32xf32>, vector<32x128xf32>, vector<1x128xf32> -> vector<1x128xf32>
    %308 = arith.addf %306, %307 : vector<1x128xf32>
    %309 = arith.negf %308 : vector<1x128xf32>
    %310 = math.exp %309 : vector<1x128xf32>
    %cst_76 = arith.constant 1.000000e+00 : f32
    %311 = vector.broadcast %cst_76 : f32 to vector<1x128xf32>
    %312 = arith.addf %311, %310 : vector<1x128xf32>
    %313 = arith.divf %311, %312 : vector<1x128xf32>
    %314 = math.tanh %308 : vector<1x128xf32>
    %315 = vector.extract_strided_slice %313 {offsets = [0, 0], sizes = [1, 32], strides = [1, 1]} : vector<1x128xf32> to vector<1x32xf32>
    %316 = vector.extract_strided_slice %313 {offsets = [0, 32], sizes = [1, 32], strides = [1, 1]} : vector<1x128xf32> to vector<1x32xf32>
    %317 = vector.extract_strided_slice %314 {offsets = [0, 64], sizes = [1, 32], strides = [1, 1]} : vector<1x128xf32> to vector<1x32xf32>
    %318 = vector.extract_strided_slice %313 {offsets = [0, 96], sizes = [1, 32], strides = [1, 1]} : vector<1x128xf32> to vector<1x32xf32>
    %319 = arith.mulf %316, %283 : vector<1x32xf32>
    %320 = arith.mulf %315, %317 : vector<1x32xf32>
    %321 = arith.addf %319, %320 : vector<1x32xf32>
    %322 = math.tanh %321 : vector<1x32xf32>
    %323 = arith.mulf %318, %322 : vector<1x32xf32>
    %c0_77 = arith.constant 0 : index
    %c0_78 = arith.constant 0 : index
    %324 = vector.load %arg7[%c0_77, %c0_78] : memref<8x32xf32, #tpu.memory_space<vmem>>, vector<1x32xf32>
    tpu.vector_store %arg7[%c0_77, %c0_78], %323 {strides = array<i32>} : memref<8x32xf32, #tpu.memory_space<vmem>>, vector<1x32xf32>,
    %c2_79 = arith.constant 2 : index
    %c0_80 = arith.constant 0 : index
    %c0_81 = arith.constant 0 : index
    %325 = vector.load %arg2[%c2_79, %c0_80, %c0_81] : memref<6x64x128xf32, #tpu.memory_space<vmem>>, vector<1x64x128xf32>
    %326 = vector.shape_cast %325 : vector<1x64x128xf32> to vector<64x128xf32>
    %c3_82 = arith.constant 3 : index
    %c0_83 = arith.constant 0 : index
    %c0_84 = arith.constant 0 : index
    %327 = vector.load %arg2[%c3_82, %c0_83, %c0_84] : memref<6x64x128xf32, #tpu.memory_space<vmem>>, vector<1x64x128xf32>
    %328 = vector.shape_cast %327 : vector<1x64x128xf32> to vector<64x128xf32>
    %c2_85 = arith.constant 2 : index
    %c0_86 = arith.constant 0 : index
    %c0_87 = arith.constant 0 : index
    %329 = vector.load %arg3[%c2_85, %c0_86, %c0_87] : memref<6x32x128xf32, #tpu.memory_space<vmem>>, vector<1x32x128xf32>
    %330 = vector.shape_cast %329 : vector<1x32x128xf32> to vector<32x128xf32>
    %c3_88 = arith.constant 3 : index
    %c0_89 = arith.constant 0 : index
    %c0_90 = arith.constant 0 : index
    %331 = vector.load %arg3[%c3_88, %c0_89, %c0_90] : memref<6x32x128xf32, #tpu.memory_space<vmem>>, vector<1x32x128xf32>
    %332 = vector.shape_cast %331 : vector<1x32x128xf32> to vector<32x128xf32>
    %c2_91 = arith.constant 2 : index
    %c0_92 = arith.constant 0 : index
    %333 = vector.load %arg4[%c2_91, %c0_92] : memref<6x128xf32, #tpu.memory_space<vmem>>, vector<1x128xf32>
    %c3_93 = arith.constant 3 : index
    %c0_94 = arith.constant 0 : index
    %334 = vector.load %arg4[%c3_93, %c0_94] : memref<6x128xf32, #tpu.memory_space<vmem>>, vector<1x128xf32>
    %c0_95 = arith.constant 0 : index
    %c0_96 = arith.constant 0 : index
    %335 = vector.load %arg6[%c0_95, %c0_96] : memref<8x32xf32, #tpu.memory_space<vmem>>, vector<8x32xf32>
    %c0_97 = arith.constant 0 : index
    %c0_98 = arith.constant 0 : index
    %336 = vector.load %arg7[%c0_97, %c0_98] : memref<8x32xf32, #tpu.memory_space<vmem>>, vector<8x32xf32>
    %337 = vector.extract_strided_slice %326 {offsets = [0, 0], sizes = [32, 128], strides = [1, 1]} : vector<64x128xf32> to vector<32x128xf32>
    %cst_99 = arith.constant dense<0.000000e+00> : vector<8x128xf32>
    %338 = tpu.matmul %335, %337, %cst_99 {dimension_numbers = #tpu.dot_dimension_numbers<[1], [0], [0], [1], [0, 0, 1, 1], [], []>} : vector<8x32xf32>, vector<32x128xf32>, vector<8x128xf32> -> vector<8x128xf32>
    %339 = vector.extract_strided_slice %326 {offsets = [32, 0], sizes = [32, 128], strides = [1, 1]} : vector<64x128xf32> to vector<32x128xf32>
    %cst_100 = arith.constant dense<0.000000e+00> : vector<8x128xf32>
    %340 = tpu.matmul %336, %339, %cst_100 {dimension_numbers = #tpu.dot_dimension_numbers<[1], [0], [0], [1], [0, 0, 1, 1], [], []>} : vector<8x32xf32>, vector<32x128xf32>, vector<8x128xf32> -> vector<8x128xf32>
    %341 = arith.addf %338, %340 : vector<8x128xf32>
    %342 = vector.broadcast %333 : vector<1x128xf32> to vector<8x128xf32>
    %343 = arith.addf %341, %342 : vector<8x128xf32>
    %344 = vector.extract_strided_slice %328 {offsets = [0, 0], sizes = [32, 128], strides = [1, 1]} : vector<64x128xf32> to vector<32x128xf32>
    %cst_101 = arith.constant dense<0.000000e+00> : vector<8x128xf32>
    %345 = tpu.matmul %335, %344, %cst_101 {dimension_numbers = #tpu.dot_dimension_numbers<[1], [0], [0], [1], [0, 0, 1, 1], [], []>} : vector<8x32xf32>, vector<32x128xf32>, vector<8x128xf32> -> vector<8x128xf32>
    %346 = vector.extract_strided_slice %328 {offsets = [32, 0], sizes = [32, 128], strides = [1, 1]} : vector<64x128xf32> to vector<32x128xf32>
    %cst_102 = arith.constant dense<0.000000e+00> : vector<8x128xf32>
    %347 = tpu.matmul %336, %346, %cst_102 {dimension_numbers = #tpu.dot_dimension_numbers<[1], [0], [0], [1], [0, 0, 1, 1], [], []>} : vector<8x32xf32>, vector<32x128xf32>, vector<8x128xf32> -> vector<8x128xf32>
    %348 = arith.addf %345, %347 : vector<8x128xf32>
    %349 = vector.broadcast %334 : vector<1x128xf32> to vector<8x128xf32>
    %350 = arith.addf %348, %349 : vector<8x128xf32>
    %cst_103 = arith.constant 0.000000e+00 : f32
    %351 = vector.broadcast %cst_103 : f32 to vector<1x32xf32>
    %cst_104 = arith.constant 0.000000e+00 : f32
    %352 = vector.broadcast %cst_104 : f32 to vector<1x32xf32>
    %cst_105 = arith.constant 0.000000e+00 : f32
    %353 = vector.broadcast %cst_105 : f32 to vector<1x32xf32>
    %cst_106 = arith.constant 0.000000e+00 : f32
    %354 = vector.broadcast %cst_106 : f32 to vector<1x32xf32>
    %355 = vector.extract_strided_slice %343 {offsets = [0, 0], sizes = [1, 128], strides = [1, 1]} : vector<8x128xf32> to vector<1x128xf32>
    %cst_107 = arith.constant dense<0.000000e+00> : vector<1x128xf32>
    %356 = tpu.matmul %351, %330, %cst_107 {dimension_numbers = #tpu.dot_dimension_numbers<[1], [0], [0], [1], [0, 0, 1, 1], [], []>} : vector<1x32xf32>, vector<32x128xf32>, vector<1x128xf32> -> vector<1x128xf32>
    %357 = arith.addf %355, %356 : vector<1x128xf32>
    %358 = arith.negf %357 : vector<1x128xf32>
    %359 = math.exp %358 : vector<1x128xf32>
    %cst_108 = arith.constant 1.000000e+00 : f32
    %360 = vector.broadcast %cst_108 : f32 to vector<1x128xf32>
    %361 = arith.addf %360, %359 : vector<1x128xf32>
    %362 = arith.divf %360, %361 : vector<1x128xf32>
    %363 = math.tanh %357 : vector<1x128xf32>
    %364 = vector.extract_strided_slice %362 {offsets = [0, 0], sizes = [1, 32], strides = [1, 1]} : vector<1x128xf32> to vector<1x32xf32>
    %365 = vector.extract_strided_slice %362 {offsets = [0, 32], sizes = [1, 32], strides = [1, 1]} : vector<1x128xf32> to vector<1x32xf32>
    %366 = vector.extract_strided_slice %363 {offsets = [0, 64], sizes = [1, 32], strides = [1, 1]} : vector<1x128xf32> to vector<1x32xf32>
    %367 = vector.extract_strided_slice %362 {offsets = [0, 96], sizes = [1, 32], strides = [1, 1]} : vector<1x128xf32> to vector<1x32xf32>
    %368 = arith.mulf %365, %352 : vector<1x32xf32>
    %369 = arith.mulf %364, %366 : vector<1x32xf32>
    %370 = arith.addf %368, %369 : vector<1x32xf32>
    %371 = math.tanh %370 : vector<1x32xf32>
    %372 = arith.mulf %367, %371 : vector<1x32xf32>
    %c0_109 = arith.constant 0 : index
    %c0_110 = arith.constant 0 : index
    %373 = vector.load %arg6[%c0_109, %c0_110] : memref<8x32xf32, #tpu.memory_space<vmem>>, vector<1x32xf32>
    tpu.vector_store %arg6[%c0_109, %c0_110], %372 {strides = array<i32>} : memref<8x32xf32, #tpu.memory_space<vmem>>, vector<1x32xf32>,
    %374 = vector.extract_strided_slice %350 {offsets = [7, 0], sizes = [1, 128], strides = [1, 1]} : vector<8x128xf32> to vector<1x128xf32>
    %cst_111 = arith.constant dense<0.000000e+00> : vector<1x128xf32>
    %375 = tpu.matmul %353, %332, %cst_111 {dimension_numbers = #tpu.dot_dimension_numbers<[1], [0], [0], [1], [0, 0, 1, 1], [], []>} : vector<1x32xf32>, vector<32x128xf32>, vector<1x128xf32> -> vector<1x128xf32>
    %376 = arith.addf %374, %375 : vector<1x128xf32>
    %377 = arith.negf %376 : vector<1x128xf32>
    %378 = math.exp %377 : vector<1x128xf32>
    %cst_112 = arith.constant 1.000000e+00 : f32
    %379 = vector.broadcast %cst_112 : f32 to vector<1x128xf32>
    %380 = arith.addf %379, %378 : vector<1x128xf32>
    %381 = arith.divf %379, %380 : vector<1x128xf32>
    %382 = math.tanh %376 : vector<1x128xf32>
    %383 = vector.extract_strided_slice %381 {offsets = [0, 0], sizes = [1, 32], strides = [1, 1]} : vector<1x128xf32> to vector<1x32xf32>
    %384 = vector.extract_strided_slice %381 {offsets = [0, 32], sizes = [1, 32], strides = [1, 1]} : vector<1x128xf32> to vector<1x32xf32>
    %385 = vector.extract_strided_slice %382 {offsets = [0, 64], sizes = [1, 32], strides = [1, 1]} : vector<1x128xf32> to vector<1x32xf32>
    %386 = vector.extract_strided_slice %381 {offsets = [0, 96], sizes = [1, 32], strides = [1, 1]} : vector<1x128xf32> to vector<1x32xf32>
    %387 = arith.mulf %384, %354 : vector<1x32xf32>
    %388 = arith.mulf %383, %385 : vector<1x32xf32>
    %389 = arith.addf %387, %388 : vector<1x32xf32>
    %390 = math.tanh %389 : vector<1x32xf32>
    %391 = arith.mulf %386, %390 : vector<1x32xf32>
    %c7_113 = arith.constant 7 : index
    %c0_114 = arith.constant 0 : index
    %392 = vector.load %arg7[%c7_113, %c0_114] : memref<8x32xf32, #tpu.memory_space<vmem>>, vector<1x32xf32>
    tpu.vector_store %arg7[%c7_113, %c0_114], %391 {strides = array<i32>} : memref<8x32xf32, #tpu.memory_space<vmem>>, vector<1x32xf32>,
    %393 = vector.extract_strided_slice %343 {offsets = [1, 0], sizes = [1, 128], strides = [1, 1]} : vector<8x128xf32> to vector<1x128xf32>
    %cst_115 = arith.constant dense<0.000000e+00> : vector<1x128xf32>
    %394 = tpu.matmul %372, %330, %cst_115 {dimension_numbers = #tpu.dot_dimension_numbers<[1], [0], [0], [1], [0, 0, 1, 1], [], []>} : vector<1x32xf32>, vector<32x128xf32>, vector<1x128xf32> -> vector<1x128xf32>
    %395 = arith.addf %393, %394 : vector<1x128xf32>
    %396 = arith.negf %395 : vector<1x128xf32>
    %397 = math.exp %396 : vector<1x128xf32>
    %cst_116 = arith.constant 1.000000e+00 : f32
    %398 = vector.broadcast %cst_116 : f32 to vector<1x128xf32>
    %399 = arith.addf %398, %397 : vector<1x128xf32>
    %400 = arith.divf %398, %399 : vector<1x128xf32>
    %401 = math.tanh %395 : vector<1x128xf32>
    %402 = vector.extract_strided_slice %400 {offsets = [0, 0], sizes = [1, 32], strides = [1, 1]} : vector<1x128xf32> to vector<1x32xf32>
    %403 = vector.extract_strided_slice %400 {offsets = [0, 32], sizes = [1, 32], strides = [1, 1]} : vector<1x128xf32> to vector<1x32xf32>
    %404 = vector.extract_strided_slice %401 {offsets = [0, 64], sizes = [1, 32], strides = [1, 1]} : vector<1x128xf32> to vector<1x32xf32>
    %405 = vector.extract_strided_slice %400 {offsets = [0, 96], sizes = [1, 32], strides = [1, 1]} : vector<1x128xf32> to vector<1x32xf32>
    %406 = arith.mulf %403, %370 : vector<1x32xf32>
    %407 = arith.mulf %402, %404 : vector<1x32xf32>
    %408 = arith.addf %406, %407 : vector<1x32xf32>
    %409 = math.tanh %408 : vector<1x32xf32>
    %410 = arith.mulf %405, %409 : vector<1x32xf32>
    %c1_117 = arith.constant 1 : index
    %c0_118 = arith.constant 0 : index
    %411 = vector.load %arg6[%c1_117, %c0_118] : memref<8x32xf32, #tpu.memory_space<vmem>>, vector<1x32xf32>
    tpu.vector_store %arg6[%c1_117, %c0_118], %410 {strides = array<i32>} : memref<8x32xf32, #tpu.memory_space<vmem>>, vector<1x32xf32>,
    %412 = vector.extract_strided_slice %350 {offsets = [6, 0], sizes = [1, 128], strides = [1, 1]} : vector<8x128xf32> to vector<1x128xf32>
    %cst_119 = arith.constant dense<0.000000e+00> : vector<1x128xf32>
    %413 = tpu.matmul %391, %332, %cst_119 {dimension_numbers = #tpu.dot_dimension_numbers<[1], [0], [0], [1], [0, 0, 1, 1], [], []>} : vector<1x32xf32>, vector<32x128xf32>, vector<1x128xf32> -> vector<1x128xf32>
    %414 = arith.addf %412, %413 : vector<1x128xf32>
    %415 = arith.negf %414 : vector<1x128xf32>
    %416 = math.exp %415 : vector<1x128xf32>
    %cst_120 = arith.constant 1.000000e+00 : f32
    %417 = vector.broadcast %cst_120 : f32 to vector<1x128xf32>
    %418 = arith.addf %417, %416 : vector<1x128xf32>
    %419 = arith.divf %417, %418 : vector<1x128xf32>
    %420 = math.tanh %414 : vector<1x128xf32>
    %421 = vector.extract_strided_slice %419 {offsets = [0, 0], sizes = [1, 32], strides = [1, 1]} : vector<1x128xf32> to vector<1x32xf32>
    %422 = vector.extract_strided_slice %419 {offsets = [0, 32], sizes = [1, 32], strides = [1, 1]} : vector<1x128xf32> to vector<1x32xf32>
    %423 = vector.extract_strided_slice %420 {offsets = [0, 64], sizes = [1, 32], strides = [1, 1]} : vector<1x128xf32> to vector<1x32xf32>
    %424 = vector.extract_strided_slice %419 {offsets = [0, 96], sizes = [1, 32], strides = [1, 1]} : vector<1x128xf32> to vector<1x32xf32>
    %425 = arith.mulf %422, %389 : vector<1x32xf32>
    %426 = arith.mulf %421, %423 : vector<1x32xf32>
    %427 = arith.addf %425, %426 : vector<1x32xf32>
    %428 = math.tanh %427 : vector<1x32xf32>
    %429 = arith.mulf %424, %428 : vector<1x32xf32>
    %c6_121 = arith.constant 6 : index
    %c0_122 = arith.constant 0 : index
    %430 = vector.load %arg7[%c6_121, %c0_122] : memref<8x32xf32, #tpu.memory_space<vmem>>, vector<1x32xf32>
    tpu.vector_store %arg7[%c6_121, %c0_122], %429 {strides = array<i32>} : memref<8x32xf32, #tpu.memory_space<vmem>>, vector<1x32xf32>,
    %431 = vector.extract_strided_slice %343 {offsets = [2, 0], sizes = [1, 128], strides = [1, 1]} : vector<8x128xf32> to vector<1x128xf32>
    %cst_123 = arith.constant dense<0.000000e+00> : vector<1x128xf32>
    %432 = tpu.matmul %410, %330, %cst_123 {dimension_numbers = #tpu.dot_dimension_numbers<[1], [0], [0], [1], [0, 0, 1, 1], [], []>} : vector<1x32xf32>, vector<32x128xf32>, vector<1x128xf32> -> vector<1x128xf32>
    %433 = arith.addf %431, %432 : vector<1x128xf32>
    %434 = arith.negf %433 : vector<1x128xf32>
    %435 = math.exp %434 : vector<1x128xf32>
    %cst_124 = arith.constant 1.000000e+00 : f32
    %436 = vector.broadcast %cst_124 : f32 to vector<1x128xf32>
    %437 = arith.addf %436, %435 : vector<1x128xf32>
    %438 = arith.divf %436, %437 : vector<1x128xf32>
    %439 = math.tanh %433 : vector<1x128xf32>
    %440 = vector.extract_strided_slice %438 {offsets = [0, 0], sizes = [1, 32], strides = [1, 1]} : vector<1x128xf32> to vector<1x32xf32>
    %441 = vector.extract_strided_slice %438 {offsets = [0, 32], sizes = [1, 32], strides = [1, 1]} : vector<1x128xf32> to vector<1x32xf32>
    %442 = vector.extract_strided_slice %439 {offsets = [0, 64], sizes = [1, 32], strides = [1, 1]} : vector<1x128xf32> to vector<1x32xf32>
    %443 = vector.extract_strided_slice %438 {offsets = [0, 96], sizes = [1, 32], strides = [1, 1]} : vector<1x128xf32> to vector<1x32xf32>
    %444 = arith.mulf %441, %408 : vector<1x32xf32>
    %445 = arith.mulf %440, %442 : vector<1x32xf32>
    %446 = arith.addf %444, %445 : vector<1x32xf32>
    %447 = math.tanh %446 : vector<1x32xf32>
    %448 = arith.mulf %443, %447 : vector<1x32xf32>
    %c2_125 = arith.constant 2 : index
    %c0_126 = arith.constant 0 : index
    %449 = vector.load %arg6[%c2_125, %c0_126] : memref<8x32xf32, #tpu.memory_space<vmem>>, vector<1x32xf32>
    tpu.vector_store %arg6[%c2_125, %c0_126], %448 {strides = array<i32>} : memref<8x32xf32, #tpu.memory_space<vmem>>, vector<1x32xf32>,
    %450 = vector.extract_strided_slice %350 {offsets = [5, 0], sizes = [1, 128], strides = [1, 1]} : vector<8x128xf32> to vector<1x128xf32>
    %cst_127 = arith.constant dense<0.000000e+00> : vector<1x128xf32>
    %451 = tpu.matmul %429, %332, %cst_127 {dimension_numbers = #tpu.dot_dimension_numbers<[1], [0], [0], [1], [0, 0, 1, 1], [], []>} : vector<1x32xf32>, vector<32x128xf32>, vector<1x128xf32> -> vector<1x128xf32>
    %452 = arith.addf %450, %451 : vector<1x128xf32>
    %453 = arith.negf %452 : vector<1x128xf32>
    %454 = math.exp %453 : vector<1x128xf32>
    %cst_128 = arith.constant 1.000000e+00 : f32
    %455 = vector.broadcast %cst_128 : f32 to vector<1x128xf32>
    %456 = arith.addf %455, %454 : vector<1x128xf32>
    %457 = arith.divf %455, %456 : vector<1x128xf32>
    %458 = math.tanh %452 : vector<1x128xf32>
    %459 = vector.extract_strided_slice %457 {offsets = [0, 0], sizes = [1, 32], strides = [1, 1]} : vector<1x128xf32> to vector<1x32xf32>
    %460 = vector.extract_strided_slice %457 {offsets = [0, 32], sizes = [1, 32], strides = [1, 1]} : vector<1x128xf32> to vector<1x32xf32>
    %461 = vector.extract_strided_slice %458 {offsets = [0, 64], sizes = [1, 32], strides = [1, 1]} : vector<1x128xf32> to vector<1x32xf32>
    %462 = vector.extract_strided_slice %457 {offsets = [0, 96], sizes = [1, 32], strides = [1, 1]} : vector<1x128xf32> to vector<1x32xf32>
    %463 = arith.mulf %460, %427 : vector<1x32xf32>
    %464 = arith.mulf %459, %461 : vector<1x32xf32>
    %465 = arith.addf %463, %464 : vector<1x32xf32>
    %466 = math.tanh %465 : vector<1x32xf32>
    %467 = arith.mulf %462, %466 : vector<1x32xf32>
    %c5_129 = arith.constant 5 : index
    %c0_130 = arith.constant 0 : index
    %468 = vector.load %arg7[%c5_129, %c0_130] : memref<8x32xf32, #tpu.memory_space<vmem>>, vector<1x32xf32>
    tpu.vector_store %arg7[%c5_129, %c0_130], %467 {strides = array<i32>} : memref<8x32xf32, #tpu.memory_space<vmem>>, vector<1x32xf32>,
    %469 = vector.extract_strided_slice %343 {offsets = [3, 0], sizes = [1, 128], strides = [1, 1]} : vector<8x128xf32> to vector<1x128xf32>
    %cst_131 = arith.constant dense<0.000000e+00> : vector<1x128xf32>
    %470 = tpu.matmul %448, %330, %cst_131 {dimension_numbers = #tpu.dot_dimension_numbers<[1], [0], [0], [1], [0, 0, 1, 1], [], []>} : vector<1x32xf32>, vector<32x128xf32>, vector<1x128xf32> -> vector<1x128xf32>
    %471 = arith.addf %469, %470 : vector<1x128xf32>
    %472 = arith.negf %471 : vector<1x128xf32>
    %473 = math.exp %472 : vector<1x128xf32>
    %cst_132 = arith.constant 1.000000e+00 : f32
    %474 = vector.broadcast %cst_132 : f32 to vector<1x128xf32>
    %475 = arith.addf %474, %473 : vector<1x128xf32>
    %476 = arith.divf %474, %475 : vector<1x128xf32>
    %477 = math.tanh %471 : vector<1x128xf32>
    %478 = vector.extract_strided_slice %476 {offsets = [0, 0], sizes = [1, 32], strides = [1, 1]} : vector<1x128xf32> to vector<1x32xf32>
    %479 = vector.extract_strided_slice %476 {offsets = [0, 32], sizes = [1, 32], strides = [1, 1]} : vector<1x128xf32> to vector<1x32xf32>
    %480 = vector.extract_strided_slice %477 {offsets = [0, 64], sizes = [1, 32], strides = [1, 1]} : vector<1x128xf32> to vector<1x32xf32>
    %481 = vector.extract_strided_slice %476 {offsets = [0, 96], sizes = [1, 32], strides = [1, 1]} : vector<1x128xf32> to vector<1x32xf32>
    %482 = arith.mulf %479, %446 : vector<1x32xf32>
    %483 = arith.mulf %478, %480 : vector<1x32xf32>
    %484 = arith.addf %482, %483 : vector<1x32xf32>
    %485 = math.tanh %484 : vector<1x32xf32>
    %486 = arith.mulf %481, %485 : vector<1x32xf32>
    %c3_133 = arith.constant 3 : index
    %c0_134 = arith.constant 0 : index
    %487 = vector.load %arg6[%c3_133, %c0_134] : memref<8x32xf32, #tpu.memory_space<vmem>>, vector<1x32xf32>
    tpu.vector_store %arg6[%c3_133, %c0_134], %486 {strides = array<i32>} : memref<8x32xf32, #tpu.memory_space<vmem>>, vector<1x32xf32>,
    %488 = vector.extract_strided_slice %350 {offsets = [4, 0], sizes = [1, 128], strides = [1, 1]} : vector<8x128xf32> to vector<1x128xf32>
    %cst_135 = arith.constant dense<0.000000e+00> : vector<1x128xf32>
    %489 = tpu.matmul %467, %332, %cst_135 {dimension_numbers = #tpu.dot_dimension_numbers<[1], [0], [0], [1], [0, 0, 1, 1], [], []>} : vector<1x32xf32>, vector<32x128xf32>, vector<1x128xf32> -> vector<1x128xf32>
    %490 = arith.addf %488, %489 : vector<1x128xf32>
    %491 = arith.negf %490 : vector<1x128xf32>
    %492 = math.exp %491 : vector<1x128xf32>
    %cst_136 = arith.constant 1.000000e+00 : f32
    %493 = vector.broadcast %cst_136 : f32 to vector<1x128xf32>
    %494 = arith.addf %493, %492 : vector<1x128xf32>
    %495 = arith.divf %493, %494 : vector<1x128xf32>
    %496 = math.tanh %490 : vector<1x128xf32>
    %497 = vector.extract_strided_slice %495 {offsets = [0, 0], sizes = [1, 32], strides = [1, 1]} : vector<1x128xf32> to vector<1x32xf32>
    %498 = vector.extract_strided_slice %495 {offsets = [0, 32], sizes = [1, 32], strides = [1, 1]} : vector<1x128xf32> to vector<1x32xf32>
    %499 = vector.extract_strided_slice %496 {offsets = [0, 64], sizes = [1, 32], strides = [1, 1]} : vector<1x128xf32> to vector<1x32xf32>
    %500 = vector.extract_strided_slice %495 {offsets = [0, 96], sizes = [1, 32], strides = [1, 1]} : vector<1x128xf32> to vector<1x32xf32>
    %501 = arith.mulf %498, %465 : vector<1x32xf32>
    %502 = arith.mulf %497, %499 : vector<1x32xf32>
    %503 = arith.addf %501, %502 : vector<1x32xf32>
    %504 = math.tanh %503 : vector<1x32xf32>
    %505 = arith.mulf %500, %504 : vector<1x32xf32>
    %c4_137 = arith.constant 4 : index
    %c0_138 = arith.constant 0 : index
    %506 = vector.load %arg7[%c4_137, %c0_138] : memref<8x32xf32, #tpu.memory_space<vmem>>, vector<1x32xf32>
    tpu.vector_store %arg7[%c4_137, %c0_138], %505 {strides = array<i32>} : memref<8x32xf32, #tpu.memory_space<vmem>>, vector<1x32xf32>,
    %507 = vector.extract_strided_slice %343 {offsets = [4, 0], sizes = [1, 128], strides = [1, 1]} : vector<8x128xf32> to vector<1x128xf32>
    %cst_139 = arith.constant dense<0.000000e+00> : vector<1x128xf32>
    %508 = tpu.matmul %486, %330, %cst_139 {dimension_numbers = #tpu.dot_dimension_numbers<[1], [0], [0], [1], [0, 0, 1, 1], [], []>} : vector<1x32xf32>, vector<32x128xf32>, vector<1x128xf32> -> vector<1x128xf32>
    %509 = arith.addf %507, %508 : vector<1x128xf32>
    %510 = arith.negf %509 : vector<1x128xf32>
    %511 = math.exp %510 : vector<1x128xf32>
    %cst_140 = arith.constant 1.000000e+00 : f32
    %512 = vector.broadcast %cst_140 : f32 to vector<1x128xf32>
    %513 = arith.addf %512, %511 : vector<1x128xf32>
    %514 = arith.divf %512, %513 : vector<1x128xf32>
    %515 = math.tanh %509 : vector<1x128xf32>
    %516 = vector.extract_strided_slice %514 {offsets = [0, 0], sizes = [1, 32], strides = [1, 1]} : vector<1x128xf32> to vector<1x32xf32>
    %517 = vector.extract_strided_slice %514 {offsets = [0, 32], sizes = [1, 32], strides = [1, 1]} : vector<1x128xf32> to vector<1x32xf32>
    %518 = vector.extract_strided_slice %515 {offsets = [0, 64], sizes = [1, 32], strides = [1, 1]} : vector<1x128xf32> to vector<1x32xf32>
    %519 = vector.extract_strided_slice %514 {offsets = [0, 96], sizes = [1, 32], strides = [1, 1]} : vector<1x128xf32> to vector<1x32xf32>
    %520 = arith.mulf %517, %484 : vector<1x32xf32>
    %521 = arith.mulf %516, %518 : vector<1x32xf32>
    %522 = arith.addf %520, %521 : vector<1x32xf32>
    %523 = math.tanh %522 : vector<1x32xf32>
    %524 = arith.mulf %519, %523 : vector<1x32xf32>
    %c4_141 = arith.constant 4 : index
    %c0_142 = arith.constant 0 : index
    %525 = vector.load %arg6[%c4_141, %c0_142] : memref<8x32xf32, #tpu.memory_space<vmem>>, vector<1x32xf32>
    tpu.vector_store %arg6[%c4_141, %c0_142], %524 {strides = array<i32>} : memref<8x32xf32, #tpu.memory_space<vmem>>, vector<1x32xf32>,
    %526 = vector.extract_strided_slice %350 {offsets = [3, 0], sizes = [1, 128], strides = [1, 1]} : vector<8x128xf32> to vector<1x128xf32>
    %cst_143 = arith.constant dense<0.000000e+00> : vector<1x128xf32>
    %527 = tpu.matmul %505, %332, %cst_143 {dimension_numbers = #tpu.dot_dimension_numbers<[1], [0], [0], [1], [0, 0, 1, 1], [], []>} : vector<1x32xf32>, vector<32x128xf32>, vector<1x128xf32> -> vector<1x128xf32>
    %528 = arith.addf %526, %527 : vector<1x128xf32>
    %529 = arith.negf %528 : vector<1x128xf32>
    %530 = math.exp %529 : vector<1x128xf32>
    %cst_144 = arith.constant 1.000000e+00 : f32
    %531 = vector.broadcast %cst_144 : f32 to vector<1x128xf32>
    %532 = arith.addf %531, %530 : vector<1x128xf32>
    %533 = arith.divf %531, %532 : vector<1x128xf32>
    %534 = math.tanh %528 : vector<1x128xf32>
    %535 = vector.extract_strided_slice %533 {offsets = [0, 0], sizes = [1, 32], strides = [1, 1]} : vector<1x128xf32> to vector<1x32xf32>
    %536 = vector.extract_strided_slice %533 {offsets = [0, 32], sizes = [1, 32], strides = [1, 1]} : vector<1x128xf32> to vector<1x32xf32>
    %537 = vector.extract_strided_slice %534 {offsets = [0, 64], sizes = [1, 32], strides = [1, 1]} : vector<1x128xf32> to vector<1x32xf32>
    %538 = vector.extract_strided_slice %533 {offsets = [0, 96], sizes = [1, 32], strides = [1, 1]} : vector<1x128xf32> to vector<1x32xf32>
    %539 = arith.mulf %536, %503 : vector<1x32xf32>
    %540 = arith.mulf %535, %537 : vector<1x32xf32>
    %541 = arith.addf %539, %540 : vector<1x32xf32>
    %542 = math.tanh %541 : vector<1x32xf32>
    %543 = arith.mulf %538, %542 : vector<1x32xf32>
    %c3_145 = arith.constant 3 : index
    %c0_146 = arith.constant 0 : index
    %544 = vector.load %arg7[%c3_145, %c0_146] : memref<8x32xf32, #tpu.memory_space<vmem>>, vector<1x32xf32>
    tpu.vector_store %arg7[%c3_145, %c0_146], %543 {strides = array<i32>} : memref<8x32xf32, #tpu.memory_space<vmem>>, vector<1x32xf32>,
    %545 = vector.extract_strided_slice %343 {offsets = [5, 0], sizes = [1, 128], strides = [1, 1]} : vector<8x128xf32> to vector<1x128xf32>
    %cst_147 = arith.constant dense<0.000000e+00> : vector<1x128xf32>
    %546 = tpu.matmul %524, %330, %cst_147 {dimension_numbers = #tpu.dot_dimension_numbers<[1], [0], [0], [1], [0, 0, 1, 1], [], []>} : vector<1x32xf32>, vector<32x128xf32>, vector<1x128xf32> -> vector<1x128xf32>
    %547 = arith.addf %545, %546 : vector<1x128xf32>
    %548 = arith.negf %547 : vector<1x128xf32>
    %549 = math.exp %548 : vector<1x128xf32>
    %cst_148 = arith.constant 1.000000e+00 : f32
    %550 = vector.broadcast %cst_148 : f32 to vector<1x128xf32>
    %551 = arith.addf %550, %549 : vector<1x128xf32>
    %552 = arith.divf %550, %551 : vector<1x128xf32>
    %553 = math.tanh %547 : vector<1x128xf32>
    %554 = vector.extract_strided_slice %552 {offsets = [0, 0], sizes = [1, 32], strides = [1, 1]} : vector<1x128xf32> to vector<1x32xf32>
    %555 = vector.extract_strided_slice %552 {offsets = [0, 32], sizes = [1, 32], strides = [1, 1]} : vector<1x128xf32> to vector<1x32xf32>
    %556 = vector.extract_strided_slice %553 {offsets = [0, 64], sizes = [1, 32], strides = [1, 1]} : vector<1x128xf32> to vector<1x32xf32>
    %557 = vector.extract_strided_slice %552 {offsets = [0, 96], sizes = [1, 32], strides = [1, 1]} : vector<1x128xf32> to vector<1x32xf32>
    %558 = arith.mulf %555, %522 : vector<1x32xf32>
    %559 = arith.mulf %554, %556 : vector<1x32xf32>
    %560 = arith.addf %558, %559 : vector<1x32xf32>
    %561 = math.tanh %560 : vector<1x32xf32>
    %562 = arith.mulf %557, %561 : vector<1x32xf32>
    %c5_149 = arith.constant 5 : index
    %c0_150 = arith.constant 0 : index
    %563 = vector.load %arg6[%c5_149, %c0_150] : memref<8x32xf32, #tpu.memory_space<vmem>>, vector<1x32xf32>
    tpu.vector_store %arg6[%c5_149, %c0_150], %562 {strides = array<i32>} : memref<8x32xf32, #tpu.memory_space<vmem>>, vector<1x32xf32>,
    %564 = vector.extract_strided_slice %350 {offsets = [2, 0], sizes = [1, 128], strides = [1, 1]} : vector<8x128xf32> to vector<1x128xf32>
    %cst_151 = arith.constant dense<0.000000e+00> : vector<1x128xf32>
    %565 = tpu.matmul %543, %332, %cst_151 {dimension_numbers = #tpu.dot_dimension_numbers<[1], [0], [0], [1], [0, 0, 1, 1], [], []>} : vector<1x32xf32>, vector<32x128xf32>, vector<1x128xf32> -> vector<1x128xf32>
    %566 = arith.addf %564, %565 : vector<1x128xf32>
    %567 = arith.negf %566 : vector<1x128xf32>
    %568 = math.exp %567 : vector<1x128xf32>
    %cst_152 = arith.constant 1.000000e+00 : f32
    %569 = vector.broadcast %cst_152 : f32 to vector<1x128xf32>
    %570 = arith.addf %569, %568 : vector<1x128xf32>
    %571 = arith.divf %569, %570 : vector<1x128xf32>
    %572 = math.tanh %566 : vector<1x128xf32>
    %573 = vector.extract_strided_slice %571 {offsets = [0, 0], sizes = [1, 32], strides = [1, 1]} : vector<1x128xf32> to vector<1x32xf32>
    %574 = vector.extract_strided_slice %571 {offsets = [0, 32], sizes = [1, 32], strides = [1, 1]} : vector<1x128xf32> to vector<1x32xf32>
    %575 = vector.extract_strided_slice %572 {offsets = [0, 64], sizes = [1, 32], strides = [1, 1]} : vector<1x128xf32> to vector<1x32xf32>
    %576 = vector.extract_strided_slice %571 {offsets = [0, 96], sizes = [1, 32], strides = [1, 1]} : vector<1x128xf32> to vector<1x32xf32>
    %577 = arith.mulf %574, %541 : vector<1x32xf32>
    %578 = arith.mulf %573, %575 : vector<1x32xf32>
    %579 = arith.addf %577, %578 : vector<1x32xf32>
    %580 = math.tanh %579 : vector<1x32xf32>
    %581 = arith.mulf %576, %580 : vector<1x32xf32>
    %c2_153 = arith.constant 2 : index
    %c0_154 = arith.constant 0 : index
    %582 = vector.load %arg7[%c2_153, %c0_154] : memref<8x32xf32, #tpu.memory_space<vmem>>, vector<1x32xf32>
    tpu.vector_store %arg7[%c2_153, %c0_154], %581 {strides = array<i32>} : memref<8x32xf32, #tpu.memory_space<vmem>>, vector<1x32xf32>,
    %583 = vector.extract_strided_slice %343 {offsets = [6, 0], sizes = [1, 128], strides = [1, 1]} : vector<8x128xf32> to vector<1x128xf32>
    %cst_155 = arith.constant dense<0.000000e+00> : vector<1x128xf32>
    %584 = tpu.matmul %562, %330, %cst_155 {dimension_numbers = #tpu.dot_dimension_numbers<[1], [0], [0], [1], [0, 0, 1, 1], [], []>} : vector<1x32xf32>, vector<32x128xf32>, vector<1x128xf32> -> vector<1x128xf32>
    %585 = arith.addf %583, %584 : vector<1x128xf32>
    %586 = arith.negf %585 : vector<1x128xf32>
    %587 = math.exp %586 : vector<1x128xf32>
    %cst_156 = arith.constant 1.000000e+00 : f32
    %588 = vector.broadcast %cst_156 : f32 to vector<1x128xf32>
    %589 = arith.addf %588, %587 : vector<1x128xf32>
    %590 = arith.divf %588, %589 : vector<1x128xf32>
    %591 = math.tanh %585 : vector<1x128xf32>
    %592 = vector.extract_strided_slice %590 {offsets = [0, 0], sizes = [1, 32], strides = [1, 1]} : vector<1x128xf32> to vector<1x32xf32>
    %593 = vector.extract_strided_slice %590 {offsets = [0, 32], sizes = [1, 32], strides = [1, 1]} : vector<1x128xf32> to vector<1x32xf32>
    %594 = vector.extract_strided_slice %591 {offsets = [0, 64], sizes = [1, 32], strides = [1, 1]} : vector<1x128xf32> to vector<1x32xf32>
    %595 = vector.extract_strided_slice %590 {offsets = [0, 96], sizes = [1, 32], strides = [1, 1]} : vector<1x128xf32> to vector<1x32xf32>
    %596 = arith.mulf %593, %560 : vector<1x32xf32>
    %597 = arith.mulf %592, %594 : vector<1x32xf32>
    %598 = arith.addf %596, %597 : vector<1x32xf32>
    %599 = math.tanh %598 : vector<1x32xf32>
    %600 = arith.mulf %595, %599 : vector<1x32xf32>
    %c6_157 = arith.constant 6 : index
    %c0_158 = arith.constant 0 : index
    %601 = vector.load %arg6[%c6_157, %c0_158] : memref<8x32xf32, #tpu.memory_space<vmem>>, vector<1x32xf32>
    tpu.vector_store %arg6[%c6_157, %c0_158], %600 {strides = array<i32>} : memref<8x32xf32, #tpu.memory_space<vmem>>, vector<1x32xf32>,
    %602 = vector.extract_strided_slice %350 {offsets = [1, 0], sizes = [1, 128], strides = [1, 1]} : vector<8x128xf32> to vector<1x128xf32>
    %cst_159 = arith.constant dense<0.000000e+00> : vector<1x128xf32>
    %603 = tpu.matmul %581, %332, %cst_159 {dimension_numbers = #tpu.dot_dimension_numbers<[1], [0], [0], [1], [0, 0, 1, 1], [], []>} : vector<1x32xf32>, vector<32x128xf32>, vector<1x128xf32> -> vector<1x128xf32>
    %604 = arith.addf %602, %603 : vector<1x128xf32>
    %605 = arith.negf %604 : vector<1x128xf32>
    %606 = math.exp %605 : vector<1x128xf32>
    %cst_160 = arith.constant 1.000000e+00 : f32
    %607 = vector.broadcast %cst_160 : f32 to vector<1x128xf32>
    %608 = arith.addf %607, %606 : vector<1x128xf32>
    %609 = arith.divf %607, %608 : vector<1x128xf32>
    %610 = math.tanh %604 : vector<1x128xf32>
    %611 = vector.extract_strided_slice %609 {offsets = [0, 0], sizes = [1, 32], strides = [1, 1]} : vector<1x128xf32> to vector<1x32xf32>
    %612 = vector.extract_strided_slice %609 {offsets = [0, 32], sizes = [1, 32], strides = [1, 1]} : vector<1x128xf32> to vector<1x32xf32>
    %613 = vector.extract_strided_slice %610 {offsets = [0, 64], sizes = [1, 32], strides = [1, 1]} : vector<1x128xf32> to vector<1x32xf32>
    %614 = vector.extract_strided_slice %609 {offsets = [0, 96], sizes = [1, 32], strides = [1, 1]} : vector<1x128xf32> to vector<1x32xf32>
    %615 = arith.mulf %612, %579 : vector<1x32xf32>
    %616 = arith.mulf %611, %613 : vector<1x32xf32>
    %617 = arith.addf %615, %616 : vector<1x32xf32>
    %618 = math.tanh %617 : vector<1x32xf32>
    %619 = arith.mulf %614, %618 : vector<1x32xf32>
    %c1_161 = arith.constant 1 : index
    %c0_162 = arith.constant 0 : index
    %620 = vector.load %arg7[%c1_161, %c0_162] : memref<8x32xf32, #tpu.memory_space<vmem>>, vector<1x32xf32>
    tpu.vector_store %arg7[%c1_161, %c0_162], %619 {strides = array<i32>} : memref<8x32xf32, #tpu.memory_space<vmem>>, vector<1x32xf32>,
    %621 = vector.extract_strided_slice %343 {offsets = [7, 0], sizes = [1, 128], strides = [1, 1]} : vector<8x128xf32> to vector<1x128xf32>
    %cst_163 = arith.constant dense<0.000000e+00> : vector<1x128xf32>
    %622 = tpu.matmul %600, %330, %cst_163 {dimension_numbers = #tpu.dot_dimension_numbers<[1], [0], [0], [1], [0, 0, 1, 1], [], []>} : vector<1x32xf32>, vector<32x128xf32>, vector<1x128xf32> -> vector<1x128xf32>
    %623 = arith.addf %621, %622 : vector<1x128xf32>
    %624 = arith.negf %623 : vector<1x128xf32>
    %625 = math.exp %624 : vector<1x128xf32>
    %cst_164 = arith.constant 1.000000e+00 : f32
    %626 = vector.broadcast %cst_164 : f32 to vector<1x128xf32>
    %627 = arith.addf %626, %625 : vector<1x128xf32>
    %628 = arith.divf %626, %627 : vector<1x128xf32>
    %629 = math.tanh %623 : vector<1x128xf32>
    %630 = vector.extract_strided_slice %628 {offsets = [0, 0], sizes = [1, 32], strides = [1, 1]} : vector<1x128xf32> to vector<1x32xf32>
    %631 = vector.extract_strided_slice %628 {offsets = [0, 32], sizes = [1, 32], strides = [1, 1]} : vector<1x128xf32> to vector<1x32xf32>
    %632 = vector.extract_strided_slice %629 {offsets = [0, 64], sizes = [1, 32], strides = [1, 1]} : vector<1x128xf32> to vector<1x32xf32>
    %633 = vector.extract_strided_slice %628 {offsets = [0, 96], sizes = [1, 32], strides = [1, 1]} : vector<1x128xf32> to vector<1x32xf32>
    %634 = arith.mulf %631, %598 : vector<1x32xf32>
    %635 = arith.mulf %630, %632 : vector<1x32xf32>
    %636 = arith.addf %634, %635 : vector<1x32xf32>
    %637 = math.tanh %636 : vector<1x32xf32>
    %638 = arith.mulf %633, %637 : vector<1x32xf32>
    %c7_165 = arith.constant 7 : index
    %c0_166 = arith.constant 0 : index
    %639 = vector.load %arg6[%c7_165, %c0_166] : memref<8x32xf32, #tpu.memory_space<vmem>>, vector<1x32xf32>
    tpu.vector_store %arg6[%c7_165, %c0_166], %638 {strides = array<i32>} : memref<8x32xf32, #tpu.memory_space<vmem>>, vector<1x32xf32>,
    %640 = vector.extract_strided_slice %350 {offsets = [0, 0], sizes = [1, 128], strides = [1, 1]} : vector<8x128xf32> to vector<1x128xf32>
    %cst_167 = arith.constant dense<0.000000e+00> : vector<1x128xf32>
    %641 = tpu.matmul %619, %332, %cst_167 {dimension_numbers = #tpu.dot_dimension_numbers<[1], [0], [0], [1], [0, 0, 1, 1], [], []>} : vector<1x32xf32>, vector<32x128xf32>, vector<1x128xf32> -> vector<1x128xf32>
    %642 = arith.addf %640, %641 : vector<1x128xf32>
    %643 = arith.negf %642 : vector<1x128xf32>
    %644 = math.exp %643 : vector<1x128xf32>
    %cst_168 = arith.constant 1.000000e+00 : f32
    %645 = vector.broadcast %cst_168 : f32 to vector<1x128xf32>
    %646 = arith.addf %645, %644 : vector<1x128xf32>
    %647 = arith.divf %645, %646 : vector<1x128xf32>
    %648 = math.tanh %642 : vector<1x128xf32>
    %649 = vector.extract_strided_slice %647 {offsets = [0, 0], sizes = [1, 32], strides = [1, 1]} : vector<1x128xf32> to vector<1x32xf32>
    %650 = vector.extract_strided_slice %647 {offsets = [0, 32], sizes = [1, 32], strides = [1, 1]} : vector<1x128xf32> to vector<1x32xf32>
    %651 = vector.extract_strided_slice %648 {offsets = [0, 64], sizes = [1, 32], strides = [1, 1]} : vector<1x128xf32> to vector<1x32xf32>
    %652 = vector.extract_strided_slice %647 {offsets = [0, 96], sizes = [1, 32], strides = [1, 1]} : vector<1x128xf32> to vector<1x32xf32>
    %653 = arith.mulf %650, %617 : vector<1x32xf32>
    %654 = arith.mulf %649, %651 : vector<1x32xf32>
    %655 = arith.addf %653, %654 : vector<1x32xf32>
    %656 = math.tanh %655 : vector<1x32xf32>
    %657 = arith.mulf %652, %656 : vector<1x32xf32>
    %c0_169 = arith.constant 0 : index
    %c0_170 = arith.constant 0 : index
    %658 = vector.load %arg7[%c0_169, %c0_170] : memref<8x32xf32, #tpu.memory_space<vmem>>, vector<1x32xf32>
    tpu.vector_store %arg7[%c0_169, %c0_170], %657 {strides = array<i32>} : memref<8x32xf32, #tpu.memory_space<vmem>>, vector<1x32xf32>,
    %c4_171 = arith.constant 4 : index
    %c0_172 = arith.constant 0 : index
    %c0_173 = arith.constant 0 : index
    %659 = vector.load %arg2[%c4_171, %c0_172, %c0_173] : memref<6x64x128xf32, #tpu.memory_space<vmem>>, vector<1x64x128xf32>
    %660 = vector.shape_cast %659 : vector<1x64x128xf32> to vector<64x128xf32>
    %c5_174 = arith.constant 5 : index
    %c0_175 = arith.constant 0 : index
    %c0_176 = arith.constant 0 : index
    %661 = vector.load %arg2[%c5_174, %c0_175, %c0_176] : memref<6x64x128xf32, #tpu.memory_space<vmem>>, vector<1x64x128xf32>
    %662 = vector.shape_cast %661 : vector<1x64x128xf32> to vector<64x128xf32>
    %c4_177 = arith.constant 4 : index
    %c0_178 = arith.constant 0 : index
    %c0_179 = arith.constant 0 : index
    %663 = vector.load %arg3[%c4_177, %c0_178, %c0_179] : memref<6x32x128xf32, #tpu.memory_space<vmem>>, vector<1x32x128xf32>
    %664 = vector.shape_cast %663 : vector<1x32x128xf32> to vector<32x128xf32>
    %c5_180 = arith.constant 5 : index
    %c0_181 = arith.constant 0 : index
    %c0_182 = arith.constant 0 : index
    %665 = vector.load %arg3[%c5_180, %c0_181, %c0_182] : memref<6x32x128xf32, #tpu.memory_space<vmem>>, vector<1x32x128xf32>
    %666 = vector.shape_cast %665 : vector<1x32x128xf32> to vector<32x128xf32>
    %c4_183 = arith.constant 4 : index
    %c0_184 = arith.constant 0 : index
    %667 = vector.load %arg4[%c4_183, %c0_184] : memref<6x128xf32, #tpu.memory_space<vmem>>, vector<1x128xf32>
    %c5_185 = arith.constant 5 : index
    %c0_186 = arith.constant 0 : index
    %668 = vector.load %arg4[%c5_185, %c0_186] : memref<6x128xf32, #tpu.memory_space<vmem>>, vector<1x128xf32>
    %c0_187 = arith.constant 0 : index
    %c0_188 = arith.constant 0 : index
    %669 = vector.load %arg6[%c0_187, %c0_188] : memref<8x32xf32, #tpu.memory_space<vmem>>, vector<8x32xf32>
    %c0_189 = arith.constant 0 : index
    %c0_190 = arith.constant 0 : index
    %670 = vector.load %arg7[%c0_189, %c0_190] : memref<8x32xf32, #tpu.memory_space<vmem>>, vector<8x32xf32>
    %671 = vector.extract_strided_slice %660 {offsets = [0, 0], sizes = [32, 128], strides = [1, 1]} : vector<64x128xf32> to vector<32x128xf32>
    %cst_191 = arith.constant dense<0.000000e+00> : vector<8x128xf32>
    %672 = tpu.matmul %669, %671, %cst_191 {dimension_numbers = #tpu.dot_dimension_numbers<[1], [0], [0], [1], [0, 0, 1, 1], [], []>} : vector<8x32xf32>, vector<32x128xf32>, vector<8x128xf32> -> vector<8x128xf32>
    %673 = vector.extract_strided_slice %660 {offsets = [32, 0], sizes = [32, 128], strides = [1, 1]} : vector<64x128xf32> to vector<32x128xf32>
    %cst_192 = arith.constant dense<0.000000e+00> : vector<8x128xf32>
    %674 = tpu.matmul %670, %673, %cst_192 {dimension_numbers = #tpu.dot_dimension_numbers<[1], [0], [0], [1], [0, 0, 1, 1], [], []>} : vector<8x32xf32>, vector<32x128xf32>, vector<8x128xf32> -> vector<8x128xf32>
    %675 = arith.addf %672, %674 : vector<8x128xf32>
    %676 = vector.broadcast %667 : vector<1x128xf32> to vector<8x128xf32>
    %677 = arith.addf %675, %676 : vector<8x128xf32>
    %678 = vector.extract_strided_slice %662 {offsets = [0, 0], sizes = [32, 128], strides = [1, 1]} : vector<64x128xf32> to vector<32x128xf32>
    %cst_193 = arith.constant dense<0.000000e+00> : vector<8x128xf32>
    %679 = tpu.matmul %669, %678, %cst_193 {dimension_numbers = #tpu.dot_dimension_numbers<[1], [0], [0], [1], [0, 0, 1, 1], [], []>} : vector<8x32xf32>, vector<32x128xf32>, vector<8x128xf32> -> vector<8x128xf32>
    %680 = vector.extract_strided_slice %662 {offsets = [32, 0], sizes = [32, 128], strides = [1, 1]} : vector<64x128xf32> to vector<32x128xf32>
    %cst_194 = arith.constant dense<0.000000e+00> : vector<8x128xf32>
    %681 = tpu.matmul %670, %680, %cst_194 {dimension_numbers = #tpu.dot_dimension_numbers<[1], [0], [0], [1], [0, 0, 1, 1], [], []>} : vector<8x32xf32>, vector<32x128xf32>, vector<8x128xf32> -> vector<8x128xf32>
    %682 = arith.addf %679, %681 : vector<8x128xf32>
    %683 = vector.broadcast %668 : vector<1x128xf32> to vector<8x128xf32>
    %684 = arith.addf %682, %683 : vector<8x128xf32>
    %cst_195 = arith.constant 0.000000e+00 : f32
    %685 = vector.broadcast %cst_195 : f32 to vector<1x32xf32>
    %cst_196 = arith.constant 0.000000e+00 : f32
    %686 = vector.broadcast %cst_196 : f32 to vector<1x32xf32>
    %cst_197 = arith.constant 0.000000e+00 : f32
    %687 = vector.broadcast %cst_197 : f32 to vector<1x32xf32>
    %cst_198 = arith.constant 0.000000e+00 : f32
    %688 = vector.broadcast %cst_198 : f32 to vector<1x32xf32>
    %689 = vector.extract_strided_slice %677 {offsets = [0, 0], sizes = [1, 128], strides = [1, 1]} : vector<8x128xf32> to vector<1x128xf32>
    %cst_199 = arith.constant dense<0.000000e+00> : vector<1x128xf32>
    %690 = tpu.matmul %685, %664, %cst_199 {dimension_numbers = #tpu.dot_dimension_numbers<[1], [0], [0], [1], [0, 0, 1, 1], [], []>} : vector<1x32xf32>, vector<32x128xf32>, vector<1x128xf32> -> vector<1x128xf32>
    %691 = arith.addf %689, %690 : vector<1x128xf32>
    %692 = arith.negf %691 : vector<1x128xf32>
    %693 = math.exp %692 : vector<1x128xf32>
    %cst_200 = arith.constant 1.000000e+00 : f32
    %694 = vector.broadcast %cst_200 : f32 to vector<1x128xf32>
    %695 = arith.addf %694, %693 : vector<1x128xf32>
    %696 = arith.divf %694, %695 : vector<1x128xf32>
    %697 = math.tanh %691 : vector<1x128xf32>
    %698 = vector.extract_strided_slice %696 {offsets = [0, 0], sizes = [1, 32], strides = [1, 1]} : vector<1x128xf32> to vector<1x32xf32>
    %699 = vector.extract_strided_slice %696 {offsets = [0, 32], sizes = [1, 32], strides = [1, 1]} : vector<1x128xf32> to vector<1x32xf32>
    %700 = vector.extract_strided_slice %697 {offsets = [0, 64], sizes = [1, 32], strides = [1, 1]} : vector<1x128xf32> to vector<1x32xf32>
    %701 = vector.extract_strided_slice %696 {offsets = [0, 96], sizes = [1, 32], strides = [1, 1]} : vector<1x128xf32> to vector<1x32xf32>
    %702 = arith.mulf %699, %686 : vector<1x32xf32>
    %703 = arith.mulf %698, %700 : vector<1x32xf32>
    %704 = arith.addf %702, %703 : vector<1x32xf32>
    %705 = math.tanh %704 : vector<1x32xf32>
    %706 = arith.mulf %701, %705 : vector<1x32xf32>
    %707 = vector.extract_strided_slice %684 {offsets = [7, 0], sizes = [1, 128], strides = [1, 1]} : vector<8x128xf32> to vector<1x128xf32>
    %cst_201 = arith.constant dense<0.000000e+00> : vector<1x128xf32>
    %708 = tpu.matmul %687, %666, %cst_201 {dimension_numbers = #tpu.dot_dimension_numbers<[1], [0], [0], [1], [0, 0, 1, 1], [], []>} : vector<1x32xf32>, vector<32x128xf32>, vector<1x128xf32> -> vector<1x128xf32>
    %709 = arith.addf %707, %708 : vector<1x128xf32>
    %710 = arith.negf %709 : vector<1x128xf32>
    %711 = math.exp %710 : vector<1x128xf32>
    %cst_202 = arith.constant 1.000000e+00 : f32
    %712 = vector.broadcast %cst_202 : f32 to vector<1x128xf32>
    %713 = arith.addf %712, %711 : vector<1x128xf32>
    %714 = arith.divf %712, %713 : vector<1x128xf32>
    %715 = math.tanh %709 : vector<1x128xf32>
    %716 = vector.extract_strided_slice %714 {offsets = [0, 0], sizes = [1, 32], strides = [1, 1]} : vector<1x128xf32> to vector<1x32xf32>
    %717 = vector.extract_strided_slice %714 {offsets = [0, 32], sizes = [1, 32], strides = [1, 1]} : vector<1x128xf32> to vector<1x32xf32>
    %718 = vector.extract_strided_slice %715 {offsets = [0, 64], sizes = [1, 32], strides = [1, 1]} : vector<1x128xf32> to vector<1x32xf32>
    %719 = vector.extract_strided_slice %714 {offsets = [0, 96], sizes = [1, 32], strides = [1, 1]} : vector<1x128xf32> to vector<1x32xf32>
    %720 = arith.mulf %717, %688 : vector<1x32xf32>
    %721 = arith.mulf %716, %718 : vector<1x32xf32>
    %722 = arith.addf %720, %721 : vector<1x32xf32>
    %723 = math.tanh %722 : vector<1x32xf32>
    %724 = arith.mulf %719, %723 : vector<1x32xf32>
    %725 = vector.extract_strided_slice %677 {offsets = [1, 0], sizes = [1, 128], strides = [1, 1]} : vector<8x128xf32> to vector<1x128xf32>
    %cst_203 = arith.constant dense<0.000000e+00> : vector<1x128xf32>
    %726 = tpu.matmul %706, %664, %cst_203 {dimension_numbers = #tpu.dot_dimension_numbers<[1], [0], [0], [1], [0, 0, 1, 1], [], []>} : vector<1x32xf32>, vector<32x128xf32>, vector<1x128xf32> -> vector<1x128xf32>
    %727 = arith.addf %725, %726 : vector<1x128xf32>
    %728 = arith.negf %727 : vector<1x128xf32>
    %729 = math.exp %728 : vector<1x128xf32>
    %cst_204 = arith.constant 1.000000e+00 : f32
    %730 = vector.broadcast %cst_204 : f32 to vector<1x128xf32>
    %731 = arith.addf %730, %729 : vector<1x128xf32>
    %732 = arith.divf %730, %731 : vector<1x128xf32>
    %733 = math.tanh %727 : vector<1x128xf32>
    %734 = vector.extract_strided_slice %732 {offsets = [0, 0], sizes = [1, 32], strides = [1, 1]} : vector<1x128xf32> to vector<1x32xf32>
    %735 = vector.extract_strided_slice %732 {offsets = [0, 32], sizes = [1, 32], strides = [1, 1]} : vector<1x128xf32> to vector<1x32xf32>
    %736 = vector.extract_strided_slice %733 {offsets = [0, 64], sizes = [1, 32], strides = [1, 1]} : vector<1x128xf32> to vector<1x32xf32>
    %737 = vector.extract_strided_slice %732 {offsets = [0, 96], sizes = [1, 32], strides = [1, 1]} : vector<1x128xf32> to vector<1x32xf32>
    %738 = arith.mulf %735, %704 : vector<1x32xf32>
    %739 = arith.mulf %734, %736 : vector<1x32xf32>
    %740 = arith.addf %738, %739 : vector<1x32xf32>
    %741 = math.tanh %740 : vector<1x32xf32>
    %742 = arith.mulf %737, %741 : vector<1x32xf32>
    %743 = vector.extract_strided_slice %677 {offsets = [2, 0], sizes = [1, 128], strides = [1, 1]} : vector<8x128xf32> to vector<1x128xf32>
    %cst_205 = arith.constant dense<0.000000e+00> : vector<1x128xf32>
    %744 = tpu.matmul %742, %664, %cst_205 {dimension_numbers = #tpu.dot_dimension_numbers<[1], [0], [0], [1], [0, 0, 1, 1], [], []>} : vector<1x32xf32>, vector<32x128xf32>, vector<1x128xf32> -> vector<1x128xf32>
    %745 = arith.addf %743, %744 : vector<1x128xf32>
    %746 = arith.negf %745 : vector<1x128xf32>
    %747 = math.exp %746 : vector<1x128xf32>
    %cst_206 = arith.constant 1.000000e+00 : f32
    %748 = vector.broadcast %cst_206 : f32 to vector<1x128xf32>
    %749 = arith.addf %748, %747 : vector<1x128xf32>
    %750 = arith.divf %748, %749 : vector<1x128xf32>
    %751 = math.tanh %745 : vector<1x128xf32>
    %752 = vector.extract_strided_slice %750 {offsets = [0, 0], sizes = [1, 32], strides = [1, 1]} : vector<1x128xf32> to vector<1x32xf32>
    %753 = vector.extract_strided_slice %750 {offsets = [0, 32], sizes = [1, 32], strides = [1, 1]} : vector<1x128xf32> to vector<1x32xf32>
    %754 = vector.extract_strided_slice %751 {offsets = [0, 64], sizes = [1, 32], strides = [1, 1]} : vector<1x128xf32> to vector<1x32xf32>
    %755 = vector.extract_strided_slice %750 {offsets = [0, 96], sizes = [1, 32], strides = [1, 1]} : vector<1x128xf32> to vector<1x32xf32>
    %756 = arith.mulf %753, %740 : vector<1x32xf32>
    %757 = arith.mulf %752, %754 : vector<1x32xf32>
    %758 = arith.addf %756, %757 : vector<1x32xf32>
    %759 = math.tanh %758 : vector<1x32xf32>
    %760 = arith.mulf %755, %759 : vector<1x32xf32>
    %761 = vector.extract_strided_slice %677 {offsets = [3, 0], sizes = [1, 128], strides = [1, 1]} : vector<8x128xf32> to vector<1x128xf32>
    %cst_207 = arith.constant dense<0.000000e+00> : vector<1x128xf32>
    %762 = tpu.matmul %760, %664, %cst_207 {dimension_numbers = #tpu.dot_dimension_numbers<[1], [0], [0], [1], [0, 0, 1, 1], [], []>} : vector<1x32xf32>, vector<32x128xf32>, vector<1x128xf32> -> vector<1x128xf32>
    %763 = arith.addf %761, %762 : vector<1x128xf32>
    %764 = arith.negf %763 : vector<1x128xf32>
    %765 = math.exp %764 : vector<1x128xf32>
    %cst_208 = arith.constant 1.000000e+00 : f32
    %766 = vector.broadcast %cst_208 : f32 to vector<1x128xf32>
    %767 = arith.addf %766, %765 : vector<1x128xf32>
    %768 = arith.divf %766, %767 : vector<1x128xf32>
    %769 = math.tanh %763 : vector<1x128xf32>
    %770 = vector.extract_strided_slice %768 {offsets = [0, 0], sizes = [1, 32], strides = [1, 1]} : vector<1x128xf32> to vector<1x32xf32>
    %771 = vector.extract_strided_slice %768 {offsets = [0, 32], sizes = [1, 32], strides = [1, 1]} : vector<1x128xf32> to vector<1x32xf32>
    %772 = vector.extract_strided_slice %769 {offsets = [0, 64], sizes = [1, 32], strides = [1, 1]} : vector<1x128xf32> to vector<1x32xf32>
    %773 = vector.extract_strided_slice %768 {offsets = [0, 96], sizes = [1, 32], strides = [1, 1]} : vector<1x128xf32> to vector<1x32xf32>
    %774 = arith.mulf %771, %758 : vector<1x32xf32>
    %775 = arith.mulf %770, %772 : vector<1x32xf32>
    %776 = arith.addf %774, %775 : vector<1x32xf32>
    %777 = math.tanh %776 : vector<1x32xf32>
    %778 = arith.mulf %773, %777 : vector<1x32xf32>
    %779 = vector.extract_strided_slice %677 {offsets = [4, 0], sizes = [1, 128], strides = [1, 1]} : vector<8x128xf32> to vector<1x128xf32>
    %cst_209 = arith.constant dense<0.000000e+00> : vector<1x128xf32>
    %780 = tpu.matmul %778, %664, %cst_209 {dimension_numbers = #tpu.dot_dimension_numbers<[1], [0], [0], [1], [0, 0, 1, 1], [], []>} : vector<1x32xf32>, vector<32x128xf32>, vector<1x128xf32> -> vector<1x128xf32>
    %781 = arith.addf %779, %780 : vector<1x128xf32>
    %782 = arith.negf %781 : vector<1x128xf32>
    %783 = math.exp %782 : vector<1x128xf32>
    %cst_210 = arith.constant 1.000000e+00 : f32
    %784 = vector.broadcast %cst_210 : f32 to vector<1x128xf32>
    %785 = arith.addf %784, %783 : vector<1x128xf32>
    %786 = arith.divf %784, %785 : vector<1x128xf32>
    %787 = math.tanh %781 : vector<1x128xf32>
    %788 = vector.extract_strided_slice %786 {offsets = [0, 0], sizes = [1, 32], strides = [1, 1]} : vector<1x128xf32> to vector<1x32xf32>
    %789 = vector.extract_strided_slice %786 {offsets = [0, 32], sizes = [1, 32], strides = [1, 1]} : vector<1x128xf32> to vector<1x32xf32>
    %790 = vector.extract_strided_slice %787 {offsets = [0, 64], sizes = [1, 32], strides = [1, 1]} : vector<1x128xf32> to vector<1x32xf32>
    %791 = vector.extract_strided_slice %786 {offsets = [0, 96], sizes = [1, 32], strides = [1, 1]} : vector<1x128xf32> to vector<1x32xf32>
    %792 = arith.mulf %789, %776 : vector<1x32xf32>
    %793 = arith.mulf %788, %790 : vector<1x32xf32>
    %794 = arith.addf %792, %793 : vector<1x32xf32>
    %795 = math.tanh %794 : vector<1x32xf32>
    %796 = arith.mulf %791, %795 : vector<1x32xf32>
    %797 = vector.extract_strided_slice %677 {offsets = [5, 0], sizes = [1, 128], strides = [1, 1]} : vector<8x128xf32> to vector<1x128xf32>
    %cst_211 = arith.constant dense<0.000000e+00> : vector<1x128xf32>
    %798 = tpu.matmul %796, %664, %cst_211 {dimension_numbers = #tpu.dot_dimension_numbers<[1], [0], [0], [1], [0, 0, 1, 1], [], []>} : vector<1x32xf32>, vector<32x128xf32>, vector<1x128xf32> -> vector<1x128xf32>
    %799 = arith.addf %797, %798 : vector<1x128xf32>
    %800 = arith.negf %799 : vector<1x128xf32>
    %801 = math.exp %800 : vector<1x128xf32>
    %cst_212 = arith.constant 1.000000e+00 : f32
    %802 = vector.broadcast %cst_212 : f32 to vector<1x128xf32>
    %803 = arith.addf %802, %801 : vector<1x128xf32>
    %804 = arith.divf %802, %803 : vector<1x128xf32>
    %805 = math.tanh %799 : vector<1x128xf32>
    %806 = vector.extract_strided_slice %804 {offsets = [0, 0], sizes = [1, 32], strides = [1, 1]} : vector<1x128xf32> to vector<1x32xf32>
    %807 = vector.extract_strided_slice %804 {offsets = [0, 32], sizes = [1, 32], strides = [1, 1]} : vector<1x128xf32> to vector<1x32xf32>
    %808 = vector.extract_strided_slice %805 {offsets = [0, 64], sizes = [1, 32], strides = [1, 1]} : vector<1x128xf32> to vector<1x32xf32>
    %809 = vector.extract_strided_slice %804 {offsets = [0, 96], sizes = [1, 32], strides = [1, 1]} : vector<1x128xf32> to vector<1x32xf32>
    %810 = arith.mulf %807, %794 : vector<1x32xf32>
    %811 = arith.mulf %806, %808 : vector<1x32xf32>
    %812 = arith.addf %810, %811 : vector<1x32xf32>
    %813 = math.tanh %812 : vector<1x32xf32>
    %814 = arith.mulf %809, %813 : vector<1x32xf32>
    %815 = vector.extract_strided_slice %677 {offsets = [6, 0], sizes = [1, 128], strides = [1, 1]} : vector<8x128xf32> to vector<1x128xf32>
    %cst_213 = arith.constant dense<0.000000e+00> : vector<1x128xf32>
    %816 = tpu.matmul %814, %664, %cst_213 {dimension_numbers = #tpu.dot_dimension_numbers<[1], [0], [0], [1], [0, 0, 1, 1], [], []>} : vector<1x32xf32>, vector<32x128xf32>, vector<1x128xf32> -> vector<1x128xf32>
    %817 = arith.addf %815, %816 : vector<1x128xf32>
    %818 = arith.negf %817 : vector<1x128xf32>
    %819 = math.exp %818 : vector<1x128xf32>
    %cst_214 = arith.constant 1.000000e+00 : f32
    %820 = vector.broadcast %cst_214 : f32 to vector<1x128xf32>
    %821 = arith.addf %820, %819 : vector<1x128xf32>
    %822 = arith.divf %820, %821 : vector<1x128xf32>
    %823 = math.tanh %817 : vector<1x128xf32>
    %824 = vector.extract_strided_slice %822 {offsets = [0, 0], sizes = [1, 32], strides = [1, 1]} : vector<1x128xf32> to vector<1x32xf32>
    %825 = vector.extract_strided_slice %822 {offsets = [0, 32], sizes = [1, 32], strides = [1, 1]} : vector<1x128xf32> to vector<1x32xf32>
    %826 = vector.extract_strided_slice %823 {offsets = [0, 64], sizes = [1, 32], strides = [1, 1]} : vector<1x128xf32> to vector<1x32xf32>
    %827 = vector.extract_strided_slice %822 {offsets = [0, 96], sizes = [1, 32], strides = [1, 1]} : vector<1x128xf32> to vector<1x32xf32>
    %828 = arith.mulf %825, %812 : vector<1x32xf32>
    %829 = arith.mulf %824, %826 : vector<1x32xf32>
    %830 = arith.addf %828, %829 : vector<1x32xf32>
    %831 = math.tanh %830 : vector<1x32xf32>
    %832 = arith.mulf %827, %831 : vector<1x32xf32>
    %833 = vector.extract_strided_slice %677 {offsets = [7, 0], sizes = [1, 128], strides = [1, 1]} : vector<8x128xf32> to vector<1x128xf32>
    %cst_215 = arith.constant dense<0.000000e+00> : vector<1x128xf32>
    %834 = tpu.matmul %832, %664, %cst_215 {dimension_numbers = #tpu.dot_dimension_numbers<[1], [0], [0], [1], [0, 0, 1, 1], [], []>} : vector<1x32xf32>, vector<32x128xf32>, vector<1x128xf32> -> vector<1x128xf32>
    %835 = arith.addf %833, %834 : vector<1x128xf32>
    %836 = arith.negf %835 : vector<1x128xf32>
    %837 = math.exp %836 : vector<1x128xf32>
    %cst_216 = arith.constant 1.000000e+00 : f32
    %838 = vector.broadcast %cst_216 : f32 to vector<1x128xf32>
    %839 = arith.addf %838, %837 : vector<1x128xf32>
    %840 = arith.divf %838, %839 : vector<1x128xf32>
    %841 = math.tanh %835 : vector<1x128xf32>
    %842 = vector.extract_strided_slice %840 {offsets = [0, 0], sizes = [1, 32], strides = [1, 1]} : vector<1x128xf32> to vector<1x32xf32>
    %843 = vector.extract_strided_slice %840 {offsets = [0, 32], sizes = [1, 32], strides = [1, 1]} : vector<1x128xf32> to vector<1x32xf32>
    %844 = vector.extract_strided_slice %841 {offsets = [0, 64], sizes = [1, 32], strides = [1, 1]} : vector<1x128xf32> to vector<1x32xf32>
    %845 = vector.extract_strided_slice %840 {offsets = [0, 96], sizes = [1, 32], strides = [1, 1]} : vector<1x128xf32> to vector<1x32xf32>
    %846 = arith.mulf %843, %830 : vector<1x32xf32>
    %847 = arith.mulf %842, %844 : vector<1x32xf32>
    %848 = arith.addf %846, %847 : vector<1x32xf32>
    %849 = math.tanh %848 : vector<1x32xf32>
    %850 = arith.mulf %845, %849 : vector<1x32xf32>
    %c0_217 = arith.constant 0 : index
    %c0_218 = arith.constant 0 : index
    %851 = vector.load %arg5[%c0_217, %c0_218] : memref<2x32xf32, #tpu.memory_space<vmem>>, vector<1x32xf32>
    tpu.vector_store %arg5[%c0_217, %c0_218], %850 {strides = array<i32>} : memref<2x32xf32, #tpu.memory_space<vmem>>, vector<1x32xf32>,
    %c1_219 = arith.constant 1 : index
    %c0_220 = arith.constant 0 : index
    %852 = vector.load %arg5[%c1_219, %c0_220] : memref<2x32xf32, #tpu.memory_space<vmem>>, vector<1x32xf32>
    tpu.vector_store %arg5[%c1_219, %c0_220], %724 {strides = array<i32>} : memref<2x32xf32, #tpu.memory_space<vmem>>, vector<1x32xf32>,
    return
  }
  func.func @transform_0(%arg0: i32) -> (i32, i32) {
    %c0_i32 = arith.constant 0 : i32
    %c0_i32_0 = arith.constant 0 : i32
    %c0_i32_1 = arith.constant 0 : i32
    return %c0_i32, %c0_i32_0 : i32, i32
  }
  func.func @transform_1(%arg0: i32) -> (i32, i32, i32) {
    %c0_i32 = arith.constant 0 : i32
    %c0_i32_0 = arith.constant 0 : i32
    %c0_i32_1 = arith.constant 0 : i32
    %c0_i32_2 = arith.constant 0 : i32
    return %c0_i32, %c0_i32_0, %c0_i32_1 : i32, i32, i32
  }
  func.func @transform_2(%arg0: i32) -> (i32, i32, i32) {
    %c0_i32 = arith.constant 0 : i32
    %c0_i32_0 = arith.constant 0 : i32
    %c0_i32_1 = arith.constant 0 : i32
    %c0_i32_2 = arith.constant 0 : i32
    return %c0_i32, %c0_i32_0, %c0_i32_1 : i32, i32, i32
  }
  func.func @transform_3(%arg0: i32) -> (i32, i32) {
    %c0_i32 = arith.constant 0 : i32
    %c0_i32_0 = arith.constant 0 : i32
    %c0_i32_1 = arith.constant 0 : i32
    return %c0_i32, %c0_i32_0 : i32, i32
  }
  func.func @transform_4(%arg0: i32) -> (i32, i32) {
    %c0_i32 = arith.constant 0 : i32
    %c0_i32_0 = arith.constant 0 : i32
    %c0_i32_1 = arith.constant 0 : i32
    return %c0_i32, %c0_i32_0 : i32, i32
  }
}

</mosaic_0001>

<llo_original>
// kernel: encoder_forward.1
$region0: #{encoder_forward.1}
  #allocation0 [shape = 'u32[]', space=smem, size = 0x4, offset = 0x4, fixed_abs, tag = 'smem constant byte address 0x4 - core index']
  #allocation1 [shape = 'u32[144,128]{1,0:T(1,128)}', space=vmem, size = 0x12000, scoped, tag = 'internal scratch']
  #allocation2 [shape = 'f32[8,32]{1,0:T(8,128)}', space=vmem, size = 0x1000, scoped, tag = 'scratch operand']
  #allocation3 [shape = 'f32[8,32]{1,0:T(8,128)}', space=vmem, size = 0x1000, scoped, tag = 'scratch operand']
  %s0 = inlined_call_operand.vmem [shape: f32[8,64], index: 0, kind: input, shape index: {}]
  %s1 = inlined_call_operand.hbm [shape: f32[6,64,128], index: 1, kind: input, shape index: {}]
  %s2 = inlined_call_operand.hbm [shape: f32[6,32,128], index: 2, kind: input, shape index: {}]
  %s3 = inlined_call_operand.vmem [shape: f32[6,128], index: 3, kind: input, shape index: {}]
  %s4 = inlined_call_operand.vmem [shape: f32[2,32], index: 4, kind: output, shape index: {}]
  %s5 = sld [smem:[#allocation0]]
  $region34: #{encoder_forward.1} parent=0
    _
  %s7 = ssub.s32 1, %s5
  %s8 = scalar_select 0, %s7, %s5
  $region1: #{encoder_forward.1} parent=0
    #allocation4 [shape = 'u8[196608]{0}', space=vmem, size = 0x30000, scoped, tag = 'input window, operand 1, single buffered']
    #allocation5 [shape = 's32[1]{0}', space=sflag, size = 0x4, scoped, tag = 'scoped memory for encoder_forward.1']
    #allocation6 [shape = 'u8[98304]{0}', space=vmem, size = 0x18000, scoped, tag = 'input window, operand 2, single buffered']
    #allocation7 [shape = 's32[1]{0}', space=sflag, size = 0x4, scoped, tag = 'scoped memory for encoder_forward.1']
    %9 = vsyncpa [#allocation5], 0
    %10 = vsyncpa [#allocation7], 0
    // Predicated region
    $region2: #{encoder_forward.1} parent=1 // pred_check
      _
    $region3: #{encoder_forward.1} parent=1 // pred_check_branch
      %12 = sbr.rel (0) target = $region5
    $region4: #{encoder_forward.1} parent=1 // pred_region
      _
    $region5: #{encoder_forward.1} parent=1 // pred_fallthru
      _
    // Predicated region
    $region6: #{encoder_forward.1} parent=1 // pred_check
      _
    $region7: #{encoder_forward.1} parent=1 // pred_check_branch
      %14 = sbr.rel (0) target = $region9
    $region8: #{encoder_forward.1} parent=1 // pred_region
      %s16 = ssub.s32 6144, 6144
      %17 = vsyncadd [#allocation5], %s16
      %s18 = sshll.u32 [#allocation4], 4
      %s19 = int_to_ptr.vmem [resolvable:$true] %s18
      %24 = dma.hbm_to_vmem [thread:$0]  %s1, 6144, %s19, [#allocation5], 128, 128, 8
    $region9: #{encoder_forward.1} parent=1 // pred_fallthru
      _
    // Predicated region
    $region10: #{encoder_forward.1} parent=1 // pred_check
      _
    $region11: #{encoder_forward.1} parent=1 // pred_check_branch
      %26 = sbr.rel (0) target = $region13
    $region12: #{encoder_forward.1} parent=1 // pred_region
      %s28 = ssub.s32 3072, 3072
      %29 = vsyncadd [#allocation7], %s28
      %s30 = sshll.u32 [#allocation6], 4
      %s31 = int_to_ptr.vmem [resolvable:$true] %s30
      %36 = dma.hbm_to_vmem [thread:$0]  %s2, 3072, %s31, [#allocation7], 128, 128, 8
    $region13: #{encoder_forward.1} parent=1 // pred_fallthru
      _
    // Predicated region
    $region14: #{encoder_forward.1} parent=1 // pred_check
      _
    $region15: #{encoder_forward.1} parent=1 // pred_check_branch
      %38 = sbr.rel (0) target = $region17
    $region16: #{encoder_forward.1} parent=1 // pred_region
      _
    $region17: #{encoder_forward.1} parent=1 // pred_fallthru
      _
    // Predicated region
    $region18: #{encoder_forward.1} parent=1 // pred_check
      _
    $region19: #{encoder_forward.1} parent=1 // pred_check_branch
      %40 = sbr.rel (0) target = $region21
    $region20: #{encoder_forward.1} parent=1 // pred_region
      %41 = dma.done [#allocation5], 6144
    $region21: #{encoder_forward.1} parent=1 // pred_fallthru
      _
    // Predicated region
    $region22: #{encoder_forward.1} parent=1 // pred_check
      _
    $region23: #{encoder_forward.1} parent=1 // pred_check_branch
      %43 = sbr.rel (0) target = $region25
    $region24: #{encoder_forward.1} parent=1 // pred_region
      %44 = dma.done [#allocation7], 3072
    $region25: #{encoder_forward.1} parent=1 // pred_fallthru
      _
    %v45 = vld [vmem:[%s0] sm:$0xff]
    %v46 = vld [vmem:[#allocation4] sm:$0xff]
    %v47 = vld [vmem:[#allocation4 + $0x8] sm:$0xff]
    %v48 = vld [vmem:[#allocation4 + $0x10] sm:$0xff]
    %v49 = vld [vmem:[#allocation4 + $0x18] sm:$0xff]
    %v50 = vld [vmem:[#allocation4 + $0x20] sm:$0xff]
    %v51 = vld [vmem:[#allocation4 + $0x28] sm:$0xff]
    %v52 = vld [vmem:[#allocation4 + $0x30] sm:$0xff]
    %v53 = vld [vmem:[#allocation4 + $0x38] sm:$0xff]
    %s54 = scalar_lea.vmem [#allocation4], 64
    %v55 = vld [vmem:[%s54] sm:$0xff]
    %v56 = vld [vmem:[%s54 + $0x8] sm:$0xff]
    %v57 = vld [vmem:[%s54 + $0x10] sm:$0xff]
    %v58 = vld [vmem:[%s54 + $0x18] sm:$0xff]
    %v59 = vld [vmem:[%s54 + $0x20] sm:$0xff]
    %v60 = vld [vmem:[%s54 + $0x28] sm:$0xff]
    %v61 = vld [vmem:[%s54 + $0x30] sm:$0xff]
    %v62 = vld [vmem:[%s54 + $0x38] sm:$0xff]
    %v63 = vld [vmem:[#allocation6] sm:$0xff]
    %v64 = vld [vmem:[#allocation6 + $0x8] sm:$0xff]
    %v65 = vld [vmem:[#allocation6 + $0x10] sm:$0xff]
    %v66 = vld [vmem:[#allocation6 + $0x18] sm:$0xff]
    %s67 = scalar_lea.vmem [#allocation6], 32
    %v68 = vld [vmem:[%s67] sm:$0xff]
    %v69 = vld [vmem:[%s67 + $0x8] sm:$0xff]
    %v70 = vld [vmem:[%s67 + $0x10] sm:$0xff]
    %v71 = vld [vmem:[%s67 + $0x18] sm:$0xff]
    %v72 = vld [vmem:[%s3] sm:$0x1]
    %v73 = vld [vmem:[%s3 + $0x1] sm:$0x1]
    %v74 = vlaneseq
    %v75 = vshrl.u32 %v74, 7
    %v76 = vsub.s32 0, %v75
    %v77 = vrot.slane %v72, %v76
    %vm78 = vcmask 523264
    %v80 = vsel %vm78, %v45, 0
    %82 = vmatprep.subr.mxu0 0.0
    %83 = vmatpush1.msra.mxu0 0.0
    %84 = vmatprep.subr.mxu0 0.0
    %85 = vmatpush1.msra.mxu0 0.0
    %86 = vmatprep.subr.mxu0 0.0
    %87 = vmatpush1.msra.mxu0 0.0
    %88 = vmatprep.subr.mxu0 0.0
    %89 = vmatpush1.msra.mxu0 0.0
    %90 = vmatprep.subr.mxu0 0.0
    %91 = vmatpush1.msra.mxu0 0.0
    %92 = vmatprep.subr.mxu0 0.0
    %93 = vmatpush1.msra.mxu0 0.0
    %94 = vmatprep.subr.mxu0 0.0
    %95 = vmatpush1.msra.mxu0 0.0
    %96 = vmatprep.subr.mxu0 0.0
    %97 = vmatpush1.msra.mxu0 0.0
    %98 = vmatprep.subr.mxu0 0.0
    %99 = vmatpush1.msra.mxu0 %v53
    %100 = vmatprep.subr.mxu0 0.0
    %101 = vmatpush1.msra.mxu0 %v52
    %102 = vmatprep.subr.mxu0 0.0
    %103 = vmatpush1.msra.mxu0 %v51
    %104 = vmatprep.subr.mxu0 0.0
    %105 = vmatpush1.msra.mxu0 %v50
    %106 = vmatprep.subr.mxu0 0.0
    %107 = vmatpush1.msra.mxu0 %v49
    %108 = vmatprep.subr.mxu0 0.0
    %109 = vmatpush1.msra.mxu0 %v48
    %110 = vmatprep.subr.mxu0 0.0
    %111 = vmatpush1.msra.mxu0 %v47
    %112 = vmatprep.subr.mxu0 0.0
    %113 = vmatpush1.msra.mxu0 %v46
    %114 = vmatprep.subr.mxu0 0.0
    %115 = vmatpush2.msra.mxu0 0.0
    %116 = vmatprep.subr.mxu0 0.0
    %117 = vmatpush2.msra.mxu0 0.0
    %118 = vmatprep.subr.mxu0 0.0
    %119 = vmatpush2.msra.mxu0 0.0
    %120 = vmatprep.subr.mxu0 0.0
    %121 = vmatpush2.msra.mxu0 0.0
    %122 = vmatprep.subr.mxu0 0.0
    %123 = vmatpush2.msra.mxu0 0.0
    %124 = vmatprep.subr.mxu0 0.0
    %125 = vmatpush2.msra.mxu0 0.0
    %126 = vmatprep.subr.mxu0 0.0
    %127 = vmatpush2.msra.mxu0 0.0
    %128 = vmatprep.subr.mxu0 0.0
    %129 = vmatpush2.msra.mxu0 0.0
    %130 = vmatprep.subr.mxu0 0.0
    %131 = vmatpush2.msra.mxu0 0.0
    %132 = vmatprep.subr.mxu0 0.0
    %133 = vmatpush2.msra.mxu0 0.0
    %134 = vmatprep.subr.mxu0 0.0
    %135 = vmatpush2.msra.mxu0 0.0
    %136 = vmatprep.subr.mxu0 0.0
    %137 = vmatpush2.msra.mxu0 0.0
    %138 = vmatprep.subr.mxu0 0.0
    %139 = vmatpush2.msra.mxu0 0.0
    %140 = vmatprep.subr.mxu0 0.0
    %141 = vmatpush2.msra.mxu0 0.0
    %142 = vmatprep.subr.mxu0 0.0
    %143 = vmatpush2.msra.mxu0 0.0
    %144 = vmatprep.subr.mxu0 0.0
    %145 = vmatpush2.msra.mxu0 0.0
    %146 = vmatprep.mubr.f32.mxu0 0.0
    %147 = vmatmul.mubr.f32.gmra.mxu0 %v80
    %v148 = vpop.f32.mrf.mxu0
    %v149 = vadd.f32 %v77, %v148
    %v150 = vpop.f32.mrf.mxu0
    %151 = vdwg.mxu0
    %v152 = vlaneseq
    %v153 = vshrl.u32 %v152, 7
    %v154 = vsub.s32 0, %v153
    %v155 = vrot.slane %v73, %v154
    %156 = vmatprep.subr.mxu0 0.0
    %157 = vmatpush1.msra.mxu0 0.0
    %158 = vmatprep.subr.mxu0 0.0
    %159 = vmatpush1.msra.mxu0 0.0
    %160 = vmatprep.subr.mxu0 0.0
    %161 = vmatpush1.msra.mxu0 0.0
    %162 = vmatprep.subr.mxu0 0.0
    %163 = vmatpush1.msra.mxu0 0.0
    %164 = vmatprep.subr.mxu0 0.0
    %165 = vmatpush1.msra.mxu0 0.0
    %166 = vmatprep.subr.mxu0 0.0
    %167 = vmatpush1.msra.mxu0 0.0
    %168 = vmatprep.subr.mxu0 0.0
    %169 = vmatpush1.msra.mxu0 0.0
    %170 = vmatprep.subr.mxu0 0.0
    %171 = vmatpush1.msra.mxu0 0.0
    %172 = vmatprep.subr.mxu0 0.0
    %173 = vmatpush1.msra.mxu0 %v62
    %174 = vmatprep.subr.mxu0 0.0
    %175 = vmatpush1.msra.mxu0 %v61
    %176 = vmatprep.subr.mxu0 0.0
    %177 = vmatpush1.msra.mxu0 %v60
    %178 = vmatprep.subr.mxu0 0.0
    %179 = vmatpush1.msra.mxu0 %v59
    %180 = vmatprep.subr.mxu0 0.0
    %181 = vmatpush1.msra.mxu0 %v58
    %182 = vmatprep.subr.mxu0 0.0
    %183 = vmatpush1.msra.mxu0 %v57
    %184 = vmatprep.subr.mxu0 0.0
    %185 = vmatpush1.msra.mxu0 %v56
    %186 = vmatprep.subr.mxu0 0.0
    %187 = vmatpush1.msra.mxu0 %v55
    %188 = vmatprep.subr.mxu0 0.0
    %189 = vmatpush2.msra.mxu0 0.0
    %190 = vmatprep.subr.mxu0 0.0
    %191 = vmatpush2.msra.mxu0 0.0
    %192 = vmatprep.subr.mxu0 0.0
    %193 = vmatpush2.msra.mxu0 0.0
    %194 = vmatprep.subr.mxu0 0.0
    %195 = vmatpush2.msra.mxu0 0.0
    %196 = vmatprep.subr.mxu0 0.0
    %197 = vmatpush2.msra.mxu0 0.0
    %198 = vmatprep.subr.mxu0 0.0
    %199 = vmatpush2.msra.mxu0 0.0
    %200 = vmatprep.subr.mxu0 0.0
    %201 = vmatpush2.msra.mxu0 0.0
    %202 = vmatprep.subr.mxu0 0.0
    %203 = vmatpush2.msra.mxu0 0.0
    %204 = vmatprep.subr.mxu0 0.0
    %205 = vmatpush2.msra.mxu0 0.0
    %206 = vmatprep.subr.mxu0 0.0
    %207 = vmatpush2.msra.mxu0 0.0
    %208 = vmatprep.subr.mxu0 0.0
    %209 = vmatpush2.msra.mxu0 0.0
    %210 = vmatprep.subr.mxu0 0.0
    %211 = vmatpush2.msra.mxu0 0.0
    %212 = vmatprep.subr.mxu0 0.0
    %213 = vmatpush2.msra.mxu0 0.0
    %214 = vmatprep.subr.mxu0 0.0
    %215 = vmatpush2.msra.mxu0 0.0
    %216 = vmatprep.subr.mxu0 0.0
    %217 = vmatpush2.msra.mxu0 0.0
    %218 = vmatprep.subr.mxu0 0.0
    %219 = vmatpush2.msra.mxu0 0.0
    %220 = vmatprep.mubr.f32.mxu0 0.0
    %221 = vmatmul.mubr.f32.gmra.mxu0 %v80
    %v222 = vpop.f32.mrf.mxu0
    %v223 = vadd.f32 %v155, %v222
    %v224 = vpop.f32.mrf.mxu0
    %225 = vdwg.mxu0
    %vm226 = vcmask 261120
    %v228 = vsel %vm226, 0.0, 0
    %230 = vmatprep.subr.mxu0 0.0
    %231 = vmatpush1.msra.mxu0 0.0
    %232 = vmatprep.subr.mxu0 0.0
    %233 = vmatpush1.msra.mxu0 0.0
    %234 = vmatprep.subr.mxu0 0.0
    %235 = vmatpush1.msra.mxu0 0.0
    %236 = vmatprep.subr.mxu0 0.0
    %237 = vmatpush1.msra.mxu0 0.0
    %238 = vmatprep.subr.mxu0 0.0
    %239 = vmatpush1.msra.mxu0 0.0
    %240 = vmatprep.subr.mxu0 0.0
    %241 = vmatpush1.msra.mxu0 0.0
    %242 = vmatprep.subr.mxu0 0.0
    %243 = vmatpush1.msra.mxu0 0.0
    %244 = vmatprep.subr.mxu0 0.0
    %245 = vmatpush1.msra.mxu0 0.0
    %246 = vmatprep.subr.mxu0 0.0
    %247 = vmatpush1.msra.mxu0 0.0
    %248 = vmatprep.subr.mxu0 0.0
    %249 = vmatpush1.msra.mxu0 0.0
    %250 = vmatprep.subr.mxu0 0.0
    %251 = vmatpush1.msra.mxu0 0.0
    %252 = vmatprep.subr.mxu0 0.0
    %253 = vmatpush1.msra.mxu0 0.0
    %254 = vmatprep.subr.mxu0 0.0
    %255 = vmatpush1.msra.mxu0 %v66
    %256 = vmatprep.subr.mxu0 0.0
    %257 = vmatpush1.msra.mxu0 %v65
    %258 = vmatprep.subr.mxu0 0.0
    %259 = vmatpush1.msra.mxu0 %v64
    %260 = vmatprep.subr.mxu0 0.0
    %261 = vmatpush1.msra.mxu0 %v63
    %262 = vmatprep.subr.mxu0 0.0
    %263 = vmatpush2.msra.mxu0 0.0
    %264 = vmatprep.subr.mxu0 0.0
    %265 = vmatpush2.msra.mxu0 0.0
    %266 = vmatprep.subr.mxu0 0.0
    %267 = vmatpush2.msra.mxu0 0.0
    %268 = vmatprep.subr.mxu0 0.0
    %269 = vmatpush2.msra.mxu0 0.0
    %270 = vmatprep.subr.mxu0 0.0
    %271 = vmatpush2.msra.mxu0 0.0
    %272 = vmatprep.subr.mxu0 0.0
    %273 = vmatpush2.msra.mxu0 0.0
    %274 = vmatprep.subr.mxu0 0.0
    %275 = vmatpush2.msra.mxu0 0.0
    %276 = vmatprep.subr.mxu0 0.0
    %277 = vmatpush2.msra.mxu0 0.0
    %278 = vmatprep.subr.mxu0 0.0
    %279 = vmatpush2.msra.mxu0 0.0
    %280 = vmatprep.subr.mxu0 0.0
    %281 = vmatpush2.msra.mxu0 0.0
    %282 = vmatprep.subr.mxu0 0.0
    %283 = vmatpush2.msra.mxu0 0.0
    %284 = vmatprep.subr.mxu0 0.0
    %285 = vmatpush2.msra.mxu0 0.0
    %286 = vmatprep.subr.mxu0 0.0
    %287 = vmatpush2.msra.mxu0 0.0
    %288 = vmatprep.subr.mxu0 0.0
    %289 = vmatpush2.msra.mxu0 0.0
    %290 = vmatprep.subr.mxu0 0.0
    %291 = vmatpush2.msra.mxu0 0.0
    %292 = vmatprep.subr.mxu0 0.0
    %293 = vmatpush2.msra.mxu0 0.0
    %294 = vmatprep.mubr.f32.mxu0 0.0
    %295 = vmatmul.mubr.f32.gmra.mxu0 %v228
    %v296 = vpop.f32.mrf.mxu0
    %v297 = vadd.f32 0.0, %v296
    %v298 = vpop.f32.mrf.mxu0
    %299 = vdwg.mxu0
    %v300 = vadd.f32 %v149, %v297
    %v301 = vxor.u32 %v300, 2147483648
    %v302 = vmul.f32 %v301, 1.442695
    %v303 = vpow.pop %v302
    %v304 = vadd.f32 %v303, 1.0
    %v305 = vrcp.pop %v304
    %v306 = vmul.f32 1.0, %v305
    %v307 = vtanh.pop %v300
    %v308 = vmul.f32 %v306, 0.0
    %310 = vrot.lane.b32.xlu0 %v307, 64
    %v311 = vpop.permute.xlu0 %310
    %v313 = vmul.f32 %v306, %v311
    %315 = vrot.lane.b32.xlu0 %v313, 32
    %v316 = vpop.permute.xlu0 %315
    %v318 = vadd.f32 %v308, %v316
    %v319 = vtanh.pop %v318
    %321 = vrot.lane.b32.xlu0 %v319, 64
    %v322 = vpop.permute.xlu0 %321
    %v324 = vmul.f32 %v306, %v322
    %326 = vrot.lane.b32.xlu0 %v324, 32
    %v327 = vpop.permute.xlu0 %326
    %vm329 = vcmask 253952
    %330 = vst.msk [vmem:[#allocation2] sm:$0x1] %vm329, %v327
    %331 = vmatprep.subr.mxu0 0.0
    %332 = vmatpush1.msra.mxu0 0.0
    %333 = vmatprep.subr.mxu0 0.0
    %334 = vmatpush1.msra.mxu0 0.0
    %335 = vmatprep.subr.mxu0 0.0
    %336 = vmatpush1.msra.mxu0 0.0
    %337 = vmatprep.subr.mxu0 0.0
    %338 = vmatpush1.msra.mxu0 0.0
    %339 = vmatprep.subr.mxu0 0.0
    %340 = vmatpush1.msra.mxu0 0.0
    %341 = vmatprep.subr.mxu0 0.0
    %342 = vmatpush1.msra.mxu0 0.0
    %343 = vmatprep.subr.mxu0 0.0
    %344 = vmatpush1.msra.mxu0 0.0
    %345 = vmatprep.subr.mxu0 0.0
    %346 = vmatpush1.msra.mxu0 0.0
    %347 = vmatprep.subr.mxu0 0.0
    %348 = vmatpush1.msra.mxu0 0.0
    %349 = vmatprep.subr.mxu0 0.0
    %350 = vmatpush1.msra.mxu0 0.0
    %351 = vmatprep.subr.mxu0 0.0
    %352 = vmatpush1.msra.mxu0 0.0
    %353 = vmatprep.subr.mxu0 0.0
    %354 = vmatpush1.msra.mxu0 0.0
    %355 = vmatprep.subr.mxu0 0.0
    %356 = vmatpush1.msra.mxu0 %v71
    %357 = vmatprep.subr.mxu0 0.0
    %358 = vmatpush1.msra.mxu0 %v70
    %359 = vmatprep.subr.mxu0 0.0
    %360 = vmatpush1.msra.mxu0 %v69
    %361 = vmatprep.subr.mxu0 0.0
    %362 = vmatpush1.msra.mxu0 %v68
    %363 = vmatprep.subr.mxu0 0.0
    %364 = vmatpush2.msra.mxu0 0.0
    %365 = vmatprep.subr.mxu0 0.0
    %366 = vmatpush2.msra.mxu0 0.0
    %367 = vmatprep.subr.mxu0 0.0
    %368 = vmatpush2.msra.mxu0 0.0
    %369 = vmatprep.subr.mxu0 0.0
    %370 = vmatpush2.msra.mxu0 0.0
    %371 = vmatprep.subr.mxu0 0.0
    %372 = vmatpush2.msra.mxu0 0.0
    %373 = vmatprep.subr.mxu0 0.0
    %374 = vmatpush2.msra.mxu0 0.0
    %375 = vmatprep.subr.mxu0 0.0
    %376 = vmatpush2.msra.mxu0 0.0
    %377 = vmatprep.subr.mxu0 0.0
    %378 = vmatpush2.msra.mxu0 0.0
    %379 = vmatprep.subr.mxu0 0.0
    %380 = vmatpush2.msra.mxu0 0.0
    %381 = vmatprep.subr.mxu0 0.0
    %382 = vmatpush2.msra.mxu0 0.0
    %383 = vmatprep.subr.mxu0 0.0
    %384 = vmatpush2.msra.mxu0 0.0
    %385 = vmatprep.subr.mxu0 0.0
    %386 = vmatpush2.msra.mxu0 0.0
    %387 = vmatprep.subr.mxu0 0.0
    %388 = vmatpush2.msra.mxu0 0.0
    %389 = vmatprep.subr.mxu0 0.0
    %390 = vmatpush2.msra.mxu0 0.0
    %391 = vmatprep.subr.mxu0 0.0
    %392 = vmatpush2.msra.mxu0 0.0
    %393 = vmatprep.subr.mxu0 0.0
    %394 = vmatpush2.msra.mxu0 0.0
    %395 = vmatprep.mubr.f32.mxu0 0.0
    %396 = vmatmul.mubr.f32.gmra.mxu0 %v228
    %v397 = vpop.f32.mrf.mxu0
    %v398 = vadd.f32 0.0, %v397
    %v399 = vpop.f32.mrf.mxu0
    %400 = vdwg.mxu0
    %v402 = vrot.slane %v398, 1
    %v404 = vadd.f32 %v223, %v402
    %v405 = vxor.u32 %v404, 2147483648
    %v406 = vmul.f32 %v405, 1.442695
    %v407 = vpow.pop %v406
    %v408 = vadd.f32 %v407, 1.0
    %v409 = vrcp.pop %v408
    %v410 = vmul.f32 1.0, %v409
    %v411 = vtanh.pop %v404
    %v412 = vmul.f32 %v410, 0.0
    %414 = vrot.lane.b32.xlu0 %v411, 64
    %v415 = vpop.permute.xlu0 %414
    %v417 = vmul.f32 %v410, %v415
    %419 = vrot.lane.b32.xlu0 %v417, 32
    %v420 = vpop.permute.xlu0 %419
    %v422 = vadd.f32 %v412, %v420
    %v423 = vtanh.pop %v422
    %425 = vrot.lane.b32.xlu0 %v423, 64
    %v426 = vpop.permute.xlu0 %425
    %v428 = vmul.f32 %v410, %v426
    %430 = vrot.lane.b32.xlu0 %v428, 32
    %v431 = vpop.permute.xlu0 %430
    %vm433 = vcmask 261127
    %434 = vst.msk [vmem:[#allocation3] sm:$0x80] %vm433, %v431
    %v435 = vsel %vm226, %v327, 0
    %437 = vmatprep.subr.mxu0 0.0
    %438 = vmatpush1.msra.mxu0 0.0
    %439 = vmatprep.subr.mxu0 0.0
    %440 = vmatpush1.msra.mxu0 0.0
    %441 = vmatprep.subr.mxu0 0.0
    %442 = vmatpush1.msra.mxu0 0.0
    %443 = vmatprep.subr.mxu0 0.0
    %444 = vmatpush1.msra.mxu0 0.0
    %445 = vmatprep.subr.mxu0 0.0
    %446 = vmatpush1.msra.mxu0 0.0
    %447 = vmatprep.subr.mxu0 0.0
    %448 = vmatpush1.msra.mxu0 0.0
    %449 = vmatprep.subr.mxu0 0.0
    %450 = vmatpush1.msra.mxu0 0.0
    %451 = vmatprep.subr.mxu0 0.0
    %452 = vmatpush1.msra.mxu0 0.0
    %453 = vmatprep.subr.mxu0 0.0
    %454 = vmatpush1.msra.mxu0 0.0
    %455 = vmatprep.subr.mxu0 0.0
    %456 = vmatpush1.msra.mxu0 0.0
    %457 = vmatprep.subr.mxu0 0.0
    %458 = vmatpush1.msra.mxu0 0.0
    %459 = vmatprep.subr.mxu0 0.0
    %460 = vmatpush1.msra.mxu0 0.0
    %461 = vmatprep.subr.mxu0 0.0
    %462 = vmatpush1.msra.mxu0 %v66
    %463 = vmatprep.subr.mxu0 0.0
    %464 = vmatpush1.msra.mxu0 %v65
    %465 = vmatprep.subr.mxu0 0.0
    %466 = vmatpush1.msra.mxu0 %v64
    %467 = vmatprep.subr.mxu0 0.0
    %468 = vmatpush1.msra.mxu0 %v63
    %469 = vmatprep.subr.mxu0 0.0
    %470 = vmatpush2.msra.mxu0 0.0
    %471 = vmatprep.subr.mxu0 0.0
    %472 = vmatpush2.msra.mxu0 0.0
    %473 = vmatprep.subr.mxu0 0.0
    %474 = vmatpush2.msra.mxu0 0.0
    %475 = vmatprep.subr.mxu0 0.0
    %476 = vmatpush2.msra.mxu0 0.0
    %477 = vmatprep.subr.mxu0 0.0
    %478 = vmatpush2.msra.mxu0 0.0
    %479 = vmatprep.subr.mxu0 0.0
    %480 = vmatpush2.msra.mxu0 0.0
    %481 = vmatprep.subr.mxu0 0.0
    %482 = vmatpush2.msra.mxu0 0.0
    %483 = vmatprep.subr.mxu0 0.0
    %484 = vmatpush2.msra.mxu0 0.0
    %485 = vmatprep.subr.mxu0 0.0
    %486 = vmatpush2.msra.mxu0 0.0
    %487 = vmatprep.subr.mxu0 0.0
    %488 = vmatpush2.msra.mxu0 0.0
    %489 = vmatprep.subr.mxu0 0.0
    %490 = vmatpush2.msra.mxu0 0.0
    %491 = vmatprep.subr.mxu0 0.0
    %492 = vmatpush2.msra.mxu0 0.0
    %493 = vmatprep.subr.mxu0 0.0
    %494 = vmatpush2.msra.mxu0 0.0
    %495 = vmatprep.subr.mxu0 0.0
    %496 = vmatpush2.msra.mxu0 0.0
    %497 = vmatprep.subr.mxu0 0.0
    %498 = vmatpush2.msra.mxu0 0.0
    %499 = vmatprep.subr.mxu0 0.0
    %500 = vmatpush2.msra.mxu0 0.0
    %501 = vmatprep.mubr.f32.mxu0 0.0
    %502 = vmatmul.mubr.f32.gmra.mxu0 %v435
    %v503 = vpop.f32.mrf.mxu0
    %v504 = vadd.f32 0.0, %v503
    %v505 = vpop.f32.mrf.mxu0
    %506 = vdwg.mxu0
    %v508 = vrot.slane %v504, 7
    %v510 = vadd.f32 %v149, %v508
    %v511 = vxor.u32 %v510, 2147483648
    %v512 = vmul.f32 %v511, 1.442695
    %v513 = vpow.pop %v512
    %v514 = vadd.f32 %v513, 1.0
    %v515 = vrcp.pop %v514
    %v516 = vmul.f32 1.0, %v515
    %v517 = vtanh.pop %v510
    %v519 = vrot.slane %v318, 7
    %v521 = vmul.f32 %v516, %v519
    %523 = vrot.lane.b32.xlu0 %v517, 64
    %v524 = vpop.permute.xlu0 %523
    %v526 = vmul.f32 %v516, %v524
    %528 = vrot.lane.b32.xlu0 %v526, 32
    %v529 = vpop.permute.xlu0 %528
    %v531 = vadd.f32 %v521, %v529
    %v532 = vtanh.pop %v531
    %534 = vrot.lane.b32.xlu0 %v532, 64
    %v535 = vpop.permute.xlu0 %534
    %v537 = vmul.f32 %v516, %v535
    %539 = vrot.lane.b32.xlu0 %v537, 32
    %v540 = vpop.permute.xlu0 %539
    %vm542 = vcmask 254977
    %543 = vst.msk [vmem:[#allocation2] sm:$0x2] %vm542, %v540
    %v544 = vrot.slane %v428, 7
    %545 = vrot.lane.b32.xlu0 %v544, 32
    %v546 = vpop.permute.xlu0 %545
    %v547 = vsel %vm226, %v546, 0
    %549 = vmatprep.subr.mxu0 0.0
    %550 = vmatpush1.msra.mxu0 0.0
    %551 = vmatprep.subr.mxu0 0.0
    %552 = vmatpush1.msra.mxu0 0.0
    %553 = vmatprep.subr.mxu0 0.0
    %554 = vmatpush1.msra.mxu0 0.0
    %555 = vmatprep.subr.mxu0 0.0
    %556 = vmatpush1.msra.mxu0 0.0
    %557 = vmatprep.subr.mxu0 0.0
    %558 = vmatpush1.msra.mxu0 0.0
    %559 = vmatprep.subr.mxu0 0.0
    %560 = vmatpush1.msra.mxu0 0.0
    %561 = vmatprep.subr.mxu0 0.0
    %562 = vmatpush1.msra.mxu0 0.0
    %563 = vmatprep.subr.mxu0 0.0
    %564 = vmatpush1.msra.mxu0 0.0
    %565 = vmatprep.subr.mxu0 0.0
    %566 = vmatpush1.msra.mxu0 0.0
    %567 = vmatprep.subr.mxu0 0.0
    %568 = vmatpush1.msra.mxu0 0.0
    %569 = vmatprep.subr.mxu0 0.0
    %570 = vmatpush1.msra.mxu0 0.0
    %571 = vmatprep.subr.mxu0 0.0
    %572 = vmatpush1.msra.mxu0 0.0
    %573 = vmatprep.subr.mxu0 0.0
    %574 = vmatpush1.msra.mxu0 %v71
    %575 = vmatprep.subr.mxu0 0.0
    %576 = vmatpush1.msra.mxu0 %v70
    %577 = vmatprep.subr.mxu0 0.0
    %578 = vmatpush1.msra.mxu0 %v69
    %579 = vmatprep.subr.mxu0 0.0
    %580 = vmatpush1.msra.mxu0 %v68
    %581 = vmatprep.subr.mxu0 0.0
    %582 = vmatpush2.msra.mxu0 0.0
    %583 = vmatprep.subr.mxu0 0.0
    %584 = vmatpush2.msra.mxu0 0.0
    %585 = vmatprep.subr.mxu0 0.0
    %586 = vmatpush2.msra.mxu0 0.0
    %587 = vmatprep.subr.mxu0 0.0
    %588 = vmatpush2.msra.mxu0 0.0
    %589 = vmatprep.subr.mxu0 0.0
    %590 = vmatpush2.msra.mxu0 0.0
    %591 = vmatprep.subr.mxu0 0.0
    %592 = vmatpush2.msra.mxu0 0.0
    %593 = vmatprep.subr.mxu0 0.0
    %594 = vmatpush2.msra.mxu0 0.0
    %595 = vmatprep.subr.mxu0 0.0
    %596 = vmatpush2.msra.mxu0 0.0
    %597 = vmatprep.subr.mxu0 0.0
    %598 = vmatpush2.msra.mxu0 0.0
    %599 = vmatprep.subr.mxu0 0.0
    %600 = vmatpush2.msra.mxu0 0.0
    %601 = vmatprep.subr.mxu0 0.0
    %602 = vmatpush2.msra.mxu0 0.0
    %603 = vmatprep.subr.mxu0 0.0
    %604 = vmatpush2.msra.mxu0 0.0
    %605 = vmatprep.subr.mxu0 0.0
    %606 = vmatpush2.msra.mxu0 0.0
    %607 = vmatprep.subr.mxu0 0.0
    %608 = vmatpush2.msra.mxu0 0.0
    %609 = vmatprep.subr.mxu0 0.0
    %610 = vmatpush2.msra.mxu0 0.0
    %611 = vmatprep.subr.mxu0 0.0
    %612 = vmatpush2.msra.mxu0 0.0
    %613 = vmatprep.mubr.f32.mxu0 0.0
    %614 = vmatmul.mubr.f32.gmra.mxu0 %v547
    %v615 = vpop.f32.mrf.mxu0
    %v616 = vadd.f32 0.0, %v615
    %v617 = vpop.f32.mrf.mxu0
    %618 = vdwg.mxu0
    %v620 = vrot.slane %v616, 2
    %v622 = vadd.f32 %v223, %v620
    %v623 = vxor.u32 %v622, 2147483648
    %v624 = vmul.f32 %v623, 1.442695
    %v625 = vpow.pop %v624
    %v626 = vadd.f32 %v625, 1.0
    %v627 = vrcp.pop %v626
    %v628 = vmul.f32 1.0, %v627
    %v629 = vtanh.pop %v622
    %v631 = vrot.slane %v422, 1
    %v633 = vmul.f32 %v628, %v631
    %635 = vrot.lane.b32.xlu0 %v629, 64
    %v636 = vpop.permute.xlu0 %635
    %v638 = vmul.f32 %v628, %v636
    %640 = vrot.lane.b32.xlu0 %v638, 32
    %v641 = vpop.permute.xlu0 %640
    %v643 = vadd.f32 %v633, %v641
    %v644 = vtanh.pop %v643
    %646 = vrot.lane.b32.xlu0 %v644, 64
    %v647 = vpop.permute.xlu0 %646
    %v649 = vmul.f32 %v628, %v647
    %651 = vrot.lane.b32.xlu0 %v649, 32
    %v652 = vpop.permute.xlu0 %651
    %vm654 = vcmask 260102
    %655 = vst.msk [vmem:[#allocation3] sm:$0x40] %vm654, %v652
    %v656 = vrot.slane %v537, 1
    %657 = vrot.lane.b32.xlu0 %v656, 32
    %v658 = vpop.permute.xlu0 %657
    %v659 = vsel %vm226, %v658, 0
    %661 = vmatprep.subr.mxu0 0.0
    %662 = vmatpush1.msra.mxu0 0.0
    %663 = vmatprep.subr.mxu0 0.0
    %664 = vmatpush1.msra.mxu0 0.0
    %665 = vmatprep.subr.mxu0 0.0
    %666 = vmatpush1.msra.mxu0 0.0
    %667 = vmatprep.subr.mxu0 0.0
    %668 = vmatpush1.msra.mxu0 0.0
    %669 = vmatprep.subr.mxu0 0.0
    %670 = vmatpush1.msra.mxu0 0.0
    %671 = vmatprep.subr.mxu0 0.0
    %672 = vmatpush1.msra.mxu0 0.0
    %673 = vmatprep.subr.mxu0 0.0
    %674 = vmatpush1.msra.mxu0 0.0
    %675 = vmatprep.subr.mxu0 0.0
    %676 = vmatpush1.msra.mxu0 0.0
    %677 = vmatprep.subr.mxu0 0.0
    %678 = vmatpush1.msra.mxu0 0.0
    %679 = vmatprep.subr.mxu0 0.0
    %680 = vmatpush1.msra.mxu0 0.0
    %681 = vmatprep.subr.mxu0 0.0
    %682 = vmatpush1.msra.mxu0 0.0
    %683 = vmatprep.subr.mxu0 0.0
    %684 = vmatpush1.msra.mxu0 0.0
    %685 = vmatprep.subr.mxu0 0.0
    %686 = vmatpush1.msra.mxu0 %v66
    %687 = vmatprep.subr.mxu0 0.0
    %688 = vmatpush1.msra.mxu0 %v65
    %689 = vmatprep.subr.mxu0 0.0
    %690 = vmatpush1.msra.mxu0 %v64
    %691 = vmatprep.subr.mxu0 0.0
    %692 = vmatpush1.msra.mxu0 %v63
    %693 = vmatprep.subr.mxu0 0.0
    %694 = vmatpush2.msra.mxu0 0.0
    %695 = vmatprep.subr.mxu0 0.0
    %696 = vmatpush2.msra.mxu0 0.0
    %697 = vmatprep.subr.mxu0 0.0
    %698 = vmatpush2.msra.mxu0 0.0
    %699 = vmatprep.subr.mxu0 0.0
    %700 = vmatpush2.msra.mxu0 0.0
    %701 = vmatprep.subr.mxu0 0.0
    %702 = vmatpush2.msra.mxu0 0.0
    %703 = vmatprep.subr.mxu0 0.0
    %704 = vmatpush2.msra.mxu0 0.0
    %705 = vmatprep.subr.mxu0 0.0
    %706 = vmatpush2.msra.mxu0 0.0
    %707 = vmatprep.subr.mxu0 0.0
    %708 = vmatpush2.msra.mxu0 0.0
    %709 = vmatprep.subr.mxu0 0.0
    %710 = vmatpush2.msra.mxu0 0.0
    %711 = vmatprep.subr.mxu0 0.0
    %712 = vmatpush2.msra.mxu0 0.0
    %713 = vmatprep.subr.mxu0 0.0
    %714 = vmatpush2.msra.mxu0 0.0
    %715 = vmatprep.subr.mxu0 0.0
    %716 = vmatpush2.msra.mxu0 0.0
    %717 = vmatprep.subr.mxu0 0.0
    %718 = vmatpush2.msra.mxu0 0.0
    %719 = vmatprep.subr.mxu0 0.0
    %720 = vmatpush2.msra.mxu0 0.0
    %721 = vmatprep.subr.mxu0 0.0
    %722 = vmatpush2.msra.mxu0 0.0
    %723 = vmatprep.subr.mxu0 0.0
    %724 = vmatpush2.msra.mxu0 0.0
    %725 = vmatprep.mubr.f32.mxu0 0.0
    %726 = vmatmul.mubr.f32.gmra.mxu0 %v659
    %v727 = vpop.f32.mrf.mxu0
    %v728 = vadd.f32 0.0, %v727
    %v729 = vpop.f32.mrf.mxu0
    %730 = vdwg.mxu0
    %v732 = vrot.slane %v728, 6
    %v734 = vadd.f32 %v149, %v732
    %v735 = vxor.u32 %v734, 2147483648
    %v736 = vmul.f32 %v735, 1.442695
    %v737 = vpow.pop %v736
    %v738 = vadd.f32 %v737, 1.0
    %v739 = vrcp.pop %v738
    %v740 = vmul.f32 1.0, %v739
    %v741 = vtanh.pop %v734
    %v743 = vrot.slane %v531, 7
    %v745 = vmul.f32 %v740, %v743
    %747 = vrot.lane.b32.xlu0 %v741, 64
    %v748 = vpop.permute.xlu0 %747
    %v750 = vmul.f32 %v740, %v748
    %752 = vrot.lane.b32.xlu0 %v750, 32
    %v753 = vpop.permute.xlu0 %752
    %v755 = vadd.f32 %v745, %v753
    %v756 = vtanh.pop %v755
    %758 = vrot.lane.b32.xlu0 %v756, 64
    %v759 = vpop.permute.xlu0 %758
    %v761 = vmul.f32 %v740, %v759
    %763 = vrot.lane.b32.xlu0 %v761, 32
    %v764 = vpop.permute.xlu0 %763
    %vm766 = vcmask 256002
    %767 = vst.msk [vmem:[#allocation2] sm:$0x4] %vm766, %v764
    %v768 = vrot.slane %v649, 6
    %769 = vrot.lane.b32.xlu0 %v768, 32
    %v770 = vpop.permute.xlu0 %769
    %v771 = vsel %vm226, %v770, 0
    %773 = vmatprep.subr.mxu0 0.0
    %774 = vmatpush1.msra.mxu0 0.0
    %775 = vmatprep.subr.mxu0 0.0
    %776 = vmatpush1.msra.mxu0 0.0
    %777 = vmatprep.subr.mxu0 0.0
    %778 = vmatpush1.msra.mxu0 0.0
    %779 = vmatprep.subr.mxu0 0.0
    %780 = vmatpush1.msra.mxu0 0.0
    %781 = vmatprep.subr.mxu0 0.0
    %782 = vmatpush1.msra.mxu0 0.0
    %783 = vmatprep.subr.mxu0 0.0
    %784 = vmatpush1.msra.mxu0 0.0
    %785 = vmatprep.subr.mxu0 0.0
    %786 = vmatpush1.msra.mxu0 0.0
    %787 = vmatprep.subr.mxu0 0.0
    %788 = vmatpush1.msra.mxu0 0.0
    %789 = vmatprep.subr.mxu0 0.0
    %790 = vmatpush1.msra.mxu0 0.0
    %791 = vmatprep.subr.mxu0 0.0
    %792 = vmatpush1.msra.mxu0 0.0
    %793 = vmatprep.subr.mxu0 0.0
    %794 = vmatpush1.msra.mxu0 0.0
    %795 = vmatprep.subr.mxu0 0.0
    %796 = vmatpush1.msra.mxu0 0.0
    %797 = vmatprep.subr.mxu0 0.0
    %798 = vmatpush1.msra.mxu0 %v71
    %799 = vmatprep.subr.mxu0 0.0
    %800 = vmatpush1.msra.mxu0 %v70
    %801 = vmatprep.subr.mxu0 0.0
    %802 = vmatpush1.msra.mxu0 %v69
    %803 = vmatprep.subr.mxu0 0.0
    %804 = vmatpush1.msra.mxu0 %v68
    %805 = vmatprep.subr.mxu0 0.0
    %806 = vmatpush2.msra.mxu0 0.0
    %807 = vmatprep.subr.mxu0 0.0
    %808 = vmatpush2.msra.mxu0 0.0
    %809 = vmatprep.subr.mxu0 0.0
    %810 = vmatpush2.msra.mxu0 0.0
    %811 = vmatprep.subr.mxu0 0.0
    %812 = vmatpush2.msra.mxu0 0.0
    %813 = vmatprep.subr.mxu0 0.0
    %814 = vmatpush2.msra.mxu0 0.0
    %815 = vmatprep.subr.mxu0 0.0
    %816 = vmatpush2.msra.mxu0 0.0
    %817 = vmatprep.subr.mxu0 0.0
    %818 = vmatpush2.msra.mxu0 0.0
    %819 = vmatprep.subr.mxu0 0.0
    %820 = vmatpush2.msra.mxu0 0.0
    %821 = vmatprep.subr.mxu0 0.0
    %822 = vmatpush2.msra.mxu0 0.0
    %823 = vmatprep.subr.mxu0 0.0
    %824 = vmatpush2.msra.mxu0 0.0
    %825 = vmatprep.subr.mxu0 0.0
    %826 = vmatpush2.msra.mxu0 0.0
    %827 = vmatprep.subr.mxu0 0.0
    %828 = vmatpush2.msra.mxu0 0.0
    %829 = vmatprep.subr.mxu0 0.0
    %830 = vmatpush2.msra.mxu0 0.0
    %831 = vmatprep.subr.mxu0 0.0
    %832 = vmatpush2.msra.mxu0 0.0
    %833 = vmatprep.subr.mxu0 0.0
    %834 = vmatpush2.msra.mxu0 0.0
    %835 = vmatprep.subr.mxu0 0.0
    %836 = vmatpush2.msra.mxu0 0.0
    %837 = vmatprep.mubr.f32.mxu0 0.0
    %838 = vmatmul.mubr.f32.gmra.mxu0 %v771
    %v839 = vpop.f32.mrf.mxu0
    %v840 = vadd.f32 0.0, %v839
    %v841 = vpop.f32.mrf.mxu0
    %842 = vdwg.mxu0
    %v844 = vrot.slane %v840, 3
    %v846 = vadd.f32 %v223, %v844
    %v847 = vxor.u32 %v846, 2147483648
    %v848 = vmul.f32 %v847, 1.442695
    %v849 = vpow.pop %v848
    %v850 = vadd.f32 %v849, 1.0
    %v851 = vrcp.pop %v850
    %v852 = vmul.f32 1.0, %v851
    %v853 = vtanh.pop %v846
    %v855 = vrot.slane %v643, 1
    %v857 = vmul.f32 %v852, %v855
    %859 = vrot.lane.b32.xlu0 %v853, 64
    %v860 = vpop.permute.xlu0 %859
    %v862 = vmul.f32 %v852, %v860
    %864 = vrot.lane.b32.xlu0 %v862, 32
    %v865 = vpop.permute.xlu0 %864
    %v867 = vadd.f32 %v857, %v865
    %v868 = vtanh.pop %v867
    %870 = vrot.lane.b32.xlu0 %v868, 64
    %v871 = vpop.permute.xlu0 %870
    %v873 = vmul.f32 %v852, %v871
    %875 = vrot.lane.b32.xlu0 %v873, 32
    %v876 = vpop.permute.xlu0 %875
    %vm878 = vcmask 259077
    %879 = vst.msk [vmem:[#allocation3] sm:$0x20] %vm878, %v876
    %v880 = vrot.slane %v761, 2
    %881 = vrot.lane.b32.xlu0 %v880, 32
    %v882 = vpop.permute.xlu0 %881
    %v883 = vsel %vm226, %v882, 0
    %885 = vmatprep.subr.mxu0 0.0
    %886 = vmatpush1.msra.mxu0 0.0
    %887 = vmatprep.subr.mxu0 0.0
    %888 = vmatpush1.msra.mxu0 0.0
    %889 = vmatprep.subr.mxu0 0.0
    %890 = vmatpush1.msra.mxu0 0.0
    %891 = vmatprep.subr.mxu0 0.0
    %892 = vmatpush1.msra.mxu0 0.0
    %893 = vmatprep.subr.mxu0 0.0
    %894 = vmatpush1.msra.mxu0 0.0
    %895 = vmatprep.subr.mxu0 0.0
    %896 = vmatpush1.msra.mxu0 0.0
    %897 = vmatprep.subr.mxu0 0.0
    %898 = vmatpush1.msra.mxu0 0.0
    %899 = vmatprep.subr.mxu0 0.0
    %900 = vmatpush1.msra.mxu0 0.0
    %901 = vmatprep.subr.mxu0 0.0
    %902 = vmatpush1.msra.mxu0 0.0
    %903 = vmatprep.subr.mxu0 0.0
    %904 = vmatpush1.msra.mxu0 0.0
    %905 = vmatprep.subr.mxu0 0.0
    %906 = vmatpush1.msra.mxu0 0.0
    %907 = vmatprep.subr.mxu0 0.0
    %908 = vmatpush1.msra.mxu0 0.0
    %909 = vmatprep.subr.mxu0 0.0
    %910 = vmatpush1.msra.mxu0 %v66
    %911 = vmatprep.subr.mxu0 0.0
    %912 = vmatpush1.msra.mxu0 %v65
    %913 = vmatprep.subr.mxu0 0.0
    %914 = vmatpush1.msra.mxu0 %v64
    %915 = vmatprep.subr.mxu0 0.0
    %916 = vmatpush1.msra.mxu0 %v63
    %917 = vmatprep.subr.mxu0 0.0
    %918 = vmatpush2.msra.mxu0 0.0
    %919 = vmatprep.subr.mxu0 0.0
    %920 = vmatpush2.msra.mxu0 0.0
    %921 = vmatprep.subr.mxu0 0.0
    %922 = vmatpush2.msra.mxu0 0.0
    %923 = vmatprep.subr.mxu0 0.0
    %924 = vmatpush2.msra.mxu0 0.0
    %925 = vmatprep.subr.mxu0 0.0
    %926 = vmatpush2.msra.mxu0 0.0
    %927 = vmatprep.subr.mxu0 0.0
    %928 = vmatpush2.msra.mxu0 0.0
    %929 = vmatprep.subr.mxu0 0.0
    %930 = vmatpush2.msra.mxu0 0.0
    %931 = vmatprep.subr.mxu0 0.0
    %932 = vmatpush2.msra.mxu0 0.0
    %933 = vmatprep.subr.mxu0 0.0
    %934 = vmatpush2.msra.mxu0 0.0
    %935 = vmatprep.subr.mxu0 0.0
    %936 = vmatpush2.msra.mxu0 0.0
    %937 = vmatprep.subr.mxu0 0.0
    %938 = vmatpush2.msra.mxu0 0.0
    %939 = vmatprep.subr.mxu0 0.0
    %940 = vmatpush2.msra.mxu0 0.0
    %941 = vmatprep.subr.mxu0 0.0
    %942 = vmatpush2.msra.mxu0 0.0
    %943 = vmatprep.subr.mxu0 0.0
    %944 = vmatpush2.msra.mxu0 0.0
    %945 = vmatprep.subr.mxu0 0.0
    %946 = vmatpush2.msra.mxu0 0.0
    %947 = vmatprep.subr.mxu0 0.0
    %948 = vmatpush2.msra.mxu0 0.0
    %949 = vmatprep.mubr.f32.mxu0 0.0
    %950 = vmatmul.mubr.f32.gmra.mxu0 %v883
    %v951 = vpop.f32.mrf.mxu0
    %v952 = vadd.f32 0.0, %v951
    %v953 = vpop.f32.mrf.mxu0
    %954 = vdwg.mxu0
    %v956 = vrot.slane %v952, 5
    %v958 = vadd.f32 %v149, %v956
    %v959 = vxor.u32 %v958, 2147483648
    %v960 = vmul.f32 %v959, 1.442695
    %v961 = vpow.pop %v960
    %v962 = vadd.f32 %v961, 1.0
    %v963 = vrcp.pop %v962
    %v964 = vmul.f32 1.0, %v963
    %v965 = vtanh.pop %v958
    %v967 = vrot.slane %v755, 7
    %v969 = vmul.f32 %v964, %v967
    %971 = vrot.lane.b32.xlu0 %v965, 64
    %v972 = vpop.permute.xlu0 %971
    %v974 = vmul.f32 %v964, %v972
    %976 = vrot.lane.b32.xlu0 %v974, 32
    %v977 = vpop.permute.xlu0 %976
    %v979 = vadd.f32 %v969, %v977
    %v980 = vtanh.pop %v979
    %982 = vrot.lane.b32.xlu0 %v980, 64
    %v983 = vpop.permute.xlu0 %982
    %v985 = vmul.f32 %v964, %v983
    %987 = vrot.lane.b32.xlu0 %v985, 32
    %v988 = vpop.permute.xlu0 %987
    %vm990 = vcmask 257027
    %991 = vst.msk [vmem:[#allocation2] sm:$0x8] %vm990, %v988
    %v992 = vrot.slane %v873, 5
    %993 = vrot.lane.b32.xlu0 %v992, 32
    %v994 = vpop.permute.xlu0 %993
    %v995 = vsel %vm226, %v994, 0
    %997 = vmatprep.subr.mxu0 0.0
    %998 = vmatpush1.msra.mxu0 0.0
    %999 = vmatprep.subr.mxu0 0.0
    %1000 = vmatpush1.msra.mxu0 0.0
    %1001 = vmatprep.subr.mxu0 0.0
    %1002 = vmatpush1.msra.mxu0 0.0
    %1003 = vmatprep.subr.mxu0 0.0
    %1004 = vmatpush1.msra.mxu0 0.0
    %1005 = vmatprep.subr.mxu0 0.0
    %1006 = vmatpush1.msra.mxu0 0.0
    %1007 = vmatprep.subr.mxu0 0.0
    %1008 = vmatpush1.msra.mxu0 0.0
    %1009 = vmatprep.subr.mxu0 0.0
    %1010 = vmatpush1.msra.mxu0 0.0
    %1011 = vmatprep.subr.mxu0 0.0
    %1012 = vmatpush1.msra.mxu0 0.0
    %1013 = vmatprep.subr.mxu0 0.0
    %1014 = vmatpush1.msra.mxu0 0.0
    %1015 = vmatprep.subr.mxu0 0.0
    %1016 = vmatpush1.msra.mxu0 0.0
    %1017 = vmatprep.subr.mxu0 0.0
    %1018 = vmatpush1.msra.mxu0 0.0
    %1019 = vmatprep.subr.mxu0 0.0
    %1020 = vmatpush1.msra.mxu0 0.0
    %1021 = vmatprep.subr.mxu0 0.0
    %1022 = vmatpush1.msra.mxu0 %v71
    %1023 = vmatprep.subr.mxu0 0.0
    %1024 = vmatpush1.msra.mxu0 %v70
    %1025 = vmatprep.subr.mxu0 0.0
    %1026 = vmatpush1.msra.mxu0 %v69
    %1027 = vmatprep.subr.mxu0 0.0
    %1028 = vmatpush1.msra.mxu0 %v68
    %1029 = vmatprep.subr.mxu0 0.0
    %1030 = vmatpush2.msra.mxu0 0.0
    %1031 = vmatprep.subr.mxu0 0.0
    %1032 = vmatpush2.msra.mxu0 0.0
    %1033 = vmatprep.subr.mxu0 0.0
    %1034 = vmatpush2.msra.mxu0 0.0
    %1035 = vmatprep.subr.mxu0 0.0
    %1036 = vmatpush2.msra.mxu0 0.0
    %1037 = vmatprep.subr.mxu0 0.0
    %1038 = vmatpush2.msra.mxu0 0.0
    %1039 = vmatprep.subr.mxu0 0.0
    %1040 = vmatpush2.msra.mxu0 0.0
    %1041 = vmatprep.subr.mxu0 0.0
    %1042 = vmatpush2.msra.mxu0 0.0
    %1043 = vmatprep.subr.mxu0 0.0
    %1044 = vmatpush2.msra.mxu0 0.0
    %1045 = vmatprep.subr.mxu0 0.0
    %1046 = vmatpush2.msra.mxu0 0.0
    %1047 = vmatprep.subr.mxu0 0.0
    %1048 = vmatpush2.msra.mxu0 0.0
    %1049 = vmatprep.subr.mxu0 0.0
    %1050 = vmatpush2.msra.mxu0 0.0
    %1051 = vmatprep.subr.mxu0 0.0
    %1052 = vmatpush2.msra.mxu0 0.0
    %1053 = vmatprep.subr.mxu0 0.0
    %1054 = vmatpush2.msra.mxu0 0.0
    %1055 = vmatprep.subr.mxu0 0.0
    %1056 = vmatpush2.msra.mxu0 0.0
    %1057 = vmatprep.subr.mxu0 0.0
    %1058 = vmatpush2.msra.mxu0 0.0
    %1059 = vmatprep.subr.mxu0 0.0
    %1060 = vmatpush2.msra.mxu0 0.0
    %1061 = vmatprep.mubr.f32.mxu0 0.0
    %1062 = vmatmul.mubr.f32.gmra.mxu0 %v995
    %v1063 = vpop.f32.mrf.mxu0
    %v1064 = vadd.f32 0.0, %v1063
    %v1065 = vpop.f32.mrf.mxu0
    %1066 = vdwg.mxu0
    %v1068 = vrot.slane %v1064, 4
    %v1070 = vadd.f32 %v223, %v1068
    %v1071 = vxor.u32 %v1070, 2147483648
    %v1072 = vmul.f32 %v1071, 1.442695
    %v1073 = vpow.pop %v1072
    %v1074 = vadd.f32 %v1073, 1.0
    %v1075 = vrcp.pop %v1074
    %v1076 = vmul.f32 1.0, %v1075
    %v1077 = vtanh.pop %v1070
    %v1079 = vrot.slane %v867, 1
    %v1081 = vmul.f32 %v1076, %v1079
    %1083 = vrot.lane.b32.xlu0 %v1077, 64
    %v1084 = vpop.permute.xlu0 %1083
    %v1086 = vmul.f32 %v1076, %v1084
    %1088 = vrot.lane.b32.xlu0 %v1086, 32
    %v1089 = vpop.permute.xlu0 %1088
    %v1091 = vadd.f32 %v1081, %v1089
    %v1092 = vtanh.pop %v1091
    %1094 = vrot.lane.b32.xlu0 %v1092, 64
    %v1095 = vpop.permute.xlu0 %1094
    %v1097 = vmul.f32 %v1076, %v1095
    %1099 = vrot.lane.b32.xlu0 %v1097, 32
    %v1100 = vpop.permute.xlu0 %1099
    %vm1102 = vcmask 258052
    %1103 = vst.msk [vmem:[#allocation3] sm:$0x10] %vm1102, %v1100
    %v1104 = vrot.slane %v985, 3
    %1105 = vrot.lane.b32.xlu0 %v1104, 32
    %v1106 = vpop.permute.xlu0 %1105
    %v1107 = vsel %vm226, %v1106, 0
    %1109 = vmatprep.subr.mxu0 0.0
    %1110 = vmatpush1.msra.mxu0 0.0
    %1111 = vmatprep.subr.mxu0 0.0
    %1112 = vmatpush1.msra.mxu0 0.0
    %1113 = vmatprep.subr.mxu0 0.0
    %1114 = vmatpush1.msra.mxu0 0.0
    %1115 = vmatprep.subr.mxu0 0.0
    %1116 = vmatpush1.msra.mxu0 0.0
    %1117 = vmatprep.subr.mxu0 0.0
    %1118 = vmatpush1.msra.mxu0 0.0
    %1119 = vmatprep.subr.mxu0 0.0
    %1120 = vmatpush1.msra.mxu0 0.0
    %1121 = vmatprep.subr.mxu0 0.0
    %1122 = vmatpush1.msra.mxu0 0.0
    %1123 = vmatprep.subr.mxu0 0.0
    %1124 = vmatpush1.msra.mxu0 0.0
    %1125 = vmatprep.subr.mxu0 0.0
    %1126 = vmatpush1.msra.mxu0 0.0
    %1127 = vmatprep.subr.mxu0 0.0
    %1128 = vmatpush1.msra.mxu0 0.0
    %1129 = vmatprep.subr.mxu0 0.0
    %1130 = vmatpush1.msra.mxu0 0.0
    %1131 = vmatprep.subr.mxu0 0.0
    %1132 = vmatpush1.msra.mxu0 0.0
    %1133 = vmatprep.subr.mxu0 0.0
    %1134 = vmatpush1.msra.mxu0 %v66
    %1135 = vmatprep.subr.mxu0 0.0
    %1136 = vmatpush1.msra.mxu0 %v65
    %1137 = vmatprep.subr.mxu0 0.0
    %1138 = vmatpush1.msra.mxu0 %v64
    %1139 = vmatprep.subr.mxu0 0.0
    %1140 = vmatpush1.msra.mxu0 %v63
    %1141 = vmatprep.subr.mxu0 0.0
    %1142 = vmatpush2.msra.mxu0 0.0
    %1143 = vmatprep.subr.mxu0 0.0
    %1144 = vmatpush2.msra.mxu0 0.0
    %1145 = vmatprep.subr.mxu0 0.0
    %1146 = vmatpush2.msra.mxu0 0.0
    %1147 = vmatprep.subr.mxu0 0.0
    %1148 = vmatpush2.msra.mxu0 0.0
    %1149 = vmatprep.subr.mxu0 0.0
    %1150 = vmatpush2.msra.mxu0 0.0
    %1151 = vmatprep.subr.mxu0 0.0
    %1152 = vmatpush2.msra.mxu0 0.0
    %1153 = vmatprep.subr.mxu0 0.0
    %1154 = vmatpush2.msra.mxu0 0.0
    %1155 = vmatprep.subr.mxu0 0.0
    %1156 = vmatpush2.msra.mxu0 0.0
    %1157 = vmatprep.subr.mxu0 0.0
    %1158 = vmatpush2.msra.mxu0 0.0
    %1159 = vmatprep.subr.mxu0 0.0
    %1160 = vmatpush2.msra.mxu0 0.0
    %1161 = vmatprep.subr.mxu0 0.0
    %1162 = vmatpush2.msra.mxu0 0.0
    %1163 = vmatprep.subr.mxu0 0.0
    %1164 = vmatpush2.msra.mxu0 0.0
    %1165 = vmatprep.subr.mxu0 0.0
    %1166 = vmatpush2.msra.mxu0 0.0
    %1167 = vmatprep.subr.mxu0 0.0
    %1168 = vmatpush2.msra.mxu0 0.0
    %1169 = vmatprep.subr.mxu0 0.0
    %1170 = vmatpush2.msra.mxu0 0.0
    %1171 = vmatprep.subr.mxu0 0.0
    %1172 = vmatpush2.msra.mxu0 0.0
    %1173 = vmatprep.mubr.f32.mxu0 0.0
    %1174 = vmatmul.mubr.f32.gmra.mxu0 %v1107
    %v1175 = vpop.f32.mrf.mxu0
    %v1176 = vadd.f32 0.0, %v1175
    %v1177 = vpop.f32.mrf.mxu0
    %1178 = vdwg.mxu0
    %v1180 = vrot.slane %v1176, 4
    %v1182 = vadd.f32 %v149, %v1180
    %v1183 = vxor.u32 %v1182, 2147483648
    %v1184 = vmul.f32 %v1183, 1.442695
    %v1185 = vpow.pop %v1184
    %v1186 = vadd.f32 %v1185, 1.0
    %v1187 = vrcp.pop %v1186
    %v1188 = vmul.f32 1.0, %v1187
    %v1189 = vtanh.pop %v1182
    %v1191 = vrot.slane %v979, 7
    %v1193 = vmul.f32 %v1188, %v1191
    %1195 = vrot.lane.b32.xlu0 %v1189, 64
    %v1196 = vpop.permute.xlu0 %1195
    %v1198 = vmul.f32 %v1188, %v1196
    %1200 = vrot.lane.b32.xlu0 %v1198, 32
    %v1201 = vpop.permute.xlu0 %1200
    %v1203 = vadd.f32 %v1193, %v1201
    %v1204 = vtanh.pop %v1203
    %1206 = vrot.lane.b32.xlu0 %v1204, 64
    %v1207 = vpop.permute.xlu0 %1206
    %v1209 = vmul.f32 %v1188, %v1207
    %1211 = vrot.lane.b32.xlu0 %v1209, 32
    %v1212 = vpop.permute.xlu0 %1211
    %1214 = vst.msk [vmem:[#allocation2] sm:$0x10] %vm1102, %v1212
    %v1215 = vrot.slane %v1097, 4
    %1216 = vrot.lane.b32.xlu0 %v1215, 32
    %v1217 = vpop.permute.xlu0 %1216
    %v1218 = vsel %vm226, %v1217, 0
    %1220 = vmatprep.subr.mxu0 0.0
    %1221 = vmatpush1.msra.mxu0 0.0
    %1222 = vmatprep.subr.mxu0 0.0
    %1223 = vmatpush1.msra.mxu0 0.0
    %1224 = vmatprep.subr.mxu0 0.0
    %1225 = vmatpush1.msra.mxu0 0.0
    %1226 = vmatprep.subr.mxu0 0.0
    %1227 = vmatpush1.msra.mxu0 0.0
    %1228 = vmatprep.subr.mxu0 0.0
    %1229 = vmatpush1.msra.mxu0 0.0
    %1230 = vmatprep.subr.mxu0 0.0
    %1231 = vmatpush1.msra.mxu0 0.0
    %1232 = vmatprep.subr.mxu0 0.0
    %1233 = vmatpush1.msra.mxu0 0.0
    %1234 = vmatprep.subr.mxu0 0.0
    %1235 = vmatpush1.msra.mxu0 0.0
    %1236 = vmatprep.subr.mxu0 0.0
    %1237 = vmatpush1.msra.mxu0 0.0
    %1238 = vmatprep.subr.mxu0 0.0
    %1239 = vmatpush1.msra.mxu0 0.0
    %1240 = vmatprep.subr.mxu0 0.0
    %1241 = vmatpush1.msra.mxu0 0.0
    %1242 = vmatprep.subr.mxu0 0.0
    %1243 = vmatpush1.msra.mxu0 0.0
    %1244 = vmatprep.subr.mxu0 0.0
    %1245 = vmatpush1.msra.mxu0 %v71
    %1246 = vmatprep.subr.mxu0 0.0
    %1247 = vmatpush1.msra.mxu0 %v70
    %1248 = vmatprep.subr.mxu0 0.0
    %1249 = vmatpush1.msra.mxu0 %v69
    %1250 = vmatprep.subr.mxu0 0.0
    %1251 = vmatpush1.msra.mxu0 %v68
    %1252 = vmatprep.subr.mxu0 0.0
    %1253 = vmatpush2.msra.mxu0 0.0
    %1254 = vmatprep.subr.mxu0 0.0
    %1255 = vmatpush2.msra.mxu0 0.0
    %1256 = vmatprep.subr.mxu0 0.0
    %1257 = vmatpush2.msra.mxu0 0.0
    %1258 = vmatprep.subr.mxu0 0.0
    %1259 = vmatpush2.msra.mxu0 0.0
    %1260 = vmatprep.subr.mxu0 0.0
    %1261 = vmatpush2.msra.mxu0 0.0
    %1262 = vmatprep.subr.mxu0 0.0
    %1263 = vmatpush2.msra.mxu0 0.0
    %1264 = vmatprep.subr.mxu0 0.0
    %1265 = vmatpush2.msra.mxu0 0.0
    %1266 = vmatprep.subr.mxu0 0.0
    %1267 = vmatpush2.msra.mxu0 0.0
    %1268 = vmatprep.subr.mxu0 0.0
    %1269 = vmatpush2.msra.mxu0 0.0
    %1270 = vmatprep.subr.mxu0 0.0
    %1271 = vmatpush2.msra.mxu0 0.0
    %1272 = vmatprep.subr.mxu0 0.0
    %1273 = vmatpush2.msra.mxu0 0.0
    %1274 = vmatprep.subr.mxu0 0.0
    %1275 = vmatpush2.msra.mxu0 0.0
    %1276 = vmatprep.subr.mxu0 0.0
    %1277 = vmatpush2.msra.mxu0 0.0
    %1278 = vmatprep.subr.mxu0 0.0
    %1279 = vmatpush2.msra.mxu0 0.0
    %1280 = vmatprep.subr.mxu0 0.0
    %1281 = vmatpush2.msra.mxu0 0.0
    %1282 = vmatprep.subr.mxu0 0.0
    %1283 = vmatpush2.msra.mxu0 0.0
    %1284 = vmatprep.mubr.f32.mxu0 0.0
    %1285 = vmatmul.mubr.f32.gmra.mxu0 %v1218
    %v1286 = vpop.f32.mrf.mxu0
    %v1287 = vadd.f32 0.0, %v1286
    %v1288 = vpop.f32.mrf.mxu0
    %1289 = vdwg.mxu0
    %v1291 = vrot.slane %v1287, 5
    %v1293 = vadd.f32 %v223, %v1291
    %v1294 = vxor.u32 %v1293, 2147483648
    %v1295 = vmul.f32 %v1294, 1.442695
    %v1296 = vpow.pop %v1295
    %v1297 = vadd.f32 %v1296, 1.0
    %v1298 = vrcp.pop %v1297
    %v1299 = vmul.f32 1.0, %v1298
    %v1300 = vtanh.pop %v1293
    %v1302 = vrot.slane %v1091, 1
    %v1304 = vmul.f32 %v1299, %v1302
    %1306 = vrot.lane.b32.xlu0 %v1300, 64
    %v1307 = vpop.permute.xlu0 %1306
    %v1309 = vmul.f32 %v1299, %v1307
    %1311 = vrot.lane.b32.xlu0 %v1309, 32
    %v1312 = vpop.permute.xlu0 %1311
    %v1314 = vadd.f32 %v1304, %v1312
    %v1315 = vtanh.pop %v1314
    %1317 = vrot.lane.b32.xlu0 %v1315, 64
    %v1318 = vpop.permute.xlu0 %1317
    %v1320 = vmul.f32 %v1299, %v1318
    %1322 = vrot.lane.b32.xlu0 %v1320, 32
    %v1323 = vpop.permute.xlu0 %1322
    %1325 = vst.msk [vmem:[#allocation3] sm:$0x8] %vm990, %v1323
    %v1326 = vrot.slane %v1209, 4
    %1327 = vrot.lane.b32.xlu0 %v1326, 32
    %v1328 = vpop.permute.xlu0 %1327
    %v1329 = vsel %vm226, %v1328, 0
    %1331 = vmatprep.subr.mxu0 0.0
    %1332 = vmatpush1.msra.mxu0 0.0
    %1333 = vmatprep.subr.mxu0 0.0
    %1334 = vmatpush1.msra.mxu0 0.0
    %1335 = vmatprep.subr.mxu0 0.0
    %1336 = vmatpush1.msra.mxu0 0.0
    %1337 = vmatprep.subr.mxu0 0.0
    %1338 = vmatpush1.msra.mxu0 0.0
    %1339 = vmatprep.subr.mxu0 0.0
    %1340 = vmatpush1.msra.mxu0 0.0
    %1341 = vmatprep.subr.mxu0 0.0
    %1342 = vmatpush1.msra.mxu0 0.0
    %1343 = vmatprep.subr.mxu0 0.0
    %1344 = vmatpush1.msra.mxu0 0.0
    %1345 = vmatprep.subr.mxu0 0.0
    %1346 = vmatpush1.msra.mxu0 0.0
    %1347 = vmatprep.subr.mxu0 0.0
    %1348 = vmatpush1.msra.mxu0 0.0
    %1349 = vmatprep.subr.mxu0 0.0
    %1350 = vmatpush1.msra.mxu0 0.0
    %1351 = vmatprep.subr.mxu0 0.0
    %1352 = vmatpush1.msra.mxu0 0.0
    %1353 = vmatprep.subr.mxu0 0.0
    %1354 = vmatpush1.msra.mxu0 0.0
    %1355 = vmatprep.subr.mxu0 0.0
    %1356 = vmatpush1.msra.mxu0 %v66
    %1357 = vmatprep.subr.mxu0 0.0
    %1358 = vmatpush1.msra.mxu0 %v65
    %1359 = vmatprep.subr.mxu0 0.0
    %1360 = vmatpush1.msra.mxu0 %v64
    %1361 = vmatprep.subr.mxu0 0.0
    %1362 = vmatpush1.msra.mxu0 %v63
    %1363 = vmatprep.subr.mxu0 0.0
    %1364 = vmatpush2.msra.mxu0 0.0
    %1365 = vmatprep.subr.mxu0 0.0
    %1366 = vmatpush2.msra.mxu0 0.0
    %1367 = vmatprep.subr.mxu0 0.0
    %1368 = vmatpush2.msra.mxu0 0.0
    %1369 = vmatprep.subr.mxu0 0.0
    %1370 = vmatpush2.msra.mxu0 0.0
    %1371 = vmatprep.subr.mxu0 0.0
    %1372 = vmatpush2.msra.mxu0 0.0
    %1373 = vmatprep.subr.mxu0 0.0
    %1374 = vmatpush2.msra.mxu0 0.0
    %1375 = vmatprep.subr.mxu0 0.0
    %1376 = vmatpush2.msra.mxu0 0.0
    %1377 = vmatprep.subr.mxu0 0.0
    %1378 = vmatpush2.msra.mxu0 0.0
    %1379 = vmatprep.subr.mxu0 0.0
    %1380 = vmatpush2.msra.mxu0 0.0
    %1381 = vmatprep.subr.mxu0 0.0
    %1382 = vmatpush2.msra.mxu0 0.0
    %1383 = vmatprep.subr.mxu0 0.0
    %1384 = vmatpush2.msra.mxu0 0.0
    %1385 = vmatprep.subr.mxu0 0.0
    %1386 = vmatpush2.msra.mxu0 0.0
    %1387 = vmatprep.subr.mxu0 0.0
    %1388 = vmatpush2.msra.mxu0 0.0
    %1389 = vmatprep.subr.mxu0 0.0
    %1390 = vmatpush2.msra.mxu0 0.0
    %1391 = vmatprep.subr.mxu0 0.0
    %1392 = vmatpush2.msra.mxu0 0.0
    %1393 = vmatprep.subr.mxu0 0.0
    %1394 = vmatpush2.msra.mxu0 0.0
    %1395 = vmatprep.mubr.f32.mxu0 0.0
    %1396 = vmatmul.mubr.f32.gmra.mxu0 %v1329
    %v1397 = vpop.f32.mrf.mxu0
    %v1398 = vadd.f32 0.0, %v1397
    %v1399 = vpop.f32.mrf.mxu0
    %1400 = vdwg.mxu0
    %v1402 = vrot.slane %v1398, 3
    %v1404 = vadd.f32 %v149, %v1402
    %v1405 = vxor.u32 %v1404, 2147483648
    %v1406 = vmul.f32 %v1405, 1.442695
    %v1407 = vpow.pop %v1406
    %v1408 = vadd.f32 %v1407, 1.0
    %v1409 = vrcp.pop %v1408
    %v1410 = vmul.f32 1.0, %v1409
    %v1411 = vtanh.pop %v1404
    %v1413 = vrot.slane %v1203, 7
    %v1415 = vmul.f32 %v1410, %v1413
    %1417 = vrot.lane.b32.xlu0 %v1411, 64
    %v1418 = vpop.permute.xlu0 %1417
    %v1420 = vmul.f32 %v1410, %v1418
    %1422 = vrot.lane.b32.xlu0 %v1420, 32
    %v1423 = vpop.permute.xlu0 %1422
    %v1425 = vadd.f32 %v1415, %v1423
    %v1426 = vtanh.pop %v1425
    %1428 = vrot.lane.b32.xlu0 %v1426, 64
    %v1429 = vpop.permute.xlu0 %1428
    %v1431 = vmul.f32 %v1410, %v1429
    %1433 = vrot.lane.b32.xlu0 %v1431, 32
    %v1434 = vpop.permute.xlu0 %1433
    %1436 = vst.msk [vmem:[#allocation2] sm:$0x20] %vm878, %v1434
    %v1437 = vrot.slane %v1320, 3
    %1438 = vrot.lane.b32.xlu0 %v1437, 32
    %v1439 = vpop.permute.xlu0 %1438
    %v1440 = vsel %vm226, %v1439, 0
    %1442 = vmatprep.subr.mxu0 0.0
    %1443 = vmatpush1.msra.mxu0 0.0
    %1444 = vmatprep.subr.mxu0 0.0
    %1445 = vmatpush1.msra.mxu0 0.0
    %1446 = vmatprep.subr.mxu0 0.0
    %1447 = vmatpush1.msra.mxu0 0.0
    %1448 = vmatprep.subr.mxu0 0.0
    %1449 = vmatpush1.msra.mxu0 0.0
    %1450 = vmatprep.subr.mxu0 0.0
    %1451 = vmatpush1.msra.mxu0 0.0
    %1452 = vmatprep.subr.mxu0 0.0
    %1453 = vmatpush1.msra.mxu0 0.0
    %1454 = vmatprep.subr.mxu0 0.0
    %1455 = vmatpush1.msra.mxu0 0.0
    %1456 = vmatprep.subr.mxu0 0.0
    %1457 = vmatpush1.msra.mxu0 0.0
    %1458 = vmatprep.subr.mxu0 0.0
    %1459 = vmatpush1.msra.mxu0 0.0
    %1460 = vmatprep.subr.mxu0 0.0
    %1461 = vmatpush1.msra.mxu0 0.0
    %1462 = vmatprep.subr.mxu0 0.0
    %1463 = vmatpush1.msra.mxu0 0.0
    %1464 = vmatprep.subr.mxu0 0.0
    %1465 = vmatpush1.msra.mxu0 0.0
    %1466 = vmatprep.subr.mxu0 0.0
    %1467 = vmatpush1.msra.mxu0 %v71
    %1468 = vmatprep.subr.mxu0 0.0
    %1469 = vmatpush1.msra.mxu0 %v70
    %1470 = vmatprep.subr.mxu0 0.0
    %1471 = vmatpush1.msra.mxu0 %v69
    %1472 = vmatprep.subr.mxu0 0.0
    %1473 = vmatpush1.msra.mxu0 %v68
    %1474 = vmatprep.subr.mxu0 0.0
    %1475 = vmatpush2.msra.mxu0 0.0
    %1476 = vmatprep.subr.mxu0 0.0
    %1477 = vmatpush2.msra.mxu0 0.0
    %1478 = vmatprep.subr.mxu0 0.0
    %1479 = vmatpush2.msra.mxu0 0.0
    %1480 = vmatprep.subr.mxu0 0.0
    %1481 = vmatpush2.msra.mxu0 0.0
    %1482 = vmatprep.subr.mxu0 0.0
    %1483 = vmatpush2.msra.mxu0 0.0
    %1484 = vmatprep.subr.mxu0 0.0
    %1485 = vmatpush2.msra.mxu0 0.0
    %1486 = vmatprep.subr.mxu0 0.0
    %1487 = vmatpush2.msra.mxu0 0.0
    %1488 = vmatprep.subr.mxu0 0.0
    %1489 = vmatpush2.msra.mxu0 0.0
    %1490 = vmatprep.subr.mxu0 0.0
    %1491 = vmatpush2.msra.mxu0 0.0
    %1492 = vmatprep.subr.mxu0 0.0
    %1493 = vmatpush2.msra.mxu0 0.0
    %1494 = vmatprep.subr.mxu0 0.0
    %1495 = vmatpush2.msra.mxu0 0.0
    %1496 = vmatprep.subr.mxu0 0.0
    %1497 = vmatpush2.msra.mxu0 0.0
    %1498 = vmatprep.subr.mxu0 0.0
    %1499 = vmatpush2.msra.mxu0 0.0
    %1500 = vmatprep.subr.mxu0 0.0
    %1501 = vmatpush2.msra.mxu0 0.0
    %1502 = vmatprep.subr.mxu0 0.0
    %1503 = vmatpush2.msra.mxu0 0.0
    %1504 = vmatprep.subr.mxu0 0.0
    %1505 = vmatpush2.msra.mxu0 0.0
    %1506 = vmatprep.mubr.f32.mxu0 0.0
    %1507 = vmatmul.mubr.f32.gmra.mxu0 %v1440
    %v1508 = vpop.f32.mrf.mxu0
    %v1509 = vadd.f32 0.0, %v1508
    %v1510 = vpop.f32.mrf.mxu0
    %1511 = vdwg.mxu0
    %v1513 = vrot.slane %v1509, 6
    %v1515 = vadd.f32 %v223, %v1513
    %v1516 = vxor.u32 %v1515, 2147483648
    %v1517 = vmul.f32 %v1516, 1.442695
    %v1518 = vpow.pop %v1517
    %v1519 = vadd.f32 %v1518, 1.0
    %v1520 = vrcp.pop %v1519
    %v1521 = vmul.f32 1.0, %v1520
    %v1522 = vtanh.pop %v1515
    %v1524 = vrot.slane %v1314, 1
    %v1526 = vmul.f32 %v1521, %v1524
    %1528 = vrot.lane.b32.xlu0 %v1522, 64
    %v1529 = vpop.permute.xlu0 %1528
    %v1531 = vmul.f32 %v1521, %v1529
    %1533 = vrot.lane.b32.xlu0 %v1531, 32
    %v1534 = vpop.permute.xlu0 %1533
    %v1536 = vadd.f32 %v1526, %v1534
    %v1537 = vtanh.pop %v1536
    %1539 = vrot.lane.b32.xlu0 %v1537, 64
    %v1540 = vpop.permute.xlu0 %1539
    %v1542 = vmul.f32 %v1521, %v1540
    %1544 = vrot.lane.b32.xlu0 %v1542, 32
    %v1545 = vpop.permute.xlu0 %1544
    %1547 = vst.msk [vmem:[#allocation3] sm:$0x4] %vm766, %v1545
    %v1548 = vrot.slane %v1431, 5
    %1549 = vrot.lane.b32.xlu0 %v1548, 32
    %v1550 = vpop.permute.xlu0 %1549
    %v1551 = vsel %vm226, %v1550, 0
    %1553 = vmatprep.subr.mxu0 0.0
    %1554 = vmatpush1.msra.mxu0 0.0
    %1555 = vmatprep.subr.mxu0 0.0
    %1556 = vmatpush1.msra.mxu0 0.0
    %1557 = vmatprep.subr.mxu0 0.0
    %1558 = vmatpush1.msra.mxu0 0.0
    %1559 = vmatprep.subr.mxu0 0.0
    %1560 = vmatpush1.msra.mxu0 0.0
    %1561 = vmatprep.subr.mxu0 0.0
    %1562 = vmatpush1.msra.mxu0 0.0
    %1563 = vmatprep.subr.mxu0 0.0
    %1564 = vmatpush1.msra.mxu0 0.0
    %1565 = vmatprep.subr.mxu0 0.0
    %1566 = vmatpush1.msra.mxu0 0.0
    %1567 = vmatprep.subr.mxu0 0.0
    %1568 = vmatpush1.msra.mxu0 0.0
    %1569 = vmatprep.subr.mxu0 0.0
    %1570 = vmatpush1.msra.mxu0 0.0
    %1571 = vmatprep.subr.mxu0 0.0
    %1572 = vmatpush1.msra.mxu0 0.0
    %1573 = vmatprep.subr.mxu0 0.0
    %1574 = vmatpush1.msra.mxu0 0.0
    %1575 = vmatprep.subr.mxu0 0.0
    %1576 = vmatpush1.msra.mxu0 0.0
    %1577 = vmatprep.subr.mxu0 0.0
    %1578 = vmatpush1.msra.mxu0 %v66
    %1579 = vmatprep.subr.mxu0 0.0
    %1580 = vmatpush1.msra.mxu0 %v65
    %1581 = vmatprep.subr.mxu0 0.0
    %1582 = vmatpush1.msra.mxu0 %v64
    %1583 = vmatprep.subr.mxu0 0.0
    %1584 = vmatpush1.msra.mxu0 %v63
    %1585 = vmatprep.subr.mxu0 0.0
    %1586 = vmatpush2.msra.mxu0 0.0
    %1587 = vmatprep.subr.mxu0 0.0
    %1588 = vmatpush2.msra.mxu0 0.0
    %1589 = vmatprep.subr.mxu0 0.0
    %1590 = vmatpush2.msra.mxu0 0.0
    %1591 = vmatprep.subr.mxu0 0.0
    %1592 = vmatpush2.msra.mxu0 0.0
    %1593 = vmatprep.subr.mxu0 0.0
    %1594 = vmatpush2.msra.mxu0 0.0
    %1595 = vmatprep.subr.mxu0 0.0
    %1596 = vmatpush2.msra.mxu0 0.0
    %1597 = vmatprep.subr.mxu0 0.0
    %1598 = vmatpush2.msra.mxu0 0.0
    %1599 = vmatprep.subr.mxu0 0.0
    %1600 = vmatpush2.msra.mxu0 0.0
    %1601 = vmatprep.subr.mxu0 0.0
    %1602 = vmatpush2.msra.mxu0 0.0
    %1603 = vmatprep.subr.mxu0 0.0
    %1604 = vmatpush2.msra.mxu0 0.0
    %1605 = vmatprep.subr.mxu0 0.0
    %1606 = vmatpush2.msra.mxu0 0.0
    %1607 = vmatprep.subr.mxu0 0.0
    %1608 = vmatpush2.msra.mxu0 0.0
    %1609 = vmatprep.subr.mxu0 0.0
    %1610 = vmatpush2.msra.mxu0 0.0
    %1611 = vmatprep.subr.mxu0 0.0
    %1612 = vmatpush2.msra.mxu0 0.0
    %1613 = vmatprep.subr.mxu0 0.0
    %1614 = vmatpush2.msra.mxu0 0.0
    %1615 = vmatprep.subr.mxu0 0.0
    %1616 = vmatpush2.msra.mxu0 0.0
    %1617 = vmatprep.mubr.f32.mxu0 0.0
    %1618 = vmatmul.mubr.f32.gmra.mxu0 %v1551
    %v1619 = vpop.f32.mrf.mxu0
    %v1620 = vadd.f32 0.0, %v1619
    %v1621 = vpop.f32.mrf.mxu0
    %1622 = vdwg.mxu0
    %v1624 = vrot.slane %v1620, 2
    %v1626 = vadd.f32 %v149, %v1624
    %v1627 = vxor.u32 %v1626, 2147483648
    %v1628 = vmul.f32 %v1627, 1.442695
    %v1629 = vpow.pop %v1628
    %v1630 = vadd.f32 %v1629, 1.0
    %v1631 = vrcp.pop %v1630
    %v1632 = vmul.f32 1.0, %v1631
    %v1633 = vtanh.pop %v1626
    %v1635 = vrot.slane %v1425, 7
    %v1637 = vmul.f32 %v1632, %v1635
    %1639 = vrot.lane.b32.xlu0 %v1633, 64
    %v1640 = vpop.permute.xlu0 %1639
    %v1642 = vmul.f32 %v1632, %v1640
    %1644 = vrot.lane.b32.xlu0 %v1642, 32
    %v1645 = vpop.permute.xlu0 %1644
    %v1647 = vadd.f32 %v1637, %v1645
    %v1648 = vtanh.pop %v1647
    %1650 = vrot.lane.b32.xlu0 %v1648, 64
    %v1651 = vpop.permute.xlu0 %1650
    %v1653 = vmul.f32 %v1632, %v1651
    %1655 = vrot.lane.b32.xlu0 %v1653, 32
    %v1656 = vpop.permute.xlu0 %1655
    %1658 = vst.msk [vmem:[#allocation2] sm:$0x40] %vm654, %v1656
    %v1659 = vrot.slane %v1542, 2
    %1660 = vrot.lane.b32.xlu0 %v1659, 32
    %v1661 = vpop.permute.xlu0 %1660
    %v1662 = vsel %vm226, %v1661, 0
    %1664 = vmatprep.subr.mxu0 0.0
    %1665 = vmatpush1.msra.mxu0 0.0
    %1666 = vmatprep.subr.mxu0 0.0
    %1667 = vmatpush1.msra.mxu0 0.0
    %1668 = vmatprep.subr.mxu0 0.0
    %1669 = vmatpush1.msra.mxu0 0.0
    %1670 = vmatprep.subr.mxu0 0.0
    %1671 = vmatpush1.msra.mxu0 0.0
    %1672 = vmatprep.subr.mxu0 0.0
    %1673 = vmatpush1.msra.mxu0 0.0
    %1674 = vmatprep.subr.mxu0 0.0
    %1675 = vmatpush1.msra.mxu0 0.0
    %1676 = vmatprep.subr.mxu0 0.0
    %1677 = vmatpush1.msra.mxu0 0.0
    %1678 = vmatprep.subr.mxu0 0.0
    %1679 = vmatpush1.msra.mxu0 0.0
    %1680 = vmatprep.subr.mxu0 0.0
    %1681 = vmatpush1.msra.mxu0 0.0
    %1682 = vmatprep.subr.mxu0 0.0
    %1683 = vmatpush1.msra.mxu0 0.0
    %1684 = vmatprep.subr.mxu0 0.0
    %1685 = vmatpush1.msra.mxu0 0.0
    %1686 = vmatprep.subr.mxu0 0.0
    %1687 = vmatpush1.msra.mxu0 0.0
    %1688 = vmatprep.subr.mxu0 0.0
    %1689 = vmatpush1.msra.mxu0 %v71
    %1690 = vmatprep.subr.mxu0 0.0
    %1691 = vmatpush1.msra.mxu0 %v70
    %1692 = vmatprep.subr.mxu0 0.0
    %1693 = vmatpush1.msra.mxu0 %v69
    %1694 = vmatprep.subr.mxu0 0.0
    %1695 = vmatpush1.msra.mxu0 %v68
    %1696 = vmatprep.subr.mxu0 0.0
    %1697 = vmatpush2.msra.mxu0 0.0
    %1698 = vmatprep.subr.mxu0 0.0
    %1699 = vmatpush2.msra.mxu0 0.0
    %1700 = vmatprep.subr.mxu0 0.0
    %1701 = vmatpush2.msra.mxu0 0.0
    %1702 = vmatprep.subr.mxu0 0.0
    %1703 = vmatpush2.msra.mxu0 0.0
    %1704 = vmatprep.subr.mxu0 0.0
    %1705 = vmatpush2.msra.mxu0 0.0
    %1706 = vmatprep.subr.mxu0 0.0
    %1707 = vmatpush2.msra.mxu0 0.0
    %1708 = vmatprep.subr.mxu0 0.0
    %1709 = vmatpush2.msra.mxu0 0.0
    %1710 = vmatprep.subr.mxu0 0.0
    %1711 = vmatpush2.msra.mxu0 0.0
    %1712 = vmatprep.subr.mxu0 0.0
    %1713 = vmatpush2.msra.mxu0 0.0
    %1714 = vmatprep.subr.mxu0 0.0
    %1715 = vmatpush2.msra.mxu0 0.0
    %1716 = vmatprep.subr.mxu0 0.0
    %1717 = vmatpush2.msra.mxu0 0.0
    %1718 = vmatprep.subr.mxu0 0.0
    %1719 = vmatpush2.msra.mxu0 0.0
    %1720 = vmatprep.subr.mxu0 0.0
    %1721 = vmatpush2.msra.mxu0 0.0
    %1722 = vmatprep.subr.mxu0 0.0
    %1723 = vmatpush2.msra.mxu0 0.0
    %1724 = vmatprep.subr.mxu0 0.0
    %1725 = vmatpush2.msra.mxu0 0.0
    %1726 = vmatprep.subr.mxu0 0.0
    %1727 = vmatpush2.msra.mxu0 0.0
    %1728 = vmatprep.mubr.f32.mxu0 0.0
    %1729 = vmatmul.mubr.f32.gmra.mxu0 %v1662
    %v1730 = vpop.f32.mrf.mxu0
    %v1731 = vadd.f32 0.0, %v1730
    %v1732 = vpop.f32.mrf.mxu0
    %1733 = vdwg.mxu0
    %v1735 = vrot.slane %v1731, 7
    %v1737 = vadd.f32 %v223, %v1735
    %v1738 = vxor.u32 %v1737, 2147483648
    %v1739 = vmul.f32 %v1738, 1.442695
    %v1740 = vpow.pop %v1739
    %v1741 = vadd.f32 %v1740, 1.0
    %v1742 = vrcp.pop %v1741
    %v1743 = vmul.f32 1.0, %v1742
    %v1744 = vtanh.pop %v1737
    %v1746 = vrot.slane %v1536, 1
    %v1748 = vmul.f32 %v1743, %v1746
    %1750 = vrot.lane.b32.xlu0 %v1744, 64
    %v1751 = vpop.permute.xlu0 %1750
    %v1753 = vmul.f32 %v1743, %v1751
    %1755 = vrot.lane.b32.xlu0 %v1753, 32
    %v1756 = vpop.permute.xlu0 %1755
    %v1758 = vadd.f32 %v1748, %v1756
    %v1759 = vtanh.pop %v1758
    %1761 = vrot.lane.b32.xlu0 %v1759, 64
    %v1762 = vpop.permute.xlu0 %1761
    %v1764 = vmul.f32 %v1743, %v1762
    %1766 = vrot.lane.b32.xlu0 %v1764, 32
    %v1767 = vpop.permute.xlu0 %1766
    %1769 = vst.msk [vmem:[#allocation3] sm:$0x2] %vm542, %v1767
    %v1770 = vrot.slane %v1653, 6
    %1771 = vrot.lane.b32.xlu0 %v1770, 32
    %v1772 = vpop.permute.xlu0 %1771
    %v1773 = vsel %vm226, %v1772, 0
    %1775 = vmatprep.subr.mxu0 0.0
    %1776 = vmatpush1.msra.mxu0 0.0
    %1777 = vmatprep.subr.mxu0 0.0
    %1778 = vmatpush1.msra.mxu0 0.0
    %1779 = vmatprep.subr.mxu0 0.0
    %1780 = vmatpush1.msra.mxu0 0.0
    %1781 = vmatprep.subr.mxu0 0.0
    %1782 = vmatpush1.msra.mxu0 0.0
    %1783 = vmatprep.subr.mxu0 0.0
    %1784 = vmatpush1.msra.mxu0 0.0
    %1785 = vmatprep.subr.mxu0 0.0
    %1786 = vmatpush1.msra.mxu0 0.0
    %1787 = vmatprep.subr.mxu0 0.0
    %1788 = vmatpush1.msra.mxu0 0.0
    %1789 = vmatprep.subr.mxu0 0.0
    %1790 = vmatpush1.msra.mxu0 0.0
    %1791 = vmatprep.subr.mxu0 0.0
    %1792 = vmatpush1.msra.mxu0 0.0
    %1793 = vmatprep.subr.mxu0 0.0
    %1794 = vmatpush1.msra.mxu0 0.0
    %1795 = vmatprep.subr.mxu0 0.0
    %1796 = vmatpush1.msra.mxu0 0.0
    %1797 = vmatprep.subr.mxu0 0.0
    %1798 = vmatpush1.msra.mxu0 0.0
    %1799 = vmatprep.subr.mxu0 0.0
    %1800 = vmatpush1.msra.mxu0 %v66
    %1801 = vmatprep.subr.mxu0 0.0
    %1802 = vmatpush1.msra.mxu0 %v65
    %1803 = vmatprep.subr.mxu0 0.0
    %1804 = vmatpush1.msra.mxu0 %v64
    %1805 = vmatprep.subr.mxu0 0.0
    %1806 = vmatpush1.msra.mxu0 %v63
    %1807 = vmatprep.subr.mxu0 0.0
    %1808 = vmatpush2.msra.mxu0 0.0
    %1809 = vmatprep.subr.mxu0 0.0
    %1810 = vmatpush2.msra.mxu0 0.0
    %1811 = vmatprep.subr.mxu0 0.0
    %1812 = vmatpush2.msra.mxu0 0.0
    %1813 = vmatprep.subr.mxu0 0.0
    %1814 = vmatpush2.msra.mxu0 0.0
    %1815 = vmatprep.subr.mxu0 0.0
    %1816 = vmatpush2.msra.mxu0 0.0
    %1817 = vmatprep.subr.mxu0 0.0
    %1818 = vmatpush2.msra.mxu0 0.0
    %1819 = vmatprep.subr.mxu0 0.0
    %1820 = vmatpush2.msra.mxu0 0.0
    %1821 = vmatprep.subr.mxu0 0.0
    %1822 = vmatpush2.msra.mxu0 0.0
    %1823 = vmatprep.subr.mxu0 0.0
    %1824 = vmatpush2.msra.mxu0 0.0
    %1825 = vmatprep.subr.mxu0 0.0
    %1826 = vmatpush2.msra.mxu0 0.0
    %1827 = vmatprep.subr.mxu0 0.0
    %1828 = vmatpush2.msra.mxu0 0.0
    %1829 = vmatprep.subr.mxu0 0.0
    %1830 = vmatpush2.msra.mxu0 0.0
    %1831 = vmatprep.subr.mxu0 0.0
    %1832 = vmatpush2.msra.mxu0 0.0
    %1833 = vmatprep.subr.mxu0 0.0
    %1834 = vmatpush2.msra.mxu0 0.0
    %1835 = vmatprep.subr.mxu0 0.0
    %1836 = vmatpush2.msra.mxu0 0.0
    %1837 = vmatprep.subr.mxu0 0.0
    %1838 = vmatpush2.msra.mxu0 0.0
    %1839 = vmatprep.mubr.f32.mxu0 0.0
    %1840 = vmatmul.mubr.f32.gmra.mxu0 %v1773
    %v1841 = vpop.f32.mrf.mxu0
    %v1842 = vadd.f32 0.0, %v1841
    %v1843 = vpop.f32.mrf.mxu0
    %1844 = vdwg.mxu0
    %v1846 = vrot.slane %v1842, 1
    %v1848 = vadd.f32 %v149, %v1846
    %v1849 = vxor.u32 %v1848, 2147483648
    %v1850 = vmul.f32 %v1849, 1.442695
    %v1851 = vpow.pop %v1850
    %v1852 = vadd.f32 %v1851, 1.0
    %v1853 = vrcp.pop %v1852
    %v1854 = vmul.f32 1.0, %v1853
    %v1855 = vtanh.pop %v1848
    %v1857 = vrot.slane %v1647, 7
    %v1859 = vmul.f32 %v1854, %v1857
    %1861 = vrot.lane.b32.xlu0 %v1855, 64
    %v1862 = vpop.permute.xlu0 %1861
    %v1864 = vmul.f32 %v1854, %v1862
    %1866 = vrot.lane.b32.xlu0 %v1864, 32
    %v1867 = vpop.permute.xlu0 %1866
    %v1869 = vadd.f32 %v1859, %v1867
    %v1870 = vtanh.pop %v1869
    %1872 = vrot.lane.b32.xlu0 %v1870, 64
    %v1873 = vpop.permute.xlu0 %1872
    %v1875 = vmul.f32 %v1854, %v1873
    %1877 = vrot.lane.b32.xlu0 %v1875, 32
    %v1878 = vpop.permute.xlu0 %1877
    %1880 = vst.msk [vmem:[#allocation2] sm:$0x80] %vm433, %v1878
    %v1881 = vrot.slane %v1764, 1
    %1882 = vrot.lane.b32.xlu0 %v1881, 32
    %v1883 = vpop.permute.xlu0 %1882
    %v1884 = vsel %vm226, %v1883, 0
    %1886 = vmatprep.subr.mxu0 0.0
    %1887 = vmatpush1.msra.mxu0 0.0
    %1888 = vmatprep.subr.mxu0 0.0
    %1889 = vmatpush1.msra.mxu0 0.0
    %1890 = vmatprep.subr.mxu0 0.0
    %1891 = vmatpush1.msra.mxu0 0.0
    %1892 = vmatprep.subr.mxu0 0.0
    %1893 = vmatpush1.msra.mxu0 0.0
    %1894 = vmatprep.subr.mxu0 0.0
    %1895 = vmatpush1.msra.mxu0 0.0
    %1896 = vmatprep.subr.mxu0 0.0
    %1897 = vmatpush1.msra.mxu0 0.0
    %1898 = vmatprep.subr.mxu0 0.0
    %1899 = vmatpush1.msra.mxu0 0.0
    %1900 = vmatprep.subr.mxu0 0.0
    %1901 = vmatpush1.msra.mxu0 0.0
    %1902 = vmatprep.subr.mxu0 0.0
    %1903 = vmatpush1.msra.mxu0 0.0
    %1904 = vmatprep.subr.mxu0 0.0
    %1905 = vmatpush1.msra.mxu0 0.0
    %1906 = vmatprep.subr.mxu0 0.0
    %1907 = vmatpush1.msra.mxu0 0.0
    %1908 = vmatprep.subr.mxu0 0.0
    %1909 = vmatpush1.msra.mxu0 0.0
    %1910 = vmatprep.subr.mxu0 0.0
    %1911 = vmatpush1.msra.mxu0 %v71
    %1912 = vmatprep.subr.mxu0 0.0
    %1913 = vmatpush1.msra.mxu0 %v70
    %1914 = vmatprep.subr.mxu0 0.0
    %1915 = vmatpush1.msra.mxu0 %v69
    %1916 = vmatprep.subr.mxu0 0.0
    %1917 = vmatpush1.msra.mxu0 %v68
    %1918 = vmatprep.subr.mxu0 0.0
    %1919 = vmatpush2.msra.mxu0 0.0
    %1920 = vmatprep.subr.mxu0 0.0
    %1921 = vmatpush2.msra.mxu0 0.0
    %1922 = vmatprep.subr.mxu0 0.0
    %1923 = vmatpush2.msra.mxu0 0.0
    %1924 = vmatprep.subr.mxu0 0.0
    %1925 = vmatpush2.msra.mxu0 0.0
    %1926 = vmatprep.subr.mxu0 0.0
    %1927 = vmatpush2.msra.mxu0 0.0
    %1928 = vmatprep.subr.mxu0 0.0
    %1929 = vmatpush2.msra.mxu0 0.0
    %1930 = vmatprep.subr.mxu0 0.0
    %1931 = vmatpush2.msra.mxu0 0.0
    %1932 = vmatprep.subr.mxu0 0.0
    %1933 = vmatpush2.msra.mxu0 0.0
    %1934 = vmatprep.subr.mxu0 0.0
    %1935 = vmatpush2.msra.mxu0 0.0
    %1936 = vmatprep.subr.mxu0 0.0
    %1937 = vmatpush2.msra.mxu0 0.0
    %1938 = vmatprep.subr.mxu0 0.0
    %1939 = vmatpush2.msra.mxu0 0.0
    %1940 = vmatprep.subr.mxu0 0.0
    %1941 = vmatpush2.msra.mxu0 0.0
    %1942 = vmatprep.subr.mxu0 0.0
    %1943 = vmatpush2.msra.mxu0 0.0
    %1944 = vmatprep.subr.mxu0 0.0
    %1945 = vmatpush2.msra.mxu0 0.0
    %1946 = vmatprep.subr.mxu0 0.0
    %1947 = vmatpush2.msra.mxu0 0.0
    %1948 = vmatprep.subr.mxu0 0.0
    %1949 = vmatpush2.msra.mxu0 0.0
    %1950 = vmatprep.mubr.f32.mxu0 0.0
    %1951 = vmatmul.mubr.f32.gmra.mxu0 %v1884
    %v1952 = vpop.f32.mrf.mxu0
    %v1953 = vadd.f32 0.0, %v1952
    %v1954 = vpop.f32.mrf.mxu0
    %1955 = vdwg.mxu0
    %v1956 = vadd.f32 %v223, %v1953
    %v1957 = vxor.u32 %v1956, 2147483648
    %v1958 = vmul.f32 %v1957, 1.442695
    %v1959 = vpow.pop %v1958
    %v1960 = vadd.f32 %v1959, 1.0
    %v1961 = vrcp.pop %v1960
    %v1962 = vmul.f32 1.0, %v1961
    %v1963 = vtanh.pop %v1956
    %v1965 = vrot.slane %v1758, 1
    %v1967 = vmul.f32 %v1962, %v1965
    %1969 = vrot.lane.b32.xlu0 %v1963, 64
    %v1970 = vpop.permute.xlu0 %1969
    %v1972 = vmul.f32 %v1962, %v1970
    %1974 = vrot.lane.b32.xlu0 %v1972, 32
    %v1975 = vpop.permute.xlu0 %1974
    %v1977 = vadd.f32 %v1967, %v1975
    %v1978 = vtanh.pop %v1977
    %1980 = vrot.lane.b32.xlu0 %v1978, 64
    %v1981 = vpop.permute.xlu0 %1980
    %v1983 = vmul.f32 %v1962, %v1981
    %1985 = vrot.lane.b32.xlu0 %v1983, 32
    %v1986 = vpop.permute.xlu0 %1985
    %1988 = vst.msk [vmem:[#allocation3] sm:$0x1] %vm329, %v1986
    %s1989 = scalar_lea.vmem [#allocation4], 128
    %v1990 = vld [vmem:[%s1989] sm:$0xff]
    %v1991 = vld [vmem:[%s1989 + $0x8] sm:$0xff]
    %v1992 = vld [vmem:[%s1989 + $0x10] sm:$0xff]
    %v1993 = vld [vmem:[%s1989 + $0x18] sm:$0xff]
    %v1994 = vld [vmem:[%s1989 + $0x20] sm:$0xff]
    %v1995 = vld [vmem:[%s1989 + $0x28] sm:$0xff]
    %v1996 = vld [vmem:[%s1989 + $0x30] sm:$0xff]
    %v1997 = vld [vmem:[%s1989 + $0x38] sm:$0xff]
    %s1998 = scalar_lea.vmem [#allocation4], 192
    %v1999 = vld [vmem:[%s1998] sm:$0xff]
    %v2000 = vld [vmem:[%s1998 + $0x8] sm:$0xff]
    %v2001 = vld [vmem:[%s1998 + $0x10] sm:$0xff]
    %v2002 = vld [vmem:[%s1998 + $0x18] sm:$0xff]
    %v2003 = vld [vmem:[%s1998 + $0x20] sm:$0xff]
    %v2004 = vld [vmem:[%s1998 + $0x28] sm:$0xff]
    %v2005 = vld [vmem:[%s1998 + $0x30] sm:$0xff]
    %v2006 = vld [vmem:[%s1998 + $0x38] sm:$0xff]
    %s2007 = scalar_lea.vmem [#allocation6], 64
    %v2008 = vld [vmem:[%s2007] sm:$0xff]
    %v2009 = vld [vmem:[%s2007 + $0x8] sm:$0xff]
    %v2010 = vld [vmem:[%s2007 + $0x10] sm:$0xff]
    %v2011 = vld [vmem:[%s2007 + $0x18] sm:$0xff]
    %s2012 = scalar_lea.vmem [#allocation6], 96
    %v2013 = vld [vmem:[%s2012] sm:$0xff]
    %v2014 = vld [vmem:[%s2012 + $0x8] sm:$0xff]
    %v2015 = vld [vmem:[%s2012 + $0x10] sm:$0xff]
    %v2016 = vld [vmem:[%s2012 + $0x18] sm:$0xff]
    %v2017 = vld [vmem:[%s3 + $0x2] sm:$0x1]
    %v2018 = vld [vmem:[%s3 + $0x3] sm:$0x1]
    %v2019 = vld [vmem:[#allocation2] sm:$0xff]
    %v2020 = vld [vmem:[#allocation3] sm:$0xff]
    %v2022 = vsel %vm226, %v2020, 0
    %2024 = vmatprep.subr.mxu0 0.0
    %2025 = vmatpush1.msra.mxu0 0.0
    %2026 = vmatprep.subr.mxu0 0.0
    %2027 = vmatpush1.msra.mxu0 0.0
    %2028 = vmatprep.subr.mxu0 0.0
    %2029 = vmatpush1.msra.mxu0 0.0
    %2030 = vmatprep.subr.mxu0 0.0
    %2031 = vmatpush1.msra.mxu0 0.0
    %2032 = vmatprep.subr.mxu0 0.0
    %2033 = vmatpush1.msra.mxu0 0.0
    %2034 = vmatprep.subr.mxu0 0.0
    %2035 = vmatpush1.msra.mxu0 0.0
    %2036 = vmatprep.subr.mxu0 0.0
    %2037 = vmatpush1.msra.mxu0 0.0
    %2038 = vmatprep.subr.mxu0 0.0
    %2039 = vmatpush1.msra.mxu0 0.0
    %2040 = vmatprep.subr.mxu0 0.0
    %2041 = vmatpush1.msra.mxu0 0.0
    %2042 = vmatprep.subr.mxu0 0.0
    %2043 = vmatpush1.msra.mxu0 0.0
    %2044 = vmatprep.subr.mxu0 0.0
    %2045 = vmatpush1.msra.mxu0 0.0
    %2046 = vmatprep.subr.mxu0 0.0
    %2047 = vmatpush1.msra.mxu0 0.0
    %2048 = vmatprep.subr.mxu0 0.0
    %2049 = vmatpush1.msra.mxu0 %v1997
    %2050 = vmatprep.subr.mxu0 0.0
    %2051 = vmatpush1.msra.mxu0 %v1996
    %2052 = vmatprep.subr.mxu0 0.0
    %2053 = vmatpush1.msra.mxu0 %v1995
    %2054 = vmatprep.subr.mxu0 0.0
    %2055 = vmatpush1.msra.mxu0 %v1994
    %2056 = vmatprep.subr.mxu0 0.0
    %2057 = vmatpush2.msra.mxu0 0.0
    %2058 = vmatprep.subr.mxu0 0.0
    %2059 = vmatpush2.msra.mxu0 0.0
    %2060 = vmatprep.subr.mxu0 0.0
    %2061 = vmatpush2.msra.mxu0 0.0
    %2062 = vmatprep.subr.mxu0 0.0
    %2063 = vmatpush2.msra.mxu0 0.0
    %2064 = vmatprep.subr.mxu0 0.0
    %2065 = vmatpush2.msra.mxu0 0.0
    %2066 = vmatprep.subr.mxu0 0.0
    %2067 = vmatpush2.msra.mxu0 0.0
    %2068 = vmatprep.subr.mxu0 0.0
    %2069 = vmatpush2.msra.mxu0 0.0
    %2070 = vmatprep.subr.mxu0 0.0
    %2071 = vmatpush2.msra.mxu0 0.0
    %2072 = vmatprep.subr.mxu0 0.0
    %2073 = vmatpush2.msra.mxu0 0.0
    %2074 = vmatprep.subr.mxu0 0.0
    %2075 = vmatpush2.msra.mxu0 0.0
    %2076 = vmatprep.subr.mxu0 0.0
    %2077 = vmatpush2.msra.mxu0 0.0
    %2078 = vmatprep.subr.mxu0 0.0
    %2079 = vmatpush2.msra.mxu0 0.0
    %2080 = vmatprep.subr.mxu0 0.0
    %2081 = vmatpush2.msra.mxu0 0.0
    %2082 = vmatprep.subr.mxu0 0.0
    %2083 = vmatpush2.msra.mxu0 0.0
    %2084 = vmatprep.subr.mxu0 0.0
    %2085 = vmatpush2.msra.mxu0 0.0
    %2086 = vmatprep.subr.mxu0 0.0
    %2087 = vmatpush2.msra.mxu0 0.0
    %2088 = vmatprep.mubr.f32.mxu0 0.0
    %2089 = vmatmul.mubr.f32.gmra.mxu0 %v2022
    %v2090 = vpop.f32.mrf.mxu0
    %v2091 = vadd.f32 0.0, %v2090
    %v2092 = vpop.f32.mrf.mxu0
    %2093 = vdwg.mxu0
    %v2095 = vsel %vm226, %v2019, 0
    %2097 = vmatprep.subr.mxu0 0.0
    %2098 = vmatpush1.msra.mxu0 0.0
    %2099 = vmatprep.subr.mxu0 0.0
    %2100 = vmatpush1.msra.mxu0 0.0
    %2101 = vmatprep.subr.mxu0 0.0
    %2102 = vmatpush1.msra.mxu0 0.0
    %2103 = vmatprep.subr.mxu0 0.0
    %2104 = vmatpush1.msra.mxu0 0.0
    %2105 = vmatprep.subr.mxu0 0.0
    %2106 = vmatpush1.msra.mxu0 0.0
    %2107 = vmatprep.subr.mxu0 0.0
    %2108 = vmatpush1.msra.mxu0 0.0
    %2109 = vmatprep.subr.mxu0 0.0
    %2110 = vmatpush1.msra.mxu0 0.0
    %2111 = vmatprep.subr.mxu0 0.0
    %2112 = vmatpush1.msra.mxu0 0.0
    %2113 = vmatprep.subr.mxu0 0.0
    %2114 = vmatpush1.msra.mxu0 0.0
    %2115 = vmatprep.subr.mxu0 0.0
    %2116 = vmatpush1.msra.mxu0 0.0
    %2117 = vmatprep.subr.mxu0 0.0
    %2118 = vmatpush1.msra.mxu0 0.0
    %2119 = vmatprep.subr.mxu0 0.0
    %2120 = vmatpush1.msra.mxu0 0.0
    %2121 = vmatprep.subr.mxu0 0.0
    %2122 = vmatpush1.msra.mxu0 %v1993
    %2123 = vmatprep.subr.mxu0 0.0
    %2124 = vmatpush1.msra.mxu0 %v1992
    %2125 = vmatprep.subr.mxu0 0.0
    %2126 = vmatpush1.msra.mxu0 %v1991
    %2127 = vmatprep.subr.mxu0 0.0
    %2128 = vmatpush1.msra.mxu0 %v1990
    %2129 = vmatprep.subr.mxu0 0.0
    %2130 = vmatpush2.msra.mxu0 0.0
    %2131 = vmatprep.subr.mxu0 0.0
    %2132 = vmatpush2.msra.mxu0 0.0
    %2133 = vmatprep.subr.mxu0 0.0
    %2134 = vmatpush2.msra.mxu0 0.0
    %2135 = vmatprep.subr.mxu0 0.0
    %2136 = vmatpush2.msra.mxu0 0.0
    %2137 = vmatprep.subr.mxu0 0.0
    %2138 = vmatpush2.msra.mxu0 0.0
    %2139 = vmatprep.subr.mxu0 0.0
    %2140 = vmatpush2.msra.mxu0 0.0
    %2141 = vmatprep.subr.mxu0 0.0
    %2142 = vmatpush2.msra.mxu0 0.0
    %2143 = vmatprep.subr.mxu0 0.0
    %2144 = vmatpush2.msra.mxu0 0.0
    %2145 = vmatprep.subr.mxu0 0.0
    %2146 = vmatpush2.msra.mxu0 0.0
    %2147 = vmatprep.subr.mxu0 0.0
    %2148 = vmatpush2.msra.mxu0 0.0
    %2149 = vmatprep.subr.mxu0 0.0
    %2150 = vmatpush2.msra.mxu0 0.0
    %2151 = vmatprep.subr.mxu0 0.0
    %2152 = vmatpush2.msra.mxu0 0.0
    %2153 = vmatprep.subr.mxu0 0.0
    %2154 = vmatpush2.msra.mxu0 0.0
    %2155 = vmatprep.subr.mxu0 0.0
    %2156 = vmatpush2.msra.mxu0 0.0
    %2157 = vmatprep.subr.mxu0 0.0
    %2158 = vmatpush2.msra.mxu0 0.0
    %2159 = vmatprep.subr.mxu0 0.0
    %2160 = vmatpush2.msra.mxu0 0.0
    %2161 = vmatprep.mubr.f32.mxu0 0.0
    %2162 = vmatmul.mubr.f32.gmra.mxu0 %v2095
    %v2163 = vpop.f32.mrf.mxu0
    %v2164 = vadd.f32 %v2091, %v2163
    %v2165 = vpop.f32.mrf.mxu0
    %2166 = vdwg.mxu0
    %v2167 = vlaneseq
    %v2168 = vshrl.u32 %v2167, 7
    %v2169 = vsub.s32 0, %v2168
    %v2170 = vrot.slane %v2017, %v2169
    %v2171 = vadd.f32 %v2164, %v2170
    %2172 = vmatprep.subr.mxu0 0.0
    %2173 = vmatpush1.msra.mxu0 0.0
    %2174 = vmatprep.subr.mxu0 0.0
    %2175 = vmatpush1.msra.mxu0 0.0
    %2176 = vmatprep.subr.mxu0 0.0
    %2177 = vmatpush1.msra.mxu0 0.0
    %2178 = vmatprep.subr.mxu0 0.0
    %2179 = vmatpush1.msra.mxu0 0.0
    %2180 = vmatprep.subr.mxu0 0.0
    %2181 = vmatpush1.msra.mxu0 0.0
    %2182 = vmatprep.subr.mxu0 0.0
    %2183 = vmatpush1.msra.mxu0 0.0
    %2184 = vmatprep.subr.mxu0 0.0
    %2185 = vmatpush1.msra.mxu0 0.0
    %2186 = vmatprep.subr.mxu0 0.0
    %2187 = vmatpush1.msra.mxu0 0.0
    %2188 = vmatprep.subr.mxu0 0.0
    %2189 = vmatpush1.msra.mxu0 0.0
    %2190 = vmatprep.subr.mxu0 0.0
    %2191 = vmatpush1.msra.mxu0 0.0
    %2192 = vmatprep.subr.mxu0 0.0
    %2193 = vmatpush1.msra.mxu0 0.0
    %2194 = vmatprep.subr.mxu0 0.0
    %2195 = vmatpush1.msra.mxu0 0.0
    %2196 = vmatprep.subr.mxu0 0.0
    %2197 = vmatpush1.msra.mxu0 %v2006
    %2198 = vmatprep.subr.mxu0 0.0
    %2199 = vmatpush1.msra.mxu0 %v2005
    %2200 = vmatprep.subr.mxu0 0.0
    %2201 = vmatpush1.msra.mxu0 %v2004
    %2202 = vmatprep.subr.mxu0 0.0
    %2203 = vmatpush1.msra.mxu0 %v2003
    %2204 = vmatprep.subr.mxu0 0.0
    %2205 = vmatpush2.msra.mxu0 0.0
    %2206 = vmatprep.subr.mxu0 0.0
    %2207 = vmatpush2.msra.mxu0 0.0
    %2208 = vmatprep.subr.mxu0 0.0
    %2209 = vmatpush2.msra.mxu0 0.0
    %2210 = vmatprep.subr.mxu0 0.0
    %2211 = vmatpush2.msra.mxu0 0.0
    %2212 = vmatprep.subr.mxu0 0.0
    %2213 = vmatpush2.msra.mxu0 0.0
    %2214 = vmatprep.subr.mxu0 0.0
    %2215 = vmatpush2.msra.mxu0 0.0
    %2216 = vmatprep.subr.mxu0 0.0
    %2217 = vmatpush2.msra.mxu0 0.0
    %2218 = vmatprep.subr.mxu0 0.0
    %2219 = vmatpush2.msra.mxu0 0.0
    %2220 = vmatprep.subr.mxu0 0.0
    %2221 = vmatpush2.msra.mxu0 0.0
    %2222 = vmatprep.subr.mxu0 0.0
    %2223 = vmatpush2.msra.mxu0 0.0
    %2224 = vmatprep.subr.mxu0 0.0
    %2225 = vmatpush2.msra.mxu0 0.0
    %2226 = vmatprep.subr.mxu0 0.0
    %2227 = vmatpush2.msra.mxu0 0.0
    %2228 = vmatprep.subr.mxu0 0.0
    %2229 = vmatpush2.msra.mxu0 0.0
    %2230 = vmatprep.subr.mxu0 0.0
    %2231 = vmatpush2.msra.mxu0 0.0
    %2232 = vmatprep.subr.mxu0 0.0
    %2233 = vmatpush2.msra.mxu0 0.0
    %2234 = vmatprep.subr.mxu0 0.0
    %2235 = vmatpush2.msra.mxu0 0.0
    %2236 = vmatprep.mubr.f32.mxu0 0.0
    %2237 = vmatmul.mubr.f32.gmra.mxu0 %v2022
    %v2238 = vpop.f32.mrf.mxu0
    %v2239 = vadd.f32 0.0, %v2238
    %v2240 = vpop.f32.mrf.mxu0
    %2241 = vdwg.mxu0
    %2242 = vmatprep.subr.mxu0 0.0
    %2243 = vmatpush1.msra.mxu0 0.0
    %2244 = vmatprep.subr.mxu0 0.0
    %2245 = vmatpush1.msra.mxu0 0.0
    %2246 = vmatprep.subr.mxu0 0.0
    %2247 = vmatpush1.msra.mxu0 0.0
    %2248 = vmatprep.subr.mxu0 0.0
    %2249 = vmatpush1.msra.mxu0 0.0
    %2250 = vmatprep.subr.mxu0 0.0
    %2251 = vmatpush1.msra.mxu0 0.0
    %2252 = vmatprep.subr.mxu0 0.0
    %2253 = vmatpush1.msra.mxu0 0.0
    %2254 = vmatprep.subr.mxu0 0.0
    %2255 = vmatpush1.msra.mxu0 0.0
    %2256 = vmatprep.subr.mxu0 0.0
    %2257 = vmatpush1.msra.mxu0 0.0
    %2258 = vmatprep.subr.mxu0 0.0
    %2259 = vmatpush1.msra.mxu0 0.0
    %2260 = vmatprep.subr.mxu0 0.0
    %2261 = vmatpush1.msra.mxu0 0.0
    %2262 = vmatprep.subr.mxu0 0.0
    %2263 = vmatpush1.msra.mxu0 0.0
    %2264 = vmatprep.subr.mxu0 0.0
    %2265 = vmatpush1.msra.mxu0 0.0
    %2266 = vmatprep.subr.mxu0 0.0
    %2267 = vmatpush1.msra.mxu0 %v2002
    %2268 = vmatprep.subr.mxu0 0.0
    %2269 = vmatpush1.msra.mxu0 %v2001
    %2270 = vmatprep.subr.mxu0 0.0
    %2271 = vmatpush1.msra.mxu0 %v2000
    %2272 = vmatprep.subr.mxu0 0.0
    %2273 = vmatpush1.msra.mxu0 %v1999
    %2274 = vmatprep.subr.mxu0 0.0
    %2275 = vmatpush2.msra.mxu0 0.0
    %2276 = vmatprep.subr.mxu0 0.0
    %2277 = vmatpush2.msra.mxu0 0.0
    %2278 = vmatprep.subr.mxu0 0.0
    %2279 = vmatpush2.msra.mxu0 0.0
    %2280 = vmatprep.subr.mxu0 0.0
    %2281 = vmatpush2.msra.mxu0 0.0
    %2282 = vmatprep.subr.mxu0 0.0
    %2283 = vmatpush2.msra.mxu0 0.0
    %2284 = vmatprep.subr.mxu0 0.0
    %2285 = vmatpush2.msra.mxu0 0.0
    %2286 = vmatprep.subr.mxu0 0.0
    %2287 = vmatpush2.msra.mxu0 0.0
    %2288 = vmatprep.subr.mxu0 0.0
    %2289 = vmatpush2.msra.mxu0 0.0
    %2290 = vmatprep.subr.mxu0 0.0
    %2291 = vmatpush2.msra.mxu0 0.0
    %2292 = vmatprep.subr.mxu0 0.0
    %2293 = vmatpush2.msra.mxu0 0.0
    %2294 = vmatprep.subr.mxu0 0.0
    %2295 = vmatpush2.msra.mxu0 0.0
    %2296 = vmatprep.subr.mxu0 0.0
    %2297 = vmatpush2.msra.mxu0 0.0
    %2298 = vmatprep.subr.mxu0 0.0
    %2299 = vmatpush2.msra.mxu0 0.0
    %2300 = vmatprep.subr.mxu0 0.0
    %2301 = vmatpush2.msra.mxu0 0.0
    %2302 = vmatprep.subr.mxu0 0.0
    %2303 = vmatpush2.msra.mxu0 0.0
    %2304 = vmatprep.subr.mxu0 0.0
    %2305 = vmatpush2.msra.mxu0 0.0
    %2306 = vmatprep.mubr.f32.mxu0 0.0
    %2307 = vmatmul.mubr.f32.gmra.mxu0 %v2095
    %v2308 = vpop.f32.mrf.mxu0
    %v2309 = vadd.f32 %v2239, %v2308
    %v2310 = vpop.f32.mrf.mxu0
    %2311 = vdwg.mxu0
    %v2312 = vlaneseq
    %v2313 = vshrl.u32 %v2312, 7
    %v2314 = vsub.s32 0, %v2313
    %v2315 = vrot.slane %v2018, %v2314
    %v2316 = vadd.f32 %v2309, %v2315
    %2317 = vmatprep.subr.mxu0 0.0
    %2318 = vmatpush1.msra.mxu0 0.0
    %2319 = vmatprep.subr.mxu0 0.0
    %2320 = vmatpush1.msra.mxu0 0.0
    %2321 = vmatprep.subr.mxu0 0.0
    %2322 = vmatpush1.msra.mxu0 0.0
    %2323 = vmatprep.subr.mxu0 0.0
    %2324 = vmatpush1.msra.mxu0 0.0
    %2325 = vmatprep.subr.mxu0 0.0
    %2326 = vmatpush1.msra.mxu0 0.0
    %2327 = vmatprep.subr.mxu0 0.0
    %2328 = vmatpush1.msra.mxu0 0.0
    %2329 = vmatprep.subr.mxu0 0.0
    %2330 = vmatpush1.msra.mxu0 0.0
    %2331 = vmatprep.subr.mxu0 0.0
    %2332 = vmatpush1.msra.mxu0 0.0
    %2333 = vmatprep.subr.mxu0 0.0
    %2334 = vmatpush1.msra.mxu0 0.0
    %2335 = vmatprep.subr.mxu0 0.0
    %2336 = vmatpush1.msra.mxu0 0.0
    %2337 = vmatprep.subr.mxu0 0.0
    %2338 = vmatpush1.msra.mxu0 0.0
    %2339 = vmatprep.subr.mxu0 0.0
    %2340 = vmatpush1.msra.mxu0 0.0
    %2341 = vmatprep.subr.mxu0 0.0
    %2342 = vmatpush1.msra.mxu0 %v2011
    %2343 = vmatprep.subr.mxu0 0.0
    %2344 = vmatpush1.msra.mxu0 %v2010
    %2345 = vmatprep.subr.mxu0 0.0
    %2346 = vmatpush1.msra.mxu0 %v2009
    %2347 = vmatprep.subr.mxu0 0.0
    %2348 = vmatpush1.msra.mxu0 %v2008
    %2349 = vmatprep.subr.mxu0 0.0
    %2350 = vmatpush2.msra.mxu0 0.0
    %2351 = vmatprep.subr.mxu0 0.0
    %2352 = vmatpush2.msra.mxu0 0.0
    %2353 = vmatprep.subr.mxu0 0.0
    %2354 = vmatpush2.msra.mxu0 0.0
    %2355 = vmatprep.subr.mxu0 0.0
    %2356 = vmatpush2.msra.mxu0 0.0
    %2357 = vmatprep.subr.mxu0 0.0
    %2358 = vmatpush2.msra.mxu0 0.0
    %2359 = vmatprep.subr.mxu0 0.0
    %2360 = vmatpush2.msra.mxu0 0.0
    %2361 = vmatprep.subr.mxu0 0.0
    %2362 = vmatpush2.msra.mxu0 0.0
    %2363 = vmatprep.subr.mxu0 0.0
    %2364 = vmatpush2.msra.mxu0 0.0
    %2365 = vmatprep.subr.mxu0 0.0
    %2366 = vmatpush2.msra.mxu0 0.0
    %2367 = vmatprep.subr.mxu0 0.0
    %2368 = vmatpush2.msra.mxu0 0.0
    %2369 = vmatprep.subr.mxu0 0.0
    %2370 = vmatpush2.msra.mxu0 0.0
    %2371 = vmatprep.subr.mxu0 0.0
    %2372 = vmatpush2.msra.mxu0 0.0
    %2373 = vmatprep.subr.mxu0 0.0
    %2374 = vmatpush2.msra.mxu0 0.0
    %2375 = vmatprep.subr.mxu0 0.0
    %2376 = vmatpush2.msra.mxu0 0.0
    %2377 = vmatprep.subr.mxu0 0.0
    %2378 = vmatpush2.msra.mxu0 0.0
    %2379 = vmatprep.subr.mxu0 0.0
    %2380 = vmatpush2.msra.mxu0 0.0
    %2381 = vmatprep.mubr.f32.mxu0 0.0
    %2382 = vmatmul.mubr.f32.gmra.mxu0 %v228
    %v2383 = vpop.f32.mrf.mxu0
    %v2384 = vadd.f32 0.0, %v2383
    %v2385 = vpop.f32.mrf.mxu0
    %2386 = vdwg.mxu0
    %v2387 = vadd.f32 %v2171, %v2384
    %v2388 = vxor.u32 %v2387, 2147483648
    %v2389 = vmul.f32 %v2388, 1.442695
    %v2390 = vpow.pop %v2389
    %v2391 = vadd.f32 %v2390, 1.0
    %v2392 = vrcp.pop %v2391
    %v2393 = vmul.f32 1.0, %v2392
    %v2394 = vtanh.pop %v2387
    %v2395 = vmul.f32 %v2393, 0.0
    %2397 = vrot.lane.b32.xlu0 %v2394, 64
    %v2398 = vpop.permute.xlu0 %2397
    %v2400 = vmul.f32 %v2393, %v2398
    %2402 = vrot.lane.b32.xlu0 %v2400, 32
    %v2403 = vpop.permute.xlu0 %2402
    %v2405 = vadd.f32 %v2395, %v2403
    %v2406 = vtanh.pop %v2405
    %2408 = vrot.lane.b32.xlu0 %v2406, 64
    %v2409 = vpop.permute.xlu0 %2408
    %v2411 = vmul.f32 %v2393, %v2409
    %2413 = vrot.lane.b32.xlu0 %v2411, 32
    %v2414 = vpop.permute.xlu0 %2413
    %2416 = vst.msk [vmem:[#allocation2] sm:$0x1] %vm329, %v2414
    %2417 = vmatprep.subr.mxu0 0.0
    %2418 = vmatpush1.msra.mxu0 0.0
    %2419 = vmatprep.subr.mxu0 0.0
    %2420 = vmatpush1.msra.mxu0 0.0
    %2421 = vmatprep.subr.mxu0 0.0
    %2422 = vmatpush1.msra.mxu0 0.0
    %2423 = vmatprep.subr.mxu0 0.0
    %2424 = vmatpush1.msra.mxu0 0.0
    %2425 = vmatprep.subr.mxu0 0.0
    %2426 = vmatpush1.msra.mxu0 0.0
    %2427 = vmatprep.subr.mxu0 0.0
    %2428 = vmatpush1.msra.mxu0 0.0
    %2429 = vmatprep.subr.mxu0 0.0
    %2430 = vmatpush1.msra.mxu0 0.0
    %2431 = vmatprep.subr.mxu0 0.0
    %2432 = vmatpush1.msra.mxu0 0.0
    %2433 = vmatprep.subr.mxu0 0.0
    %2434 = vmatpush1.msra.mxu0 0.0
    %2435 = vmatprep.subr.mxu0 0.0
    %2436 = vmatpush1.msra.mxu0 0.0
    %2437 = vmatprep.subr.mxu0 0.0
    %2438 = vmatpush1.msra.mxu0 0.0
    %2439 = vmatprep.subr.mxu0 0.0
    %2440 = vmatpush1.msra.mxu0 0.0
    %2441 = vmatprep.subr.mxu0 0.0
    %2442 = vmatpush1.msra.mxu0 %v2016
    %2443 = vmatprep.subr.mxu0 0.0
    %2444 = vmatpush1.msra.mxu0 %v2015
    %2445 = vmatprep.subr.mxu0 0.0
    %2446 = vmatpush1.msra.mxu0 %v2014
    %2447 = vmatprep.subr.mxu0 0.0
    %2448 = vmatpush1.msra.mxu0 %v2013
    %2449 = vmatprep.subr.mxu0 0.0
    %2450 = vmatpush2.msra.mxu0 0.0
    %2451 = vmatprep.subr.mxu0 0.0
    %2452 = vmatpush2.msra.mxu0 0.0
    %2453 = vmatprep.subr.mxu0 0.0
    %2454 = vmatpush2.msra.mxu0 0.0
    %2455 = vmatprep.subr.mxu0 0.0
    %2456 = vmatpush2.msra.mxu0 0.0
    %2457 = vmatprep.subr.mxu0 0.0
    %2458 = vmatpush2.msra.mxu0 0.0
    %2459 = vmatprep.subr.mxu0 0.0
    %2460 = vmatpush2.msra.mxu0 0.0
    %2461 = vmatprep.subr.mxu0 0.0
    %2462 = vmatpush2.msra.mxu0 0.0
    %2463 = vmatprep.subr.mxu0 0.0
    %2464 = vmatpush2.msra.mxu0 0.0
    %2465 = vmatprep.subr.mxu0 0.0
    %2466 = vmatpush2.msra.mxu0 0.0
    %2467 = vmatprep.subr.mxu0 0.0
    %2468 = vmatpush2.msra.mxu0 0.0
    %2469 = vmatprep.subr.mxu0 0.0
    %2470 = vmatpush2.msra.mxu0 0.0
    %2471 = vmatprep.subr.mxu0 0.0
    %2472 = vmatpush2.msra.mxu0 0.0
    %2473 = vmatprep.subr.mxu0 0.0
    %2474 = vmatpush2.msra.mxu0 0.0
    %2475 = vmatprep.subr.mxu0 0.0
    %2476 = vmatpush2.msra.mxu0 0.0
    %2477 = vmatprep.subr.mxu0 0.0
    %2478 = vmatpush2.msra.mxu0 0.0
    %2479 = vmatprep.subr.mxu0 0.0
    %2480 = vmatpush2.msra.mxu0 0.0
    %2481 = vmatprep.mubr.f32.mxu0 0.0
    %2482 = vmatmul.mubr.f32.gmra.mxu0 %v228
    %v2483 = vpop.f32.mrf.mxu0
    %v2484 = vadd.f32 0.0, %v2483
    %v2485 = vpop.f32.mrf.mxu0
    %2486 = vdwg.mxu0
    %v2488 = vrot.slane %v2484, 1
    %v2490 = vadd.f32 %v2316, %v2488
    %v2491 = vxor.u32 %v2490, 2147483648
    %v2492 = vmul.f32 %v2491, 1.442695
    %v2493 = vpow.pop %v2492
    %v2494 = vadd.f32 %v2493, 1.0
    %v2495 = vrcp.pop %v2494
    %v2496 = vmul.f32 1.0, %v2495
    %v2497 = vtanh.pop %v2490
    %v2498 = vmul.f32 %v2496, 0.0
    %2500 = vrot.lane.b32.xlu0 %v2497, 64
    %v2501 = vpop.permute.xlu0 %2500
    %v2503 = vmul.f32 %v2496, %v2501
    %2505 = vrot.lane.b32.xlu0 %v2503, 32
    %v2506 = vpop.permute.xlu0 %2505
    %v2508 = vadd.f32 %v2498, %v2506
    %v2509 = vtanh.pop %v2508
    %2511 = vrot.lane.b32.xlu0 %v2509, 64
    %v2512 = vpop.permute.xlu0 %2511
    %v2514 = vmul.f32 %v2496, %v2512
    %2516 = vrot.lane.b32.xlu0 %v2514, 32
    %v2517 = vpop.permute.xlu0 %2516
    %2519 = vst.msk [vmem:[#allocation3] sm:$0x80] %vm433, %v2517
    %v2520 = vsel %vm226, %v2414, 0
    %2522 = vmatprep.subr.mxu0 0.0
    %2523 = vmatpush1.msra.mxu0 0.0
    %2524 = vmatprep.subr.mxu0 0.0
    %2525 = vmatpush1.msra.mxu0 0.0
    %2526 = vmatprep.subr.mxu0 0.0
    %2527 = vmatpush1.msra.mxu0 0.0
    %2528 = vmatprep.subr.mxu0 0.0
    %2529 = vmatpush1.msra.mxu0 0.0
    %2530 = vmatprep.subr.mxu0 0.0
    %2531 = vmatpush1.msra.mxu0 0.0
    %2532 = vmatprep.subr.mxu0 0.0
    %2533 = vmatpush1.msra.mxu0 0.0
    %2534 = vmatprep.subr.mxu0 0.0
    %2535 = vmatpush1.msra.mxu0 0.0
    %2536 = vmatprep.subr.mxu0 0.0
    %2537 = vmatpush1.msra.mxu0 0.0
    %2538 = vmatprep.subr.mxu0 0.0
    %2539 = vmatpush1.msra.mxu0 0.0
    %2540 = vmatprep.subr.mxu0 0.0
    %2541 = vmatpush1.msra.mxu0 0.0
    %2542 = vmatprep.subr.mxu0 0.0
    %2543 = vmatpush1.msra.mxu0 0.0
    %2544 = vmatprep.subr.mxu0 0.0
    %2545 = vmatpush1.msra.mxu0 0.0
    %2546 = vmatprep.subr.mxu0 0.0
    %2547 = vmatpush1.msra.mxu0 %v2011
    %2548 = vmatprep.subr.mxu0 0.0
    %2549 = vmatpush1.msra.mxu0 %v2010
    %2550 = vmatprep.subr.mxu0 0.0
    %2551 = vmatpush1.msra.mxu0 %v2009
    %2552 = vmatprep.subr.mxu0 0.0
    %2553 = vmatpush1.msra.mxu0 %v2008
    %2554 = vmatprep.subr.mxu0 0.0
    %2555 = vmatpush2.msra.mxu0 0.0
    %2556 = vmatprep.subr.mxu0 0.0
    %2557 = vmatpush2.msra.mxu0 0.0
    %2558 = vmatprep.subr.mxu0 0.0
    %2559 = vmatpush2.msra.mxu0 0.0
    %2560 = vmatprep.subr.mxu0 0.0
    %2561 = vmatpush2.msra.mxu0 0.0
    %2562 = vmatprep.subr.mxu0 0.0
    %2563 = vmatpush2.msra.mxu0 0.0
    %2564 = vmatprep.subr.mxu0 0.0
    %2565 = vmatpush2.msra.mxu0 0.0
    %2566 = vmatprep.subr.mxu0 0.0
    %2567 = vmatpush2.msra.mxu0 0.0
    %2568 = vmatprep.subr.mxu0 0.0
    %2569 = vmatpush2.msra.mxu0 0.0
    %2570 = vmatprep.subr.mxu0 0.0
    %2571 = vmatpush2.msra.mxu0 0.0
    %2572 = vmatprep.subr.mxu0 0.0
    %2573 = vmatpush2.msra.mxu0 0.0
    %2574 = vmatprep.subr.mxu0 0.0
    %2575 = vmatpush2.msra.mxu0 0.0
    %2576 = vmatprep.subr.mxu0 0.0
    %2577 = vmatpush2.msra.mxu0 0.0
    %2578 = vmatprep.subr.mxu0 0.0
    %2579 = vmatpush2.msra.mxu0 0.0
    %2580 = vmatprep.subr.mxu0 0.0
    %2581 = vmatpush2.msra.mxu0 0.0
    %2582 = vmatprep.subr.mxu0 0.0
    %2583 = vmatpush2.msra.mxu0 0.0
    %2584 = vmatprep.subr.mxu0 0.0
    %2585 = vmatpush2.msra.mxu0 0.0
    %2586 = vmatprep.mubr.f32.mxu0 0.0
    %2587 = vmatmul.mubr.f32.gmra.mxu0 %v2520
    %v2588 = vpop.f32.mrf.mxu0
    %v2589 = vadd.f32 0.0, %v2588
    %v2590 = vpop.f32.mrf.mxu0
    %2591 = vdwg.mxu0
    %v2593 = vrot.slane %v2589, 7
    %v2595 = vadd.f32 %v2171, %v2593
    %v2596 = vxor.u32 %v2595, 2147483648
    %v2597 = vmul.f32 %v2596, 1.442695
    %v2598 = vpow.pop %v2597
    %v2599 = vadd.f32 %v2598, 1.0
    %v2600 = vrcp.pop %v2599
    %v2601 = vmul.f32 1.0, %v2600
    %v2602 = vtanh.pop %v2595
    %v2604 = vrot.slane %v2405, 7
    %v2606 = vmul.f32 %v2601, %v2604
    %2608 = vrot.lane.b32.xlu0 %v2602, 64
    %v2609 = vpop.permute.xlu0 %2608
    %v2611 = vmul.f32 %v2601, %v2609
    %2613 = vrot.lane.b32.xlu0 %v2611, 32
    %v2614 = vpop.permute.xlu0 %2613
    %v2616 = vadd.f32 %v2606, %v2614
    %v2617 = vtanh.pop %v2616
    %2619 = vrot.lane.b32.xlu0 %v2617, 64
    %v2620 = vpop.permute.xlu0 %2619
    %v2622 = vmul.f32 %v2601, %v2620
    %2624 = vrot.lane.b32.xlu0 %v2622, 32
    %v2625 = vpop.permute.xlu0 %2624
    %2627 = vst.msk [vmem:[#allocation2] sm:$0x2] %vm542, %v2625
    %v2628 = vrot.slane %v2514, 7
    %2629 = vrot.lane.b32.xlu0 %v2628, 32
    %v2630 = vpop.permute.xlu0 %2629
    %v2631 = vsel %vm226, %v2630, 0
    %2633 = vmatprep.subr.mxu0 0.0
    %2634 = vmatpush1.msra.mxu0 0.0
    %2635 = vmatprep.subr.mxu0 0.0
    %2636 = vmatpush1.msra.mxu0 0.0
    %2637 = vmatprep.subr.mxu0 0.0
    %2638 = vmatpush1.msra.mxu0 0.0
    %2639 = vmatprep.subr.mxu0 0.0
    %2640 = vmatpush1.msra.mxu0 0.0
    %2641 = vmatprep.subr.mxu0 0.0
    %2642 = vmatpush1.msra.mxu0 0.0
    %2643 = vmatprep.subr.mxu0 0.0
    %2644 = vmatpush1.msra.mxu0 0.0
    %2645 = vmatprep.subr.mxu0 0.0
    %2646 = vmatpush1.msra.mxu0 0.0
    %2647 = vmatprep.subr.mxu0 0.0
    %2648 = vmatpush1.msra.mxu0 0.0
    %2649 = vmatprep.subr.mxu0 0.0
    %2650 = vmatpush1.msra.mxu0 0.0
    %2651 = vmatprep.subr.mxu0 0.0
    %2652 = vmatpush1.msra.mxu0 0.0
    %2653 = vmatprep.subr.mxu0 0.0
    %2654 = vmatpush1.msra.mxu0 0.0
    %2655 = vmatprep.subr.mxu0 0.0
    %2656 = vmatpush1.msra.mxu0 0.0
    %2657 = vmatprep.subr.mxu0 0.0
    %2658 = vmatpush1.msra.mxu0 %v2016
    %2659 = vmatprep.subr.mxu0 0.0
    %2660 = vmatpush1.msra.mxu0 %v2015
    %2661 = vmatprep.subr.mxu0 0.0
    %2662 = vmatpush1.msra.mxu0 %v2014
    %2663 = vmatprep.subr.mxu0 0.0
    %2664 = vmatpush1.msra.mxu0 %v2013
    %2665 = vmatprep.subr.mxu0 0.0
    %2666 = vmatpush2.msra.mxu0 0.0
    %2667 = vmatprep.subr.mxu0 0.0
    %2668 = vmatpush2.msra.mxu0 0.0
    %2669 = vmatprep.subr.mxu0 0.0
    %2670 = vmatpush2.msra.mxu0 0.0
    %2671 = vmatprep.subr.mxu0 0.0
    %2672 = vmatpush2.msra.mxu0 0.0
    %2673 = vmatprep.subr.mxu0 0.0
    %2674 = vmatpush2.msra.mxu0 0.0
    %2675 = vmatprep.subr.mxu0 0.0
    %2676 = vmatpush2.msra.mxu0 0.0
    %2677 = vmatprep.subr.mxu0 0.0
    %2678 = vmatpush2.msra.mxu0 0.0
    %2679 = vmatprep.subr.mxu0 0.0
    %2680 = vmatpush2.msra.mxu0 0.0
    %2681 = vmatprep.subr.mxu0 0.0
    %2682 = vmatpush2.msra.mxu0 0.0
    %2683 = vmatprep.subr.mxu0 0.0
    %2684 = vmatpush2.msra.mxu0 0.0
    %2685 = vmatprep.subr.mxu0 0.0
    %2686 = vmatpush2.msra.mxu0 0.0
    %2687 = vmatprep.subr.mxu0 0.0
    %2688 = vmatpush2.msra.mxu0 0.0
    %2689 = vmatprep.subr.mxu0 0.0
    %2690 = vmatpush2.msra.mxu0 0.0
    %2691 = vmatprep.subr.mxu0 0.0
    %2692 = vmatpush2.msra.mxu0 0.0
    %2693 = vmatprep.subr.mxu0 0.0
    %2694 = vmatpush2.msra.mxu0 0.0
    %2695 = vmatprep.subr.mxu0 0.0
    %2696 = vmatpush2.msra.mxu0 0.0
    %2697 = vmatprep.mubr.f32.mxu0 0.0
    %2698 = vmatmul.mubr.f32.gmra.mxu0 %v2631
    %v2699 = vpop.f32.mrf.mxu0
    %v2700 = vadd.f32 0.0, %v2699
    %v2701 = vpop.f32.mrf.mxu0
    %2702 = vdwg.mxu0
    %v2704 = vrot.slane %v2700, 2
    %v2706 = vadd.f32 %v2316, %v2704
    %v2707 = vxor.u32 %v2706, 2147483648
    %v2708 = vmul.f32 %v2707, 1.442695
    %v2709 = vpow.pop %v2708
    %v2710 = vadd.f32 %v2709, 1.0
    %v2711 = vrcp.pop %v2710
    %v2712 = vmul.f32 1.0, %v2711
    %v2713 = vtanh.pop %v2706
    %v2715 = vrot.slane %v2508, 1
    %v2717 = vmul.f32 %v2712, %v2715
    %2719 = vrot.lane.b32.xlu0 %v2713, 64
    %v2720 = vpop.permute.xlu0 %2719
    %v2722 = vmul.f32 %v2712, %v2720
    %2724 = vrot.lane.b32.xlu0 %v2722, 32
    %v2725 = vpop.permute.xlu0 %2724
    %v2727 = vadd.f32 %v2717, %v2725
    %v2728 = vtanh.pop %v2727
    %2730 = vrot.lane.b32.xlu0 %v2728, 64
    %v2731 = vpop.permute.xlu0 %2730
    %v2733 = vmul.f32 %v2712, %v2731
    %2735 = vrot.lane.b32.xlu0 %v2733, 32
    %v2736 = vpop.permute.xlu0 %2735
    %2738 = vst.msk [vmem:[#allocation3] sm:$0x40] %vm654, %v2736
    %v2739 = vrot.slane %v2622, 1
    %2740 = vrot.lane.b32.xlu0 %v2739, 32
    %v2741 = vpop.permute.xlu0 %2740
    %v2742 = vsel %vm226, %v2741, 0
    %2744 = vmatprep.subr.mxu0 0.0
    %2745 = vmatpush1.msra.mxu0 0.0
    %2746 = vmatprep.subr.mxu0 0.0
    %2747 = vmatpush1.msra.mxu0 0.0
    %2748 = vmatprep.subr.mxu0 0.0
    %2749 = vmatpush1.msra.mxu0 0.0
    %2750 = vmatprep.subr.mxu0 0.0
    %2751 = vmatpush1.msra.mxu0 0.0
    %2752 = vmatprep.subr.mxu0 0.0
    %2753 = vmatpush1.msra.mxu0 0.0
    %2754 = vmatprep.subr.mxu0 0.0
    %2755 = vmatpush1.msra.mxu0 0.0
    %2756 = vmatprep.subr.mxu0 0.0
    %2757 = vmatpush1.msra.mxu0 0.0
    %2758 = vmatprep.subr.mxu0 0.0
    %2759 = vmatpush1.msra.mxu0 0.0
    %2760 = vmatprep.subr.mxu0 0.0
    %2761 = vmatpush1.msra.mxu0 0.0
    %2762 = vmatprep.subr.mxu0 0.0
    %2763 = vmatpush1.msra.mxu0 0.0
    %2764 = vmatprep.subr.mxu0 0.0
    %2765 = vmatpush1.msra.mxu0 0.0
    %2766 = vmatprep.subr.mxu0 0.0
    %2767 = vmatpush1.msra.mxu0 0.0
    %2768 = vmatprep.subr.mxu0 0.0
    %2769 = vmatpush1.msra.mxu0 %v2011
    %2770 = vmatprep.subr.mxu0 0.0
    %2771 = vmatpush1.msra.mxu0 %v2010
    %2772 = vmatprep.subr.mxu0 0.0
    %2773 = vmatpush1.msra.mxu0 %v2009
    %2774 = vmatprep.subr.mxu0 0.0
    %2775 = vmatpush1.msra.mxu0 %v2008
    %2776 = vmatprep.subr.mxu0 0.0
    %2777 = vmatpush2.msra.mxu0 0.0
    %2778 = vmatprep.subr.mxu0 0.0
    %2779 = vmatpush2.msra.mxu0 0.0
    %2780 = vmatprep.subr.mxu0 0.0
    %2781 = vmatpush2.msra.mxu0 0.0
    %2782 = vmatprep.subr.mxu0 0.0
    %2783 = vmatpush2.msra.mxu0 0.0
    %2784 = vmatprep.subr.mxu0 0.0
    %2785 = vmatpush2.msra.mxu0 0.0
    %2786 = vmatprep.subr.mxu0 0.0
    %2787 = vmatpush2.msra.mxu0 0.0
    %2788 = vmatprep.subr.mxu0 0.0
    %2789 = vmatpush2.msra.mxu0 0.0
    %2790 = vmatprep.subr.mxu0 0.0
    %2791 = vmatpush2.msra.mxu0 0.0
    %2792 = vmatprep.subr.mxu0 0.0
    %2793 = vmatpush2.msra.mxu0 0.0
    %2794 = vmatprep.subr.mxu0 0.0
    %2795 = vmatpush2.msra.mxu0 0.0
    %2796 = vmatprep.subr.mxu0 0.0
    %2797 = vmatpush2.msra.mxu0 0.0
    %2798 = vmatprep.subr.mxu0 0.0
    %2799 = vmatpush2.msra.mxu0 0.0
    %2800 = vmatprep.subr.mxu0 0.0
    %2801 = vmatpush2.msra.mxu0 0.0
    %2802 = vmatprep.subr.mxu0 0.0
    %2803 = vmatpush2.msra.mxu0 0.0
    %2804 = vmatprep.subr.mxu0 0.0
    %2805 = vmatpush2.msra.mxu0 0.0
    %2806 = vmatprep.subr.mxu0 0.0
    %2807 = vmatpush2.msra.mxu0 0.0
    %2808 = vmatprep.mubr.f32.mxu0 0.0
    %2809 = vmatmul.mubr.f32.gmra.mxu0 %v2742
    %v2810 = vpop.f32.mrf.mxu0
    %v2811 = vadd.f32 0.0, %v2810
    %v2812 = vpop.f32.mrf.mxu0
    %2813 = vdwg.mxu0
    %v2815 = vrot.slane %v2811, 6
    %v2817 = vadd.f32 %v2171, %v2815
    %v2818 = vxor.u32 %v2817, 2147483648
    %v2819 = vmul.f32 %v2818, 1.442695
    %v2820 = vpow.pop %v2819
    %v2821 = vadd.f32 %v2820, 1.0
    %v2822 = vrcp.pop %v2821
    %v2823 = vmul.f32 1.0, %v2822
    %v2824 = vtanh.pop %v2817
    %v2826 = vrot.slane %v2616, 7
    %v2828 = vmul.f32 %v2823, %v2826
    %2830 = vrot.lane.b32.xlu0 %v2824, 64
    %v2831 = vpop.permute.xlu0 %2830
    %v2833 = vmul.f32 %v2823, %v2831
    %2835 = vrot.lane.b32.xlu0 %v2833, 32
    %v2836 = vpop.permute.xlu0 %2835
    %v2838 = vadd.f32 %v2828, %v2836
    %v2839 = vtanh.pop %v2838
    %2841 = vrot.lane.b32.xlu0 %v2839, 64
    %v2842 = vpop.permute.xlu0 %2841
    %v2844 = vmul.f32 %v2823, %v2842
    %2846 = vrot.lane.b32.xlu0 %v2844, 32
    %v2847 = vpop.permute.xlu0 %2846
    %2849 = vst.msk [vmem:[#allocation2] sm:$0x4] %vm766, %v2847
    %v2850 = vrot.slane %v2733, 6
    %2851 = vrot.lane.b32.xlu0 %v2850, 32
    %v2852 = vpop.permute.xlu0 %2851
    %v2853 = vsel %vm226, %v2852, 0
    %2855 = vmatprep.subr.mxu0 0.0
    %2856 = vmatpush1.msra.mxu0 0.0
    %2857 = vmatprep.subr.mxu0 0.0
    %2858 = vmatpush1.msra.mxu0 0.0
    %2859 = vmatprep.subr.mxu0 0.0
    %2860 = vmatpush1.msra.mxu0 0.0
    %2861 = vmatprep.subr.mxu0 0.0
    %2862 = vmatpush1.msra.mxu0 0.0
    %2863 = vmatprep.subr.mxu0 0.0
    %2864 = vmatpush1.msra.mxu0 0.0
    %2865 = vmatprep.subr.mxu0 0.0
    %2866 = vmatpush1.msra.mxu0 0.0
    %2867 = vmatprep.subr.mxu0 0.0
    %2868 = vmatpush1.msra.mxu0 0.0
    %2869 = vmatprep.subr.mxu0 0.0
    %2870 = vmatpush1.msra.mxu0 0.0
    %2871 = vmatprep.subr.mxu0 0.0
    %2872 = vmatpush1.msra.mxu0 0.0
    %2873 = vmatprep.subr.mxu0 0.0
    %2874 = vmatpush1.msra.mxu0 0.0
    %2875 = vmatprep.subr.mxu0 0.0
    %2876 = vmatpush1.msra.mxu0 0.0
    %2877 = vmatprep.subr.mxu0 0.0
    %2878 = vmatpush1.msra.mxu0 0.0
    %2879 = vmatprep.subr.mxu0 0.0
    %2880 = vmatpush1.msra.mxu0 %v2016
    %2881 = vmatprep.subr.mxu0 0.0
    %2882 = vmatpush1.msra.mxu0 %v2015
    %2883 = vmatprep.subr.mxu0 0.0
    %2884 = vmatpush1.msra.mxu0 %v2014
    %2885 = vmatprep.subr.mxu0 0.0
    %2886 = vmatpush1.msra.mxu0 %v2013
    %2887 = vmatprep.subr.mxu0 0.0
    %2888 = vmatpush2.msra.mxu0 0.0
    %2889 = vmatprep.subr.mxu0 0.0
    %2890 = vmatpush2.msra.mxu0 0.0
    %2891 = vmatprep.subr.mxu0 0.0
    %2892 = vmatpush2.msra.mxu0 0.0
    %2893 = vmatprep.subr.mxu0 0.0
    %2894 = vmatpush2.msra.mxu0 0.0
    %2895 = vmatprep.subr.mxu0 0.0
    %2896 = vmatpush2.msra.mxu0 0.0
    %2897 = vmatprep.subr.mxu0 0.0
    %2898 = vmatpush2.msra.mxu0 0.0
    %2899 = vmatprep.subr.mxu0 0.0
    %2900 = vmatpush2.msra.mxu0 0.0
    %2901 = vmatprep.subr.mxu0 0.0
    %2902 = vmatpush2.msra.mxu0 0.0
    %2903 = vmatprep.subr.mxu0 0.0
    %2904 = vmatpush2.msra.mxu0 0.0
    %2905 = vmatprep.subr.mxu0 0.0
    %2906 = vmatpush2.msra.mxu0 0.0
    %2907 = vmatprep.subr.mxu0 0.0
    %2908 = vmatpush2.msra.mxu0 0.0
    %2909 = vmatprep.subr.mxu0 0.0
    %2910 = vmatpush2.msra.mxu0 0.0
    %2911 = vmatprep.subr.mxu0 0.0
    %2912 = vmatpush2.msra.mxu0 0.0
    %2913 = vmatprep.subr.mxu0 0.0
    %2914 = vmatpush2.msra.mxu0 0.0
    %2915 = vmatprep.subr.mxu0 0.0
    %2916 = vmatpush2.msra.mxu0 0.0
    %2917 = vmatprep.subr.mxu0 0.0
    %2918 = vmatpush2.msra.mxu0 0.0
    %2919 = vmatprep.mubr.f32.mxu0 0.0
    %2920 = vmatmul.mubr.f32.gmra.mxu0 %v2853
    %v2921 = vpop.f32.mrf.mxu0
    %v2922 = vadd.f32 0.0, %v2921
    %v2923 = vpop.f32.mrf.mxu0
    %2924 = vdwg.mxu0
    %v2926 = vrot.slane %v2922, 3
    %v2928 = vadd.f32 %v2316, %v2926
    %v2929 = vxor.u32 %v2928, 2147483648
    %v2930 = vmul.f32 %v2929, 1.442695
    %v2931 = vpow.pop %v2930
    %v2932 = vadd.f32 %v2931, 1.0
    %v2933 = vrcp.pop %v2932
    %v2934 = vmul.f32 1.0, %v2933
    %v2935 = vtanh.pop %v2928
    %v2937 = vrot.slane %v2727, 1
    %v2939 = vmul.f32 %v2934, %v2937
    %2941 = vrot.lane.b32.xlu0 %v2935, 64
    %v2942 = vpop.permute.xlu0 %2941
    %v2944 = vmul.f32 %v2934, %v2942
    %2946 = vrot.lane.b32.xlu0 %v2944, 32
    %v2947 = vpop.permute.xlu0 %2946
    %v2949 = vadd.f32 %v2939, %v2947
    %v2950 = vtanh.pop %v2949
    %2952 = vrot.lane.b32.xlu0 %v2950, 64
    %v2953 = vpop.permute.xlu0 %2952
    %v2955 = vmul.f32 %v2934, %v2953
    %2957 = vrot.lane.b32.xlu0 %v2955, 32
    %v2958 = vpop.permute.xlu0 %2957
    %2960 = vst.msk [vmem:[#allocation3] sm:$0x20] %vm878, %v2958
    %v2961 = vrot.slane %v2844, 2
    %2962 = vrot.lane.b32.xlu0 %v2961, 32
    %v2963 = vpop.permute.xlu0 %2962
    %v2964 = vsel %vm226, %v2963, 0
    %2966 = vmatprep.subr.mxu0 0.0
    %2967 = vmatpush1.msra.mxu0 0.0
    %2968 = vmatprep.subr.mxu0 0.0
    %2969 = vmatpush1.msra.mxu0 0.0
    %2970 = vmatprep.subr.mxu0 0.0
    %2971 = vmatpush1.msra.mxu0 0.0
    %2972 = vmatprep.subr.mxu0 0.0
    %2973 = vmatpush1.msra.mxu0 0.0
    %2974 = vmatprep.subr.mxu0 0.0
    %2975 = vmatpush1.msra.mxu0 0.0
    %2976 = vmatprep.subr.mxu0 0.0
    %2977 = vmatpush1.msra.mxu0 0.0
    %2978 = vmatprep.subr.mxu0 0.0
    %2979 = vmatpush1.msra.mxu0 0.0
    %2980 = vmatprep.subr.mxu0 0.0
    %2981 = vmatpush1.msra.mxu0 0.0
    %2982 = vmatprep.subr.mxu0 0.0
    %2983 = vmatpush1.msra.mxu0 0.0
    %2984 = vmatprep.subr.mxu0 0.0
    %2985 = vmatpush1.msra.mxu0 0.0
    %2986 = vmatprep.subr.mxu0 0.0
    %2987 = vmatpush1.msra.mxu0 0.0
    %2988 = vmatprep.subr.mxu0 0.0
    %2989 = vmatpush1.msra.mxu0 0.0
    %2990 = vmatprep.subr.mxu0 0.0
    %2991 = vmatpush1.msra.mxu0 %v2011
    %2992 = vmatprep.subr.mxu0 0.0
    %2993 = vmatpush1.msra.mxu0 %v2010
    %2994 = vmatprep.subr.mxu0 0.0
    %2995 = vmatpush1.msra.mxu0 %v2009
    %2996 = vmatprep.subr.mxu0 0.0
    %2997 = vmatpush1.msra.mxu0 %v2008
    %2998 = vmatprep.subr.mxu0 0.0
    %2999 = vmatpush2.msra.mxu0 0.0
    %3000 = vmatprep.subr.mxu0 0.0
    %3001 = vmatpush2.msra.mxu0 0.0
    %3002 = vmatprep.subr.mxu0 0.0
    %3003 = vmatpush2.msra.mxu0 0.0
    %3004 = vmatprep.subr.mxu0 0.0
    %3005 = vmatpush2.msra.mxu0 0.0
    %3006 = vmatprep.subr.mxu0 0.0
    %3007 = vmatpush2.msra.mxu0 0.0
    %3008 = vmatprep.subr.mxu0 0.0
    %3009 = vmatpush2.msra.mxu0 0.0
    %3010 = vmatprep.subr.mxu0 0.0
    %3011 = vmatpush2.msra.mxu0 0.0
    %3012 = vmatprep.subr.mxu0 0.0
    %3013 = vmatpush2.msra.mxu0 0.0
    %3014 = vmatprep.subr.mxu0 0.0
    %3015 = vmatpush2.msra.mxu0 0.0
    %3016 = vmatprep.subr.mxu0 0.0
    %3017 = vmatpush2.msra.mxu0 0.0
    %3018 = vmatprep.subr.mxu0 0.0
    %3019 = vmatpush2.msra.mxu0 0.0
    %3020 = vmatprep.subr.mxu0 0.0
    %3021 = vmatpush2.msra.mxu0 0.0
    %3022 = vmatprep.subr.mxu0 0.0
    %3023 = vmatpush2.msra.mxu0 0.0
    %3024 = vmatprep.subr.mxu0 0.0
    %3025 = vmatpush2.msra.mxu0 0.0
    %3026 = vmatprep.subr.mxu0 0.0
    %3027 = vmatpush2.msra.mxu0 0.0
    %3028 = vmatprep.subr.mxu0 0.0
    %3029 = vmatpush2.msra.mxu0 0.0
    %3030 = vmatprep.mubr.f32.mxu0 0.0
    %3031 = vmatmul.mubr.f32.gmra.mxu0 %v2964
    %v3032 = vpop.f32.mrf.mxu0
    %v3033 = vadd.f32 0.0, %v3032
    %v3034 = vpop.f32.mrf.mxu0
    %3035 = vdwg.mxu0
    %v3037 = vrot.slane %v3033, 5
    %v3039 = vadd.f32 %v2171, %v3037
    %v3040 = vxor.u32 %v3039, 2147483648
    %v3041 = vmul.f32 %v3040, 1.442695
    %v3042 = vpow.pop %v3041
    %v3043 = vadd.f32 %v3042, 1.0
    %v3044 = vrcp.pop %v3043
    %v3045 = vmul.f32 1.0, %v3044
    %v3046 = vtanh.pop %v3039
    %v3048 = vrot.slane %v2838, 7
    %v3050 = vmul.f32 %v3045, %v3048
    %3052 = vrot.lane.b32.xlu0 %v3046, 64
    %v3053 = vpop.permute.xlu0 %3052
    %v3055 = vmul.f32 %v3045, %v3053
    %3057 = vrot.lane.b32.xlu0 %v3055, 32
    %v3058 = vpop.permute.xlu0 %3057
    %v3060 = vadd.f32 %v3050, %v3058
    %v3061 = vtanh.pop %v3060
    %3063 = vrot.lane.b32.xlu0 %v3061, 64
    %v3064 = vpop.permute.xlu0 %3063
    %v3066 = vmul.f32 %v3045, %v3064
    %3068 = vrot.lane.b32.xlu0 %v3066, 32
    %v3069 = vpop.permute.xlu0 %3068
    %3071 = vst.msk [vmem:[#allocation2] sm:$0x8] %vm990, %v3069
    %v3072 = vrot.slane %v2955, 5
    %3073 = vrot.lane.b32.xlu0 %v3072, 32
    %v3074 = vpop.permute.xlu0 %3073
    %v3075 = vsel %vm226, %v3074, 0
    %3077 = vmatprep.subr.mxu0 0.0
    %3078 = vmatpush1.msra.mxu0 0.0
    %3079 = vmatprep.subr.mxu0 0.0
    %3080 = vmatpush1.msra.mxu0 0.0
    %3081 = vmatprep.subr.mxu0 0.0
    %3082 = vmatpush1.msra.mxu0 0.0
    %3083 = vmatprep.subr.mxu0 0.0
    %3084 = vmatpush1.msra.mxu0 0.0
    %3085 = vmatprep.subr.mxu0 0.0
    %3086 = vmatpush1.msra.mxu0 0.0
    %3087 = vmatprep.subr.mxu0 0.0
    %3088 = vmatpush1.msra.mxu0 0.0
    %3089 = vmatprep.subr.mxu0 0.0
    %3090 = vmatpush1.msra.mxu0 0.0
    %3091 = vmatprep.subr.mxu0 0.0
    %3092 = vmatpush1.msra.mxu0 0.0
    %3093 = vmatprep.subr.mxu0 0.0
    %3094 = vmatpush1.msra.mxu0 0.0
    %3095 = vmatprep.subr.mxu0 0.0
    %3096 = vmatpush1.msra.mxu0 0.0
    %3097 = vmatprep.subr.mxu0 0.0
    %3098 = vmatpush1.msra.mxu0 0.0
    %3099 = vmatprep.subr.mxu0 0.0
    %3100 = vmatpush1.msra.mxu0 0.0
    %3101 = vmatprep.subr.mxu0 0.0
    %3102 = vmatpush1.msra.mxu0 %v2016
    %3103 = vmatprep.subr.mxu0 0.0
    %3104 = vmatpush1.msra.mxu0 %v2015
    %3105 = vmatprep.subr.mxu0 0.0
    %3106 = vmatpush1.msra.mxu0 %v2014
    %3107 = vmatprep.subr.mxu0 0.0
    %3108 = vmatpush1.msra.mxu0 %v2013
    %3109 = vmatprep.subr.mxu0 0.0
    %3110 = vmatpush2.msra.mxu0 0.0
    %3111 = vmatprep.subr.mxu0 0.0
    %3112 = vmatpush2.msra.mxu0 0.0
    %3113 = vmatprep.subr.mxu0 0.0
    %3114 = vmatpush2.msra.mxu0 0.0
    %3115 = vmatprep.subr.mxu0 0.0
    %3116 = vmatpush2.msra.mxu0 0.0
    %3117 = vmatprep.subr.mxu0 0.0
    %3118 = vmatpush2.msra.mxu0 0.0
    %3119 = vmatprep.subr.mxu0 0.0
    %3120 = vmatpush2.msra.mxu0 0.0
    %3121 = vmatprep.subr.mxu0 0.0
    %3122 = vmatpush2.msra.mxu0 0.0
    %3123 = vmatprep.subr.mxu0 0.0
    %3124 = vmatpush2.msra.mxu0 0.0
    %3125 = vmatprep.subr.mxu0 0.0
    %3126 = vmatpush2.msra.mxu0 0.0
    %3127 = vmatprep.subr.mxu0 0.0
    %3128 = vmatpush2.msra.mxu0 0.0
    %3129 = vmatprep.subr.mxu0 0.0
    %3130 = vmatpush2.msra.mxu0 0.0
    %3131 = vmatprep.subr.mxu0 0.0
    %3132 = vmatpush2.msra.mxu0 0.0
    %3133 = vmatprep.subr.mxu0 0.0
    %3134 = vmatpush2.msra.mxu0 0.0
    %3135 = vmatprep.subr.mxu0 0.0
    %3136 = vmatpush2.msra.mxu0 0.0
    %3137 = vmatprep.subr.mxu0 0.0
    %3138 = vmatpush2.msra.mxu0 0.0
    %3139 = vmatprep.subr.mxu0 0.0
    %3140 = vmatpush2.msra.mxu0 0.0
    %3141 = vmatprep.mubr.f32.mxu0 0.0
    %3142 = vmatmul.mubr.f32.gmra.mxu0 %v3075
    %v3143 = vpop.f32.mrf.mxu0
    %v3144 = vadd.f32 0.0, %v3143
    %v3145 = vpop.f32.mrf.mxu0
    %3146 = vdwg.mxu0
    %v3148 = vrot.slane %v3144, 4
    %v3150 = vadd.f32 %v2316, %v3148
    %v3151 = vxor.u32 %v3150, 2147483648
    %v3152 = vmul.f32 %v3151, 1.442695
    %v3153 = vpow.pop %v3152
    %v3154 = vadd.f32 %v3153, 1.0
    %v3155 = vrcp.pop %v3154
    %v3156 = vmul.f32 1.0, %v3155
    %v3157 = vtanh.pop %v3150
    %v3159 = vrot.slane %v2949, 1
    %v3161 = vmul.f32 %v3156, %v3159
    %3163 = vrot.lane.b32.xlu0 %v3157, 64
    %v3164 = vpop.permute.xlu0 %3163
    %v3166 = vmul.f32 %v3156, %v3164
    %3168 = vrot.lane.b32.xlu0 %v3166, 32
    %v3169 = vpop.permute.xlu0 %3168
    %v3171 = vadd.f32 %v3161, %v3169
    %v3172 = vtanh.pop %v3171
    %3174 = vrot.lane.b32.xlu0 %v3172, 64
    %v3175 = vpop.permute.xlu0 %3174
    %v3177 = vmul.f32 %v3156, %v3175
    %3179 = vrot.lane.b32.xlu0 %v3177, 32
    %v3180 = vpop.permute.xlu0 %3179
    %3182 = vst.msk [vmem:[#allocation3] sm:$0x10] %vm1102, %v3180
    %v3183 = vrot.slane %v3066, 3
    %3184 = vrot.lane.b32.xlu0 %v3183, 32
    %v3185 = vpop.permute.xlu0 %3184
    %v3186 = vsel %vm226, %v3185, 0
    %3188 = vmatprep.subr.mxu0 0.0
    %3189 = vmatpush1.msra.mxu0 0.0
    %3190 = vmatprep.subr.mxu0 0.0
    %3191 = vmatpush1.msra.mxu0 0.0
    %3192 = vmatprep.subr.mxu0 0.0
    %3193 = vmatpush1.msra.mxu0 0.0
    %3194 = vmatprep.subr.mxu0 0.0
    %3195 = vmatpush1.msra.mxu0 0.0
    %3196 = vmatprep.subr.mxu0 0.0
    %3197 = vmatpush1.msra.mxu0 0.0
    %3198 = vmatprep.subr.mxu0 0.0
    %3199 = vmatpush1.msra.mxu0 0.0
    %3200 = vmatprep.subr.mxu0 0.0
    %3201 = vmatpush1.msra.mxu0 0.0
    %3202 = vmatprep.subr.mxu0 0.0
    %3203 = vmatpush1.msra.mxu0 0.0
    %3204 = vmatprep.subr.mxu0 0.0
    %3205 = vmatpush1.msra.mxu0 0.0
    %3206 = vmatprep.subr.mxu0 0.0
    %3207 = vmatpush1.msra.mxu0 0.0
    %3208 = vmatprep.subr.mxu0 0.0
    %3209 = vmatpush1.msra.mxu0 0.0
    %3210 = vmatprep.subr.mxu0 0.0
    %3211 = vmatpush1.msra.mxu0 0.0
    %3212 = vmatprep.subr.mxu0 0.0
    %3213 = vmatpush1.msra.mxu0 %v2011
    %3214 = vmatprep.subr.mxu0 0.0
    %3215 = vmatpush1.msra.mxu0 %v2010
    %3216 = vmatprep.subr.mxu0 0.0
    %3217 = vmatpush1.msra.mxu0 %v2009
    %3218 = vmatprep.subr.mxu0 0.0
    %3219 = vmatpush1.msra.mxu0 %v2008
    %3220 = vmatprep.subr.mxu0 0.0
    %3221 = vmatpush2.msra.mxu0 0.0
    %3222 = vmatprep.subr.mxu0 0.0
    %3223 = vmatpush2.msra.mxu0 0.0
    %3224 = vmatprep.subr.mxu0 0.0
    %3225 = vmatpush2.msra.mxu0 0.0
    %3226 = vmatprep.subr.mxu0 0.0
    %3227 = vmatpush2.msra.mxu0 0.0
    %3228 = vmatprep.subr.mxu0 0.0
    %3229 = vmatpush2.msra.mxu0 0.0
    %3230 = vmatprep.subr.mxu0 0.0
    %3231 = vmatpush2.msra.mxu0 0.0
    %3232 = vmatprep.subr.mxu0 0.0
    %3233 = vmatpush2.msra.mxu0 0.0
    %3234 = vmatprep.subr.mxu0 0.0
    %3235 = vmatpush2.msra.mxu0 0.0
    %3236 = vmatprep.subr.mxu0 0.0
    %3237 = vmatpush2.msra.mxu0 0.0
    %3238 = vmatprep.subr.mxu0 0.0
    %3239 = vmatpush2.msra.mxu0 0.0
    %3240 = vmatprep.subr.mxu0 0.0
    %3241 = vmatpush2.msra.mxu0 0.0
    %3242 = vmatprep.subr.mxu0 0.0
    %3243 = vmatpush2.msra.mxu0 0.0
    %3244 = vmatprep.subr.mxu0 0.0
    %3245 = vmatpush2.msra.mxu0 0.0
    %3246 = vmatprep.subr.mxu0 0.0
    %3247 = vmatpush2.msra.mxu0 0.0
    %3248 = vmatprep.subr.mxu0 0.0
    %3249 = vmatpush2.msra.mxu0 0.0
    %3250 = vmatprep.subr.mxu0 0.0
    %3251 = vmatpush2.msra.mxu0 0.0
    %3252 = vmatprep.mubr.f32.mxu0 0.0
    %3253 = vmatmul.mubr.f32.gmra.mxu0 %v3186
    %v3254 = vpop.f32.mrf.mxu0
    %v3255 = vadd.f32 0.0, %v3254
    %v3256 = vpop.f32.mrf.mxu0
    %3257 = vdwg.mxu0
    %v3259 = vrot.slane %v3255, 4
    %v3261 = vadd.f32 %v2171, %v3259
    %v3262 = vxor.u32 %v3261, 2147483648
    %v3263 = vmul.f32 %v3262, 1.442695
    %v3264 = vpow.pop %v3263
    %v3265 = vadd.f32 %v3264, 1.0
    %v3266 = vrcp.pop %v3265
    %v3267 = vmul.f32 1.0, %v3266
    %v3268 = vtanh.pop %v3261
    %v3270 = vrot.slane %v3060, 7
    %v3272 = vmul.f32 %v3267, %v3270
    %3274 = vrot.lane.b32.xlu0 %v3268, 64
    %v3275 = vpop.permute.xlu0 %3274
    %v3277 = vmul.f32 %v3267, %v3275
    %3279 = vrot.lane.b32.xlu0 %v3277, 32
    %v3280 = vpop.permute.xlu0 %3279
    %v3282 = vadd.f32 %v3272, %v3280
    %v3283 = vtanh.pop %v3282
    %3285 = vrot.lane.b32.xlu0 %v3283, 64
    %v3286 = vpop.permute.xlu0 %3285
    %v3288 = vmul.f32 %v3267, %v3286
    %3290 = vrot.lane.b32.xlu0 %v3288, 32
    %v3291 = vpop.permute.xlu0 %3290
    %3293 = vst.msk [vmem:[#allocation2] sm:$0x10] %vm1102, %v3291
    %v3294 = vrot.slane %v3177, 4
    %3295 = vrot.lane.b32.xlu0 %v3294, 32
    %v3296 = vpop.permute.xlu0 %3295
    %v3297 = vsel %vm226, %v3296, 0
    %3299 = vmatprep.subr.mxu0 0.0
    %3300 = vmatpush1.msra.mxu0 0.0
    %3301 = vmatprep.subr.mxu0 0.0
    %3302 = vmatpush1.msra.mxu0 0.0
    %3303 = vmatprep.subr.mxu0 0.0
    %3304 = vmatpush1.msra.mxu0 0.0
    %3305 = vmatprep.subr.mxu0 0.0
    %3306 = vmatpush1.msra.mxu0 0.0
    %3307 = vmatprep.subr.mxu0 0.0
    %3308 = vmatpush1.msra.mxu0 0.0
    %3309 = vmatprep.subr.mxu0 0.0
    %3310 = vmatpush1.msra.mxu0 0.0
    %3311 = vmatprep.subr.mxu0 0.0
    %3312 = vmatpush1.msra.mxu0 0.0
    %3313 = vmatprep.subr.mxu0 0.0
    %3314 = vmatpush1.msra.mxu0 0.0
    %3315 = vmatprep.subr.mxu0 0.0
    %3316 = vmatpush1.msra.mxu0 0.0
    %3317 = vmatprep.subr.mxu0 0.0
    %3318 = vmatpush1.msra.mxu0 0.0
    %3319 = vmatprep.subr.mxu0 0.0
    %3320 = vmatpush1.msra.mxu0 0.0
    %3321 = vmatprep.subr.mxu0 0.0
    %3322 = vmatpush1.msra.mxu0 0.0
    %3323 = vmatprep.subr.mxu0 0.0
    %3324 = vmatpush1.msra.mxu0 %v2016
    %3325 = vmatprep.subr.mxu0 0.0
    %3326 = vmatpush1.msra.mxu0 %v2015
    %3327 = vmatprep.subr.mxu0 0.0
    %3328 = vmatpush1.msra.mxu0 %v2014
    %3329 = vmatprep.subr.mxu0 0.0
    %3330 = vmatpush1.msra.mxu0 %v2013
    %3331 = vmatprep.subr.mxu0 0.0
    %3332 = vmatpush2.msra.mxu0 0.0
    %3333 = vmatprep.subr.mxu0 0.0
    %3334 = vmatpush2.msra.mxu0 0.0
    %3335 = vmatprep.subr.mxu0 0.0
    %3336 = vmatpush2.msra.mxu0 0.0
    %3337 = vmatprep.subr.mxu0 0.0
    %3338 = vmatpush2.msra.mxu0 0.0
    %3339 = vmatprep.subr.mxu0 0.0
    %3340 = vmatpush2.msra.mxu0 0.0
    %3341 = vmatprep.subr.mxu0 0.0
    %3342 = vmatpush2.msra.mxu0 0.0
    %3343 = vmatprep.subr.mxu0 0.0
    %3344 = vmatpush2.msra.mxu0 0.0
    %3345 = vmatprep.subr.mxu0 0.0
    %3346 = vmatpush2.msra.mxu0 0.0
    %3347 = vmatprep.subr.mxu0 0.0
    %3348 = vmatpush2.msra.mxu0 0.0
    %3349 = vmatprep.subr.mxu0 0.0
    %3350 = vmatpush2.msra.mxu0 0.0
    %3351 = vmatprep.subr.mxu0 0.0
    %3352 = vmatpush2.msra.mxu0 0.0
    %3353 = vmatprep.subr.mxu0 0.0
    %3354 = vmatpush2.msra.mxu0 0.0
    %3355 = vmatprep.subr.mxu0 0.0
    %3356 = vmatpush2.msra.mxu0 0.0
    %3357 = vmatprep.subr.mxu0 0.0
    %3358 = vmatpush2.msra.mxu0 0.0
    %3359 = vmatprep.subr.mxu0 0.0
    %3360 = vmatpush2.msra.mxu0 0.0
    %3361 = vmatprep.subr.mxu0 0.0
    %3362 = vmatpush2.msra.mxu0 0.0
    %3363 = vmatprep.mubr.f32.mxu0 0.0
    %3364 = vmatmul.mubr.f32.gmra.mxu0 %v3297
    %v3365 = vpop.f32.mrf.mxu0
    %v3366 = vadd.f32 0.0, %v3365
    %v3367 = vpop.f32.mrf.mxu0
    %3368 = vdwg.mxu0
    %v3370 = vrot.slane %v3366, 5
    %v3372 = vadd.f32 %v2316, %v3370
    %v3373 = vxor.u32 %v3372, 2147483648
    %v3374 = vmul.f32 %v3373, 1.442695
    %v3375 = vpow.pop %v3374
    %v3376 = vadd.f32 %v3375, 1.0
    %v3377 = vrcp.pop %v3376
    %v3378 = vmul.f32 1.0, %v3377
    %v3379 = vtanh.pop %v3372
    %v3381 = vrot.slane %v3171, 1
    %v3383 = vmul.f32 %v3378, %v3381
    %3385 = vrot.lane.b32.xlu0 %v3379, 64
    %v3386 = vpop.permute.xlu0 %3385
    %v3388 = vmul.f32 %v3378, %v3386
    %3390 = vrot.lane.b32.xlu0 %v3388, 32
    %v3391 = vpop.permute.xlu0 %3390
    %v3393 = vadd.f32 %v3383, %v3391
    %v3394 = vtanh.pop %v3393
    %3396 = vrot.lane.b32.xlu0 %v3394, 64
    %v3397 = vpop.permute.xlu0 %3396
    %v3399 = vmul.f32 %v3378, %v3397
    %3401 = vrot.lane.b32.xlu0 %v3399, 32
    %v3402 = vpop.permute.xlu0 %3401
    %3404 = vst.msk [vmem:[#allocation3] sm:$0x8] %vm990, %v3402
    %v3405 = vrot.slane %v3288, 4
    %3406 = vrot.lane.b32.xlu0 %v3405, 32
    %v3407 = vpop.permute.xlu0 %3406
    %v3408 = vsel %vm226, %v3407, 0
    %3410 = vmatprep.subr.mxu0 0.0
    %3411 = vmatpush1.msra.mxu0 0.0
    %3412 = vmatprep.subr.mxu0 0.0
    %3413 = vmatpush1.msra.mxu0 0.0
    %3414 = vmatprep.subr.mxu0 0.0
    %3415 = vmatpush1.msra.mxu0 0.0
    %3416 = vmatprep.subr.mxu0 0.0
    %3417 = vmatpush1.msra.mxu0 0.0
    %3418 = vmatprep.subr.mxu0 0.0
    %3419 = vmatpush1.msra.mxu0 0.0
    %3420 = vmatprep.subr.mxu0 0.0
    %3421 = vmatpush1.msra.mxu0 0.0
    %3422 = vmatprep.subr.mxu0 0.0
    %3423 = vmatpush1.msra.mxu0 0.0
    %3424 = vmatprep.subr.mxu0 0.0
    %3425 = vmatpush1.msra.mxu0 0.0
    %3426 = vmatprep.subr.mxu0 0.0
    %3427 = vmatpush1.msra.mxu0 0.0
    %3428 = vmatprep.subr.mxu0 0.0
    %3429 = vmatpush1.msra.mxu0 0.0
    %3430 = vmatprep.subr.mxu0 0.0
    %3431 = vmatpush1.msra.mxu0 0.0
    %3432 = vmatprep.subr.mxu0 0.0
    %3433 = vmatpush1.msra.mxu0 0.0
    %3434 = vmatprep.subr.mxu0 0.0
    %3435 = vmatpush1.msra.mxu0 %v2011
    %3436 = vmatprep.subr.mxu0 0.0
    %3437 = vmatpush1.msra.mxu0 %v2010
    %3438 = vmatprep.subr.mxu0 0.0
    %3439 = vmatpush1.msra.mxu0 %v2009
    %3440 = vmatprep.subr.mxu0 0.0
    %3441 = vmatpush1.msra.mxu0 %v2008
    %3442 = vmatprep.subr.mxu0 0.0
    %3443 = vmatpush2.msra.mxu0 0.0
    %3444 = vmatprep.subr.mxu0 0.0
    %3445 = vmatpush2.msra.mxu0 0.0
    %3446 = vmatprep.subr.mxu0 0.0
    %3447 = vmatpush2.msra.mxu0 0.0
    %3448 = vmatprep.subr.mxu0 0.0
    %3449 = vmatpush2.msra.mxu0 0.0
    %3450 = vmatprep.subr.mxu0 0.0
    %3451 = vmatpush2.msra.mxu0 0.0
    %3452 = vmatprep.subr.mxu0 0.0
    %3453 = vmatpush2.msra.mxu0 0.0
    %3454 = vmatprep.subr.mxu0 0.0
    %3455 = vmatpush2.msra.mxu0 0.0
    %3456 = vmatprep.subr.mxu0 0.0
    %3457 = vmatpush2.msra.mxu0 0.0
    %3458 = vmatprep.subr.mxu0 0.0
    %3459 = vmatpush2.msra.mxu0 0.0
    %3460 = vmatprep.subr.mxu0 0.0
    %3461 = vmatpush2.msra.mxu0 0.0
    %3462 = vmatprep.subr.mxu0 0.0
    %3463 = vmatpush2.msra.mxu0 0.0
    %3464 = vmatprep.subr.mxu0 0.0
    %3465 = vmatpush2.msra.mxu0 0.0
    %3466 = vmatprep.subr.mxu0 0.0
    %3467 = vmatpush2.msra.mxu0 0.0
    %3468 = vmatprep.subr.mxu0 0.0
    %3469 = vmatpush2.msra.mxu0 0.0
    %3470 = vmatprep.subr.mxu0 0.0
    %3471 = vmatpush2.msra.mxu0 0.0
    %3472 = vmatprep.subr.mxu0 0.0
    %3473 = vmatpush2.msra.mxu0 0.0
    %3474 = vmatprep.mubr.f32.mxu0 0.0
    %3475 = vmatmul.mubr.f32.gmra.mxu0 %v3408
    %v3476 = vpop.f32.mrf.mxu0
    %v3477 = vadd.f32 0.0, %v3476
    %v3478 = vpop.f32.mrf.mxu0
    %3479 = vdwg.mxu0
    %v3481 = vrot.slane %v3477, 3
    %v3483 = vadd.f32 %v2171, %v3481
    %v3484 = vxor.u32 %v3483, 2147483648
    %v3485 = vmul.f32 %v3484, 1.442695
    %v3486 = vpow.pop %v3485
    %v3487 = vadd.f32 %v3486, 1.0
    %v3488 = vrcp.pop %v3487
    %v3489 = vmul.f32 1.0, %v3488
    %v3490 = vtanh.pop %v3483
    %v3492 = vrot.slane %v3282, 7
    %v3494 = vmul.f32 %v3489, %v3492
    %3496 = vrot.lane.b32.xlu0 %v3490, 64
    %v3497 = vpop.permute.xlu0 %3496
    %v3499 = vmul.f32 %v3489, %v3497
    %3501 = vrot.lane.b32.xlu0 %v3499, 32
    %v3502 = vpop.permute.xlu0 %3501
    %v3504 = vadd.f32 %v3494, %v3502
    %v3505 = vtanh.pop %v3504
    %3507 = vrot.lane.b32.xlu0 %v3505, 64
    %v3508 = vpop.permute.xlu0 %3507
    %v3510 = vmul.f32 %v3489, %v3508
    %3512 = vrot.lane.b32.xlu0 %v3510, 32
    %v3513 = vpop.permute.xlu0 %3512
    %3515 = vst.msk [vmem:[#allocation2] sm:$0x20] %vm878, %v3513
    %v3516 = vrot.slane %v3399, 3
    %3517 = vrot.lane.b32.xlu0 %v3516, 32
    %v3518 = vpop.permute.xlu0 %3517
    %v3519 = vsel %vm226, %v3518, 0
    %3521 = vmatprep.subr.mxu0 0.0
    %3522 = vmatpush1.msra.mxu0 0.0
    %3523 = vmatprep.subr.mxu0 0.0
    %3524 = vmatpush1.msra.mxu0 0.0
    %3525 = vmatprep.subr.mxu0 0.0
    %3526 = vmatpush1.msra.mxu0 0.0
    %3527 = vmatprep.subr.mxu0 0.0
    %3528 = vmatpush1.msra.mxu0 0.0
    %3529 = vmatprep.subr.mxu0 0.0
    %3530 = vmatpush1.msra.mxu0 0.0
    %3531 = vmatprep.subr.mxu0 0.0
    %3532 = vmatpush1.msra.mxu0 0.0
    %3533 = vmatprep.subr.mxu0 0.0
    %3534 = vmatpush1.msra.mxu0 0.0
    %3535 = vmatprep.subr.mxu0 0.0
    %3536 = vmatpush1.msra.mxu0 0.0
    %3537 = vmatprep.subr.mxu0 0.0
    %3538 = vmatpush1.msra.mxu0 0.0
    %3539 = vmatprep.subr.mxu0 0.0
    %3540 = vmatpush1.msra.mxu0 0.0
    %3541 = vmatprep.subr.mxu0 0.0
    %3542 = vmatpush1.msra.mxu0 0.0
    %3543 = vmatprep.subr.mxu0 0.0
    %3544 = vmatpush1.msra.mxu0 0.0
    %3545 = vmatprep.subr.mxu0 0.0
    %3546 = vmatpush1.msra.mxu0 %v2016
    %3547 = vmatprep.subr.mxu0 0.0
    %3548 = vmatpush1.msra.mxu0 %v2015
    %3549 = vmatprep.subr.mxu0 0.0
    %3550 = vmatpush1.msra.mxu0 %v2014
    %3551 = vmatprep.subr.mxu0 0.0
    %3552 = vmatpush1.msra.mxu0 %v2013
    %3553 = vmatprep.subr.mxu0 0.0
    %3554 = vmatpush2.msra.mxu0 0.0
    %3555 = vmatprep.subr.mxu0 0.0
    %3556 = vmatpush2.msra.mxu0 0.0
    %3557 = vmatprep.subr.mxu0 0.0
    %3558 = vmatpush2.msra.mxu0 0.0
    %3559 = vmatprep.subr.mxu0 0.0
    %3560 = vmatpush2.msra.mxu0 0.0
    %3561 = vmatprep.subr.mxu0 0.0
    %3562 = vmatpush2.msra.mxu0 0.0
    %3563 = vmatprep.subr.mxu0 0.0
    %3564 = vmatpush2.msra.mxu0 0.0
    %3565 = vmatprep.subr.mxu0 0.0
    %3566 = vmatpush2.msra.mxu0 0.0
    %3567 = vmatprep.subr.mxu0 0.0
    %3568 = vmatpush2.msra.mxu0 0.0
    %3569 = vmatprep.subr.mxu0 0.0
    %3570 = vmatpush2.msra.mxu0 0.0
    %3571 = vmatprep.subr.mxu0 0.0
    %3572 = vmatpush2.msra.mxu0 0.0
    %3573 = vmatprep.subr.mxu0 0.0
    %3574 = vmatpush2.msra.mxu0 0.0
    %3575 = vmatprep.subr.mxu0 0.0
    %3576 = vmatpush2.msra.mxu0 0.0
    %3577 = vmatprep.subr.mxu0 0.0
    %3578 = vmatpush2.msra.mxu0 0.0
    %3579 = vmatprep.subr.mxu0 0.0
    %3580 = vmatpush2.msra.mxu0 0.0
    %3581 = vmatprep.subr.mxu0 0.0
    %3582 = vmatpush2.msra.mxu0 0.0
    %3583 = vmatprep.subr.mxu0 0.0
    %3584 = vmatpush2.msra.mxu0 0.0
    %3585 = vmatprep.mubr.f32.mxu0 0.0
    %3586 = vmatmul.mubr.f32.gmra.mxu0 %v3519
    %v3587 = vpop.f32.mrf.mxu0
    %v3588 = vadd.f32 0.0, %v3587
    %v3589 = vpop.f32.mrf.mxu0
    %3590 = vdwg.mxu0
    %v3592 = vrot.slane %v3588, 6
    %v3594 = vadd.f32 %v2316, %v3592
    %v3595 = vxor.u32 %v3594, 2147483648
    %v3596 = vmul.f32 %v3595, 1.442695
    %v3597 = vpow.pop %v3596
    %v3598 = vadd.f32 %v3597, 1.0
    %v3599 = vrcp.pop %v3598
    %v3600 = vmul.f32 1.0, %v3599
    %v3601 = vtanh.pop %v3594
    %v3603 = vrot.slane %v3393, 1
    %v3605 = vmul.f32 %v3600, %v3603
    %3607 = vrot.lane.b32.xlu0 %v3601, 64
    %v3608 = vpop.permute.xlu0 %3607
    %v3610 = vmul.f32 %v3600, %v3608
    %3612 = vrot.lane.b32.xlu0 %v3610, 32
    %v3613 = vpop.permute.xlu0 %3612
    %v3615 = vadd.f32 %v3605, %v3613
    %v3616 = vtanh.pop %v3615
    %3618 = vrot.lane.b32.xlu0 %v3616, 64
    %v3619 = vpop.permute.xlu0 %3618
    %v3621 = vmul.f32 %v3600, %v3619
    %3623 = vrot.lane.b32.xlu0 %v3621, 32
    %v3624 = vpop.permute.xlu0 %3623
    %3626 = vst.msk [vmem:[#allocation3] sm:$0x4] %vm766, %v3624
    %v3627 = vrot.slane %v3510, 5
    %3628 = vrot.lane.b32.xlu0 %v3627, 32
    %v3629 = vpop.permute.xlu0 %3628
    %v3630 = vsel %vm226, %v3629, 0
    %3632 = vmatprep.subr.mxu0 0.0
    %3633 = vmatpush1.msra.mxu0 0.0
    %3634 = vmatprep.subr.mxu0 0.0
    %3635 = vmatpush1.msra.mxu0 0.0
    %3636 = vmatprep.subr.mxu0 0.0
    %3637 = vmatpush1.msra.mxu0 0.0
    %3638 = vmatprep.subr.mxu0 0.0
    %3639 = vmatpush1.msra.mxu0 0.0
    %3640 = vmatprep.subr.mxu0 0.0
    %3641 = vmatpush1.msra.mxu0 0.0
    %3642 = vmatprep.subr.mxu0 0.0
    %3643 = vmatpush1.msra.mxu0 0.0
    %3644 = vmatprep.subr.mxu0 0.0
    %3645 = vmatpush1.msra.mxu0 0.0
    %3646 = vmatprep.subr.mxu0 0.0
    %3647 = vmatpush1.msra.mxu0 0.0
    %3648 = vmatprep.subr.mxu0 0.0
    %3649 = vmatpush1.msra.mxu0 0.0
    %3650 = vmatprep.subr.mxu0 0.0
    %3651 = vmatpush1.msra.mxu0 0.0
    %3652 = vmatprep.subr.mxu0 0.0
    %3653 = vmatpush1.msra.mxu0 0.0
    %3654 = vmatprep.subr.mxu0 0.0
    %3655 = vmatpush1.msra.mxu0 0.0
    %3656 = vmatprep.subr.mxu0 0.0
    %3657 = vmatpush1.msra.mxu0 %v2011
    %3658 = vmatprep.subr.mxu0 0.0
    %3659 = vmatpush1.msra.mxu0 %v2010
    %3660 = vmatprep.subr.mxu0 0.0
    %3661 = vmatpush1.msra.mxu0 %v2009
    %3662 = vmatprep.subr.mxu0 0.0
    %3663 = vmatpush1.msra.mxu0 %v2008
    %3664 = vmatprep.subr.mxu0 0.0
    %3665 = vmatpush2.msra.mxu0 0.0
    %3666 = vmatprep.subr.mxu0 0.0
    %3667 = vmatpush2.msra.mxu0 0.0
    %3668 = vmatprep.subr.mxu0 0.0
    %3669 = vmatpush2.msra.mxu0 0.0
    %3670 = vmatprep.subr.mxu0 0.0
    %3671 = vmatpush2.msra.mxu0 0.0
    %3672 = vmatprep.subr.mxu0 0.0
    %3673 = vmatpush2.msra.mxu0 0.0
    %3674 = vmatprep.subr.mxu0 0.0
    %3675 = vmatpush2.msra.mxu0 0.0
    %3676 = vmatprep.subr.mxu0 0.0
    %3677 = vmatpush2.msra.mxu0 0.0
    %3678 = vmatprep.subr.mxu0 0.0
    %3679 = vmatpush2.msra.mxu0 0.0
    %3680 = vmatprep.subr.mxu0 0.0
    %3681 = vmatpush2.msra.mxu0 0.0
    %3682 = vmatprep.subr.mxu0 0.0
    %3683 = vmatpush2.msra.mxu0 0.0
    %3684 = vmatprep.subr.mxu0 0.0
    %3685 = vmatpush2.msra.mxu0 0.0
    %3686 = vmatprep.subr.mxu0 0.0
    %3687 = vmatpush2.msra.mxu0 0.0
    %3688 = vmatprep.subr.mxu0 0.0
    %3689 = vmatpush2.msra.mxu0 0.0
    %3690 = vmatprep.subr.mxu0 0.0
    %3691 = vmatpush2.msra.mxu0 0.0
    %3692 = vmatprep.subr.mxu0 0.0
    %3693 = vmatpush2.msra.mxu0 0.0
    %3694 = vmatprep.subr.mxu0 0.0
    %3695 = vmatpush2.msra.mxu0 0.0
    %3696 = vmatprep.mubr.f32.mxu0 0.0
    %3697 = vmatmul.mubr.f32.gmra.mxu0 %v3630
    %v3698 = vpop.f32.mrf.mxu0
    %v3699 = vadd.f32 0.0, %v3698
    %v3700 = vpop.f32.mrf.mxu0
    %3701 = vdwg.mxu0
    %v3703 = vrot.slane %v3699, 2
    %v3705 = vadd.f32 %v2171, %v3703
    %v3706 = vxor.u32 %v3705, 2147483648
    %v3707 = vmul.f32 %v3706, 1.442695
    %v3708 = vpow.pop %v3707
    %v3709 = vadd.f32 %v3708, 1.0
    %v3710 = vrcp.pop %v3709
    %v3711 = vmul.f32 1.0, %v3710
    %v3712 = vtanh.pop %v3705
    %v3714 = vrot.slane %v3504, 7
    %v3716 = vmul.f32 %v3711, %v3714
    %3718 = vrot.lane.b32.xlu0 %v3712, 64
    %v3719 = vpop.permute.xlu0 %3718
    %v3721 = vmul.f32 %v3711, %v3719
    %3723 = vrot.lane.b32.xlu0 %v3721, 32
    %v3724 = vpop.permute.xlu0 %3723
    %v3726 = vadd.f32 %v3716, %v3724
    %v3727 = vtanh.pop %v3726
    %3729 = vrot.lane.b32.xlu0 %v3727, 64
    %v3730 = vpop.permute.xlu0 %3729
    %v3732 = vmul.f32 %v3711, %v3730
    %3734 = vrot.lane.b32.xlu0 %v3732, 32
    %v3735 = vpop.permute.xlu0 %3734
    %3737 = vst.msk [vmem:[#allocation2] sm:$0x40] %vm654, %v3735
    %v3738 = vrot.slane %v3621, 2
    %3739 = vrot.lane.b32.xlu0 %v3738, 32
    %v3740 = vpop.permute.xlu0 %3739
    %v3741 = vsel %vm226, %v3740, 0
    %3743 = vmatprep.subr.mxu0 0.0
    %3744 = vmatpush1.msra.mxu0 0.0
    %3745 = vmatprep.subr.mxu0 0.0
    %3746 = vmatpush1.msra.mxu0 0.0
    %3747 = vmatprep.subr.mxu0 0.0
    %3748 = vmatpush1.msra.mxu0 0.0
    %3749 = vmatprep.subr.mxu0 0.0
    %3750 = vmatpush1.msra.mxu0 0.0
    %3751 = vmatprep.subr.mxu0 0.0
    %3752 = vmatpush1.msra.mxu0 0.0
    %3753 = vmatprep.subr.mxu0 0.0
    %3754 = vmatpush1.msra.mxu0 0.0
    %3755 = vmatprep.subr.mxu0 0.0
    %3756 = vmatpush1.msra.mxu0 0.0
    %3757 = vmatprep.subr.mxu0 0.0
    %3758 = vmatpush1.msra.mxu0 0.0
    %3759 = vmatprep.subr.mxu0 0.0
    %3760 = vmatpush1.msra.mxu0 0.0
    %3761 = vmatprep.subr.mxu0 0.0
    %3762 = vmatpush1.msra.mxu0 0.0
    %3763 = vmatprep.subr.mxu0 0.0
    %3764 = vmatpush1.msra.mxu0 0.0
    %3765 = vmatprep.subr.mxu0 0.0
    %3766 = vmatpush1.msra.mxu0 0.0
    %3767 = vmatprep.subr.mxu0 0.0
    %3768 = vmatpush1.msra.mxu0 %v2016
    %3769 = vmatprep.subr.mxu0 0.0
    %3770 = vmatpush1.msra.mxu0 %v2015
    %3771 = vmatprep.subr.mxu0 0.0
    %3772 = vmatpush1.msra.mxu0 %v2014
    %3773 = vmatprep.subr.mxu0 0.0
    %3774 = vmatpush1.msra.mxu0 %v2013
    %3775 = vmatprep.subr.mxu0 0.0
    %3776 = vmatpush2.msra.mxu0 0.0
    %3777 = vmatprep.subr.mxu0 0.0
    %3778 = vmatpush2.msra.mxu0 0.0
    %3779 = vmatprep.subr.mxu0 0.0
    %3780 = vmatpush2.msra.mxu0 0.0
    %3781 = vmatprep.subr.mxu0 0.0
    %3782 = vmatpush2.msra.mxu0 0.0
    %3783 = vmatprep.subr.mxu0 0.0
    %3784 = vmatpush2.msra.mxu0 0.0
    %3785 = vmatprep.subr.mxu0 0.0
    %3786 = vmatpush2.msra.mxu0 0.0
    %3787 = vmatprep.subr.mxu0 0.0
    %3788 = vmatpush2.msra.mxu0 0.0
    %3789 = vmatprep.subr.mxu0 0.0
    %3790 = vmatpush2.msra.mxu0 0.0
    %3791 = vmatprep.subr.mxu0 0.0
    %3792 = vmatpush2.msra.mxu0 0.0
    %3793 = vmatprep.subr.mxu0 0.0
    %3794 = vmatpush2.msra.mxu0 0.0
    %3795 = vmatprep.subr.mxu0 0.0
    %3796 = vmatpush2.msra.mxu0 0.0
    %3797 = vmatprep.subr.mxu0 0.0
    %3798 = vmatpush2.msra.mxu0 0.0
    %3799 = vmatprep.subr.mxu0 0.0
    %3800 = vmatpush2.msra.mxu0 0.0
    %3801 = vmatprep.subr.mxu0 0.0
    %3802 = vmatpush2.msra.mxu0 0.0
    %3803 = vmatprep.subr.mxu0 0.0
    %3804 = vmatpush2.msra.mxu0 0.0
    %3805 = vmatprep.subr.mxu0 0.0
    %3806 = vmatpush2.msra.mxu0 0.0
    %3807 = vmatprep.mubr.f32.mxu0 0.0
    %3808 = vmatmul.mubr.f32.gmra.mxu0 %v3741
    %v3809 = vpop.f32.mrf.mxu0
    %v3810 = vadd.f32 0.0, %v3809
    %v3811 = vpop.f32.mrf.mxu0
    %3812 = vdwg.mxu0
    %v3814 = vrot.slane %v3810, 7
    %v3816 = vadd.f32 %v2316, %v3814
    %v3817 = vxor.u32 %v3816, 2147483648
    %v3818 = vmul.f32 %v3817, 1.442695
    %v3819 = vpow.pop %v3818
    %v3820 = vadd.f32 %v3819, 1.0
    %v3821 = vrcp.pop %v3820
    %v3822 = vmul.f32 1.0, %v3821
    %v3823 = vtanh.pop %v3816
    %v3825 = vrot.slane %v3615, 1
    %v3827 = vmul.f32 %v3822, %v3825
    %3829 = vrot.lane.b32.xlu0 %v3823, 64
    %v3830 = vpop.permute.xlu0 %3829
    %v3832 = vmul.f32 %v3822, %v3830
    %3834 = vrot.lane.b32.xlu0 %v3832, 32
    %v3835 = vpop.permute.xlu0 %3834
    %v3837 = vadd.f32 %v3827, %v3835
    %v3838 = vtanh.pop %v3837
    %3840 = vrot.lane.b32.xlu0 %v3838, 64
    %v3841 = vpop.permute.xlu0 %3840
    %v3843 = vmul.f32 %v3822, %v3841
    %3845 = vrot.lane.b32.xlu0 %v3843, 32
    %v3846 = vpop.permute.xlu0 %3845
    %3848 = vst.msk [vmem:[#allocation3] sm:$0x2] %vm542, %v3846
    %v3849 = vrot.slane %v3732, 6
    %3850 = vrot.lane.b32.xlu0 %v3849, 32
    %v3851 = vpop.permute.xlu0 %3850
    %v3852 = vsel %vm226, %v3851, 0
    %3854 = vmatprep.subr.mxu0 0.0
    %3855 = vmatpush1.msra.mxu0 0.0
    %3856 = vmatprep.subr.mxu0 0.0
    %3857 = vmatpush1.msra.mxu0 0.0
    %3858 = vmatprep.subr.mxu0 0.0
    %3859 = vmatpush1.msra.mxu0 0.0
    %3860 = vmatprep.subr.mxu0 0.0
    %3861 = vmatpush1.msra.mxu0 0.0
    %3862 = vmatprep.subr.mxu0 0.0
    %3863 = vmatpush1.msra.mxu0 0.0
    %3864 = vmatprep.subr.mxu0 0.0
    %3865 = vmatpush1.msra.mxu0 0.0
    %3866 = vmatprep.subr.mxu0 0.0
    %3867 = vmatpush1.msra.mxu0 0.0
    %3868 = vmatprep.subr.mxu0 0.0
    %3869 = vmatpush1.msra.mxu0 0.0
    %3870 = vmatprep.subr.mxu0 0.0
    %3871 = vmatpush1.msra.mxu0 0.0
    %3872 = vmatprep.subr.mxu0 0.0
    %3873 = vmatpush1.msra.mxu0 0.0
    %3874 = vmatprep.subr.mxu0 0.0
    %3875 = vmatpush1.msra.mxu0 0.0
    %3876 = vmatprep.subr.mxu0 0.0
    %3877 = vmatpush1.msra.mxu0 0.0
    %3878 = vmatprep.subr.mxu0 0.0
    %3879 = vmatpush1.msra.mxu0 %v2011
    %3880 = vmatprep.subr.mxu0 0.0
    %3881 = vmatpush1.msra.mxu0 %v2010
    %3882 = vmatprep.subr.mxu0 0.0
    %3883 = vmatpush1.msra.mxu0 %v2009
    %3884 = vmatprep.subr.mxu0 0.0
    %3885 = vmatpush1.msra.mxu0 %v2008
    %3886 = vmatprep.subr.mxu0 0.0
    %3887 = vmatpush2.msra.mxu0 0.0
    %3888 = vmatprep.subr.mxu0 0.0
    %3889 = vmatpush2.msra.mxu0 0.0
    %3890 = vmatprep.subr.mxu0 0.0
    %3891 = vmatpush2.msra.mxu0 0.0
    %3892 = vmatprep.subr.mxu0 0.0
    %3893 = vmatpush2.msra.mxu0 0.0
    %3894 = vmatprep.subr.mxu0 0.0
    %3895 = vmatpush2.msra.mxu0 0.0
    %3896 = vmatprep.subr.mxu0 0.0
    %3897 = vmatpush2.msra.mxu0 0.0
    %3898 = vmatprep.subr.mxu0 0.0
    %3899 = vmatpush2.msra.mxu0 0.0
    %3900 = vmatprep.subr.mxu0 0.0
    %3901 = vmatpush2.msra.mxu0 0.0
    %3902 = vmatprep.subr.mxu0 0.0
    %3903 = vmatpush2.msra.mxu0 0.0
    %3904 = vmatprep.subr.mxu0 0.0
    %3905 = vmatpush2.msra.mxu0 0.0
    %3906 = vmatprep.subr.mxu0 0.0
    %3907 = vmatpush2.msra.mxu0 0.0
    %3908 = vmatprep.subr.mxu0 0.0
    %3909 = vmatpush2.msra.mxu0 0.0
    %3910 = vmatprep.subr.mxu0 0.0
    %3911 = vmatpush2.msra.mxu0 0.0
    %3912 = vmatprep.subr.mxu0 0.0
    %3913 = vmatpush2.msra.mxu0 0.0
    %3914 = vmatprep.subr.mxu0 0.0
    %3915 = vmatpush2.msra.mxu0 0.0
    %3916 = vmatprep.subr.mxu0 0.0
    %3917 = vmatpush2.msra.mxu0 0.0
    %3918 = vmatprep.mubr.f32.mxu0 0.0
    %3919 = vmatmul.mubr.f32.gmra.mxu0 %v3852
    %v3920 = vpop.f32.mrf.mxu0
    %v3921 = vadd.f32 0.0, %v3920
    %v3922 = vpop.f32.mrf.mxu0
    %3923 = vdwg.mxu0
    %v3925 = vrot.slane %v3921, 1
    %v3927 = vadd.f32 %v2171, %v3925
    %v3928 = vxor.u32 %v3927, 2147483648
    %v3929 = vmul.f32 %v3928, 1.442695
    %v3930 = vpow.pop %v3929
    %v3931 = vadd.f32 %v3930, 1.0
    %v3932 = vrcp.pop %v3931
    %v3933 = vmul.f32 1.0, %v3932
    %v3934 = vtanh.pop %v3927
    %v3936 = vrot.slane %v3726, 7
    %v3938 = vmul.f32 %v3933, %v3936
    %3940 = vrot.lane.b32.xlu0 %v3934, 64
    %v3941 = vpop.permute.xlu0 %3940
    %v3943 = vmul.f32 %v3933, %v3941
    %3945 = vrot.lane.b32.xlu0 %v3943, 32
    %v3946 = vpop.permute.xlu0 %3945
    %v3948 = vadd.f32 %v3938, %v3946
    %v3949 = vtanh.pop %v3948
    %3951 = vrot.lane.b32.xlu0 %v3949, 64
    %v3952 = vpop.permute.xlu0 %3951
    %v3954 = vmul.f32 %v3933, %v3952
    %3956 = vrot.lane.b32.xlu0 %v3954, 32
    %v3957 = vpop.permute.xlu0 %3956
    %3959 = vst.msk [vmem:[#allocation2] sm:$0x80] %vm433, %v3957
    %v3960 = vrot.slane %v3843, 1
    %3961 = vrot.lane.b32.xlu0 %v3960, 32
    %v3962 = vpop.permute.xlu0 %3961
    %v3963 = vsel %vm226, %v3962, 0
    %3965 = vmatprep.subr.mxu0 0.0
    %3966 = vmatpush1.msra.mxu0 0.0
    %3967 = vmatprep.subr.mxu0 0.0
    %3968 = vmatpush1.msra.mxu0 0.0
    %3969 = vmatprep.subr.mxu0 0.0
    %3970 = vmatpush1.msra.mxu0 0.0
    %3971 = vmatprep.subr.mxu0 0.0
    %3972 = vmatpush1.msra.mxu0 0.0
    %3973 = vmatprep.subr.mxu0 0.0
    %3974 = vmatpush1.msra.mxu0 0.0
    %3975 = vmatprep.subr.mxu0 0.0
    %3976 = vmatpush1.msra.mxu0 0.0
    %3977 = vmatprep.subr.mxu0 0.0
    %3978 = vmatpush1.msra.mxu0 0.0
    %3979 = vmatprep.subr.mxu0 0.0
    %3980 = vmatpush1.msra.mxu0 0.0
    %3981 = vmatprep.subr.mxu0 0.0
    %3982 = vmatpush1.msra.mxu0 0.0
    %3983 = vmatprep.subr.mxu0 0.0
    %3984 = vmatpush1.msra.mxu0 0.0
    %3985 = vmatprep.subr.mxu0 0.0
    %3986 = vmatpush1.msra.mxu0 0.0
    %3987 = vmatprep.subr.mxu0 0.0
    %3988 = vmatpush1.msra.mxu0 0.0
    %3989 = vmatprep.subr.mxu0 0.0
    %3990 = vmatpush1.msra.mxu0 %v2016
    %3991 = vmatprep.subr.mxu0 0.0
    %3992 = vmatpush1.msra.mxu0 %v2015
    %3993 = vmatprep.subr.mxu0 0.0
    %3994 = vmatpush1.msra.mxu0 %v2014
    %3995 = vmatprep.subr.mxu0 0.0
    %3996 = vmatpush1.msra.mxu0 %v2013
    %3997 = vmatprep.subr.mxu0 0.0
    %3998 = vmatpush2.msra.mxu0 0.0
    %3999 = vmatprep.subr.mxu0 0.0
    %4000 = vmatpush2.msra.mxu0 0.0
    %4001 = vmatprep.subr.mxu0 0.0
    %4002 = vmatpush2.msra.mxu0 0.0
    %4003 = vmatprep.subr.mxu0 0.0
    %4004 = vmatpush2.msra.mxu0 0.0
    %4005 = vmatprep.subr.mxu0 0.0
    %4006 = vmatpush2.msra.mxu0 0.0
    %4007 = vmatprep.subr.mxu0 0.0
    %4008 = vmatpush2.msra.mxu0 0.0
    %4009 = vmatprep.subr.mxu0 0.0
    %4010 = vmatpush2.msra.mxu0 0.0
    %4011 = vmatprep.subr.mxu0 0.0
    %4012 = vmatpush2.msra.mxu0 0.0
    %4013 = vmatprep.subr.mxu0 0.0
    %4014 = vmatpush2.msra.mxu0 0.0
    %4015 = vmatprep.subr.mxu0 0.0
    %4016 = vmatpush2.msra.mxu0 0.0
    %4017 = vmatprep.subr.mxu0 0.0
    %4018 = vmatpush2.msra.mxu0 0.0
    %4019 = vmatprep.subr.mxu0 0.0
    %4020 = vmatpush2.msra.mxu0 0.0
    %4021 = vmatprep.subr.mxu0 0.0
    %4022 = vmatpush2.msra.mxu0 0.0
    %4023 = vmatprep.subr.mxu0 0.0
    %4024 = vmatpush2.msra.mxu0 0.0
    %4025 = vmatprep.subr.mxu0 0.0
    %4026 = vmatpush2.msra.mxu0 0.0
    %4027 = vmatprep.subr.mxu0 0.0
    %4028 = vmatpush2.msra.mxu0 0.0
    %4029 = vmatprep.mubr.f32.mxu0 0.0
    %4030 = vmatmul.mubr.f32.gmra.mxu0 %v3963
    %v4031 = vpop.f32.mrf.mxu0
    %v4032 = vadd.f32 0.0, %v4031
    %v4033 = vpop.f32.mrf.mxu0
    %4034 = vdwg.mxu0
    %v4035 = vadd.f32 %v2316, %v4032
    %v4036 = vxor.u32 %v4035, 2147483648
    %v4037 = vmul.f32 %v4036, 1.442695
    %v4038 = vpow.pop %v4037
    %v4039 = vadd.f32 %v4038, 1.0
    %v4040 = vrcp.pop %v4039
    %v4041 = vmul.f32 1.0, %v4040
    %v4042 = vtanh.pop %v4035
    %v4044 = vrot.slane %v3837, 1
    %v4046 = vmul.f32 %v4041, %v4044
    %4048 = vrot.lane.b32.xlu0 %v4042, 64
    %v4049 = vpop.permute.xlu0 %4048
    %v4051 = vmul.f32 %v4041, %v4049
    %4053 = vrot.lane.b32.xlu0 %v4051, 32
    %v4054 = vpop.permute.xlu0 %4053
    %v4056 = vadd.f32 %v4046, %v4054
    %v4057 = vtanh.pop %v4056
    %4059 = vrot.lane.b32.xlu0 %v4057, 64
    %v4060 = vpop.permute.xlu0 %4059
    %v4062 = vmul.f32 %v4041, %v4060
    %4064 = vrot.lane.b32.xlu0 %v4062, 32
    %v4065 = vpop.permute.xlu0 %4064
    %4067 = vst.msk [vmem:[#allocation3] sm:$0x1] %vm329, %v4065
    %s4068 = scalar_lea.vmem [#allocation4], 256
    %v4069 = vld [vmem:[%s4068] sm:$0xff]
    %v4070 = vld [vmem:[%s4068 + $0x8] sm:$0xff]
    %v4071 = vld [vmem:[%s4068 + $0x10] sm:$0xff]
    %v4072 = vld [vmem:[%s4068 + $0x18] sm:$0xff]
    %v4073 = vld [vmem:[%s4068 + $0x20] sm:$0xff]
    %v4074 = vld [vmem:[%s4068 + $0x28] sm:$0xff]
    %v4075 = vld [vmem:[%s4068 + $0x30] sm:$0xff]
    %v4076 = vld [vmem:[%s4068 + $0x38] sm:$0xff]
    %s4077 = scalar_lea.vmem [#allocation4], 320
    %v4078 = vld [vmem:[%s4077] sm:$0xff]
    %v4079 = vld [vmem:[%s4077 + $0x8] sm:$0xff]
    %v4080 = vld [vmem:[%s4077 + $0x10] sm:$0xff]
    %v4081 = vld [vmem:[%s4077 + $0x18] sm:$0xff]
    %v4082 = vld [vmem:[%s4077 + $0x20] sm:$0xff]
    %v4083 = vld [vmem:[%s4077 + $0x28] sm:$0xff]
    %v4084 = vld [vmem:[%s4077 + $0x30] sm:$0xff]
    %v4085 = vld [vmem:[%s4077 + $0x38] sm:$0xff]
    %s4086 = scalar_lea.vmem [#allocation6], 128
    %v4087 = vld [vmem:[%s4086] sm:$0xff]
    %v4088 = vld [vmem:[%s4086 + $0x8] sm:$0xff]
    %v4089 = vld [vmem:[%s4086 + $0x10] sm:$0xff]
    %v4090 = vld [vmem:[%s4086 + $0x18] sm:$0xff]
    %s4091 = scalar_lea.vmem [#allocation6], 160
    %v4092 = vld [vmem:[%s4091] sm:$0xff]
    %v4093 = vld [vmem:[%s4091 + $0x8] sm:$0xff]
    %v4094 = vld [vmem:[%s4091 + $0x10] sm:$0xff]
    %v4095 = vld [vmem:[%s4091 + $0x18] sm:$0xff]
    %v4096 = vld [vmem:[%s3 + $0x4] sm:$0x1]
    %v4097 = vld [vmem:[%s3 + $0x5] sm:$0x1]
    %v4098 = vld [vmem:[#allocation2] sm:$0xff]
    %v4099 = vld [vmem:[#allocation3] sm:$0xff]
    %v4101 = vsel %vm226, %v4099, 0
    %4103 = vmatprep.subr.mxu0 0.0
    %4104 = vmatpush1.msra.mxu0 0.0
    %4105 = vmatprep.subr.mxu0 0.0
    %4106 = vmatpush1.msra.mxu0 0.0
    %4107 = vmatprep.subr.mxu0 0.0
    %4108 = vmatpush1.msra.mxu0 0.0
    %4109 = vmatprep.subr.mxu0 0.0
    %4110 = vmatpush1.msra.mxu0 0.0
    %4111 = vmatprep.subr.mxu0 0.0
    %4112 = vmatpush1.msra.mxu0 0.0
    %4113 = vmatprep.subr.mxu0 0.0
    %4114 = vmatpush1.msra.mxu0 0.0
    %4115 = vmatprep.subr.mxu0 0.0
    %4116 = vmatpush1.msra.mxu0 0.0
    %4117 = vmatprep.subr.mxu0 0.0
    %4118 = vmatpush1.msra.mxu0 0.0
    %4119 = vmatprep.subr.mxu0 0.0
    %4120 = vmatpush1.msra.mxu0 0.0
    %4121 = vmatprep.subr.mxu0 0.0
    %4122 = vmatpush1.msra.mxu0 0.0
    %4123 = vmatprep.subr.mxu0 0.0
    %4124 = vmatpush1.msra.mxu0 0.0
    %4125 = vmatprep.subr.mxu0 0.0
    %4126 = vmatpush1.msra.mxu0 0.0
    %4127 = vmatprep.subr.mxu0 0.0
    %4128 = vmatpush1.msra.mxu0 %v4076
    %4129 = vmatprep.subr.mxu0 0.0
    %4130 = vmatpush1.msra.mxu0 %v4075
    %4131 = vmatprep.subr.mxu0 0.0
    %4132 = vmatpush1.msra.mxu0 %v4074
    %4133 = vmatprep.subr.mxu0 0.0
    %4134 = vmatpush1.msra.mxu0 %v4073
    %4135 = vmatprep.subr.mxu0 0.0
    %4136 = vmatpush2.msra.mxu0 0.0
    %4137 = vmatprep.subr.mxu0 0.0
    %4138 = vmatpush2.msra.mxu0 0.0
    %4139 = vmatprep.subr.mxu0 0.0
    %4140 = vmatpush2.msra.mxu0 0.0
    %4141 = vmatprep.subr.mxu0 0.0
    %4142 = vmatpush2.msra.mxu0 0.0
    %4143 = vmatprep.subr.mxu0 0.0
    %4144 = vmatpush2.msra.mxu0 0.0
    %4145 = vmatprep.subr.mxu0 0.0
    %4146 = vmatpush2.msra.mxu0 0.0
    %4147 = vmatprep.subr.mxu0 0.0
    %4148 = vmatpush2.msra.mxu0 0.0
    %4149 = vmatprep.subr.mxu0 0.0
    %4150 = vmatpush2.msra.mxu0 0.0
    %4151 = vmatprep.subr.mxu0 0.0
    %4152 = vmatpush2.msra.mxu0 0.0
    %4153 = vmatprep.subr.mxu0 0.0
    %4154 = vmatpush2.msra.mxu0 0.0
    %4155 = vmatprep.subr.mxu0 0.0
    %4156 = vmatpush2.msra.mxu0 0.0
    %4157 = vmatprep.subr.mxu0 0.0
    %4158 = vmatpush2.msra.mxu0 0.0
    %4159 = vmatprep.subr.mxu0 0.0
    %4160 = vmatpush2.msra.mxu0 0.0
    %4161 = vmatprep.subr.mxu0 0.0
    %4162 = vmatpush2.msra.mxu0 0.0
    %4163 = vmatprep.subr.mxu0 0.0
    %4164 = vmatpush2.msra.mxu0 0.0
    %4165 = vmatprep.subr.mxu0 0.0
    %4166 = vmatpush2.msra.mxu0 0.0
    %4167 = vmatprep.mubr.f32.mxu0 0.0
    %4168 = vmatmul.mubr.f32.gmra.mxu0 %v4101
    %v4169 = vpop.f32.mrf.mxu0
    %v4170 = vadd.f32 0.0, %v4169
    %v4171 = vpop.f32.mrf.mxu0
    %4172 = vdwg.mxu0
    %v4174 = vsel %vm226, %v4098, 0
    %4176 = vmatprep.subr.mxu0 0.0
    %4177 = vmatpush1.msra.mxu0 0.0
    %4178 = vmatprep.subr.mxu0 0.0
    %4179 = vmatpush1.msra.mxu0 0.0
    %4180 = vmatprep.subr.mxu0 0.0
    %4181 = vmatpush1.msra.mxu0 0.0
    %4182 = vmatprep.subr.mxu0 0.0
    %4183 = vmatpush1.msra.mxu0 0.0
    %4184 = vmatprep.subr.mxu0 0.0
    %4185 = vmatpush1.msra.mxu0 0.0
    %4186 = vmatprep.subr.mxu0 0.0
    %4187 = vmatpush1.msra.mxu0 0.0
    %4188 = vmatprep.subr.mxu0 0.0
    %4189 = vmatpush1.msra.mxu0 0.0
    %4190 = vmatprep.subr.mxu0 0.0
    %4191 = vmatpush1.msra.mxu0 0.0
    %4192 = vmatprep.subr.mxu0 0.0
    %4193 = vmatpush1.msra.mxu0 0.0
    %4194 = vmatprep.subr.mxu0 0.0
    %4195 = vmatpush1.msra.mxu0 0.0
    %4196 = vmatprep.subr.mxu0 0.0
    %4197 = vmatpush1.msra.mxu0 0.0
    %4198 = vmatprep.subr.mxu0 0.0
    %4199 = vmatpush1.msra.mxu0 0.0
    %4200 = vmatprep.subr.mxu0 0.0
    %4201 = vmatpush1.msra.mxu0 %v4072
    %4202 = vmatprep.subr.mxu0 0.0
    %4203 = vmatpush1.msra.mxu0 %v4071
    %4204 = vmatprep.subr.mxu0 0.0
    %4205 = vmatpush1.msra.mxu0 %v4070
    %4206 = vmatprep.subr.mxu0 0.0
    %4207 = vmatpush1.msra.mxu0 %v4069
    %4208 = vmatprep.subr.mxu0 0.0
    %4209 = vmatpush2.msra.mxu0 0.0
    %4210 = vmatprep.subr.mxu0 0.0
    %4211 = vmatpush2.msra.mxu0 0.0
    %4212 = vmatprep.subr.mxu0 0.0
    %4213 = vmatpush2.msra.mxu0 0.0
    %4214 = vmatprep.subr.mxu0 0.0
    %4215 = vmatpush2.msra.mxu0 0.0
    %4216 = vmatprep.subr.mxu0 0.0
    %4217 = vmatpush2.msra.mxu0 0.0
    %4218 = vmatprep.subr.mxu0 0.0
    %4219 = vmatpush2.msra.mxu0 0.0
    %4220 = vmatprep.subr.mxu0 0.0
    %4221 = vmatpush2.msra.mxu0 0.0
    %4222 = vmatprep.subr.mxu0 0.0
    %4223 = vmatpush2.msra.mxu0 0.0
    %4224 = vmatprep.subr.mxu0 0.0
    %4225 = vmatpush2.msra.mxu0 0.0
    %4226 = vmatprep.subr.mxu0 0.0
    %4227 = vmatpush2.msra.mxu0 0.0
    %4228 = vmatprep.subr.mxu0 0.0
    %4229 = vmatpush2.msra.mxu0 0.0
    %4230 = vmatprep.subr.mxu0 0.0
    %4231 = vmatpush2.msra.mxu0 0.0
    %4232 = vmatprep.subr.mxu0 0.0
    %4233 = vmatpush2.msra.mxu0 0.0
    %4234 = vmatprep.subr.mxu0 0.0
    %4235 = vmatpush2.msra.mxu0 0.0
    %4236 = vmatprep.subr.mxu0 0.0
    %4237 = vmatpush2.msra.mxu0 0.0
    %4238 = vmatprep.subr.mxu0 0.0
    %4239 = vmatpush2.msra.mxu0 0.0
    %4240 = vmatprep.mubr.f32.mxu0 0.0
    %4241 = vmatmul.mubr.f32.gmra.mxu0 %v4174
    %v4242 = vpop.f32.mrf.mxu0
    %v4243 = vadd.f32 %v4170, %v4242
    %v4244 = vpop.f32.mrf.mxu0
    %4245 = vdwg.mxu0
    %v4246 = vlaneseq
    %v4247 = vshrl.u32 %v4246, 7
    %v4248 = vsub.s32 0, %v4247
    %v4249 = vrot.slane %v4096, %v4248
    %v4250 = vadd.f32 %v4243, %v4249
    %4251 = vmatprep.subr.mxu0 0.0
    %4252 = vmatpush1.msra.mxu0 0.0
    %4253 = vmatprep.subr.mxu0 0.0
    %4254 = vmatpush1.msra.mxu0 0.0
    %4255 = vmatprep.subr.mxu0 0.0
    %4256 = vmatpush1.msra.mxu0 0.0
    %4257 = vmatprep.subr.mxu0 0.0
    %4258 = vmatpush1.msra.mxu0 0.0
    %4259 = vmatprep.subr.mxu0 0.0
    %4260 = vmatpush1.msra.mxu0 0.0
    %4261 = vmatprep.subr.mxu0 0.0
    %4262 = vmatpush1.msra.mxu0 0.0
    %4263 = vmatprep.subr.mxu0 0.0
    %4264 = vmatpush1.msra.mxu0 0.0
    %4265 = vmatprep.subr.mxu0 0.0
    %4266 = vmatpush1.msra.mxu0 0.0
    %4267 = vmatprep.subr.mxu0 0.0
    %4268 = vmatpush1.msra.mxu0 0.0
    %4269 = vmatprep.subr.mxu0 0.0
    %4270 = vmatpush1.msra.mxu0 0.0
    %4271 = vmatprep.subr.mxu0 0.0
    %4272 = vmatpush1.msra.mxu0 0.0
    %4273 = vmatprep.subr.mxu0 0.0
    %4274 = vmatpush1.msra.mxu0 0.0
    %4275 = vmatprep.subr.mxu0 0.0
    %4276 = vmatpush1.msra.mxu0 %v4085
    %4277 = vmatprep.subr.mxu0 0.0
    %4278 = vmatpush1.msra.mxu0 %v4084
    %4279 = vmatprep.subr.mxu0 0.0
    %4280 = vmatpush1.msra.mxu0 %v4083
    %4281 = vmatprep.subr.mxu0 0.0
    %4282 = vmatpush1.msra.mxu0 %v4082
    %4283 = vmatprep.subr.mxu0 0.0
    %4284 = vmatpush2.msra.mxu0 0.0
    %4285 = vmatprep.subr.mxu0 0.0
    %4286 = vmatpush2.msra.mxu0 0.0
    %4287 = vmatprep.subr.mxu0 0.0
    %4288 = vmatpush2.msra.mxu0 0.0
    %4289 = vmatprep.subr.mxu0 0.0
    %4290 = vmatpush2.msra.mxu0 0.0
    %4291 = vmatprep.subr.mxu0 0.0
    %4292 = vmatpush2.msra.mxu0 0.0
    %4293 = vmatprep.subr.mxu0 0.0
    %4294 = vmatpush2.msra.mxu0 0.0
    %4295 = vmatprep.subr.mxu0 0.0
    %4296 = vmatpush2.msra.mxu0 0.0
    %4297 = vmatprep.subr.mxu0 0.0
    %4298 = vmatpush2.msra.mxu0 0.0
    %4299 = vmatprep.subr.mxu0 0.0
    %4300 = vmatpush2.msra.mxu0 0.0
    %4301 = vmatprep.subr.mxu0 0.0
    %4302 = vmatpush2.msra.mxu0 0.0
    %4303 = vmatprep.subr.mxu0 0.0
    %4304 = vmatpush2.msra.mxu0 0.0
    %4305 = vmatprep.subr.mxu0 0.0
    %4306 = vmatpush2.msra.mxu0 0.0
    %4307 = vmatprep.subr.mxu0 0.0
    %4308 = vmatpush2.msra.mxu0 0.0
    %4309 = vmatprep.subr.mxu0 0.0
    %4310 = vmatpush2.msra.mxu0 0.0
    %4311 = vmatprep.subr.mxu0 0.0
    %4312 = vmatpush2.msra.mxu0 0.0
    %4313 = vmatprep.subr.mxu0 0.0
    %4314 = vmatpush2.msra.mxu0 0.0
    %4315 = vmatprep.mubr.f32.mxu0 0.0
    %4316 = vmatmul.mubr.f32.gmra.mxu0 %v4101
    %v4317 = vpop.f32.mrf.mxu0
    %v4318 = vadd.f32 0.0, %v4317
    %v4319 = vpop.f32.mrf.mxu0
    %4320 = vdwg.mxu0
    %4321 = vmatprep.subr.mxu0 0.0
    %4322 = vmatpush1.msra.mxu0 0.0
    %4323 = vmatprep.subr.mxu0 0.0
    %4324 = vmatpush1.msra.mxu0 0.0
    %4325 = vmatprep.subr.mxu0 0.0
    %4326 = vmatpush1.msra.mxu0 0.0
    %4327 = vmatprep.subr.mxu0 0.0
    %4328 = vmatpush1.msra.mxu0 0.0
    %4329 = vmatprep.subr.mxu0 0.0
    %4330 = vmatpush1.msra.mxu0 0.0
    %4331 = vmatprep.subr.mxu0 0.0
    %4332 = vmatpush1.msra.mxu0 0.0
    %4333 = vmatprep.subr.mxu0 0.0
    %4334 = vmatpush1.msra.mxu0 0.0
    %4335 = vmatprep.subr.mxu0 0.0
    %4336 = vmatpush1.msra.mxu0 0.0
    %4337 = vmatprep.subr.mxu0 0.0
    %4338 = vmatpush1.msra.mxu0 0.0
    %4339 = vmatprep.subr.mxu0 0.0
    %4340 = vmatpush1.msra.mxu0 0.0
    %4341 = vmatprep.subr.mxu0 0.0
    %4342 = vmatpush1.msra.mxu0 0.0
    %4343 = vmatprep.subr.mxu0 0.0
    %4344 = vmatpush1.msra.mxu0 0.0
    %4345 = vmatprep.subr.mxu0 0.0
    %4346 = vmatpush1.msra.mxu0 %v4081
    %4347 = vmatprep.subr.mxu0 0.0
    %4348 = vmatpush1.msra.mxu0 %v4080
    %4349 = vmatprep.subr.mxu0 0.0
    %4350 = vmatpush1.msra.mxu0 %v4079
    %4351 = vmatprep.subr.mxu0 0.0
    %4352 = vmatpush1.msra.mxu0 %v4078
    %4353 = vmatprep.subr.mxu0 0.0
    %4354 = vmatpush2.msra.mxu0 0.0
    %4355 = vmatprep.subr.mxu0 0.0
    %4356 = vmatpush2.msra.mxu0 0.0
    %4357 = vmatprep.subr.mxu0 0.0
    %4358 = vmatpush2.msra.mxu0 0.0
    %4359 = vmatprep.subr.mxu0 0.0
    %4360 = vmatpush2.msra.mxu0 0.0
    %4361 = vmatprep.subr.mxu0 0.0
    %4362 = vmatpush2.msra.mxu0 0.0
    %4363 = vmatprep.subr.mxu0 0.0
    %4364 = vmatpush2.msra.mxu0 0.0
    %4365 = vmatprep.subr.mxu0 0.0
    %4366 = vmatpush2.msra.mxu0 0.0
    %4367 = vmatprep.subr.mxu0 0.0
    %4368 = vmatpush2.msra.mxu0 0.0
    %4369 = vmatprep.subr.mxu0 0.0
    %4370 = vmatpush2.msra.mxu0 0.0
    %4371 = vmatprep.subr.mxu0 0.0
    %4372 = vmatpush2.msra.mxu0 0.0
    %4373 = vmatprep.subr.mxu0 0.0
    %4374 = vmatpush2.msra.mxu0 0.0
    %4375 = vmatprep.subr.mxu0 0.0
    %4376 = vmatpush2.msra.mxu0 0.0
    %4377 = vmatprep.subr.mxu0 0.0
    %4378 = vmatpush2.msra.mxu0 0.0
    %4379 = vmatprep.subr.mxu0 0.0
    %4380 = vmatpush2.msra.mxu0 0.0
    %4381 = vmatprep.subr.mxu0 0.0
    %4382 = vmatpush2.msra.mxu0 0.0
    %4383 = vmatprep.subr.mxu0 0.0
    %4384 = vmatpush2.msra.mxu0 0.0
    %4385 = vmatprep.mubr.f32.mxu0 0.0
    %4386 = vmatmul.mubr.f32.gmra.mxu0 %v4174
    %v4387 = vpop.f32.mrf.mxu0
    %v4388 = vadd.f32 %v4318, %v4387
    %v4389 = vpop.f32.mrf.mxu0
    %4390 = vdwg.mxu0
    %v4391 = vlaneseq
    %v4392 = vshrl.u32 %v4391, 7
    %v4393 = vsub.s32 0, %v4392
    %v4394 = vrot.slane %v4097, %v4393
    %v4395 = vadd.f32 %v4388, %v4394
    %4396 = vmatprep.subr.mxu0 0.0
    %4397 = vmatpush1.msra.mxu0 0.0
    %4398 = vmatprep.subr.mxu0 0.0
    %4399 = vmatpush1.msra.mxu0 0.0
    %4400 = vmatprep.subr.mxu0 0.0
    %4401 = vmatpush1.msra.mxu0 0.0
    %4402 = vmatprep.subr.mxu0 0.0
    %4403 = vmatpush1.msra.mxu0 0.0
    %4404 = vmatprep.subr.mxu0 0.0
    %4405 = vmatpush1.msra.mxu0 0.0
    %4406 = vmatprep.subr.mxu0 0.0
    %4407 = vmatpush1.msra.mxu0 0.0
    %4408 = vmatprep.subr.mxu0 0.0
    %4409 = vmatpush1.msra.mxu0 0.0
    %4410 = vmatprep.subr.mxu0 0.0
    %4411 = vmatpush1.msra.mxu0 0.0
    %4412 = vmatprep.subr.mxu0 0.0
    %4413 = vmatpush1.msra.mxu0 0.0
    %4414 = vmatprep.subr.mxu0 0.0
    %4415 = vmatpush1.msra.mxu0 0.0
    %4416 = vmatprep.subr.mxu0 0.0
    %4417 = vmatpush1.msra.mxu0 0.0
    %4418 = vmatprep.subr.mxu0 0.0
    %4419 = vmatpush1.msra.mxu0 0.0
    %4420 = vmatprep.subr.mxu0 0.0
    %4421 = vmatpush1.msra.mxu0 %v4090
    %4422 = vmatprep.subr.mxu0 0.0
    %4423 = vmatpush1.msra.mxu0 %v4089
    %4424 = vmatprep.subr.mxu0 0.0
    %4425 = vmatpush1.msra.mxu0 %v4088
    %4426 = vmatprep.subr.mxu0 0.0
    %4427 = vmatpush1.msra.mxu0 %v4087
    %4428 = vmatprep.subr.mxu0 0.0
    %4429 = vmatpush2.msra.mxu0 0.0
    %4430 = vmatprep.subr.mxu0 0.0
    %4431 = vmatpush2.msra.mxu0 0.0
    %4432 = vmatprep.subr.mxu0 0.0
    %4433 = vmatpush2.msra.mxu0 0.0
    %4434 = vmatprep.subr.mxu0 0.0
    %4435 = vmatpush2.msra.mxu0 0.0
    %4436 = vmatprep.subr.mxu0 0.0
    %4437 = vmatpush2.msra.mxu0 0.0
    %4438 = vmatprep.subr.mxu0 0.0
    %4439 = vmatpush2.msra.mxu0 0.0
    %4440 = vmatprep.subr.mxu0 0.0
    %4441 = vmatpush2.msra.mxu0 0.0
    %4442 = vmatprep.subr.mxu0 0.0
    %4443 = vmatpush2.msra.mxu0 0.0
    %4444 = vmatprep.subr.mxu0 0.0
    %4445 = vmatpush2.msra.mxu0 0.0
    %4446 = vmatprep.subr.mxu0 0.0
    %4447 = vmatpush2.msra.mxu0 0.0
    %4448 = vmatprep.subr.mxu0 0.0
    %4449 = vmatpush2.msra.mxu0 0.0
    %4450 = vmatprep.subr.mxu0 0.0
    %4451 = vmatpush2.msra.mxu0 0.0
    %4452 = vmatprep.subr.mxu0 0.0
    %4453 = vmatpush2.msra.mxu0 0.0
    %4454 = vmatprep.subr.mxu0 0.0
    %4455 = vmatpush2.msra.mxu0 0.0
    %4456 = vmatprep.subr.mxu0 0.0
    %4457 = vmatpush2.msra.mxu0 0.0
    %4458 = vmatprep.subr.mxu0 0.0
    %4459 = vmatpush2.msra.mxu0 0.0
    %4460 = vmatprep.mubr.f32.mxu0 0.0
    %4461 = vmatmul.mubr.f32.gmra.mxu0 %v228
    %v4462 = vpop.f32.mrf.mxu0
    %v4463 = vadd.f32 0.0, %v4462
    %v4464 = vpop.f32.mrf.mxu0
    %4465 = vdwg.mxu0
    %v4466 = vadd.f32 %v4250, %v4463
    %v4467 = vxor.u32 %v4466, 2147483648
    %v4468 = vmul.f32 %v4467, 1.442695
    %v4469 = vpow.pop %v4468
    %v4470 = vadd.f32 %v4469, 1.0
    %v4471 = vrcp.pop %v4470
    %v4472 = vmul.f32 1.0, %v4471
    %v4473 = vtanh.pop %v4466
    %v4474 = vmul.f32 %v4472, 0.0
    %4476 = vrot.lane.b32.xlu0 %v4473, 64
    %v4477 = vpop.permute.xlu0 %4476
    %v4479 = vmul.f32 %v4472, %v4477
    %4481 = vrot.lane.b32.xlu0 %v4479, 32
    %v4482 = vpop.permute.xlu0 %4481
    %v4484 = vadd.f32 %v4474, %v4482
    %v4485 = vtanh.pop %v4484
    %4487 = vrot.lane.b32.xlu0 %v4485, 64
    %v4488 = vpop.permute.xlu0 %4487
    %v4490 = vmul.f32 %v4472, %v4488
    %4491 = vmatprep.subr.mxu0 0.0
    %4492 = vmatpush1.msra.mxu0 0.0
    %4493 = vmatprep.subr.mxu0 0.0
    %4494 = vmatpush1.msra.mxu0 0.0
    %4495 = vmatprep.subr.mxu0 0.0
    %4496 = vmatpush1.msra.mxu0 0.0
    %4497 = vmatprep.subr.mxu0 0.0
    %4498 = vmatpush1.msra.mxu0 0.0
    %4499 = vmatprep.subr.mxu0 0.0
    %4500 = vmatpush1.msra.mxu0 0.0
    %4501 = vmatprep.subr.mxu0 0.0
    %4502 = vmatpush1.msra.mxu0 0.0
    %4503 = vmatprep.subr.mxu0 0.0
    %4504 = vmatpush1.msra.mxu0 0.0
    %4505 = vmatprep.subr.mxu0 0.0
    %4506 = vmatpush1.msra.mxu0 0.0
    %4507 = vmatprep.subr.mxu0 0.0
    %4508 = vmatpush1.msra.mxu0 0.0
    %4509 = vmatprep.subr.mxu0 0.0
    %4510 = vmatpush1.msra.mxu0 0.0
    %4511 = vmatprep.subr.mxu0 0.0
    %4512 = vmatpush1.msra.mxu0 0.0
    %4513 = vmatprep.subr.mxu0 0.0
    %4514 = vmatpush1.msra.mxu0 0.0
    %4515 = vmatprep.subr.mxu0 0.0
    %4516 = vmatpush1.msra.mxu0 %v4095
    %4517 = vmatprep.subr.mxu0 0.0
    %4518 = vmatpush1.msra.mxu0 %v4094
    %4519 = vmatprep.subr.mxu0 0.0
    %4520 = vmatpush1.msra.mxu0 %v4093
    %4521 = vmatprep.subr.mxu0 0.0
    %4522 = vmatpush1.msra.mxu0 %v4092
    %4523 = vmatprep.subr.mxu0 0.0
    %4524 = vmatpush2.msra.mxu0 0.0
    %4525 = vmatprep.subr.mxu0 0.0
    %4526 = vmatpush2.msra.mxu0 0.0
    %4527 = vmatprep.subr.mxu0 0.0
    %4528 = vmatpush2.msra.mxu0 0.0
    %4529 = vmatprep.subr.mxu0 0.0
    %4530 = vmatpush2.msra.mxu0 0.0
    %4531 = vmatprep.subr.mxu0 0.0
    %4532 = vmatpush2.msra.mxu0 0.0
    %4533 = vmatprep.subr.mxu0 0.0
    %4534 = vmatpush2.msra.mxu0 0.0
    %4535 = vmatprep.subr.mxu0 0.0
    %4536 = vmatpush2.msra.mxu0 0.0
    %4537 = vmatprep.subr.mxu0 0.0
    %4538 = vmatpush2.msra.mxu0 0.0
    %4539 = vmatprep.subr.mxu0 0.0
    %4540 = vmatpush2.msra.mxu0 0.0
    %4541 = vmatprep.subr.mxu0 0.0
    %4542 = vmatpush2.msra.mxu0 0.0
    %4543 = vmatprep.subr.mxu0 0.0
    %4544 = vmatpush2.msra.mxu0 0.0
    %4545 = vmatprep.subr.mxu0 0.0
    %4546 = vmatpush2.msra.mxu0 0.0
    %4547 = vmatprep.subr.mxu0 0.0
    %4548 = vmatpush2.msra.mxu0 0.0
    %4549 = vmatprep.subr.mxu0 0.0
    %4550 = vmatpush2.msra.mxu0 0.0
    %4551 = vmatprep.subr.mxu0 0.0
    %4552 = vmatpush2.msra.mxu0 0.0
    %4553 = vmatprep.subr.mxu0 0.0
    %4554 = vmatpush2.msra.mxu0 0.0
    %4555 = vmatprep.mubr.f32.mxu0 0.0
    %4556 = vmatmul.mubr.f32.gmra.mxu0 %v228
    %v4557 = vpop.f32.mrf.mxu0
    %v4558 = vadd.f32 0.0, %v4557
    %v4559 = vpop.f32.mrf.mxu0
    %4560 = vdwg.mxu0
    %v4562 = vrot.slane %v4558, 1
    %v4564 = vadd.f32 %v4395, %v4562
    %v4565 = vxor.u32 %v4564, 2147483648
    %v4566 = vmul.f32 %v4565, 1.442695
    %v4567 = vpow.pop %v4566
    %v4568 = vadd.f32 %v4567, 1.0
    %v4569 = vrcp.pop %v4568
    %v4570 = vmul.f32 1.0, %v4569
    %v4571 = vtanh.pop %v4564
    %v4572 = vmul.f32 %v4570, 0.0
    %4574 = vrot.lane.b32.xlu0 %v4571, 64
    %v4575 = vpop.permute.xlu0 %4574
    %v4577 = vmul.f32 %v4570, %v4575
    %4579 = vrot.lane.b32.xlu0 %v4577, 32
    %v4580 = vpop.permute.xlu0 %4579
    %v4582 = vadd.f32 %v4572, %v4580
    %v4583 = vtanh.pop %v4582
    %4585 = vrot.lane.b32.xlu0 %v4583, 64
    %v4586 = vpop.permute.xlu0 %4585
    %v4588 = vmul.f32 %v4570, %v4586
    %4590 = vrot.lane.b32.xlu0 %v4490, 32
    %v4591 = vpop.permute.xlu0 %4590
    %v4592 = vsel %vm226, %v4591, 0
    %4594 = vmatprep.subr.mxu0 0.0
    %4595 = vmatpush1.msra.mxu0 0.0
    %4596 = vmatprep.subr.mxu0 0.0
    %4597 = vmatpush1.msra.mxu0 0.0
    %4598 = vmatprep.subr.mxu0 0.0
    %4599 = vmatpush1.msra.mxu0 0.0
    %4600 = vmatprep.subr.mxu0 0.0
    %4601 = vmatpush1.msra.mxu0 0.0
    %4602 = vmatprep.subr.mxu0 0.0
    %4603 = vmatpush1.msra.mxu0 0.0
    %4604 = vmatprep.subr.mxu0 0.0
    %4605 = vmatpush1.msra.mxu0 0.0
    %4606 = vmatprep.subr.mxu0 0.0
    %4607 = vmatpush1.msra.mxu0 0.0
    %4608 = vmatprep.subr.mxu0 0.0
    %4609 = vmatpush1.msra.mxu0 0.0
    %4610 = vmatprep.subr.mxu0 0.0
    %4611 = vmatpush1.msra.mxu0 0.0
    %4612 = vmatprep.subr.mxu0 0.0
    %4613 = vmatpush1.msra.mxu0 0.0
    %4614 = vmatprep.subr.mxu0 0.0
    %4615 = vmatpush1.msra.mxu0 0.0
    %4616 = vmatprep.subr.mxu0 0.0
    %4617 = vmatpush1.msra.mxu0 0.0
    %4618 = vmatprep.subr.mxu0 0.0
    %4619 = vmatpush1.msra.mxu0 %v4090
    %4620 = vmatprep.subr.mxu0 0.0
    %4621 = vmatpush1.msra.mxu0 %v4089
    %4622 = vmatprep.subr.mxu0 0.0
    %4623 = vmatpush1.msra.mxu0 %v4088
    %4624 = vmatprep.subr.mxu0 0.0
    %4625 = vmatpush1.msra.mxu0 %v4087
    %4626 = vmatprep.subr.mxu0 0.0
    %4627 = vmatpush2.msra.mxu0 0.0
    %4628 = vmatprep.subr.mxu0 0.0
    %4629 = vmatpush2.msra.mxu0 0.0
    %4630 = vmatprep.subr.mxu0 0.0
    %4631 = vmatpush2.msra.mxu0 0.0
    %4632 = vmatprep.subr.mxu0 0.0
    %4633 = vmatpush2.msra.mxu0 0.0
    %4634 = vmatprep.subr.mxu0 0.0
    %4635 = vmatpush2.msra.mxu0 0.0
    %4636 = vmatprep.subr.mxu0 0.0
    %4637 = vmatpush2.msra.mxu0 0.0
    %4638 = vmatprep.subr.mxu0 0.0
    %4639 = vmatpush2.msra.mxu0 0.0
    %4640 = vmatprep.subr.mxu0 0.0
    %4641 = vmatpush2.msra.mxu0 0.0
    %4642 = vmatprep.subr.mxu0 0.0
    %4643 = vmatpush2.msra.mxu0 0.0
    %4644 = vmatprep.subr.mxu0 0.0
    %4645 = vmatpush2.msra.mxu0 0.0
    %4646 = vmatprep.subr.mxu0 0.0
    %4647 = vmatpush2.msra.mxu0 0.0
    %4648 = vmatprep.subr.mxu0 0.0
    %4649 = vmatpush2.msra.mxu0 0.0
    %4650 = vmatprep.subr.mxu0 0.0
    %4651 = vmatpush2.msra.mxu0 0.0
    %4652 = vmatprep.subr.mxu0 0.0
    %4653 = vmatpush2.msra.mxu0 0.0
    %4654 = vmatprep.subr.mxu0 0.0
    %4655 = vmatpush2.msra.mxu0 0.0
    %4656 = vmatprep.subr.mxu0 0.0
    %4657 = vmatpush2.msra.mxu0 0.0
    %4658 = vmatprep.mubr.f32.mxu0 0.0
    %4659 = vmatmul.mubr.f32.gmra.mxu0 %v4592
    %v4660 = vpop.f32.mrf.mxu0
    %v4661 = vadd.f32 0.0, %v4660
    %v4662 = vpop.f32.mrf.mxu0
    %4663 = vdwg.mxu0
    %v4665 = vrot.slane %v4661, 7
    %v4667 = vadd.f32 %v4250, %v4665
    %v4668 = vxor.u32 %v4667, 2147483648
    %v4669 = vmul.f32 %v4668, 1.442695
    %v4670 = vpow.pop %v4669
    %v4671 = vadd.f32 %v4670, 1.0
    %v4672 = vrcp.pop %v4671
    %v4673 = vmul.f32 1.0, %v4672
    %v4674 = vtanh.pop %v4667
    %v4676 = vrot.slane %v4484, 7
    %v4678 = vmul.f32 %v4673, %v4676
    %4680 = vrot.lane.b32.xlu0 %v4674, 64
    %v4681 = vpop.permute.xlu0 %4680
    %v4683 = vmul.f32 %v4673, %v4681
    %4685 = vrot.lane.b32.xlu0 %v4683, 32
    %v4686 = vpop.permute.xlu0 %4685
    %v4688 = vadd.f32 %v4678, %v4686
    %v4689 = vtanh.pop %v4688
    %4691 = vrot.lane.b32.xlu0 %v4689, 64
    %v4692 = vpop.permute.xlu0 %4691
    %v4694 = vmul.f32 %v4673, %v4692
    %v4696 = vrot.slane %v4694, 1
    %4697 = vrot.lane.b32.xlu0 %v4696, 32
    %v4698 = vpop.permute.xlu0 %4697
    %v4699 = vsel %vm226, %v4698, 0
    %4701 = vmatprep.subr.mxu0 0.0
    %4702 = vmatpush1.msra.mxu0 0.0
    %4703 = vmatprep.subr.mxu0 0.0
    %4704 = vmatpush1.msra.mxu0 0.0
    %4705 = vmatprep.subr.mxu0 0.0
    %4706 = vmatpush1.msra.mxu0 0.0
    %4707 = vmatprep.subr.mxu0 0.0
    %4708 = vmatpush1.msra.mxu0 0.0
    %4709 = vmatprep.subr.mxu0 0.0
    %4710 = vmatpush1.msra.mxu0 0.0
    %4711 = vmatprep.subr.mxu0 0.0
    %4712 = vmatpush1.msra.mxu0 0.0
    %4713 = vmatprep.subr.mxu0 0.0
    %4714 = vmatpush1.msra.mxu0 0.0
    %4715 = vmatprep.subr.mxu0 0.0
    %4716 = vmatpush1.msra.mxu0 0.0
    %4717 = vmatprep.subr.mxu0 0.0
    %4718 = vmatpush1.msra.mxu0 0.0
    %4719 = vmatprep.subr.mxu0 0.0
    %4720 = vmatpush1.msra.mxu0 0.0
    %4721 = vmatprep.subr.mxu0 0.0
    %4722 = vmatpush1.msra.mxu0 0.0
    %4723 = vmatprep.subr.mxu0 0.0
    %4724 = vmatpush1.msra.mxu0 0.0
    %4725 = vmatprep.subr.mxu0 0.0
    %4726 = vmatpush1.msra.mxu0 %v4090
    %4727 = vmatprep.subr.mxu0 0.0
    %4728 = vmatpush1.msra.mxu0 %v4089
    %4729 = vmatprep.subr.mxu0 0.0
    %4730 = vmatpush1.msra.mxu0 %v4088
    %4731 = vmatprep.subr.mxu0 0.0
    %4732 = vmatpush1.msra.mxu0 %v4087
    %4733 = vmatprep.subr.mxu0 0.0
    %4734 = vmatpush2.msra.mxu0 0.0
    %4735 = vmatprep.subr.mxu0 0.0
    %4736 = vmatpush2.msra.mxu0 0.0
    %4737 = vmatprep.subr.mxu0 0.0
    %4738 = vmatpush2.msra.mxu0 0.0
    %4739 = vmatprep.subr.mxu0 0.0
    %4740 = vmatpush2.msra.mxu0 0.0
    %4741 = vmatprep.subr.mxu0 0.0
    %4742 = vmatpush2.msra.mxu0 0.0
    %4743 = vmatprep.subr.mxu0 0.0
    %4744 = vmatpush2.msra.mxu0 0.0
    %4745 = vmatprep.subr.mxu0 0.0
    %4746 = vmatpush2.msra.mxu0 0.0
    %4747 = vmatprep.subr.mxu0 0.0
    %4748 = vmatpush2.msra.mxu0 0.0
    %4749 = vmatprep.subr.mxu0 0.0
    %4750 = vmatpush2.msra.mxu0 0.0
    %4751 = vmatprep.subr.mxu0 0.0
    %4752 = vmatpush2.msra.mxu0 0.0
    %4753 = vmatprep.subr.mxu0 0.0
    %4754 = vmatpush2.msra.mxu0 0.0
    %4755 = vmatprep.subr.mxu0 0.0
    %4756 = vmatpush2.msra.mxu0 0.0
    %4757 = vmatprep.subr.mxu0 0.0
    %4758 = vmatpush2.msra.mxu0 0.0
    %4759 = vmatprep.subr.mxu0 0.0
    %4760 = vmatpush2.msra.mxu0 0.0
    %4761 = vmatprep.subr.mxu0 0.0
    %4762 = vmatpush2.msra.mxu0 0.0
    %4763 = vmatprep.subr.mxu0 0.0
    %4764 = vmatpush2.msra.mxu0 0.0
    %4765 = vmatprep.mubr.f32.mxu0 0.0
    %4766 = vmatmul.mubr.f32.gmra.mxu0 %v4699
    %v4767 = vpop.f32.mrf.mxu0
    %v4768 = vadd.f32 0.0, %v4767
    %v4769 = vpop.f32.mrf.mxu0
    %4770 = vdwg.mxu0
    %v4772 = vrot.slane %v4768, 6
    %v4774 = vadd.f32 %v4250, %v4772
    %v4775 = vxor.u32 %v4774, 2147483648
    %v4776 = vmul.f32 %v4775, 1.442695
    %v4777 = vpow.pop %v4776
    %v4778 = vadd.f32 %v4777, 1.0
    %v4779 = vrcp.pop %v4778
    %v4780 = vmul.f32 1.0, %v4779
    %v4781 = vtanh.pop %v4774
    %v4783 = vrot.slane %v4688, 7
    %v4785 = vmul.f32 %v4780, %v4783
    %4787 = vrot.lane.b32.xlu0 %v4781, 64
    %v4788 = vpop.permute.xlu0 %4787
    %v4790 = vmul.f32 %v4780, %v4788
    %4792 = vrot.lane.b32.xlu0 %v4790, 32
    %v4793 = vpop.permute.xlu0 %4792
    %v4795 = vadd.f32 %v4785, %v4793
    %v4796 = vtanh.pop %v4795
    %4798 = vrot.lane.b32.xlu0 %v4796, 64
    %v4799 = vpop.permute.xlu0 %4798
    %v4801 = vmul.f32 %v4780, %v4799
    %v4803 = vrot.slane %v4801, 2
    %4804 = vrot.lane.b32.xlu0 %v4803, 32
    %v4805 = vpop.permute.xlu0 %4804
    %v4806 = vsel %vm226, %v4805, 0
    %4808 = vmatprep.subr.mxu0 0.0
    %4809 = vmatpush1.msra.mxu0 0.0
    %4810 = vmatprep.subr.mxu0 0.0
    %4811 = vmatpush1.msra.mxu0 0.0
    %4812 = vmatprep.subr.mxu0 0.0
    %4813 = vmatpush1.msra.mxu0 0.0
    %4814 = vmatprep.subr.mxu0 0.0
    %4815 = vmatpush1.msra.mxu0 0.0
    %4816 = vmatprep.subr.mxu0 0.0
    %4817 = vmatpush1.msra.mxu0 0.0
    %4818 = vmatprep.subr.mxu0 0.0
    %4819 = vmatpush1.msra.mxu0 0.0
    %4820 = vmatprep.subr.mxu0 0.0
    %4821 = vmatpush1.msra.mxu0 0.0
    %4822 = vmatprep.subr.mxu0 0.0
    %4823 = vmatpush1.msra.mxu0 0.0
    %4824 = vmatprep.subr.mxu0 0.0
    %4825 = vmatpush1.msra.mxu0 0.0
    %4826 = vmatprep.subr.mxu0 0.0
    %4827 = vmatpush1.msra.mxu0 0.0
    %4828 = vmatprep.subr.mxu0 0.0
    %4829 = vmatpush1.msra.mxu0 0.0
    %4830 = vmatprep.subr.mxu0 0.0
    %4831 = vmatpush1.msra.mxu0 0.0
    %4832 = vmatprep.subr.mxu0 0.0
    %4833 = vmatpush1.msra.mxu0 %v4090
    %4834 = vmatprep.subr.mxu0 0.0
    %4835 = vmatpush1.msra.mxu0 %v4089
    %4836 = vmatprep.subr.mxu0 0.0
    %4837 = vmatpush1.msra.mxu0 %v4088
    %4838 = vmatprep.subr.mxu0 0.0
    %4839 = vmatpush1.msra.mxu0 %v4087
    %4840 = vmatprep.subr.mxu0 0.0
    %4841 = vmatpush2.msra.mxu0 0.0
    %4842 = vmatprep.subr.mxu0 0.0
    %4843 = vmatpush2.msra.mxu0 0.0
    %4844 = vmatprep.subr.mxu0 0.0
    %4845 = vmatpush2.msra.mxu0 0.0
    %4846 = vmatprep.subr.mxu0 0.0
    %4847 = vmatpush2.msra.mxu0 0.0
    %4848 = vmatprep.subr.mxu0 0.0
    %4849 = vmatpush2.msra.mxu0 0.0
    %4850 = vmatprep.subr.mxu0 0.0
    %4851 = vmatpush2.msra.mxu0 0.0
    %4852 = vmatprep.subr.mxu0 0.0
    %4853 = vmatpush2.msra.mxu0 0.0
    %4854 = vmatprep.subr.mxu0 0.0
    %4855 = vmatpush2.msra.mxu0 0.0
    %4856 = vmatprep.subr.mxu0 0.0
    %4857 = vmatpush2.msra.mxu0 0.0
    %4858 = vmatprep.subr.mxu0 0.0
    %4859 = vmatpush2.msra.mxu0 0.0
    %4860 = vmatprep.subr.mxu0 0.0
    %4861 = vmatpush2.msra.mxu0 0.0
    %4862 = vmatprep.subr.mxu0 0.0
    %4863 = vmatpush2.msra.mxu0 0.0
    %4864 = vmatprep.subr.mxu0 0.0
    %4865 = vmatpush2.msra.mxu0 0.0
    %4866 = vmatprep.subr.mxu0 0.0
    %4867 = vmatpush2.msra.mxu0 0.0
    %4868 = vmatprep.subr.mxu0 0.0
    %4869 = vmatpush2.msra.mxu0 0.0
    %4870 = vmatprep.subr.mxu0 0.0
    %4871 = vmatpush2.msra.mxu0 0.0
    %4872 = vmatprep.mubr.f32.mxu0 0.0
    %4873 = vmatmul.mubr.f32.gmra.mxu0 %v4806
    %v4874 = vpop.f32.mrf.mxu0
    %v4875 = vadd.f32 0.0, %v4874
    %v4876 = vpop.f32.mrf.mxu0
    %4877 = vdwg.mxu0
    %v4879 = vrot.slane %v4875, 5
    %v4881 = vadd.f32 %v4250, %v4879
    %v4882 = vxor.u32 %v4881, 2147483648
    %v4883 = vmul.f32 %v4882, 1.442695
    %v4884 = vpow.pop %v4883
    %v4885 = vadd.f32 %v4884, 1.0
    %v4886 = vrcp.pop %v4885
    %v4887 = vmul.f32 1.0, %v4886
    %v4888 = vtanh.pop %v4881
    %v4890 = vrot.slane %v4795, 7
    %v4892 = vmul.f32 %v4887, %v4890
    %4894 = vrot.lane.b32.xlu0 %v4888, 64
    %v4895 = vpop.permute.xlu0 %4894
    %v4897 = vmul.f32 %v4887, %v4895
    %4899 = vrot.lane.b32.xlu0 %v4897, 32
    %v4900 = vpop.permute.xlu0 %4899
    %v4902 = vadd.f32 %v4892, %v4900
    %v4903 = vtanh.pop %v4902
    %4905 = vrot.lane.b32.xlu0 %v4903, 64
    %v4906 = vpop.permute.xlu0 %4905
    %v4908 = vmul.f32 %v4887, %v4906
    %v4910 = vrot.slane %v4908, 3
    %4911 = vrot.lane.b32.xlu0 %v4910, 32
    %v4912 = vpop.permute.xlu0 %4911
    %v4913 = vsel %vm226, %v4912, 0
    %4915 = vmatprep.subr.mxu0 0.0
    %4916 = vmatpush1.msra.mxu0 0.0
    %4917 = vmatprep.subr.mxu0 0.0
    %4918 = vmatpush1.msra.mxu0 0.0
    %4919 = vmatprep.subr.mxu0 0.0
    %4920 = vmatpush1.msra.mxu0 0.0
    %4921 = vmatprep.subr.mxu0 0.0
    %4922 = vmatpush1.msra.mxu0 0.0
    %4923 = vmatprep.subr.mxu0 0.0
    %4924 = vmatpush1.msra.mxu0 0.0
    %4925 = vmatprep.subr.mxu0 0.0
    %4926 = vmatpush1.msra.mxu0 0.0
    %4927 = vmatprep.subr.mxu0 0.0
    %4928 = vmatpush1.msra.mxu0 0.0
    %4929 = vmatprep.subr.mxu0 0.0
    %4930 = vmatpush1.msra.mxu0 0.0
    %4931 = vmatprep.subr.mxu0 0.0
    %4932 = vmatpush1.msra.mxu0 0.0
    %4933 = vmatprep.subr.mxu0 0.0
    %4934 = vmatpush1.msra.mxu0 0.0
    %4935 = vmatprep.subr.mxu0 0.0
    %4936 = vmatpush1.msra.mxu0 0.0
    %4937 = vmatprep.subr.mxu0 0.0
    %4938 = vmatpush1.msra.mxu0 0.0
    %4939 = vmatprep.subr.mxu0 0.0
    %4940 = vmatpush1.msra.mxu0 %v4090
    %4941 = vmatprep.subr.mxu0 0.0
    %4942 = vmatpush1.msra.mxu0 %v4089
    %4943 = vmatprep.subr.mxu0 0.0
    %4944 = vmatpush1.msra.mxu0 %v4088
    %4945 = vmatprep.subr.mxu0 0.0
    %4946 = vmatpush1.msra.mxu0 %v4087
    %4947 = vmatprep.subr.mxu0 0.0
    %4948 = vmatpush2.msra.mxu0 0.0
    %4949 = vmatprep.subr.mxu0 0.0
    %4950 = vmatpush2.msra.mxu0 0.0
    %4951 = vmatprep.subr.mxu0 0.0
    %4952 = vmatpush2.msra.mxu0 0.0
    %4953 = vmatprep.subr.mxu0 0.0
    %4954 = vmatpush2.msra.mxu0 0.0
    %4955 = vmatprep.subr.mxu0 0.0
    %4956 = vmatpush2.msra.mxu0 0.0
    %4957 = vmatprep.subr.mxu0 0.0
    %4958 = vmatpush2.msra.mxu0 0.0
    %4959 = vmatprep.subr.mxu0 0.0
    %4960 = vmatpush2.msra.mxu0 0.0
    %4961 = vmatprep.subr.mxu0 0.0
    %4962 = vmatpush2.msra.mxu0 0.0
    %4963 = vmatprep.subr.mxu0 0.0
    %4964 = vmatpush2.msra.mxu0 0.0
    %4965 = vmatprep.subr.mxu0 0.0
    %4966 = vmatpush2.msra.mxu0 0.0
    %4967 = vmatprep.subr.mxu0 0.0
    %4968 = vmatpush2.msra.mxu0 0.0
    %4969 = vmatprep.subr.mxu0 0.0
    %4970 = vmatpush2.msra.mxu0 0.0
    %4971 = vmatprep.subr.mxu0 0.0
    %4972 = vmatpush2.msra.mxu0 0.0
    %4973 = vmatprep.subr.mxu0 0.0
    %4974 = vmatpush2.msra.mxu0 0.0
    %4975 = vmatprep.subr.mxu0 0.0
    %4976 = vmatpush2.msra.mxu0 0.0
    %4977 = vmatprep.subr.mxu0 0.0
    %4978 = vmatpush2.msra.mxu0 0.0
    %4979 = vmatprep.mubr.f32.mxu0 0.0
    %4980 = vmatmul.mubr.f32.gmra.mxu0 %v4913
    %v4981 = vpop.f32.mrf.mxu0
    %v4982 = vadd.f32 0.0, %v4981
    %v4983 = vpop.f32.mrf.mxu0
    %4984 = vdwg.mxu0
    %v4986 = vrot.slane %v4982, 4
    %v4988 = vadd.f32 %v4250, %v4986
    %v4989 = vxor.u32 %v4988, 2147483648
    %v4990 = vmul.f32 %v4989, 1.442695
    %v4991 = vpow.pop %v4990
    %v4992 = vadd.f32 %v4991, 1.0
    %v4993 = vrcp.pop %v4992
    %v4994 = vmul.f32 1.0, %v4993
    %v4995 = vtanh.pop %v4988
    %v4997 = vrot.slane %v4902, 7
    %v4999 = vmul.f32 %v4994, %v4997
    %5001 = vrot.lane.b32.xlu0 %v4995, 64
    %v5002 = vpop.permute.xlu0 %5001
    %v5004 = vmul.f32 %v4994, %v5002
    %5006 = vrot.lane.b32.xlu0 %v5004, 32
    %v5007 = vpop.permute.xlu0 %5006
    %v5009 = vadd.f32 %v4999, %v5007
    %v5010 = vtanh.pop %v5009
    %5012 = vrot.lane.b32.xlu0 %v5010, 64
    %v5013 = vpop.permute.xlu0 %5012
    %v5015 = vmul.f32 %v4994, %v5013
    %v5017 = vrot.slane %v5015, 4
    %5018 = vrot.lane.b32.xlu0 %v5017, 32
    %v5019 = vpop.permute.xlu0 %5018
    %v5020 = vsel %vm226, %v5019, 0
    %5022 = vmatprep.subr.mxu0 0.0
    %5023 = vmatpush1.msra.mxu0 0.0
    %5024 = vmatprep.subr.mxu0 0.0
    %5025 = vmatpush1.msra.mxu0 0.0
    %5026 = vmatprep.subr.mxu0 0.0
    %5027 = vmatpush1.msra.mxu0 0.0
    %5028 = vmatprep.subr.mxu0 0.0
    %5029 = vmatpush1.msra.mxu0 0.0
    %5030 = vmatprep.subr.mxu0 0.0
    %5031 = vmatpush1.msra.mxu0 0.0
    %5032 = vmatprep.subr.mxu0 0.0
    %5033 = vmatpush1.msra.mxu0 0.0
    %5034 = vmatprep.subr.mxu0 0.0
    %5035 = vmatpush1.msra.mxu0 0.0
    %5036 = vmatprep.subr.mxu0 0.0
    %5037 = vmatpush1.msra.mxu0 0.0
    %5038 = vmatprep.subr.mxu0 0.0
    %5039 = vmatpush1.msra.mxu0 0.0
    %5040 = vmatprep.subr.mxu0 0.0
    %5041 = vmatpush1.msra.mxu0 0.0
    %5042 = vmatprep.subr.mxu0 0.0
    %5043 = vmatpush1.msra.mxu0 0.0
    %5044 = vmatprep.subr.mxu0 0.0
    %5045 = vmatpush1.msra.mxu0 0.0
    %5046 = vmatprep.subr.mxu0 0.0
    %5047 = vmatpush1.msra.mxu0 %v4090
    %5048 = vmatprep.subr.mxu0 0.0
    %5049 = vmatpush1.msra.mxu0 %v4089
    %5050 = vmatprep.subr.mxu0 0.0
    %5051 = vmatpush1.msra.mxu0 %v4088
    %5052 = vmatprep.subr.mxu0 0.0
    %5053 = vmatpush1.msra.mxu0 %v4087
    %5054 = vmatprep.subr.mxu0 0.0
    %5055 = vmatpush2.msra.mxu0 0.0
    %5056 = vmatprep.subr.mxu0 0.0
    %5057 = vmatpush2.msra.mxu0 0.0
    %5058 = vmatprep.subr.mxu0 0.0
    %5059 = vmatpush2.msra.mxu0 0.0
    %5060 = vmatprep.subr.mxu0 0.0
    %5061 = vmatpush2.msra.mxu0 0.0
    %5062 = vmatprep.subr.mxu0 0.0
    %5063 = vmatpush2.msra.mxu0 0.0
    %5064 = vmatprep.subr.mxu0 0.0
    %5065 = vmatpush2.msra.mxu0 0.0
    %5066 = vmatprep.subr.mxu0 0.0
    %5067 = vmatpush2.msra.mxu0 0.0
    %5068 = vmatprep.subr.mxu0 0.0
    %5069 = vmatpush2.msra.mxu0 0.0
    %5070 = vmatprep.subr.mxu0 0.0
    %5071 = vmatpush2.msra.mxu0 0.0
    %5072 = vmatprep.subr.mxu0 0.0
    %5073 = vmatpush2.msra.mxu0 0.0
    %5074 = vmatprep.subr.mxu0 0.0
    %5075 = vmatpush2.msra.mxu0 0.0
    %5076 = vmatprep.subr.mxu0 0.0
    %5077 = vmatpush2.msra.mxu0 0.0
    %5078 = vmatprep.subr.mxu0 0.0
    %5079 = vmatpush2.msra.mxu0 0.0
    %5080 = vmatprep.subr.mxu0 0.0
    %5081 = vmatpush2.msra.mxu0 0.0
    %5082 = vmatprep.subr.mxu0 0.0
    %5083 = vmatpush2.msra.mxu0 0.0
    %5084 = vmatprep.subr.mxu0 0.0
    %5085 = vmatpush2.msra.mxu0 0.0
    %5086 = vmatprep.mubr.f32.mxu0 0.0
    %5087 = vmatmul.mubr.f32.gmra.mxu0 %v5020
    %v5088 = vpop.f32.mrf.mxu0
    %v5089 = vadd.f32 0.0, %v5088
    %v5090 = vpop.f32.mrf.mxu0
    %5091 = vdwg.mxu0
    %v5093 = vrot.slane %v5089, 3
    %v5095 = vadd.f32 %v4250, %v5093
    %v5096 = vxor.u32 %v5095, 2147483648
    %v5097 = vmul.f32 %v5096, 1.442695
    %v5098 = vpow.pop %v5097
    %v5099 = vadd.f32 %v5098, 1.0
    %v5100 = vrcp.pop %v5099
    %v5101 = vmul.f32 1.0, %v5100
    %v5102 = vtanh.pop %v5095
    %v5104 = vrot.slane %v5009, 7
    %v5106 = vmul.f32 %v5101, %v5104
    %5108 = vrot.lane.b32.xlu0 %v5102, 64
    %v5109 = vpop.permute.xlu0 %5108
    %v5111 = vmul.f32 %v5101, %v5109
    %5113 = vrot.lane.b32.xlu0 %v5111, 32
    %v5114 = vpop.permute.xlu0 %5113
    %v5116 = vadd.f32 %v5106, %v5114
    %v5117 = vtanh.pop %v5116
    %5119 = vrot.lane.b32.xlu0 %v5117, 64
    %v5120 = vpop.permute.xlu0 %5119
    %v5122 = vmul.f32 %v5101, %v5120
    %v5124 = vrot.slane %v5122, 5
    %5125 = vrot.lane.b32.xlu0 %v5124, 32
    %v5126 = vpop.permute.xlu0 %5125
    %v5127 = vsel %vm226, %v5126, 0
    %5129 = vmatprep.subr.mxu0 0.0
    %5130 = vmatpush1.msra.mxu0 0.0
    %5131 = vmatprep.subr.mxu0 0.0
    %5132 = vmatpush1.msra.mxu0 0.0
    %5133 = vmatprep.subr.mxu0 0.0
    %5134 = vmatpush1.msra.mxu0 0.0
    %5135 = vmatprep.subr.mxu0 0.0
    %5136 = vmatpush1.msra.mxu0 0.0
    %5137 = vmatprep.subr.mxu0 0.0
    %5138 = vmatpush1.msra.mxu0 0.0
    %5139 = vmatprep.subr.mxu0 0.0
    %5140 = vmatpush1.msra.mxu0 0.0
    %5141 = vmatprep.subr.mxu0 0.0
    %5142 = vmatpush1.msra.mxu0 0.0
    %5143 = vmatprep.subr.mxu0 0.0
    %5144 = vmatpush1.msra.mxu0 0.0
    %5145 = vmatprep.subr.mxu0 0.0
    %5146 = vmatpush1.msra.mxu0 0.0
    %5147 = vmatprep.subr.mxu0 0.0
    %5148 = vmatpush1.msra.mxu0 0.0
    %5149 = vmatprep.subr.mxu0 0.0
    %5150 = vmatpush1.msra.mxu0 0.0
    %5151 = vmatprep.subr.mxu0 0.0
    %5152 = vmatpush1.msra.mxu0 0.0
    %5153 = vmatprep.subr.mxu0 0.0
    %5154 = vmatpush1.msra.mxu0 %v4090
    %5155 = vmatprep.subr.mxu0 0.0
    %5156 = vmatpush1.msra.mxu0 %v4089
    %5157 = vmatprep.subr.mxu0 0.0
    %5158 = vmatpush1.msra.mxu0 %v4088
    %5159 = vmatprep.subr.mxu0 0.0
    %5160 = vmatpush1.msra.mxu0 %v4087
    %5161 = vmatprep.subr.mxu0 0.0
    %5162 = vmatpush2.msra.mxu0 0.0
    %5163 = vmatprep.subr.mxu0 0.0
    %5164 = vmatpush2.msra.mxu0 0.0
    %5165 = vmatprep.subr.mxu0 0.0
    %5166 = vmatpush2.msra.mxu0 0.0
    %5167 = vmatprep.subr.mxu0 0.0
    %5168 = vmatpush2.msra.mxu0 0.0
    %5169 = vmatprep.subr.mxu0 0.0
    %5170 = vmatpush2.msra.mxu0 0.0
    %5171 = vmatprep.subr.mxu0 0.0
    %5172 = vmatpush2.msra.mxu0 0.0
    %5173 = vmatprep.subr.mxu0 0.0
    %5174 = vmatpush2.msra.mxu0 0.0
    %5175 = vmatprep.subr.mxu0 0.0
    %5176 = vmatpush2.msra.mxu0 0.0
    %5177 = vmatprep.subr.mxu0 0.0
    %5178 = vmatpush2.msra.mxu0 0.0
    %5179 = vmatprep.subr.mxu0 0.0
    %5180 = vmatpush2.msra.mxu0 0.0
    %5181 = vmatprep.subr.mxu0 0.0
    %5182 = vmatpush2.msra.mxu0 0.0
    %5183 = vmatprep.subr.mxu0 0.0
    %5184 = vmatpush2.msra.mxu0 0.0
    %5185 = vmatprep.subr.mxu0 0.0
    %5186 = vmatpush2.msra.mxu0 0.0
    %5187 = vmatprep.subr.mxu0 0.0
    %5188 = vmatpush2.msra.mxu0 0.0
    %5189 = vmatprep.subr.mxu0 0.0
    %5190 = vmatpush2.msra.mxu0 0.0
    %5191 = vmatprep.subr.mxu0 0.0
    %5192 = vmatpush2.msra.mxu0 0.0
    %5193 = vmatprep.mubr.f32.mxu0 0.0
    %5194 = vmatmul.mubr.f32.gmra.mxu0 %v5127
    %v5195 = vpop.f32.mrf.mxu0
    %v5196 = vadd.f32 0.0, %v5195
    %v5197 = vpop.f32.mrf.mxu0
    %5198 = vdwg.mxu0
    %v5200 = vrot.slane %v5196, 2
    %v5202 = vadd.f32 %v4250, %v5200
    %v5203 = vxor.u32 %v5202, 2147483648
    %v5204 = vmul.f32 %v5203, 1.442695
    %v5205 = vpow.pop %v5204
    %v5206 = vadd.f32 %v5205, 1.0
    %v5207 = vrcp.pop %v5206
    %v5208 = vmul.f32 1.0, %v5207
    %v5209 = vtanh.pop %v5202
    %v5211 = vrot.slane %v5116, 7
    %v5213 = vmul.f32 %v5208, %v5211
    %5215 = vrot.lane.b32.xlu0 %v5209, 64
    %v5216 = vpop.permute.xlu0 %5215
    %v5218 = vmul.f32 %v5208, %v5216
    %5220 = vrot.lane.b32.xlu0 %v5218, 32
    %v5221 = vpop.permute.xlu0 %5220
    %v5223 = vadd.f32 %v5213, %v5221
    %v5224 = vtanh.pop %v5223
    %5226 = vrot.lane.b32.xlu0 %v5224, 64
    %v5227 = vpop.permute.xlu0 %5226
    %v5229 = vmul.f32 %v5208, %v5227
    %v5231 = vrot.slane %v5229, 6
    %5232 = vrot.lane.b32.xlu0 %v5231, 32
    %v5233 = vpop.permute.xlu0 %5232
    %v5234 = vsel %vm226, %v5233, 0
    %5236 = vmatprep.subr.mxu0 0.0
    %5237 = vmatpush1.msra.mxu0 0.0
    %5238 = vmatprep.subr.mxu0 0.0
    %5239 = vmatpush1.msra.mxu0 0.0
    %5240 = vmatprep.subr.mxu0 0.0
    %5241 = vmatpush1.msra.mxu0 0.0
    %5242 = vmatprep.subr.mxu0 0.0
    %5243 = vmatpush1.msra.mxu0 0.0
    %5244 = vmatprep.subr.mxu0 0.0
    %5245 = vmatpush1.msra.mxu0 0.0
    %5246 = vmatprep.subr.mxu0 0.0
    %5247 = vmatpush1.msra.mxu0 0.0
    %5248 = vmatprep.subr.mxu0 0.0
    %5249 = vmatpush1.msra.mxu0 0.0
    %5250 = vmatprep.subr.mxu0 0.0
    %5251 = vmatpush1.msra.mxu0 0.0
    %5252 = vmatprep.subr.mxu0 0.0
    %5253 = vmatpush1.msra.mxu0 0.0
    %5254 = vmatprep.subr.mxu0 0.0
    %5255 = vmatpush1.msra.mxu0 0.0
    %5256 = vmatprep.subr.mxu0 0.0
    %5257 = vmatpush1.msra.mxu0 0.0
    %5258 = vmatprep.subr.mxu0 0.0
    %5259 = vmatpush1.msra.mxu0 0.0
    %5260 = vmatprep.subr.mxu0 0.0
    %5261 = vmatpush1.msra.mxu0 %v4090
    %5262 = vmatprep.subr.mxu0 0.0
    %5263 = vmatpush1.msra.mxu0 %v4089
    %5264 = vmatprep.subr.mxu0 0.0
    %5265 = vmatpush1.msra.mxu0 %v4088
    %5266 = vmatprep.subr.mxu0 0.0
    %5267 = vmatpush1.msra.mxu0 %v4087
    %5268 = vmatprep.subr.mxu0 0.0
    %5269 = vmatpush2.msra.mxu0 0.0
    %5270 = vmatprep.subr.mxu0 0.0
    %5271 = vmatpush2.msra.mxu0 0.0
    %5272 = vmatprep.subr.mxu0 0.0
    %5273 = vmatpush2.msra.mxu0 0.0
    %5274 = vmatprep.subr.mxu0 0.0
    %5275 = vmatpush2.msra.mxu0 0.0
    %5276 = vmatprep.subr.mxu0 0.0
    %5277 = vmatpush2.msra.mxu0 0.0
    %5278 = vmatprep.subr.mxu0 0.0
    %5279 = vmatpush2.msra.mxu0 0.0
    %5280 = vmatprep.subr.mxu0 0.0
    %5281 = vmatpush2.msra.mxu0 0.0
    %5282 = vmatprep.subr.mxu0 0.0
    %5283 = vmatpush2.msra.mxu0 0.0
    %5284 = vmatprep.subr.mxu0 0.0
    %5285 = vmatpush2.msra.mxu0 0.0
    %5286 = vmatprep.subr.mxu0 0.0
    %5287 = vmatpush2.msra.mxu0 0.0
    %5288 = vmatprep.subr.mxu0 0.0
    %5289 = vmatpush2.msra.mxu0 0.0
    %5290 = vmatprep.subr.mxu0 0.0
    %5291 = vmatpush2.msra.mxu0 0.0
    %5292 = vmatprep.subr.mxu0 0.0
    %5293 = vmatpush2.msra.mxu0 0.0
    %5294 = vmatprep.subr.mxu0 0.0
    %5295 = vmatpush2.msra.mxu0 0.0
    %5296 = vmatprep.subr.mxu0 0.0
    %5297 = vmatpush2.msra.mxu0 0.0
    %5298 = vmatprep.subr.mxu0 0.0
    %5299 = vmatpush2.msra.mxu0 0.0
    %5300 = vmatprep.mubr.f32.mxu0 0.0
    %5301 = vmatmul.mubr.f32.gmra.mxu0 %v5234
    %v5302 = vpop.f32.mrf.mxu0
    %v5303 = vadd.f32 0.0, %v5302
    %v5304 = vpop.f32.mrf.mxu0
    %5305 = vdwg.mxu0
    %v5307 = vrot.slane %v5303, 1
    %v5309 = vadd.f32 %v4250, %v5307
    %v5310 = vxor.u32 %v5309, 2147483648
    %v5311 = vmul.f32 %v5310, 1.442695
    %v5312 = vpow.pop %v5311
    %v5313 = vadd.f32 %v5312, 1.0
    %v5314 = vrcp.pop %v5313
    %v5315 = vmul.f32 1.0, %v5314
    %v5316 = vtanh.pop %v5309
    %v5318 = vrot.slane %v5223, 7
    %v5320 = vmul.f32 %v5315, %v5318
    %5322 = vrot.lane.b32.xlu0 %v5316, 64
    %v5323 = vpop.permute.xlu0 %5322
    %v5325 = vmul.f32 %v5315, %v5323
    %5327 = vrot.lane.b32.xlu0 %v5325, 32
    %v5328 = vpop.permute.xlu0 %5327
    %v5330 = vadd.f32 %v5320, %v5328
    %v5331 = vtanh.pop %v5330
    %5333 = vrot.lane.b32.xlu0 %v5331, 64
    %v5334 = vpop.permute.xlu0 %5333
    %v5336 = vmul.f32 %v5315, %v5334
    %5338 = vrot.lane.b32.xlu0 %v5336, 32
    %v5339 = vpop.permute.xlu0 %5338
    %5341 = vst.msk [vmem:[%s4 - $0x7] sm:$0x80] %vm433, %v5339
    %5343 = vrot.lane.b32.xlu0 %v4588, 32
    %v5344 = vpop.permute.xlu0 %5343
    %5346 = vst.msk [vmem:[%s4 - $0x6] sm:$0x80] %vm433, %v5344
    // Predicated region
    $region26: #{encoder_forward.1} parent=1 // pred_check
      _
    $region27: #{encoder_forward.1} parent=1 // pred_check_branch
      %5348 = sbr.rel (0) target = $region29
    $region28: #{encoder_forward.1} parent=1 // pred_region
      _
    $region29: #{encoder_forward.1} parent=1 // pred_fallthru
      _
    // Predicated region
    $region30: #{encoder_forward.1} parent=1 // pred_check
      _
    $region31: #{encoder_forward.1} parent=1 // pred_check_branch
      %5350 = sbr.rel (0) target = $region33
    $region32: #{encoder_forward.1} parent=1 // pred_region
      _
    $region33: #{encoder_forward.1} parent=1 // pred_fallthru
      _
    %5351 = vsyncpa [#allocation5], 1
    %5352 = vsyncpa [#allocation7], 1

</llo_original>
